<compile_context>
chip_gen: v5e
topology: v5e:2x2
jax: 0.10.0
libtpu: 0.0.40
codegen_flags: <defaults>
</compile_context>

<pallas_src>
import functools

import jax
import jax.numpy as jnp
from jax.experimental import pallas as pl
from jax.experimental.pallas import tpu as pltpu


_VMEM = pl.BlockSpec(memory_space=pltpu.MemorySpace.VMEM)
_EPS = 1e-5


# ----------------------------------------------------------------------------
# Fused forward kernel: the whole generator in one pallas_call
# ----------------------------------------------------------------------------
def _fused_generator_kernel(
    # data
    prevx_ref, z_ref, yemb_ref,
    # conditioner (h0_prev..h3_prev + their BNs)
    w0_ref, b0_ref, g0_ref, be0_ref,
    wprev_ref, bprev_ref, gprev_ref, beprev_ref,
    # linear1 + bn1d_1
    wlz_ref, wly_ref, bl_ref, gl_ref, bel_ref,
    # ConvTranspose h1/h2/h3 (+ bn2/bn3/bn4), split into h-/prev-/y- parts
    wup1h_ref, wh23_ref, wpu_ref, wyu_ref, bu_ref, gu_ref, beu_ref,
    # final ConvTranspose h4
    w4h_ref, w4p_ref, w4y_ref, b4_ref,
    # output, laid out (16, B, P) so every store is a full 128-lane row
    out_ref,
    *, batch_size, eps):
  B = batch_size

  def mm(x, w):
    # bf16 operands on the MXU, f32 accumulation; epilogues stay f32.
    return jnp.dot(x.astype(jnp.bfloat16), w, preferred_element_type=jnp.float32)

  def lrelu(v):
    return jnp.where(v > 0, v, 0.2 * v)

  def relu(v):
    return jnp.maximum(v, 0.0)

  def bn_parts(parts, gamma, beta, act):
    # Training-mode BatchNorm (batch statistics, biased variance) over the
    # N*H*W samples of each channel; `parts` is a list of per-H (B, C) tiles.
    n = len(parts) * B
    mean = sum(jnp.sum(p, axis=0, keepdims=True) for p in parts) / n
    var = sum(jnp.sum((p - mean) ** 2, axis=0, keepdims=True) for p in parts) / n
    scale = gamma * jax.lax.rsqrt(var + eps)
    shift = beta - mean * scale
    return [act(p * scale + shift) for p in parts]

  yemb = yemb_ref[...]

  # ---------------- conditioner path (h0_prev .. h3_prev) ----------------
  w0 = w0_ref[...]
  b0 = b0_ref[...]
  parts = [mm(prevx_ref[h], w0) + b0 for h in range(16)]
  cur = bn_parts(parts, g0_ref[...], be0_ref[...], lrelu)          # 16 x (B,16)

  prev_acts = [cur]
  for i in range(3):
    wk0 = wprev_ref[2 * i]
    wk1 = wprev_ref[2 * i + 1]
    bi = bprev_ref[i]
    nxt = [mm(cur[2 * m], wk0) + mm(cur[2 * m + 1], wk1) + bi
           for m in range(len(cur) // 2)]
    cur = bn_parts(nxt, gprev_ref[i], beprev_ref[i], lrelu)
    prev_acts.append(cur)
  a0, a1, a2, a3 = prev_acts                                       # 16/8/4/2 x (B,16)

  # ---------------- generator head: linear1 + bn1d_1 + relu ----------------
  t = mm(z_ref[...], wlz_ref[...]) + mm(yemb, wly_ref[...]) + bl_ref[...]
  mean = jnp.mean(t, axis=0, keepdims=True)
  var = jnp.mean((t - mean) ** 2, axis=0, keepdims=True)
  h0 = relu((t - mean) * (gl_ref[...] * jax.lax.rsqrt(var + eps)) + bel_ref[...])

  # y-embedding + bias contribution of each ConvTranspose layer: identical for
  # every H row of a batch element -> computed once per layer, reused per row.
  ycon = [mm(yemb, wyu_ref[i]) + bu_ref[i] for i in range(3)]      # (B, 2*128)

  # ---------------- up-sampling path ----------------
  # up1: the h0.view(B, 128, 2, 1) channel/H fold is baked into wup1h's rows.
  cur = []
  for h in range(2):
    t2 = mm(h0, wup1h_ref[h]) + mm(a3[h], wpu_ref[0]) + ycon[0]    # (B, 2*128)
    cur.append(t2[:, 0:128])      # k = 0 -> output row 2h
    cur.append(t2[:, 128:256])    # k = 1 -> output row 2h+1
  cur = bn_parts(cur, gu_ref[0], beu_ref[0], relu)                 # 4 x (B,128)

  # up2 / up3
  for i, prev_parts in ((1, a2), (2, a1)):
    wh = wh23_ref[i - 1]
    wp = wpu_ref[i]
    yc = ycon[i]
    nxt = []
    for h in range(len(cur)):
      t2 = mm(cur[h], wh) + mm(prev_parts[h], wp) + yc
      nxt.append(t2[:, 0:128])
      nxt.append(t2[:, 128:256])
    cur = bn_parts(nxt, gu_ref[i], beu_ref[i], relu)               # 8 then 16 x (B,128)

  # ---------------- final ConvTranspose(244 -> 1, (1, P)) + sigmoid --------
  w4h = w4h_ref[...]
  w4p = w4p_ref[...]
  ycon4 = mm(yemb, w4y_ref[...]) + b4_ref[...]                     # (B, 128)
  for h in range(16):
    out_ref[h] = jax.nn.sigmoid(mm(cur[h], w4h) + mm(a0[h], w4p) + ycon4)


# ----------------------------------------------------------------------------
# Parameters: raw (PyTorch-layout) init + one-time layout preparation
# ----------------------------------------------------------------------------
def init_params(key, pitch_range):
  P = pitch_range
  keys = iter(jax.random.split(key, 64))

  def w(shape, scale=0.05):
    return scale * jax.random.normal(next(keys), shape, dtype=jnp.float32)

  params = {
      # Conv2d weights: (out, in, kH, kW); ConvTranspose2d: (in, out, kH, kW)
      "h0_prev_w": w((16, 1, 1, P)), "h0_prev_b": w((16,)),
      "h1_prev_w": w((16, 16, 2, 1)), "h1_prev_b": w((16,)),
      "h2_prev_w": w((16, 16, 2, 1)), "h2_prev_b": w((16,)),
      "h3_prev_w": w((16, 16, 2, 1)), "h3_prev_b": w((16,)),
      "linear1_w": w((256, 200)), "linear1_b": w((256,)),
      "embedding": w((25, 100), 1.0),
      "h1_w": w((244, P, 2, 1)), "h1_b": w((P,)),
      "h2_w": w((244, P, 2, 1)), "h2_b": w((P,)),
      "h3_w": w((244, P, 2, 1)), "h3_b": w((P,)),
      "h4_w": w((244, 1, 1, P)), "h4_b": w((1,)),
  }
  for name, c in [("bn0_prev", 16), ("bn1_prev", 16), ("bn2_prev", 16),
                  ("bn3_prev", 16), ("bn2", P), ("bn3", P), ("bn4", P),
                  ("bn1d_1", 256)]:
    params[name + "_g"] = 1.0 + 0.1 * jax.random.normal(next(keys), (c,), dtype=jnp.float32)
    params[name + "_b"] = 0.1 * jax.random.normal(next(keys), (c,), dtype=jnp.float32)
  return params


def prepare_params(params):
  """One-time conversion of the raw PyTorch-layout parameters into the
  matmul-friendly layouts consumed by the fused kernel (hoisted out of the
  forward pass)."""
  P = 128
  f32, bf16 = jnp.float32, jnp.bfloat16

  def row(x):
    return jnp.asarray(x, f32).reshape(1, -1)

  prepped = {"embedding": params["embedding"].astype(f32)}

  # h0_prev: Conv2d(1, 16, (1, P)) -> a (P, 16) matmul per H row.
  prepped["w0"] = params["h0_prev_w"].reshape(16, P).T.astype(bf16)
  prepped["b0"] = row(params["h0_prev_b"])
  prepped["g0"] = row(params["bn0_prev_g"])
  prepped["be0"] = row(params["bn0_prev_b"])

  # h1_prev..h3_prev: Conv2d(16,16,(2,1),stride 2) -> per-k (16,16) matmuls.
  wprev, bprev, gprev, beprev = [], [], [], []
  for conv, bn in (("h1_prev", "bn1_prev"), ("h2_prev", "bn2_prev"),
                   ("h3_prev", "bn3_prev")):
    wk = jnp.transpose(params[conv + "_w"][..., 0], (2, 1, 0))     # (k, ci, co)
    wprev += [wk[0], wk[1]]
    bprev.append(row(params[conv + "_b"]))
    gprev.append(row(params[bn + "_g"]))
    beprev.append(row(params[bn + "_b"]))
  prepped["wprev"] = jnp.stack(wprev).astype(bf16)                 # (6, 16, 16)
  prepped["bprev"] = jnp.stack(bprev)                              # (3, 1, 16)
  prepped["gprev"] = jnp.stack(gprev)
  prepped["beprev"] = jnp.stack(beprev)

  # linear1(200 -> 256), split into the z / y halves of the input concat.
  wl = params["linear1_w"]                                         # (256, 200)
  prepped["wlz"] = wl[:, :100].T.astype(bf16)                      # (100, 256)
  prepped["wly"] = wl[:, 100:].T.astype(bf16)
  prepped["bl"] = row(params["linear1_b"])
  prepped["gl"] = row(params["bn1d_1_g"])
  prepped["bel"] = row(params["bn1d_1_b"])

  # ConvTranspose2d(244, 128, (2,1), stride 2): split the 244 input channels
  # into h (0..127) / y (128..227) / prev (228..243); columns are (k*128+co).
  def split_up(w):
    full = jnp.transpose(w[..., 0], (0, 2, 1)).reshape(244, 2 * P)
    return full[:128], full[128:228], full[228:244]

  wh, wy, wp, bu = [], [], [], []
  for conv in ("h1", "h2", "h3"):
    h_part, y_part, p_part = split_up(params[conv + "_w"])
    wh.append(h_part)
    wy.append(y_part)
    wp.append(p_part)
    bu.append(jnp.tile(params[conv + "_b"], 2).reshape(1, 2 * P).astype(f32))

  # up1's h input comes from h0.view(B, 128, 2, 1): channel c / spatial h is
  # h0[:, 2c + h]; bake that fold into the weight's row indexing.
  wup1h = jnp.zeros((2, 256, 2 * P), f32)
  rows = 2 * jnp.arange(128)
  wup1h = wup1h.at[0, rows].set(wh[0])
  wup1h = wup1h.at[1, rows + 1].set(wh[0])
  prepped["wup1h"] = wup1h.astype(bf16)                            # (2, 256, 256)
  prepped["wh23"] = jnp.stack(wh[1:]).astype(bf16)                 # (2, 128, 256)
  prepped["wpu"] = jnp.stack(wp).astype(bf16)                      # (3, 16, 256)
  prepped["wyu"] = jnp.stack(wy).astype(bf16)                      # (3, 100, 256)
  prepped["bu"] = jnp.stack(bu)                                    # (3, 1, 256)
  prepped["gu"] = jnp.stack([row(params[n + "_g"]) for n in ("bn2", "bn3", "bn4")])
  prepped["beu"] = jnp.stack([row(params[n + "_b"]) for n in ("bn2", "bn3", "bn4")])

  # final ConvTranspose2d(244, 1, (1, P)): one (244, P) matmul, split 3 ways.
  w4 = params["h4_w"][:, 0, 0, :]                                  # (244, P)
  prepped["w4h"] = w4[:128].astype(bf16)
  prepped["w4y"] = w4[128:228].astype(bf16)
  prepped["w4p"] = w4[228:244].astype(bf16)
  prepped["b4"] = jnp.full((1, P), params["h4_b"][0], f32)
  return prepped


# ----------------------------------------------------------------------------
# Forward pass (one pallas_call)
# ----------------------------------------------------------------------------
@functools.partial(jax.jit, static_argnames=("batch_size", "pitch_range"))
def sample_generator_forward(prepped, z, prev_x, y, batch_size, pitch_range):
  B, P = batch_size, pitch_range
  assert P == 128, "module structure requires pitch_range == 128"

  y_emb = jnp.take(prepped["embedding"], y, axis=0).reshape(B, 100).astype(jnp.float32)
  prevx_t = prev_x.reshape(B, 16, P).transpose(1, 0, 2).astype(jnp.float32)  # (16,B,P)

  inputs = (
      prevx_t, z.astype(jnp.float32), y_emb,
      prepped["w0"], prepped["b0"], prepped["g0"], prepped["be0"],
      prepped["wprev"], prepped["bprev"], prepped["gprev"], prepped["beprev"],
      prepped["wlz"], prepped["wly"], prepped["bl"], prepped["gl"], prepped["bel"],
      prepped["wup1h"], prepped["wh23"], prepped["wpu"], prepped["wyu"],
      prepped["bu"], prepped["gu"], prepped["beu"],
      prepped["w4h"], prepped["w4p"], prepped["w4y"], prepped["b4"],
  )
  out = pl.pallas_call(
      functools.partial(_fused_generator_kernel, batch_size=B, eps=_EPS),
      out_shape=jax.ShapeDtypeStruct((16, B, P), jnp.float32),
      in_specs=[_VMEM] * len(inputs),
      out_specs=_VMEM,
  )(*inputs)
  return out.transpose(1, 0, 2).reshape(B, 1, 16, P)               # NCHW


# ----------------------------------------------------------------------------
# Pure-JAX f32 reference of the same forward pass (for a numerical check)
# ----------------------------------------------------------------------------
def _reference_forward(params, z, prev_x, y, B, P):
  hp = jax.lax.Precision.HIGHEST

  def mm(x, w):
    return jnp.dot(x, w, precision=hp)

  def bn(x, g, b):
    mean = jnp.mean(x, axis=0, keepdims=True)
    var = jnp.mean((x - mean) ** 2, axis=0, keepdims=True)
    return (x - mean) * (g.reshape(1, -1) * jax.lax.rsqrt(var + _EPS)) + b.reshape(1, -1)

  def lrelu(x):
    return jnp.where(x > 0, x, 0.2 * x)

  x0 = prev_x.reshape(B * 16, P)
  w0 = params["h0_prev_w"].reshape(16, P).T
  a0 = lrelu(bn(mm(x0, w0) + params["h0_prev_b"],
                params["bn0_prev_g"], params["bn0_prev_b"]))

  def prev_step(a, wname, bname, gname, btname):
    xin = a.reshape(-1, 32)
    wmat = jnp.transpose(params[wname][..., 0], (2, 1, 0)).reshape(32, 16)
    return lrelu(bn(mm(xin, wmat) + params[bname], params[gname], params[btname]))

  a1 = prev_step(a0, "h1_prev_w", "h1_prev_b", "bn1_prev_g", "bn1_prev_b")
  a2 = prev_step(a1, "h2_prev_w", "h2_prev_b", "bn2_prev_g", "bn2_prev_b")
  a3 = prev_step(a2, "h3_prev_w", "h3_prev_b", "bn3_prev_g", "bn3_prev_b")

  y_emb = jnp.take(params["embedding"], y, axis=0).reshape(B, -1)
  zc = jnp.concatenate([z, y_emb], axis=1)
  h0 = jnp.maximum(bn(mm(zc, params["linear1_w"].T) + params["linear1_b"],
                      params["bn1d_1_g"], params["bn1d_1_b"]), 0.0)
  h = h0.reshape(B, 128, 2).transpose(0, 2, 1).reshape(B * 2, 128)

  def up_step(h, prev, H_in, wname, bname, gname, btname):
    yrep = jnp.repeat(y_emb, H_in, axis=0)
    hcat = jnp.concatenate([h, yrep, prev], axis=1)
    wmat = jnp.transpose(params[wname][..., 0], (0, 2, 1)).reshape(244, 2 * 128)
    t = mm(hcat, wmat) + jnp.tile(params[bname], 2)
    t = t.reshape(B * H_in * 2, 128)
    return jnp.maximum(bn(t, params[gname], params[btname]), 0.0)

  h2 = up_step(h, a3, 2, "h1_w", "h1_b", "bn2_g", "bn2_b")
  h3 = up_step(h2, a2, 4, "h2_w", "h2_b", "bn3_g", "bn3_b")
  h4 = up_step(h3, a1, 8, "h3_w", "h3_b", "bn4_g", "bn4_b")

  yrep = jnp.repeat(y_emb, 16, axis=0)
  h4c = jnp.concatenate([h4, yrep, a0], axis=1)
  g = jax.nn.sigmoid(mm(h4c, params["h4_w"].reshape(244, P)) + params["h4_b"][0])
  return g.reshape(B, 1, 16, P)


if __name__ == "__main__":
  B, P = 4, 128
  key = jax.random.PRNGKey(0)
  kparam, kz, kp, ky = jax.random.split(key, 4)

  params = init_params(kparam, P)
  prepped = prepare_params(params)       # one-time weight-layout prep (hoisted)

  z = jax.random.normal(kz, (B, 100), dtype=jnp.float32)
  prev_x = jax.random.normal(kp, (B, 1, 16, P), dtype=jnp.float32)
  y = jax.random.randint(ky, (B,), 0, 25)

  out = sample_generator_forward(prepped, z, prev_x, y, batch_size=B, pitch_range=P)
  out = jax.block_until_ready(out)

  assert out.shape == (B, 1, 16, P)
  assert bool(jnp.all(jnp.isfinite(out)))
  assert bool(jnp.all((out >= 0.0) & (out <= 1.0)))

  # Numerical check against a pure-JAX f32 reference (bf16 matmul operands in
  # the kernel give ~1e-3 level differences after the sigmoid).
  ref = _reference_forward(params, z, prev_x, y, B, P)
  max_err = float(jnp.max(jnp.abs(out - ref)))
  assert max_err < 5e-2, f"max abs error vs reference: {max_err}"

  print("KERNEL_OK")
</pallas_src>

<mosaic_0001>
module attributes {stable_mosaic.version = 11 : i64} {
  func.func @_fused_generator_kernel(%arg0: memref<16x4x128xf32, #tpu.memory_space<vmem>>, %arg1: memref<4x100xf32, #tpu.memory_space<vmem>>, %arg2: memref<4x100xf32, #tpu.memory_space<vmem>>, %arg3: memref<128x16xbf16, #tpu.memory_space<vmem>>, %arg4: memref<1x16xf32, #tpu.memory_space<vmem>>, %arg5: memref<1x16xf32, #tpu.memory_space<vmem>>, %arg6: memref<1x16xf32, #tpu.memory_space<vmem>>, %arg7: memref<6x16x16xbf16, #tpu.memory_space<vmem>>, %arg8: memref<3x1x16xf32, #tpu.memory_space<vmem>>, %arg9: memref<3x1x16xf32, #tpu.memory_space<vmem>>, %arg10: memref<3x1x16xf32, #tpu.memory_space<vmem>>, %arg11: memref<100x256xbf16, #tpu.memory_space<vmem>>, %arg12: memref<100x256xbf16, #tpu.memory_space<vmem>>, %arg13: memref<1x256xf32, #tpu.memory_space<vmem>>, %arg14: memref<1x256xf32, #tpu.memory_space<vmem>>, %arg15: memref<1x256xf32, #tpu.memory_space<vmem>>, %arg16: memref<2x256x256xbf16, #tpu.memory_space<vmem>>, %arg17: memref<2x128x256xbf16, #tpu.memory_space<vmem>>, %arg18: memref<3x16x256xbf16, #tpu.memory_space<vmem>>, %arg19: memref<3x100x256xbf16, #tpu.memory_space<vmem>>, %arg20: memref<3x1x256xf32, #tpu.memory_space<vmem>>, %arg21: memref<3x1x128xf32, #tpu.memory_space<vmem>>, %arg22: memref<3x1x128xf32, #tpu.memory_space<vmem>>, %arg23: memref<128x128xbf16, #tpu.memory_space<vmem>>, %arg24: memref<16x128xbf16, #tpu.memory_space<vmem>>, %arg25: memref<100x128xbf16, #tpu.memory_space<vmem>>, %arg26: memref<1x128xf32, #tpu.memory_space<vmem>>, %arg27: memref<16x4x128xf32, #tpu.memory_space<vmem>>) attributes {dimension_semantics = [], scalar_prefetch = 0 : i64, scratch_operands = 0 : i64, tpu.core_type = #tpu.core_type<tc>} {
    %c0 = arith.constant 0 : index
    %c0_0 = arith.constant 0 : index
    %0 = vector.load %arg2[%c0, %c0_0] : memref<4x100xf32, #tpu.memory_space<vmem>>, vector<4x100xf32>
    %c0_1 = arith.constant 0 : index
    %c0_2 = arith.constant 0 : index
    %1 = vector.load %arg3[%c0_1, %c0_2] : memref<128x16xbf16, #tpu.memory_space<vmem>>, vector<128x16xbf16>
    %c0_3 = arith.constant 0 : index
    %c0_4 = arith.constant 0 : index
    %2 = vector.load %arg4[%c0_3, %c0_4] : memref<1x16xf32, #tpu.memory_space<vmem>>, vector<1x16xf32>
    %c0_5 = arith.constant 0 : index
    %c0_6 = arith.constant 0 : index
    %c0_7 = arith.constant 0 : index
    %3 = vector.load %arg0[%c0_5, %c0_6, %c0_7] : memref<16x4x128xf32, #tpu.memory_space<vmem>>, vector<1x4x128xf32>
    %4 = vector.shape_cast %3 : vector<1x4x128xf32> to vector<4x128xf32>
    %5 = arith.truncf %4 : vector<4x128xf32> to vector<4x128xbf16>
    %cst = arith.constant dense<0.000000e+00> : vector<4x16xf32>
    %6 = tpu.matmul %5, %1, %cst {dimension_numbers = #tpu.dot_dimension_numbers<[1], [0], [0], [1], [0, 0, 1, 1], [], []>} : vector<4x128xbf16>, vector<128x16xbf16>, vector<4x16xf32> -> vector<4x16xf32>
    %7 = vector.broadcast %2 : vector<1x16xf32> to vector<4x16xf32>
    %8 = arith.addf %6, %7 : vector<4x16xf32>
    %c1 = arith.constant 1 : index
    %c0_8 = arith.constant 0 : index
    %c0_9 = arith.constant 0 : index
    %9 = vector.load %arg0[%c1, %c0_8, %c0_9] : memref<16x4x128xf32, #tpu.memory_space<vmem>>, vector<1x4x128xf32>
    %10 = vector.shape_cast %9 : vector<1x4x128xf32> to vector<4x128xf32>
    %11 = arith.truncf %10 : vector<4x128xf32> to vector<4x128xbf16>
    %cst_10 = arith.constant dense<0.000000e+00> : vector<4x16xf32>
    %12 = tpu.matmul %11, %1, %cst_10 {dimension_numbers = #tpu.dot_dimension_numbers<[1], [0], [0], [1], [0, 0, 1, 1], [], []>} : vector<4x128xbf16>, vector<128x16xbf16>, vector<4x16xf32> -> vector<4x16xf32>
    %13 = vector.broadcast %2 : vector<1x16xf32> to vector<4x16xf32>
    %14 = arith.addf %12, %13 : vector<4x16xf32>
    %c2 = arith.constant 2 : index
    %c0_11 = arith.constant 0 : index
    %c0_12 = arith.constant 0 : index
    %15 = vector.load %arg0[%c2, %c0_11, %c0_12] : memref<16x4x128xf32, #tpu.memory_space<vmem>>, vector<1x4x128xf32>
    %16 = vector.shape_cast %15 : vector<1x4x128xf32> to vector<4x128xf32>
    %17 = arith.truncf %16 : vector<4x128xf32> to vector<4x128xbf16>
    %cst_13 = arith.constant dense<0.000000e+00> : vector<4x16xf32>
    %18 = tpu.matmul %17, %1, %cst_13 {dimension_numbers = #tpu.dot_dimension_numbers<[1], [0], [0], [1], [0, 0, 1, 1], [], []>} : vector<4x128xbf16>, vector<128x16xbf16>, vector<4x16xf32> -> vector<4x16xf32>
    %19 = vector.broadcast %2 : vector<1x16xf32> to vector<4x16xf32>
    %20 = arith.addf %18, %19 : vector<4x16xf32>
    %c3 = arith.constant 3 : index
    %c0_14 = arith.constant 0 : index
    %c0_15 = arith.constant 0 : index
    %21 = vector.load %arg0[%c3, %c0_14, %c0_15] : memref<16x4x128xf32, #tpu.memory_space<vmem>>, vector<1x4x128xf32>
    %22 = vector.shape_cast %21 : vector<1x4x128xf32> to vector<4x128xf32>
    %23 = arith.truncf %22 : vector<4x128xf32> to vector<4x128xbf16>
    %cst_16 = arith.constant dense<0.000000e+00> : vector<4x16xf32>
    %24 = tpu.matmul %23, %1, %cst_16 {dimension_numbers = #tpu.dot_dimension_numbers<[1], [0], [0], [1], [0, 0, 1, 1], [], []>} : vector<4x128xbf16>, vector<128x16xbf16>, vector<4x16xf32> -> vector<4x16xf32>
    %25 = vector.broadcast %2 : vector<1x16xf32> to vector<4x16xf32>
    %26 = arith.addf %24, %25 : vector<4x16xf32>
    %c4 = arith.constant 4 : index
    %c0_17 = arith.constant 0 : index
    %c0_18 = arith.constant 0 : index
    %27 = vector.load %arg0[%c4, %c0_17, %c0_18] : memref<16x4x128xf32, #tpu.memory_space<vmem>>, vector<1x4x128xf32>
    %28 = vector.shape_cast %27 : vector<1x4x128xf32> to vector<4x128xf32>
    %29 = arith.truncf %28 : vector<4x128xf32> to vector<4x128xbf16>
    %cst_19 = arith.constant dense<0.000000e+00> : vector<4x16xf32>
    %30 = tpu.matmul %29, %1, %cst_19 {dimension_numbers = #tpu.dot_dimension_numbers<[1], [0], [0], [1], [0, 0, 1, 1], [], []>} : vector<4x128xbf16>, vector<128x16xbf16>, vector<4x16xf32> -> vector<4x16xf32>
    %31 = vector.broadcast %2 : vector<1x16xf32> to vector<4x16xf32>
    %32 = arith.addf %30, %31 : vector<4x16xf32>
    %c5 = arith.constant 5 : index
    %c0_20 = arith.constant 0 : index
    %c0_21 = arith.constant 0 : index
    %33 = vector.load %arg0[%c5, %c0_20, %c0_21] : memref<16x4x128xf32, #tpu.memory_space<vmem>>, vector<1x4x128xf32>
    %34 = vector.shape_cast %33 : vector<1x4x128xf32> to vector<4x128xf32>
    %35 = arith.truncf %34 : vector<4x128xf32> to vector<4x128xbf16>
    %cst_22 = arith.constant dense<0.000000e+00> : vector<4x16xf32>
    %36 = tpu.matmul %35, %1, %cst_22 {dimension_numbers = #tpu.dot_dimension_numbers<[1], [0], [0], [1], [0, 0, 1, 1], [], []>} : vector<4x128xbf16>, vector<128x16xbf16>, vector<4x16xf32> -> vector<4x16xf32>
    %37 = vector.broadcast %2 : vector<1x16xf32> to vector<4x16xf32>
    %38 = arith.addf %36, %37 : vector<4x16xf32>
    %c6 = arith.constant 6 : index
    %c0_23 = arith.constant 0 : index
    %c0_24 = arith.constant 0 : index
    %39 = vector.load %arg0[%c6, %c0_23, %c0_24] : memref<16x4x128xf32, #tpu.memory_space<vmem>>, vector<1x4x128xf32>
    %40 = vector.shape_cast %39 : vector<1x4x128xf32> to vector<4x128xf32>
    %41 = arith.truncf %40 : vector<4x128xf32> to vector<4x128xbf16>
    %cst_25 = arith.constant dense<0.000000e+00> : vector<4x16xf32>
    %42 = tpu.matmul %41, %1, %cst_25 {dimension_numbers = #tpu.dot_dimension_numbers<[1], [0], [0], [1], [0, 0, 1, 1], [], []>} : vector<4x128xbf16>, vector<128x16xbf16>, vector<4x16xf32> -> vector<4x16xf32>
    %43 = vector.broadcast %2 : vector<1x16xf32> to vector<4x16xf32>
    %44 = arith.addf %42, %43 : vector<4x16xf32>
    %c7 = arith.constant 7 : index
    %c0_26 = arith.constant 0 : index
    %c0_27 = arith.constant 0 : index
    %45 = vector.load %arg0[%c7, %c0_26, %c0_27] : memref<16x4x128xf32, #tpu.memory_space<vmem>>, vector<1x4x128xf32>
    %46 = vector.shape_cast %45 : vector<1x4x128xf32> to vector<4x128xf32>
    %47 = arith.truncf %46 : vector<4x128xf32> to vector<4x128xbf16>
    %cst_28 = arith.constant dense<0.000000e+00> : vector<4x16xf32>
    %48 = tpu.matmul %47, %1, %cst_28 {dimension_numbers = #tpu.dot_dimension_numbers<[1], [0], [0], [1], [0, 0, 1, 1], [], []>} : vector<4x128xbf16>, vector<128x16xbf16>, vector<4x16xf32> -> vector<4x16xf32>
    %49 = vector.broadcast %2 : vector<1x16xf32> to vector<4x16xf32>
    %50 = arith.addf %48, %49 : vector<4x16xf32>
    %c8 = arith.constant 8 : index
    %c0_29 = arith.constant 0 : index
    %c0_30 = arith.constant 0 : index
    %51 = vector.load %arg0[%c8, %c0_29, %c0_30] : memref<16x4x128xf32, #tpu.memory_space<vmem>>, vector<1x4x128xf32>
    %52 = vector.shape_cast %51 : vector<1x4x128xf32> to vector<4x128xf32>
    %53 = arith.truncf %52 : vector<4x128xf32> to vector<4x128xbf16>
    %cst_31 = arith.constant dense<0.000000e+00> : vector<4x16xf32>
    %54 = tpu.matmul %53, %1, %cst_31 {dimension_numbers = #tpu.dot_dimension_numbers<[1], [0], [0], [1], [0, 0, 1, 1], [], []>} : vector<4x128xbf16>, vector<128x16xbf16>, vector<4x16xf32> -> vector<4x16xf32>
    %55 = vector.broadcast %2 : vector<1x16xf32> to vector<4x16xf32>
    %56 = arith.addf %54, %55 : vector<4x16xf32>
    %c9 = arith.constant 9 : index
    %c0_32 = arith.constant 0 : index
    %c0_33 = arith.constant 0 : index
    %57 = vector.load %arg0[%c9, %c0_32, %c0_33] : memref<16x4x128xf32, #tpu.memory_space<vmem>>, vector<1x4x128xf32>
    %58 = vector.shape_cast %57 : vector<1x4x128xf32> to vector<4x128xf32>
    %59 = arith.truncf %58 : vector<4x128xf32> to vector<4x128xbf16>
    %cst_34 = arith.constant dense<0.000000e+00> : vector<4x16xf32>
    %60 = tpu.matmul %59, %1, %cst_34 {dimension_numbers = #tpu.dot_dimension_numbers<[1], [0], [0], [1], [0, 0, 1, 1], [], []>} : vector<4x128xbf16>, vector<128x16xbf16>, vector<4x16xf32> -> vector<4x16xf32>
    %61 = vector.broadcast %2 : vector<1x16xf32> to vector<4x16xf32>
    %62 = arith.addf %60, %61 : vector<4x16xf32>
    %c10 = arith.constant 10 : index
    %c0_35 = arith.constant 0 : index
    %c0_36 = arith.constant 0 : index
    %63 = vector.load %arg0[%c10, %c0_35, %c0_36] : memref<16x4x128xf32, #tpu.memory_space<vmem>>, vector<1x4x128xf32>
    %64 = vector.shape_cast %63 : vector<1x4x128xf32> to vector<4x128xf32>
    %65 = arith.truncf %64 : vector<4x128xf32> to vector<4x128xbf16>
    %cst_37 = arith.constant dense<0.000000e+00> : vector<4x16xf32>
    %66 = tpu.matmul %65, %1, %cst_37 {dimension_numbers = #tpu.dot_dimension_numbers<[1], [0], [0], [1], [0, 0, 1, 1], [], []>} : vector<4x128xbf16>, vector<128x16xbf16>, vector<4x16xf32> -> vector<4x16xf32>
    %67 = vector.broadcast %2 : vector<1x16xf32> to vector<4x16xf32>
    %68 = arith.addf %66, %67 : vector<4x16xf32>
    %c11 = arith.constant 11 : index
    %c0_38 = arith.constant 0 : index
    %c0_39 = arith.constant 0 : index
    %69 = vector.load %arg0[%c11, %c0_38, %c0_39] : memref<16x4x128xf32, #tpu.memory_space<vmem>>, vector<1x4x128xf32>
    %70 = vector.shape_cast %69 : vector<1x4x128xf32> to vector<4x128xf32>
    %71 = arith.truncf %70 : vector<4x128xf32> to vector<4x128xbf16>
    %cst_40 = arith.constant dense<0.000000e+00> : vector<4x16xf32>
    %72 = tpu.matmul %71, %1, %cst_40 {dimension_numbers = #tpu.dot_dimension_numbers<[1], [0], [0], [1], [0, 0, 1, 1], [], []>} : vector<4x128xbf16>, vector<128x16xbf16>, vector<4x16xf32> -> vector<4x16xf32>
    %73 = vector.broadcast %2 : vector<1x16xf32> to vector<4x16xf32>
    %74 = arith.addf %72, %73 : vector<4x16xf32>
    %c12 = arith.constant 12 : index
    %c0_41 = arith.constant 0 : index
    %c0_42 = arith.constant 0 : index
    %75 = vector.load %arg0[%c12, %c0_41, %c0_42] : memref<16x4x128xf32, #tpu.memory_space<vmem>>, vector<1x4x128xf32>
    %76 = vector.shape_cast %75 : vector<1x4x128xf32> to vector<4x128xf32>
    %77 = arith.truncf %76 : vector<4x128xf32> to vector<4x128xbf16>
    %cst_43 = arith.constant dense<0.000000e+00> : vector<4x16xf32>
    %78 = tpu.matmul %77, %1, %cst_43 {dimension_numbers = #tpu.dot_dimension_numbers<[1], [0], [0], [1], [0, 0, 1, 1], [], []>} : vector<4x128xbf16>, vector<128x16xbf16>, vector<4x16xf32> -> vector<4x16xf32>
    %79 = vector.broadcast %2 : vector<1x16xf32> to vector<4x16xf32>
    %80 = arith.addf %78, %79 : vector<4x16xf32>
    %c13 = arith.constant 13 : index
    %c0_44 = arith.constant 0 : index
    %c0_45 = arith.constant 0 : index
    %81 = vector.load %arg0[%c13, %c0_44, %c0_45] : memref<16x4x128xf32, #tpu.memory_space<vmem>>, vector<1x4x128xf32>
    %82 = vector.shape_cast %81 : vector<1x4x128xf32> to vector<4x128xf32>
    %83 = arith.truncf %82 : vector<4x128xf32> to vector<4x128xbf16>
    %cst_46 = arith.constant dense<0.000000e+00> : vector<4x16xf32>
    %84 = tpu.matmul %83, %1, %cst_46 {dimension_numbers = #tpu.dot_dimension_numbers<[1], [0], [0], [1], [0, 0, 1, 1], [], []>} : vector<4x128xbf16>, vector<128x16xbf16>, vector<4x16xf32> -> vector<4x16xf32>
    %85 = vector.broadcast %2 : vector<1x16xf32> to vector<4x16xf32>
    %86 = arith.addf %84, %85 : vector<4x16xf32>
    %c14 = arith.constant 14 : index
    %c0_47 = arith.constant 0 : index
    %c0_48 = arith.constant 0 : index
    %87 = vector.load %arg0[%c14, %c0_47, %c0_48] : memref<16x4x128xf32, #tpu.memory_space<vmem>>, vector<1x4x128xf32>
    %88 = vector.shape_cast %87 : vector<1x4x128xf32> to vector<4x128xf32>
    %89 = arith.truncf %88 : vector<4x128xf32> to vector<4x128xbf16>
    %cst_49 = arith.constant dense<0.000000e+00> : vector<4x16xf32>
    %90 = tpu.matmul %89, %1, %cst_49 {dimension_numbers = #tpu.dot_dimension_numbers<[1], [0], [0], [1], [0, 0, 1, 1], [], []>} : vector<4x128xbf16>, vector<128x16xbf16>, vector<4x16xf32> -> vector<4x16xf32>
    %91 = vector.broadcast %2 : vector<1x16xf32> to vector<4x16xf32>
    %92 = arith.addf %90, %91 : vector<4x16xf32>
    %c15 = arith.constant 15 : index
    %c0_50 = arith.constant 0 : index
    %c0_51 = arith.constant 0 : index
    %93 = vector.load %arg0[%c15, %c0_50, %c0_51] : memref<16x4x128xf32, #tpu.memory_space<vmem>>, vector<1x4x128xf32>
    %94 = vector.shape_cast %93 : vector<1x4x128xf32> to vector<4x128xf32>
    %95 = arith.truncf %94 : vector<4x128xf32> to vector<4x128xbf16>
    %cst_52 = arith.constant dense<0.000000e+00> : vector<4x16xf32>
    %96 = tpu.matmul %95, %1, %cst_52 {dimension_numbers = #tpu.dot_dimension_numbers<[1], [0], [0], [1], [0, 0, 1, 1], [], []>} : vector<4x128xbf16>, vector<128x16xbf16>, vector<4x16xf32> -> vector<4x16xf32>
    %97 = vector.broadcast %2 : vector<1x16xf32> to vector<4x16xf32>
    %98 = arith.addf %96, %97 : vector<4x16xf32>
    %c0_53 = arith.constant 0 : index
    %c0_54 = arith.constant 0 : index
    %99 = vector.load %arg5[%c0_53, %c0_54] : memref<1x16xf32, #tpu.memory_space<vmem>>, vector<1x16xf32>
    %c0_55 = arith.constant 0 : index
    %c0_56 = arith.constant 0 : index
    %100 = vector.load %arg6[%c0_55, %c0_56] : memref<1x16xf32, #tpu.memory_space<vmem>>, vector<1x16xf32>
    %cst_57 = arith.constant dense<0.000000e+00> : vector<16xf32>
    %101 = vector.multi_reduction <add>, %8, %cst_57 [0] : vector<4x16xf32> to vector<16xf32>
    %102 = vector.shape_cast %101 : vector<16xf32> to vector<1x16xf32>
    %cst_58 = arith.constant 0.000000e+00 : f32
    %103 = vector.broadcast %cst_58 : f32 to vector<1x16xf32>
    %104 = arith.addf %103, %102 : vector<1x16xf32>
    %cst_59 = arith.constant dense<0.000000e+00> : vector<16xf32>
    %105 = vector.multi_reduction <add>, %14, %cst_59 [0] : vector<4x16xf32> to vector<16xf32>
    %106 = vector.shape_cast %105 : vector<16xf32> to vector<1x16xf32>
    %107 = arith.addf %104, %106 : vector<1x16xf32>
    %cst_60 = arith.constant dense<0.000000e+00> : vector<16xf32>
    %108 = vector.multi_reduction <add>, %20, %cst_60 [0] : vector<4x16xf32> to vector<16xf32>
    %109 = vector.shape_cast %108 : vector<16xf32> to vector<1x16xf32>
    %110 = arith.addf %107, %109 : vector<1x16xf32>
    %cst_61 = arith.constant dense<0.000000e+00> : vector<16xf32>
    %111 = vector.multi_reduction <add>, %26, %cst_61 [0] : vector<4x16xf32> to vector<16xf32>
    %112 = vector.shape_cast %111 : vector<16xf32> to vector<1x16xf32>
    %113 = arith.addf %110, %112 : vector<1x16xf32>
    %cst_62 = arith.constant dense<0.000000e+00> : vector<16xf32>
    %114 = vector.multi_reduction <add>, %32, %cst_62 [0] : vector<4x16xf32> to vector<16xf32>
    %115 = vector.shape_cast %114 : vector<16xf32> to vector<1x16xf32>
    %116 = arith.addf %113, %115 : vector<1x16xf32>
    %cst_63 = arith.constant dense<0.000000e+00> : vector<16xf32>
    %117 = vector.multi_reduction <add>, %38, %cst_63 [0] : vector<4x16xf32> to vector<16xf32>
    %118 = vector.shape_cast %117 : vector<16xf32> to vector<1x16xf32>
    %119 = arith.addf %116, %118 : vector<1x16xf32>
    %cst_64 = arith.constant dense<0.000000e+00> : vector<16xf32>
    %120 = vector.multi_reduction <add>, %44, %cst_64 [0] : vector<4x16xf32> to vector<16xf32>
    %121 = vector.shape_cast %120 : vector<16xf32> to vector<1x16xf32>
    %122 = arith.addf %119, %121 : vector<1x16xf32>
    %cst_65 = arith.constant dense<0.000000e+00> : vector<16xf32>
    %123 = vector.multi_reduction <add>, %50, %cst_65 [0] : vector<4x16xf32> to vector<16xf32>
    %124 = vector.shape_cast %123 : vector<16xf32> to vector<1x16xf32>
    %125 = arith.addf %122, %124 : vector<1x16xf32>
    %cst_66 = arith.constant dense<0.000000e+00> : vector<16xf32>
    %126 = vector.multi_reduction <add>, %56, %cst_66 [0] : vector<4x16xf32> to vector<16xf32>
    %127 = vector.shape_cast %126 : vector<16xf32> to vector<1x16xf32>
    %128 = arith.addf %125, %127 : vector<1x16xf32>
    %cst_67 = arith.constant dense<0.000000e+00> : vector<16xf32>
    %129 = vector.multi_reduction <add>, %62, %cst_67 [0] : vector<4x16xf32> to vector<16xf32>
    %130 = vector.shape_cast %129 : vector<16xf32> to vector<1x16xf32>
    %131 = arith.addf %128, %130 : vector<1x16xf32>
    %cst_68 = arith.constant dense<0.000000e+00> : vector<16xf32>
    %132 = vector.multi_reduction <add>, %68, %cst_68 [0] : vector<4x16xf32> to vector<16xf32>
    %133 = vector.shape_cast %132 : vector<16xf32> to vector<1x16xf32>
    %134 = arith.addf %131, %133 : vector<1x16xf32>
    %cst_69 = arith.constant dense<0.000000e+00> : vector<16xf32>
    %135 = vector.multi_reduction <add>, %74, %cst_69 [0] : vector<4x16xf32> to vector<16xf32>
    %136 = vector.shape_cast %135 : vector<16xf32> to vector<1x16xf32>
    %137 = arith.addf %134, %136 : vector<1x16xf32>
    %cst_70 = arith.constant dense<0.000000e+00> : vector<16xf32>
    %138 = vector.multi_reduction <add>, %80, %cst_70 [0] : vector<4x16xf32> to vector<16xf32>
    %139 = vector.shape_cast %138 : vector<16xf32> to vector<1x16xf32>
    %140 = arith.addf %137, %139 : vector<1x16xf32>
    %cst_71 = arith.constant dense<0.000000e+00> : vector<16xf32>
    %141 = vector.multi_reduction <add>, %86, %cst_71 [0] : vector<4x16xf32> to vector<16xf32>
    %142 = vector.shape_cast %141 : vector<16xf32> to vector<1x16xf32>
    %143 = arith.addf %140, %142 : vector<1x16xf32>
    %cst_72 = arith.constant dense<0.000000e+00> : vector<16xf32>
    %144 = vector.multi_reduction <add>, %92, %cst_72 [0] : vector<4x16xf32> to vector<16xf32>
    %145 = vector.shape_cast %144 : vector<16xf32> to vector<1x16xf32>
    %146 = arith.addf %143, %145 : vector<1x16xf32>
    %cst_73 = arith.constant dense<0.000000e+00> : vector<16xf32>
    %147 = vector.multi_reduction <add>, %98, %cst_73 [0] : vector<4x16xf32> to vector<16xf32>
    %148 = vector.shape_cast %147 : vector<16xf32> to vector<1x16xf32>
    %149 = arith.addf %146, %148 : vector<1x16xf32>
    %cst_74 = arith.constant 6.400000e+01 : f32
    %150 = vector.broadcast %cst_74 : f32 to vector<1x16xf32>
    %151 = arith.divf %149, %150 : vector<1x16xf32>
    %152 = vector.broadcast %151 : vector<1x16xf32> to vector<4x16xf32>
    %153 = arith.subf %8, %152 : vector<4x16xf32>
    %154 = arith.mulf %153, %153 : vector<4x16xf32>
    %cst_75 = arith.constant dense<0.000000e+00> : vector<16xf32>
    %155 = vector.multi_reduction <add>, %154, %cst_75 [0] : vector<4x16xf32> to vector<16xf32>
    %156 = vector.shape_cast %155 : vector<16xf32> to vector<1x16xf32>
    %cst_76 = arith.constant 0.000000e+00 : f32
    %157 = vector.broadcast %cst_76 : f32 to vector<1x16xf32>
    %158 = arith.addf %157, %156 : vector<1x16xf32>
    %159 = vector.broadcast %151 : vector<1x16xf32> to vector<4x16xf32>
    %160 = arith.subf %14, %159 : vector<4x16xf32>
    %161 = arith.mulf %160, %160 : vector<4x16xf32>
    %cst_77 = arith.constant dense<0.000000e+00> : vector<16xf32>
    %162 = vector.multi_reduction <add>, %161, %cst_77 [0] : vector<4x16xf32> to vector<16xf32>
    %163 = vector.shape_cast %162 : vector<16xf32> to vector<1x16xf32>
    %164 = arith.addf %158, %163 : vector<1x16xf32>
    %165 = vector.broadcast %151 : vector<1x16xf32> to vector<4x16xf32>
    %166 = arith.subf %20, %165 : vector<4x16xf32>
    %167 = arith.mulf %166, %166 : vector<4x16xf32>
    %cst_78 = arith.constant dense<0.000000e+00> : vector<16xf32>
    %168 = vector.multi_reduction <add>, %167, %cst_78 [0] : vector<4x16xf32> to vector<16xf32>
    %169 = vector.shape_cast %168 : vector<16xf32> to vector<1x16xf32>
    %170 = arith.addf %164, %169 : vector<1x16xf32>
    %171 = vector.broadcast %151 : vector<1x16xf32> to vector<4x16xf32>
    %172 = arith.subf %26, %171 : vector<4x16xf32>
    %173 = arith.mulf %172, %172 : vector<4x16xf32>
    %cst_79 = arith.constant dense<0.000000e+00> : vector<16xf32>
    %174 = vector.multi_reduction <add>, %173, %cst_79 [0] : vector<4x16xf32> to vector<16xf32>
    %175 = vector.shape_cast %174 : vector<16xf32> to vector<1x16xf32>
    %176 = arith.addf %170, %175 : vector<1x16xf32>
    %177 = vector.broadcast %151 : vector<1x16xf32> to vector<4x16xf32>
    %178 = arith.subf %32, %177 : vector<4x16xf32>
    %179 = arith.mulf %178, %178 : vector<4x16xf32>
    %cst_80 = arith.constant dense<0.000000e+00> : vector<16xf32>
    %180 = vector.multi_reduction <add>, %179, %cst_80 [0] : vector<4x16xf32> to vector<16xf32>
    %181 = vector.shape_cast %180 : vector<16xf32> to vector<1x16xf32>
    %182 = arith.addf %176, %181 : vector<1x16xf32>
    %183 = vector.broadcast %151 : vector<1x16xf32> to vector<4x16xf32>
    %184 = arith.subf %38, %183 : vector<4x16xf32>
    %185 = arith.mulf %184, %184 : vector<4x16xf32>
    %cst_81 = arith.constant dense<0.000000e+00> : vector<16xf32>
    %186 = vector.multi_reduction <add>, %185, %cst_81 [0] : vector<4x16xf32> to vector<16xf32>
    %187 = vector.shape_cast %186 : vector<16xf32> to vector<1x16xf32>
    %188 = arith.addf %182, %187 : vector<1x16xf32>
    %189 = vector.broadcast %151 : vector<1x16xf32> to vector<4x16xf32>
    %190 = arith.subf %44, %189 : vector<4x16xf32>
    %191 = arith.mulf %190, %190 : vector<4x16xf32>
    %cst_82 = arith.constant dense<0.000000e+00> : vector<16xf32>
    %192 = vector.multi_reduction <add>, %191, %cst_82 [0] : vector<4x16xf32> to vector<16xf32>
    %193 = vector.shape_cast %192 : vector<16xf32> to vector<1x16xf32>
    %194 = arith.addf %188, %193 : vector<1x16xf32>
    %195 = vector.broadcast %151 : vector<1x16xf32> to vector<4x16xf32>
    %196 = arith.subf %50, %195 : vector<4x16xf32>
    %197 = arith.mulf %196, %196 : vector<4x16xf32>
    %cst_83 = arith.constant dense<0.000000e+00> : vector<16xf32>
    %198 = vector.multi_reduction <add>, %197, %cst_83 [0] : vector<4x16xf32> to vector<16xf32>
    %199 = vector.shape_cast %198 : vector<16xf32> to vector<1x16xf32>
    %200 = arith.addf %194, %199 : vector<1x16xf32>
    %201 = vector.broadcast %151 : vector<1x16xf32> to vector<4x16xf32>
    %202 = arith.subf %56, %201 : vector<4x16xf32>
    %203 = arith.mulf %202, %202 : vector<4x16xf32>
    %cst_84 = arith.constant dense<0.000000e+00> : vector<16xf32>
    %204 = vector.multi_reduction <add>, %203, %cst_84 [0] : vector<4x16xf32> to vector<16xf32>
    %205 = vector.shape_cast %204 : vector<16xf32> to vector<1x16xf32>
    %206 = arith.addf %200, %205 : vector<1x16xf32>
    %207 = vector.broadcast %151 : vector<1x16xf32> to vector<4x16xf32>
    %208 = arith.subf %62, %207 : vector<4x16xf32>
    %209 = arith.mulf %208, %208 : vector<4x16xf32>
    %cst_85 = arith.constant dense<0.000000e+00> : vector<16xf32>
    %210 = vector.multi_reduction <add>, %209, %cst_85 [0] : vector<4x16xf32> to vector<16xf32>
    %211 = vector.shape_cast %210 : vector<16xf32> to vector<1x16xf32>
    %212 = arith.addf %206, %211 : vector<1x16xf32>
    %213 = vector.broadcast %151 : vector<1x16xf32> to vector<4x16xf32>
    %214 = arith.subf %68, %213 : vector<4x16xf32>
    %215 = arith.mulf %214, %214 : vector<4x16xf32>
    %cst_86 = arith.constant dense<0.000000e+00> : vector<16xf32>
    %216 = vector.multi_reduction <add>, %215, %cst_86 [0] : vector<4x16xf32> to vector<16xf32>
    %217 = vector.shape_cast %216 : vector<16xf32> to vector<1x16xf32>
    %218 = arith.addf %212, %217 : vector<1x16xf32>
    %219 = vector.broadcast %151 : vector<1x16xf32> to vector<4x16xf32>
    %220 = arith.subf %74, %219 : vector<4x16xf32>
    %221 = arith.mulf %220, %220 : vector<4x16xf32>
    %cst_87 = arith.constant dense<0.000000e+00> : vector<16xf32>
    %222 = vector.multi_reduction <add>, %221, %cst_87 [0] : vector<4x16xf32> to vector<16xf32>
    %223 = vector.shape_cast %222 : vector<16xf32> to vector<1x16xf32>
    %224 = arith.addf %218, %223 : vector<1x16xf32>
    %225 = vector.broadcast %151 : vector<1x16xf32> to vector<4x16xf32>
    %226 = arith.subf %80, %225 : vector<4x16xf32>
    %227 = arith.mulf %226, %226 : vector<4x16xf32>
    %cst_88 = arith.constant dense<0.000000e+00> : vector<16xf32>
    %228 = vector.multi_reduction <add>, %227, %cst_88 [0] : vector<4x16xf32> to vector<16xf32>
    %229 = vector.shape_cast %228 : vector<16xf32> to vector<1x16xf32>
    %230 = arith.addf %224, %229 : vector<1x16xf32>
    %231 = vector.broadcast %151 : vector<1x16xf32> to vector<4x16xf32>
    %232 = arith.subf %86, %231 : vector<4x16xf32>
    %233 = arith.mulf %232, %232 : vector<4x16xf32>
    %cst_89 = arith.constant dense<0.000000e+00> : vector<16xf32>
    %234 = vector.multi_reduction <add>, %233, %cst_89 [0] : vector<4x16xf32> to vector<16xf32>
    %235 = vector.shape_cast %234 : vector<16xf32> to vector<1x16xf32>
    %236 = arith.addf %230, %235 : vector<1x16xf32>
    %237 = vector.broadcast %151 : vector<1x16xf32> to vector<4x16xf32>
    %238 = arith.subf %92, %237 : vector<4x16xf32>
    %239 = arith.mulf %238, %238 : vector<4x16xf32>
    %cst_90 = arith.constant dense<0.000000e+00> : vector<16xf32>
    %240 = vector.multi_reduction <add>, %239, %cst_90 [0] : vector<4x16xf32> to vector<16xf32>
    %241 = vector.shape_cast %240 : vector<16xf32> to vector<1x16xf32>
    %242 = arith.addf %236, %241 : vector<1x16xf32>
    %243 = vector.broadcast %151 : vector<1x16xf32> to vector<4x16xf32>
    %244 = arith.subf %98, %243 : vector<4x16xf32>
    %245 = arith.mulf %244, %244 : vector<4x16xf32>
    %cst_91 = arith.constant dense<0.000000e+00> : vector<16xf32>
    %246 = vector.multi_reduction <add>, %245, %cst_91 [0] : vector<4x16xf32> to vector<16xf32>
    %247 = vector.shape_cast %246 : vector<16xf32> to vector<1x16xf32>
    %248 = arith.addf %242, %247 : vector<1x16xf32>
    %cst_92 = arith.constant 6.400000e+01 : f32
    %249 = vector.broadcast %cst_92 : f32 to vector<1x16xf32>
    %250 = arith.divf %248, %249 : vector<1x16xf32>
    %cst_93 = arith.constant 9.99999974E-6 : f32
    %251 = vector.broadcast %cst_93 : f32 to vector<1x16xf32>
    %252 = arith.addf %250, %251 : vector<1x16xf32>
    %253 = math.rsqrt %252 : vector<1x16xf32>
    %254 = arith.mulf %99, %253 : vector<1x16xf32>
    %255 = arith.mulf %151, %254 : vector<1x16xf32>
    %256 = arith.subf %100, %255 : vector<1x16xf32>
    %257 = vector.broadcast %254 : vector<1x16xf32> to vector<4x16xf32>
    %258 = arith.mulf %8, %257 : vector<4x16xf32>
    %259 = vector.broadcast %256 : vector<1x16xf32> to vector<4x16xf32>
    %260 = arith.addf %258, %259 : vector<4x16xf32>
    %cst_94 = arith.constant 0.000000e+00 : f32
    %261 = vector.broadcast %cst_94 : f32 to vector<4x16xf32>
    %262 = arith.cmpf ogt, %260, %261 : vector<4x16xf32>
    %cst_95 = arith.constant 2.000000e-01 : f32
    %263 = vector.broadcast %cst_95 : f32 to vector<4x16xf32>
    %264 = arith.mulf %263, %260 : vector<4x16xf32>
    %265 = arith.select %262, %260, %264 : vector<4x16xi1>, vector<4x16xf32>
    %266 = vector.broadcast %254 : vector<1x16xf32> to vector<4x16xf32>
    %267 = arith.mulf %14, %266 : vector<4x16xf32>
    %268 = vector.broadcast %256 : vector<1x16xf32> to vector<4x16xf32>
    %269 = arith.addf %267, %268 : vector<4x16xf32>
    %cst_96 = arith.constant 0.000000e+00 : f32
    %270 = vector.broadcast %cst_96 : f32 to vector<4x16xf32>
    %271 = arith.cmpf ogt, %269, %270 : vector<4x16xf32>
    %cst_97 = arith.constant 2.000000e-01 : f32
    %272 = vector.broadcast %cst_97 : f32 to vector<4x16xf32>
    %273 = arith.mulf %272, %269 : vector<4x16xf32>
    %274 = arith.select %271, %269, %273 : vector<4x16xi1>, vector<4x16xf32>
    %275 = vector.broadcast %254 : vector<1x16xf32> to vector<4x16xf32>
    %276 = arith.mulf %20, %275 : vector<4x16xf32>
    %277 = vector.broadcast %256 : vector<1x16xf32> to vector<4x16xf32>
    %278 = arith.addf %276, %277 : vector<4x16xf32>
    %cst_98 = arith.constant 0.000000e+00 : f32
    %279 = vector.broadcast %cst_98 : f32 to vector<4x16xf32>
    %280 = arith.cmpf ogt, %278, %279 : vector<4x16xf32>
    %cst_99 = arith.constant 2.000000e-01 : f32
    %281 = vector.broadcast %cst_99 : f32 to vector<4x16xf32>
    %282 = arith.mulf %281, %278 : vector<4x16xf32>
    %283 = arith.select %280, %278, %282 : vector<4x16xi1>, vector<4x16xf32>
    %284 = vector.broadcast %254 : vector<1x16xf32> to vector<4x16xf32>
    %285 = arith.mulf %26, %284 : vector<4x16xf32>
    %286 = vector.broadcast %256 : vector<1x16xf32> to vector<4x16xf32>
    %287 = arith.addf %285, %286 : vector<4x16xf32>
    %cst_100 = arith.constant 0.000000e+00 : f32
    %288 = vector.broadcast %cst_100 : f32 to vector<4x16xf32>
    %289 = arith.cmpf ogt, %287, %288 : vector<4x16xf32>
    %cst_101 = arith.constant 2.000000e-01 : f32
    %290 = vector.broadcast %cst_101 : f32 to vector<4x16xf32>
    %291 = arith.mulf %290, %287 : vector<4x16xf32>
    %292 = arith.select %289, %287, %291 : vector<4x16xi1>, vector<4x16xf32>
    %293 = vector.broadcast %254 : vector<1x16xf32> to vector<4x16xf32>
    %294 = arith.mulf %32, %293 : vector<4x16xf32>
    %295 = vector.broadcast %256 : vector<1x16xf32> to vector<4x16xf32>
    %296 = arith.addf %294, %295 : vector<4x16xf32>
    %cst_102 = arith.constant 0.000000e+00 : f32
    %297 = vector.broadcast %cst_102 : f32 to vector<4x16xf32>
    %298 = arith.cmpf ogt, %296, %297 : vector<4x16xf32>
    %cst_103 = arith.constant 2.000000e-01 : f32
    %299 = vector.broadcast %cst_103 : f32 to vector<4x16xf32>
    %300 = arith.mulf %299, %296 : vector<4x16xf32>
    %301 = arith.select %298, %296, %300 : vector<4x16xi1>, vector<4x16xf32>
    %302 = vector.broadcast %254 : vector<1x16xf32> to vector<4x16xf32>
    %303 = arith.mulf %38, %302 : vector<4x16xf32>
    %304 = vector.broadcast %256 : vector<1x16xf32> to vector<4x16xf32>
    %305 = arith.addf %303, %304 : vector<4x16xf32>
    %cst_104 = arith.constant 0.000000e+00 : f32
    %306 = vector.broadcast %cst_104 : f32 to vector<4x16xf32>
    %307 = arith.cmpf ogt, %305, %306 : vector<4x16xf32>
    %cst_105 = arith.constant 2.000000e-01 : f32
    %308 = vector.broadcast %cst_105 : f32 to vector<4x16xf32>
    %309 = arith.mulf %308, %305 : vector<4x16xf32>
    %310 = arith.select %307, %305, %309 : vector<4x16xi1>, vector<4x16xf32>
    %311 = vector.broadcast %254 : vector<1x16xf32> to vector<4x16xf32>
    %312 = arith.mulf %44, %311 : vector<4x16xf32>
    %313 = vector.broadcast %256 : vector<1x16xf32> to vector<4x16xf32>
    %314 = arith.addf %312, %313 : vector<4x16xf32>
    %cst_106 = arith.constant 0.000000e+00 : f32
    %315 = vector.broadcast %cst_106 : f32 to vector<4x16xf32>
    %316 = arith.cmpf ogt, %314, %315 : vector<4x16xf32>
    %cst_107 = arith.constant 2.000000e-01 : f32
    %317 = vector.broadcast %cst_107 : f32 to vector<4x16xf32>
    %318 = arith.mulf %317, %314 : vector<4x16xf32>
    %319 = arith.select %316, %314, %318 : vector<4x16xi1>, vector<4x16xf32>
    %320 = vector.broadcast %254 : vector<1x16xf32> to vector<4x16xf32>
    %321 = arith.mulf %50, %320 : vector<4x16xf32>
    %322 = vector.broadcast %256 : vector<1x16xf32> to vector<4x16xf32>
    %323 = arith.addf %321, %322 : vector<4x16xf32>
    %cst_108 = arith.constant 0.000000e+00 : f32
    %324 = vector.broadcast %cst_108 : f32 to vector<4x16xf32>
    %325 = arith.cmpf ogt, %323, %324 : vector<4x16xf32>
    %cst_109 = arith.constant 2.000000e-01 : f32
    %326 = vector.broadcast %cst_109 : f32 to vector<4x16xf32>
    %327 = arith.mulf %326, %323 : vector<4x16xf32>
    %328 = arith.select %325, %323, %327 : vector<4x16xi1>, vector<4x16xf32>
    %329 = vector.broadcast %254 : vector<1x16xf32> to vector<4x16xf32>
    %330 = arith.mulf %56, %329 : vector<4x16xf32>
    %331 = vector.broadcast %256 : vector<1x16xf32> to vector<4x16xf32>
    %332 = arith.addf %330, %331 : vector<4x16xf32>
    %cst_110 = arith.constant 0.000000e+00 : f32
    %333 = vector.broadcast %cst_110 : f32 to vector<4x16xf32>
    %334 = arith.cmpf ogt, %332, %333 : vector<4x16xf32>
    %cst_111 = arith.constant 2.000000e-01 : f32
    %335 = vector.broadcast %cst_111 : f32 to vector<4x16xf32>
    %336 = arith.mulf %335, %332 : vector<4x16xf32>
    %337 = arith.select %334, %332, %336 : vector<4x16xi1>, vector<4x16xf32>
    %338 = vector.broadcast %254 : vector<1x16xf32> to vector<4x16xf32>
    %339 = arith.mulf %62, %338 : vector<4x16xf32>
    %340 = vector.broadcast %256 : vector<1x16xf32> to vector<4x16xf32>
    %341 = arith.addf %339, %340 : vector<4x16xf32>
    %cst_112 = arith.constant 0.000000e+00 : f32
    %342 = vector.broadcast %cst_112 : f32 to vector<4x16xf32>
    %343 = arith.cmpf ogt, %341, %342 : vector<4x16xf32>
    %cst_113 = arith.constant 2.000000e-01 : f32
    %344 = vector.broadcast %cst_113 : f32 to vector<4x16xf32>
    %345 = arith.mulf %344, %341 : vector<4x16xf32>
    %346 = arith.select %343, %341, %345 : vector<4x16xi1>, vector<4x16xf32>
    %347 = vector.broadcast %254 : vector<1x16xf32> to vector<4x16xf32>
    %348 = arith.mulf %68, %347 : vector<4x16xf32>
    %349 = vector.broadcast %256 : vector<1x16xf32> to vector<4x16xf32>
    %350 = arith.addf %348, %349 : vector<4x16xf32>
    %cst_114 = arith.constant 0.000000e+00 : f32
    %351 = vector.broadcast %cst_114 : f32 to vector<4x16xf32>
    %352 = arith.cmpf ogt, %350, %351 : vector<4x16xf32>
    %cst_115 = arith.constant 2.000000e-01 : f32
    %353 = vector.broadcast %cst_115 : f32 to vector<4x16xf32>
    %354 = arith.mulf %353, %350 : vector<4x16xf32>
    %355 = arith.select %352, %350, %354 : vector<4x16xi1>, vector<4x16xf32>
    %356 = vector.broadcast %254 : vector<1x16xf32> to vector<4x16xf32>
    %357 = arith.mulf %74, %356 : vector<4x16xf32>
    %358 = vector.broadcast %256 : vector<1x16xf32> to vector<4x16xf32>
    %359 = arith.addf %357, %358 : vector<4x16xf32>
    %cst_116 = arith.constant 0.000000e+00 : f32
    %360 = vector.broadcast %cst_116 : f32 to vector<4x16xf32>
    %361 = arith.cmpf ogt, %359, %360 : vector<4x16xf32>
    %cst_117 = arith.constant 2.000000e-01 : f32
    %362 = vector.broadcast %cst_117 : f32 to vector<4x16xf32>
    %363 = arith.mulf %362, %359 : vector<4x16xf32>
    %364 = arith.select %361, %359, %363 : vector<4x16xi1>, vector<4x16xf32>
    %365 = vector.broadcast %254 : vector<1x16xf32> to vector<4x16xf32>
    %366 = arith.mulf %80, %365 : vector<4x16xf32>
    %367 = vector.broadcast %256 : vector<1x16xf32> to vector<4x16xf32>
    %368 = arith.addf %366, %367 : vector<4x16xf32>
    %cst_118 = arith.constant 0.000000e+00 : f32
    %369 = vector.broadcast %cst_118 : f32 to vector<4x16xf32>
    %370 = arith.cmpf ogt, %368, %369 : vector<4x16xf32>
    %cst_119 = arith.constant 2.000000e-01 : f32
    %371 = vector.broadcast %cst_119 : f32 to vector<4x16xf32>
    %372 = arith.mulf %371, %368 : vector<4x16xf32>
    %373 = arith.select %370, %368, %372 : vector<4x16xi1>, vector<4x16xf32>
    %374 = vector.broadcast %254 : vector<1x16xf32> to vector<4x16xf32>
    %375 = arith.mulf %86, %374 : vector<4x16xf32>
    %376 = vector.broadcast %256 : vector<1x16xf32> to vector<4x16xf32>
    %377 = arith.addf %375, %376 : vector<4x16xf32>
    %cst_120 = arith.constant 0.000000e+00 : f32
    %378 = vector.broadcast %cst_120 : f32 to vector<4x16xf32>
    %379 = arith.cmpf ogt, %377, %378 : vector<4x16xf32>
    %cst_121 = arith.constant 2.000000e-01 : f32
    %380 = vector.broadcast %cst_121 : f32 to vector<4x16xf32>
    %381 = arith.mulf %380, %377 : vector<4x16xf32>
    %382 = arith.select %379, %377, %381 : vector<4x16xi1>, vector<4x16xf32>
    %383 = vector.broadcast %254 : vector<1x16xf32> to vector<4x16xf32>
    %384 = arith.mulf %92, %383 : vector<4x16xf32>
    %385 = vector.broadcast %256 : vector<1x16xf32> to vector<4x16xf32>
    %386 = arith.addf %384, %385 : vector<4x16xf32>
    %cst_122 = arith.constant 0.000000e+00 : f32
    %387 = vector.broadcast %cst_122 : f32 to vector<4x16xf32>
    %388 = arith.cmpf ogt, %386, %387 : vector<4x16xf32>
    %cst_123 = arith.constant 2.000000e-01 : f32
    %389 = vector.broadcast %cst_123 : f32 to vector<4x16xf32>
    %390 = arith.mulf %389, %386 : vector<4x16xf32>
    %391 = arith.select %388, %386, %390 : vector<4x16xi1>, vector<4x16xf32>
    %392 = vector.broadcast %254 : vector<1x16xf32> to vector<4x16xf32>
    %393 = arith.mulf %98, %392 : vector<4x16xf32>
    %394 = vector.broadcast %256 : vector<1x16xf32> to vector<4x16xf32>
    %395 = arith.addf %393, %394 : vector<4x16xf32>
    %cst_124 = arith.constant 0.000000e+00 : f32
    %396 = vector.broadcast %cst_124 : f32 to vector<4x16xf32>
    %397 = arith.cmpf ogt, %395, %396 : vector<4x16xf32>
    %cst_125 = arith.constant 2.000000e-01 : f32
    %398 = vector.broadcast %cst_125 : f32 to vector<4x16xf32>
    %399 = arith.mulf %398, %395 : vector<4x16xf32>
    %400 = arith.select %397, %395, %399 : vector<4x16xi1>, vector<4x16xf32>
    %c0_126 = arith.constant 0 : index
    %c0_127 = arith.constant 0 : index
    %c0_128 = arith.constant 0 : index
    %401 = vector.load %arg7[%c0_126, %c0_127, %c0_128] : memref<6x16x16xbf16, #tpu.memory_space<vmem>>, vector<1x16x16xbf16>
    %402 = vector.shape_cast %401 : vector<1x16x16xbf16> to vector<16x16xbf16>
    %c1_129 = arith.constant 1 : index
    %c0_130 = arith.constant 0 : index
    %c0_131 = arith.constant 0 : index
    %403 = vector.load %arg7[%c1_129, %c0_130, %c0_131] : memref<6x16x16xbf16, #tpu.memory_space<vmem>>, vector<1x16x16xbf16>
    %404 = vector.shape_cast %403 : vector<1x16x16xbf16> to vector<16x16xbf16>
    %c0_132 = arith.constant 0 : index
    %c0_133 = arith.constant 0 : index
    %c0_134 = arith.constant 0 : index
    %405 = vector.load %arg8[%c0_132, %c0_133, %c0_134] : memref<3x1x16xf32, #tpu.memory_space<vmem>>, vector<1x1x16xf32>
    %406 = vector.shape_cast %405 : vector<1x1x16xf32> to vector<1x16xf32>
    %407 = arith.truncf %265 : vector<4x16xf32> to vector<4x16xbf16>
    %cst_135 = arith.constant dense<0.000000e+00> : vector<4x16xf32>
    %408 = tpu.matmul %407, %402, %cst_135 {dimension_numbers = #tpu.dot_dimension_numbers<[1], [0], [0], [1], [0, 0, 1, 1], [], []>} : vector<4x16xbf16>, vector<16x16xbf16>, vector<4x16xf32> -> vector<4x16xf32>
    %409 = arith.truncf %274 : vector<4x16xf32> to vector<4x16xbf16>
    %cst_136 = arith.constant dense<0.000000e+00> : vector<4x16xf32>
    %410 = tpu.matmul %409, %404, %cst_136 {dimension_numbers = #tpu.dot_dimension_numbers<[1], [0], [0], [1], [0, 0, 1, 1], [], []>} : vector<4x16xbf16>, vector<16x16xbf16>, vector<4x16xf32> -> vector<4x16xf32>
    %411 = arith.addf %408, %410 : vector<4x16xf32>
    %412 = vector.broadcast %406 : vector<1x16xf32> to vector<4x16xf32>
    %413 = arith.addf %411, %412 : vector<4x16xf32>
    %414 = arith.truncf %283 : vector<4x16xf32> to vector<4x16xbf16>
    %cst_137 = arith.constant dense<0.000000e+00> : vector<4x16xf32>
    %415 = tpu.matmul %414, %402, %cst_137 {dimension_numbers = #tpu.dot_dimension_numbers<[1], [0], [0], [1], [0, 0, 1, 1], [], []>} : vector<4x16xbf16>, vector<16x16xbf16>, vector<4x16xf32> -> vector<4x16xf32>
    %416 = arith.truncf %292 : vector<4x16xf32> to vector<4x16xbf16>
    %cst_138 = arith.constant dense<0.000000e+00> : vector<4x16xf32>
    %417 = tpu.matmul %416, %404, %cst_138 {dimension_numbers = #tpu.dot_dimension_numbers<[1], [0], [0], [1], [0, 0, 1, 1], [], []>} : vector<4x16xbf16>, vector<16x16xbf16>, vector<4x16xf32> -> vector<4x16xf32>
    %418 = arith.addf %415, %417 : vector<4x16xf32>
    %419 = vector.broadcast %406 : vector<1x16xf32> to vector<4x16xf32>
    %420 = arith.addf %418, %419 : vector<4x16xf32>
    %421 = arith.truncf %301 : vector<4x16xf32> to vector<4x16xbf16>
    %cst_139 = arith.constant dense<0.000000e+00> : vector<4x16xf32>
    %422 = tpu.matmul %421, %402, %cst_139 {dimension_numbers = #tpu.dot_dimension_numbers<[1], [0], [0], [1], [0, 0, 1, 1], [], []>} : vector<4x16xbf16>, vector<16x16xbf16>, vector<4x16xf32> -> vector<4x16xf32>
    %423 = arith.truncf %310 : vector<4x16xf32> to vector<4x16xbf16>
    %cst_140 = arith.constant dense<0.000000e+00> : vector<4x16xf32>
    %424 = tpu.matmul %423, %404, %cst_140 {dimension_numbers = #tpu.dot_dimension_numbers<[1], [0], [0], [1], [0, 0, 1, 1], [], []>} : vector<4x16xbf16>, vector<16x16xbf16>, vector<4x16xf32> -> vector<4x16xf32>
    %425 = arith.addf %422, %424 : vector<4x16xf32>
    %426 = vector.broadcast %406 : vector<1x16xf32> to vector<4x16xf32>
    %427 = arith.addf %425, %426 : vector<4x16xf32>
    %428 = arith.truncf %319 : vector<4x16xf32> to vector<4x16xbf16>
    %cst_141 = arith.constant dense<0.000000e+00> : vector<4x16xf32>
    %429 = tpu.matmul %428, %402, %cst_141 {dimension_numbers = #tpu.dot_dimension_numbers<[1], [0], [0], [1], [0, 0, 1, 1], [], []>} : vector<4x16xbf16>, vector<16x16xbf16>, vector<4x16xf32> -> vector<4x16xf32>
    %430 = arith.truncf %328 : vector<4x16xf32> to vector<4x16xbf16>
    %cst_142 = arith.constant dense<0.000000e+00> : vector<4x16xf32>
    %431 = tpu.matmul %430, %404, %cst_142 {dimension_numbers = #tpu.dot_dimension_numbers<[1], [0], [0], [1], [0, 0, 1, 1], [], []>} : vector<4x16xbf16>, vector<16x16xbf16>, vector<4x16xf32> -> vector<4x16xf32>
    %432 = arith.addf %429, %431 : vector<4x16xf32>
    %433 = vector.broadcast %406 : vector<1x16xf32> to vector<4x16xf32>
    %434 = arith.addf %432, %433 : vector<4x16xf32>
    %435 = arith.truncf %337 : vector<4x16xf32> to vector<4x16xbf16>
    %cst_143 = arith.constant dense<0.000000e+00> : vector<4x16xf32>
    %436 = tpu.matmul %435, %402, %cst_143 {dimension_numbers = #tpu.dot_dimension_numbers<[1], [0], [0], [1], [0, 0, 1, 1], [], []>} : vector<4x16xbf16>, vector<16x16xbf16>, vector<4x16xf32> -> vector<4x16xf32>
    %437 = arith.truncf %346 : vector<4x16xf32> to vector<4x16xbf16>
    %cst_144 = arith.constant dense<0.000000e+00> : vector<4x16xf32>
    %438 = tpu.matmul %437, %404, %cst_144 {dimension_numbers = #tpu.dot_dimension_numbers<[1], [0], [0], [1], [0, 0, 1, 1], [], []>} : vector<4x16xbf16>, vector<16x16xbf16>, vector<4x16xf32> -> vector<4x16xf32>
    %439 = arith.addf %436, %438 : vector<4x16xf32>
    %440 = vector.broadcast %406 : vector<1x16xf32> to vector<4x16xf32>
    %441 = arith.addf %439, %440 : vector<4x16xf32>
    %442 = arith.truncf %355 : vector<4x16xf32> to vector<4x16xbf16>
    %cst_145 = arith.constant dense<0.000000e+00> : vector<4x16xf32>
    %443 = tpu.matmul %442, %402, %cst_145 {dimension_numbers = #tpu.dot_dimension_numbers<[1], [0], [0], [1], [0, 0, 1, 1], [], []>} : vector<4x16xbf16>, vector<16x16xbf16>, vector<4x16xf32> -> vector<4x16xf32>
    %444 = arith.truncf %364 : vector<4x16xf32> to vector<4x16xbf16>
    %cst_146 = arith.constant dense<0.000000e+00> : vector<4x16xf32>
    %445 = tpu.matmul %444, %404, %cst_146 {dimension_numbers = #tpu.dot_dimension_numbers<[1], [0], [0], [1], [0, 0, 1, 1], [], []>} : vector<4x16xbf16>, vector<16x16xbf16>, vector<4x16xf32> -> vector<4x16xf32>
    %446 = arith.addf %443, %445 : vector<4x16xf32>
    %447 = vector.broadcast %406 : vector<1x16xf32> to vector<4x16xf32>
    %448 = arith.addf %446, %447 : vector<4x16xf32>
    %449 = arith.truncf %373 : vector<4x16xf32> to vector<4x16xbf16>
    %cst_147 = arith.constant dense<0.000000e+00> : vector<4x16xf32>
    %450 = tpu.matmul %449, %402, %cst_147 {dimension_numbers = #tpu.dot_dimension_numbers<[1], [0], [0], [1], [0, 0, 1, 1], [], []>} : vector<4x16xbf16>, vector<16x16xbf16>, vector<4x16xf32> -> vector<4x16xf32>
    %451 = arith.truncf %382 : vector<4x16xf32> to vector<4x16xbf16>
    %cst_148 = arith.constant dense<0.000000e+00> : vector<4x16xf32>
    %452 = tpu.matmul %451, %404, %cst_148 {dimension_numbers = #tpu.dot_dimension_numbers<[1], [0], [0], [1], [0, 0, 1, 1], [], []>} : vector<4x16xbf16>, vector<16x16xbf16>, vector<4x16xf32> -> vector<4x16xf32>
    %453 = arith.addf %450, %452 : vector<4x16xf32>
    %454 = vector.broadcast %406 : vector<1x16xf32> to vector<4x16xf32>
    %455 = arith.addf %453, %454 : vector<4x16xf32>
    %456 = arith.truncf %391 : vector<4x16xf32> to vector<4x16xbf16>
    %cst_149 = arith.constant dense<0.000000e+00> : vector<4x16xf32>
    %457 = tpu.matmul %456, %402, %cst_149 {dimension_numbers = #tpu.dot_dimension_numbers<[1], [0], [0], [1], [0, 0, 1, 1], [], []>} : vector<4x16xbf16>, vector<16x16xbf16>, vector<4x16xf32> -> vector<4x16xf32>
    %458 = arith.truncf %400 : vector<4x16xf32> to vector<4x16xbf16>
    %cst_150 = arith.constant dense<0.000000e+00> : vector<4x16xf32>
    %459 = tpu.matmul %458, %404, %cst_150 {dimension_numbers = #tpu.dot_dimension_numbers<[1], [0], [0], [1], [0, 0, 1, 1], [], []>} : vector<4x16xbf16>, vector<16x16xbf16>, vector<4x16xf32> -> vector<4x16xf32>
    %460 = arith.addf %457, %459 : vector<4x16xf32>
    %461 = vector.broadcast %406 : vector<1x16xf32> to vector<4x16xf32>
    %462 = arith.addf %460, %461 : vector<4x16xf32>
    %c0_151 = arith.constant 0 : index
    %c0_152 = arith.constant 0 : index
    %c0_153 = arith.constant 0 : index
    %463 = vector.load %arg9[%c0_151, %c0_152, %c0_153] : memref<3x1x16xf32, #tpu.memory_space<vmem>>, vector<1x1x16xf32>
    %464 = vector.shape_cast %463 : vector<1x1x16xf32> to vector<1x16xf32>
    %c0_154 = arith.constant 0 : index
    %c0_155 = arith.constant 0 : index
    %c0_156 = arith.constant 0 : index
    %465 = vector.load %arg10[%c0_154, %c0_155, %c0_156] : memref<3x1x16xf32, #tpu.memory_space<vmem>>, vector<1x1x16xf32>
    %466 = vector.shape_cast %465 : vector<1x1x16xf32> to vector<1x16xf32>
    %cst_157 = arith.constant dense<0.000000e+00> : vector<16xf32>
    %467 = vector.multi_reduction <add>, %413, %cst_157 [0] : vector<4x16xf32> to vector<16xf32>
    %468 = vector.shape_cast %467 : vector<16xf32> to vector<1x16xf32>
    %cst_158 = arith.constant 0.000000e+00 : f32
    %469 = vector.broadcast %cst_158 : f32 to vector<1x16xf32>
    %470 = arith.addf %469, %468 : vector<1x16xf32>
    %cst_159 = arith.constant dense<0.000000e+00> : vector<16xf32>
    %471 = vector.multi_reduction <add>, %420, %cst_159 [0] : vector<4x16xf32> to vector<16xf32>
    %472 = vector.shape_cast %471 : vector<16xf32> to vector<1x16xf32>
    %473 = arith.addf %470, %472 : vector<1x16xf32>
    %cst_160 = arith.constant dense<0.000000e+00> : vector<16xf32>
    %474 = vector.multi_reduction <add>, %427, %cst_160 [0] : vector<4x16xf32> to vector<16xf32>
    %475 = vector.shape_cast %474 : vector<16xf32> to vector<1x16xf32>
    %476 = arith.addf %473, %475 : vector<1x16xf32>
    %cst_161 = arith.constant dense<0.000000e+00> : vector<16xf32>
    %477 = vector.multi_reduction <add>, %434, %cst_161 [0] : vector<4x16xf32> to vector<16xf32>
    %478 = vector.shape_cast %477 : vector<16xf32> to vector<1x16xf32>
    %479 = arith.addf %476, %478 : vector<1x16xf32>
    %cst_162 = arith.constant dense<0.000000e+00> : vector<16xf32>
    %480 = vector.multi_reduction <add>, %441, %cst_162 [0] : vector<4x16xf32> to vector<16xf32>
    %481 = vector.shape_cast %480 : vector<16xf32> to vector<1x16xf32>
    %482 = arith.addf %479, %481 : vector<1x16xf32>
    %cst_163 = arith.constant dense<0.000000e+00> : vector<16xf32>
    %483 = vector.multi_reduction <add>, %448, %cst_163 [0] : vector<4x16xf32> to vector<16xf32>
    %484 = vector.shape_cast %483 : vector<16xf32> to vector<1x16xf32>
    %485 = arith.addf %482, %484 : vector<1x16xf32>
    %cst_164 = arith.constant dense<0.000000e+00> : vector<16xf32>
    %486 = vector.multi_reduction <add>, %455, %cst_164 [0] : vector<4x16xf32> to vector<16xf32>
    %487 = vector.shape_cast %486 : vector<16xf32> to vector<1x16xf32>
    %488 = arith.addf %485, %487 : vector<1x16xf32>
    %cst_165 = arith.constant dense<0.000000e+00> : vector<16xf32>
    %489 = vector.multi_reduction <add>, %462, %cst_165 [0] : vector<4x16xf32> to vector<16xf32>
    %490 = vector.shape_cast %489 : vector<16xf32> to vector<1x16xf32>
    %491 = arith.addf %488, %490 : vector<1x16xf32>
    %cst_166 = arith.constant 3.200000e+01 : f32
    %492 = vector.broadcast %cst_166 : f32 to vector<1x16xf32>
    %493 = arith.divf %491, %492 : vector<1x16xf32>
    %494 = vector.broadcast %493 : vector<1x16xf32> to vector<4x16xf32>
    %495 = arith.subf %413, %494 : vector<4x16xf32>
    %496 = arith.mulf %495, %495 : vector<4x16xf32>
    %cst_167 = arith.constant dense<0.000000e+00> : vector<16xf32>
    %497 = vector.multi_reduction <add>, %496, %cst_167 [0] : vector<4x16xf32> to vector<16xf32>
    %498 = vector.shape_cast %497 : vector<16xf32> to vector<1x16xf32>
    %cst_168 = arith.constant 0.000000e+00 : f32
    %499 = vector.broadcast %cst_168 : f32 to vector<1x16xf32>
    %500 = arith.addf %499, %498 : vector<1x16xf32>
    %501 = vector.broadcast %493 : vector<1x16xf32> to vector<4x16xf32>
    %502 = arith.subf %420, %501 : vector<4x16xf32>
    %503 = arith.mulf %502, %502 : vector<4x16xf32>
    %cst_169 = arith.constant dense<0.000000e+00> : vector<16xf32>
    %504 = vector.multi_reduction <add>, %503, %cst_169 [0] : vector<4x16xf32> to vector<16xf32>
    %505 = vector.shape_cast %504 : vector<16xf32> to vector<1x16xf32>
    %506 = arith.addf %500, %505 : vector<1x16xf32>
    %507 = vector.broadcast %493 : vector<1x16xf32> to vector<4x16xf32>
    %508 = arith.subf %427, %507 : vector<4x16xf32>
    %509 = arith.mulf %508, %508 : vector<4x16xf32>
    %cst_170 = arith.constant dense<0.000000e+00> : vector<16xf32>
    %510 = vector.multi_reduction <add>, %509, %cst_170 [0] : vector<4x16xf32> to vector<16xf32>
    %511 = vector.shape_cast %510 : vector<16xf32> to vector<1x16xf32>
    %512 = arith.addf %506, %511 : vector<1x16xf32>
    %513 = vector.broadcast %493 : vector<1x16xf32> to vector<4x16xf32>
    %514 = arith.subf %434, %513 : vector<4x16xf32>
    %515 = arith.mulf %514, %514 : vector<4x16xf32>
    %cst_171 = arith.constant dense<0.000000e+00> : vector<16xf32>
    %516 = vector.multi_reduction <add>, %515, %cst_171 [0] : vector<4x16xf32> to vector<16xf32>
    %517 = vector.shape_cast %516 : vector<16xf32> to vector<1x16xf32>
    %518 = arith.addf %512, %517 : vector<1x16xf32>
    %519 = vector.broadcast %493 : vector<1x16xf32> to vector<4x16xf32>
    %520 = arith.subf %441, %519 : vector<4x16xf32>
    %521 = arith.mulf %520, %520 : vector<4x16xf32>
    %cst_172 = arith.constant dense<0.000000e+00> : vector<16xf32>
    %522 = vector.multi_reduction <add>, %521, %cst_172 [0] : vector<4x16xf32> to vector<16xf32>
    %523 = vector.shape_cast %522 : vector<16xf32> to vector<1x16xf32>
    %524 = arith.addf %518, %523 : vector<1x16xf32>
    %525 = vector.broadcast %493 : vector<1x16xf32> to vector<4x16xf32>
    %526 = arith.subf %448, %525 : vector<4x16xf32>
    %527 = arith.mulf %526, %526 : vector<4x16xf32>
    %cst_173 = arith.constant dense<0.000000e+00> : vector<16xf32>
    %528 = vector.multi_reduction <add>, %527, %cst_173 [0] : vector<4x16xf32> to vector<16xf32>
    %529 = vector.shape_cast %528 : vector<16xf32> to vector<1x16xf32>
    %530 = arith.addf %524, %529 : vector<1x16xf32>
    %531 = vector.broadcast %493 : vector<1x16xf32> to vector<4x16xf32>
    %532 = arith.subf %455, %531 : vector<4x16xf32>
    %533 = arith.mulf %532, %532 : vector<4x16xf32>
    %cst_174 = arith.constant dense<0.000000e+00> : vector<16xf32>
    %534 = vector.multi_reduction <add>, %533, %cst_174 [0] : vector<4x16xf32> to vector<16xf32>
    %535 = vector.shape_cast %534 : vector<16xf32> to vector<1x16xf32>
    %536 = arith.addf %530, %535 : vector<1x16xf32>
    %537 = vector.broadcast %493 : vector<1x16xf32> to vector<4x16xf32>
    %538 = arith.subf %462, %537 : vector<4x16xf32>
    %539 = arith.mulf %538, %538 : vector<4x16xf32>
    %cst_175 = arith.constant dense<0.000000e+00> : vector<16xf32>
    %540 = vector.multi_reduction <add>, %539, %cst_175 [0] : vector<4x16xf32> to vector<16xf32>
    %541 = vector.shape_cast %540 : vector<16xf32> to vector<1x16xf32>
    %542 = arith.addf %536, %541 : vector<1x16xf32>
    %cst_176 = arith.constant 3.200000e+01 : f32
    %543 = vector.broadcast %cst_176 : f32 to vector<1x16xf32>
    %544 = arith.divf %542, %543 : vector<1x16xf32>
    %cst_177 = arith.constant 9.99999974E-6 : f32
    %545 = vector.broadcast %cst_177 : f32 to vector<1x16xf32>
    %546 = arith.addf %544, %545 : vector<1x16xf32>
    %547 = math.rsqrt %546 : vector<1x16xf32>
    %548 = arith.mulf %464, %547 : vector<1x16xf32>
    %549 = arith.mulf %493, %548 : vector<1x16xf32>
    %550 = arith.subf %466, %549 : vector<1x16xf32>
    %551 = vector.broadcast %548 : vector<1x16xf32> to vector<4x16xf32>
    %552 = arith.mulf %413, %551 : vector<4x16xf32>
    %553 = vector.broadcast %550 : vector<1x16xf32> to vector<4x16xf32>
    %554 = arith.addf %552, %553 : vector<4x16xf32>
    %cst_178 = arith.constant 0.000000e+00 : f32
    %555 = vector.broadcast %cst_178 : f32 to vector<4x16xf32>
    %556 = arith.cmpf ogt, %554, %555 : vector<4x16xf32>
    %cst_179 = arith.constant 2.000000e-01 : f32
    %557 = vector.broadcast %cst_179 : f32 to vector<4x16xf32>
    %558 = arith.mulf %557, %554 : vector<4x16xf32>
    %559 = arith.select %556, %554, %558 : vector<4x16xi1>, vector<4x16xf32>
    %560 = vector.broadcast %548 : vector<1x16xf32> to vector<4x16xf32>
    %561 = arith.mulf %420, %560 : vector<4x16xf32>
    %562 = vector.broadcast %550 : vector<1x16xf32> to vector<4x16xf32>
    %563 = arith.addf %561, %562 : vector<4x16xf32>
    %cst_180 = arith.constant 0.000000e+00 : f32
    %564 = vector.broadcast %cst_180 : f32 to vector<4x16xf32>
    %565 = arith.cmpf ogt, %563, %564 : vector<4x16xf32>
    %cst_181 = arith.constant 2.000000e-01 : f32
    %566 = vector.broadcast %cst_181 : f32 to vector<4x16xf32>
    %567 = arith.mulf %566, %563 : vector<4x16xf32>
    %568 = arith.select %565, %563, %567 : vector<4x16xi1>, vector<4x16xf32>
    %569 = vector.broadcast %548 : vector<1x16xf32> to vector<4x16xf32>
    %570 = arith.mulf %427, %569 : vector<4x16xf32>
    %571 = vector.broadcast %550 : vector<1x16xf32> to vector<4x16xf32>
    %572 = arith.addf %570, %571 : vector<4x16xf32>
    %cst_182 = arith.constant 0.000000e+00 : f32
    %573 = vector.broadcast %cst_182 : f32 to vector<4x16xf32>
    %574 = arith.cmpf ogt, %572, %573 : vector<4x16xf32>
    %cst_183 = arith.constant 2.000000e-01 : f32
    %575 = vector.broadcast %cst_183 : f32 to vector<4x16xf32>
    %576 = arith.mulf %575, %572 : vector<4x16xf32>
    %577 = arith.select %574, %572, %576 : vector<4x16xi1>, vector<4x16xf32>
    %578 = vector.broadcast %548 : vector<1x16xf32> to vector<4x16xf32>
    %579 = arith.mulf %434, %578 : vector<4x16xf32>
    %580 = vector.broadcast %550 : vector<1x16xf32> to vector<4x16xf32>
    %581 = arith.addf %579, %580 : vector<4x16xf32>
    %cst_184 = arith.constant 0.000000e+00 : f32
    %582 = vector.broadcast %cst_184 : f32 to vector<4x16xf32>
    %583 = arith.cmpf ogt, %581, %582 : vector<4x16xf32>
    %cst_185 = arith.constant 2.000000e-01 : f32
    %584 = vector.broadcast %cst_185 : f32 to vector<4x16xf32>
    %585 = arith.mulf %584, %581 : vector<4x16xf32>
    %586 = arith.select %583, %581, %585 : vector<4x16xi1>, vector<4x16xf32>
    %587 = vector.broadcast %548 : vector<1x16xf32> to vector<4x16xf32>
    %588 = arith.mulf %441, %587 : vector<4x16xf32>
    %589 = vector.broadcast %550 : vector<1x16xf32> to vector<4x16xf32>
    %590 = arith.addf %588, %589 : vector<4x16xf32>
    %cst_186 = arith.constant 0.000000e+00 : f32
    %591 = vector.broadcast %cst_186 : f32 to vector<4x16xf32>
    %592 = arith.cmpf ogt, %590, %591 : vector<4x16xf32>
    %cst_187 = arith.constant 2.000000e-01 : f32
    %593 = vector.broadcast %cst_187 : f32 to vector<4x16xf32>
    %594 = arith.mulf %593, %590 : vector<4x16xf32>
    %595 = arith.select %592, %590, %594 : vector<4x16xi1>, vector<4x16xf32>
    %596 = vector.broadcast %548 : vector<1x16xf32> to vector<4x16xf32>
    %597 = arith.mulf %448, %596 : vector<4x16xf32>
    %598 = vector.broadcast %550 : vector<1x16xf32> to vector<4x16xf32>
    %599 = arith.addf %597, %598 : vector<4x16xf32>
    %cst_188 = arith.constant 0.000000e+00 : f32
    %600 = vector.broadcast %cst_188 : f32 to vector<4x16xf32>
    %601 = arith.cmpf ogt, %599, %600 : vector<4x16xf32>
    %cst_189 = arith.constant 2.000000e-01 : f32
    %602 = vector.broadcast %cst_189 : f32 to vector<4x16xf32>
    %603 = arith.mulf %602, %599 : vector<4x16xf32>
    %604 = arith.select %601, %599, %603 : vector<4x16xi1>, vector<4x16xf32>
    %605 = vector.broadcast %548 : vector<1x16xf32> to vector<4x16xf32>
    %606 = arith.mulf %455, %605 : vector<4x16xf32>
    %607 = vector.broadcast %550 : vector<1x16xf32> to vector<4x16xf32>
    %608 = arith.addf %606, %607 : vector<4x16xf32>
    %cst_190 = arith.constant 0.000000e+00 : f32
    %609 = vector.broadcast %cst_190 : f32 to vector<4x16xf32>
    %610 = arith.cmpf ogt, %608, %609 : vector<4x16xf32>
    %cst_191 = arith.constant 2.000000e-01 : f32
    %611 = vector.broadcast %cst_191 : f32 to vector<4x16xf32>
    %612 = arith.mulf %611, %608 : vector<4x16xf32>
    %613 = arith.select %610, %608, %612 : vector<4x16xi1>, vector<4x16xf32>
    %614 = vector.broadcast %548 : vector<1x16xf32> to vector<4x16xf32>
    %615 = arith.mulf %462, %614 : vector<4x16xf32>
    %616 = vector.broadcast %550 : vector<1x16xf32> to vector<4x16xf32>
    %617 = arith.addf %615, %616 : vector<4x16xf32>
    %cst_192 = arith.constant 0.000000e+00 : f32
    %618 = vector.broadcast %cst_192 : f32 to vector<4x16xf32>
    %619 = arith.cmpf ogt, %617, %618 : vector<4x16xf32>
    %cst_193 = arith.constant 2.000000e-01 : f32
    %620 = vector.broadcast %cst_193 : f32 to vector<4x16xf32>
    %621 = arith.mulf %620, %617 : vector<4x16xf32>
    %622 = arith.select %619, %617, %621 : vector<4x16xi1>, vector<4x16xf32>
    %c2_194 = arith.constant 2 : index
    %c0_195 = arith.constant 0 : index
    %c0_196 = arith.constant 0 : index
    %623 = vector.load %arg7[%c2_194, %c0_195, %c0_196] : memref<6x16x16xbf16, #tpu.memory_space<vmem>>, vector<1x16x16xbf16>
    %624 = vector.shape_cast %623 : vector<1x16x16xbf16> to vector<16x16xbf16>
    %c3_197 = arith.constant 3 : index
    %c0_198 = arith.constant 0 : index
    %c0_199 = arith.constant 0 : index
    %625 = vector.load %arg7[%c3_197, %c0_198, %c0_199] : memref<6x16x16xbf16, #tpu.memory_space<vmem>>, vector<1x16x16xbf16>
    %626 = vector.shape_cast %625 : vector<1x16x16xbf16> to vector<16x16xbf16>
    %c1_200 = arith.constant 1 : index
    %c0_201 = arith.constant 0 : index
    %c0_202 = arith.constant 0 : index
    %627 = vector.load %arg8[%c1_200, %c0_201, %c0_202] : memref<3x1x16xf32, #tpu.memory_space<vmem>>, vector<1x1x16xf32>
    %628 = vector.shape_cast %627 : vector<1x1x16xf32> to vector<1x16xf32>
    %629 = arith.truncf %559 : vector<4x16xf32> to vector<4x16xbf16>
    %cst_203 = arith.constant dense<0.000000e+00> : vector<4x16xf32>
    %630 = tpu.matmul %629, %624, %cst_203 {dimension_numbers = #tpu.dot_dimension_numbers<[1], [0], [0], [1], [0, 0, 1, 1], [], []>} : vector<4x16xbf16>, vector<16x16xbf16>, vector<4x16xf32> -> vector<4x16xf32>
    %631 = arith.truncf %568 : vector<4x16xf32> to vector<4x16xbf16>
    %cst_204 = arith.constant dense<0.000000e+00> : vector<4x16xf32>
    %632 = tpu.matmul %631, %626, %cst_204 {dimension_numbers = #tpu.dot_dimension_numbers<[1], [0], [0], [1], [0, 0, 1, 1], [], []>} : vector<4x16xbf16>, vector<16x16xbf16>, vector<4x16xf32> -> vector<4x16xf32>
    %633 = arith.addf %630, %632 : vector<4x16xf32>
    %634 = vector.broadcast %628 : vector<1x16xf32> to vector<4x16xf32>
    %635 = arith.addf %633, %634 : vector<4x16xf32>
    %636 = arith.truncf %577 : vector<4x16xf32> to vector<4x16xbf16>
    %cst_205 = arith.constant dense<0.000000e+00> : vector<4x16xf32>
    %637 = tpu.matmul %636, %624, %cst_205 {dimension_numbers = #tpu.dot_dimension_numbers<[1], [0], [0], [1], [0, 0, 1, 1], [], []>} : vector<4x16xbf16>, vector<16x16xbf16>, vector<4x16xf32> -> vector<4x16xf32>
    %638 = arith.truncf %586 : vector<4x16xf32> to vector<4x16xbf16>
    %cst_206 = arith.constant dense<0.000000e+00> : vector<4x16xf32>
    %639 = tpu.matmul %638, %626, %cst_206 {dimension_numbers = #tpu.dot_dimension_numbers<[1], [0], [0], [1], [0, 0, 1, 1], [], []>} : vector<4x16xbf16>, vector<16x16xbf16>, vector<4x16xf32> -> vector<4x16xf32>
    %640 = arith.addf %637, %639 : vector<4x16xf32>
    %641 = vector.broadcast %628 : vector<1x16xf32> to vector<4x16xf32>
    %642 = arith.addf %640, %641 : vector<4x16xf32>
    %643 = arith.truncf %595 : vector<4x16xf32> to vector<4x16xbf16>
    %cst_207 = arith.constant dense<0.000000e+00> : vector<4x16xf32>
    %644 = tpu.matmul %643, %624, %cst_207 {dimension_numbers = #tpu.dot_dimension_numbers<[1], [0], [0], [1], [0, 0, 1, 1], [], []>} : vector<4x16xbf16>, vector<16x16xbf16>, vector<4x16xf32> -> vector<4x16xf32>
    %645 = arith.truncf %604 : vector<4x16xf32> to vector<4x16xbf16>
    %cst_208 = arith.constant dense<0.000000e+00> : vector<4x16xf32>
    %646 = tpu.matmul %645, %626, %cst_208 {dimension_numbers = #tpu.dot_dimension_numbers<[1], [0], [0], [1], [0, 0, 1, 1], [], []>} : vector<4x16xbf16>, vector<16x16xbf16>, vector<4x16xf32> -> vector<4x16xf32>
    %647 = arith.addf %644, %646 : vector<4x16xf32>
    %648 = vector.broadcast %628 : vector<1x16xf32> to vector<4x16xf32>
    %649 = arith.addf %647, %648 : vector<4x16xf32>
    %650 = arith.truncf %613 : vector<4x16xf32> to vector<4x16xbf16>
    %cst_209 = arith.constant dense<0.000000e+00> : vector<4x16xf32>
    %651 = tpu.matmul %650, %624, %cst_209 {dimension_numbers = #tpu.dot_dimension_numbers<[1], [0], [0], [1], [0, 0, 1, 1], [], []>} : vector<4x16xbf16>, vector<16x16xbf16>, vector<4x16xf32> -> vector<4x16xf32>
    %652 = arith.truncf %622 : vector<4x16xf32> to vector<4x16xbf16>
    %cst_210 = arith.constant dense<0.000000e+00> : vector<4x16xf32>
    %653 = tpu.matmul %652, %626, %cst_210 {dimension_numbers = #tpu.dot_dimension_numbers<[1], [0], [0], [1], [0, 0, 1, 1], [], []>} : vector<4x16xbf16>, vector<16x16xbf16>, vector<4x16xf32> -> vector<4x16xf32>
    %654 = arith.addf %651, %653 : vector<4x16xf32>
    %655 = vector.broadcast %628 : vector<1x16xf32> to vector<4x16xf32>
    %656 = arith.addf %654, %655 : vector<4x16xf32>
    %c1_211 = arith.constant 1 : index
    %c0_212 = arith.constant 0 : index
    %c0_213 = arith.constant 0 : index
    %657 = vector.load %arg9[%c1_211, %c0_212, %c0_213] : memref<3x1x16xf32, #tpu.memory_space<vmem>>, vector<1x1x16xf32>
    %658 = vector.shape_cast %657 : vector<1x1x16xf32> to vector<1x16xf32>
    %c1_214 = arith.constant 1 : index
    %c0_215 = arith.constant 0 : index
    %c0_216 = arith.constant 0 : index
    %659 = vector.load %arg10[%c1_214, %c0_215, %c0_216] : memref<3x1x16xf32, #tpu.memory_space<vmem>>, vector<1x1x16xf32>
    %660 = vector.shape_cast %659 : vector<1x1x16xf32> to vector<1x16xf32>
    %cst_217 = arith.constant dense<0.000000e+00> : vector<16xf32>
    %661 = vector.multi_reduction <add>, %635, %cst_217 [0] : vector<4x16xf32> to vector<16xf32>
    %662 = vector.shape_cast %661 : vector<16xf32> to vector<1x16xf32>
    %cst_218 = arith.constant 0.000000e+00 : f32
    %663 = vector.broadcast %cst_218 : f32 to vector<1x16xf32>
    %664 = arith.addf %663, %662 : vector<1x16xf32>
    %cst_219 = arith.constant dense<0.000000e+00> : vector<16xf32>
    %665 = vector.multi_reduction <add>, %642, %cst_219 [0] : vector<4x16xf32> to vector<16xf32>
    %666 = vector.shape_cast %665 : vector<16xf32> to vector<1x16xf32>
    %667 = arith.addf %664, %666 : vector<1x16xf32>
    %cst_220 = arith.constant dense<0.000000e+00> : vector<16xf32>
    %668 = vector.multi_reduction <add>, %649, %cst_220 [0] : vector<4x16xf32> to vector<16xf32>
    %669 = vector.shape_cast %668 : vector<16xf32> to vector<1x16xf32>
    %670 = arith.addf %667, %669 : vector<1x16xf32>
    %cst_221 = arith.constant dense<0.000000e+00> : vector<16xf32>
    %671 = vector.multi_reduction <add>, %656, %cst_221 [0] : vector<4x16xf32> to vector<16xf32>
    %672 = vector.shape_cast %671 : vector<16xf32> to vector<1x16xf32>
    %673 = arith.addf %670, %672 : vector<1x16xf32>
    %cst_222 = arith.constant 1.600000e+01 : f32
    %674 = vector.broadcast %cst_222 : f32 to vector<1x16xf32>
    %675 = arith.divf %673, %674 : vector<1x16xf32>
    %676 = vector.broadcast %675 : vector<1x16xf32> to vector<4x16xf32>
    %677 = arith.subf %635, %676 : vector<4x16xf32>
    %678 = arith.mulf %677, %677 : vector<4x16xf32>
    %cst_223 = arith.constant dense<0.000000e+00> : vector<16xf32>
    %679 = vector.multi_reduction <add>, %678, %cst_223 [0] : vector<4x16xf32> to vector<16xf32>
    %680 = vector.shape_cast %679 : vector<16xf32> to vector<1x16xf32>
    %cst_224 = arith.constant 0.000000e+00 : f32
    %681 = vector.broadcast %cst_224 : f32 to vector<1x16xf32>
    %682 = arith.addf %681, %680 : vector<1x16xf32>
    %683 = vector.broadcast %675 : vector<1x16xf32> to vector<4x16xf32>
    %684 = arith.subf %642, %683 : vector<4x16xf32>
    %685 = arith.mulf %684, %684 : vector<4x16xf32>
    %cst_225 = arith.constant dense<0.000000e+00> : vector<16xf32>
    %686 = vector.multi_reduction <add>, %685, %cst_225 [0] : vector<4x16xf32> to vector<16xf32>
    %687 = vector.shape_cast %686 : vector<16xf32> to vector<1x16xf32>
    %688 = arith.addf %682, %687 : vector<1x16xf32>
    %689 = vector.broadcast %675 : vector<1x16xf32> to vector<4x16xf32>
    %690 = arith.subf %649, %689 : vector<4x16xf32>
    %691 = arith.mulf %690, %690 : vector<4x16xf32>
    %cst_226 = arith.constant dense<0.000000e+00> : vector<16xf32>
    %692 = vector.multi_reduction <add>, %691, %cst_226 [0] : vector<4x16xf32> to vector<16xf32>
    %693 = vector.shape_cast %692 : vector<16xf32> to vector<1x16xf32>
    %694 = arith.addf %688, %693 : vector<1x16xf32>
    %695 = vector.broadcast %675 : vector<1x16xf32> to vector<4x16xf32>
    %696 = arith.subf %656, %695 : vector<4x16xf32>
    %697 = arith.mulf %696, %696 : vector<4x16xf32>
    %cst_227 = arith.constant dense<0.000000e+00> : vector<16xf32>
    %698 = vector.multi_reduction <add>, %697, %cst_227 [0] : vector<4x16xf32> to vector<16xf32>
    %699 = vector.shape_cast %698 : vector<16xf32> to vector<1x16xf32>
    %700 = arith.addf %694, %699 : vector<1x16xf32>
    %cst_228 = arith.constant 1.600000e+01 : f32
    %701 = vector.broadcast %cst_228 : f32 to vector<1x16xf32>
    %702 = arith.divf %700, %701 : vector<1x16xf32>
    %cst_229 = arith.constant 9.99999974E-6 : f32
    %703 = vector.broadcast %cst_229 : f32 to vector<1x16xf32>
    %704 = arith.addf %702, %703 : vector<1x16xf32>
    %705 = math.rsqrt %704 : vector<1x16xf32>
    %706 = arith.mulf %658, %705 : vector<1x16xf32>
    %707 = arith.mulf %675, %706 : vector<1x16xf32>
    %708 = arith.subf %660, %707 : vector<1x16xf32>
    %709 = vector.broadcast %706 : vector<1x16xf32> to vector<4x16xf32>
    %710 = arith.mulf %635, %709 : vector<4x16xf32>
    %711 = vector.broadcast %708 : vector<1x16xf32> to vector<4x16xf32>
    %712 = arith.addf %710, %711 : vector<4x16xf32>
    %cst_230 = arith.constant 0.000000e+00 : f32
    %713 = vector.broadcast %cst_230 : f32 to vector<4x16xf32>
    %714 = arith.cmpf ogt, %712, %713 : vector<4x16xf32>
    %cst_231 = arith.constant 2.000000e-01 : f32
    %715 = vector.broadcast %cst_231 : f32 to vector<4x16xf32>
    %716 = arith.mulf %715, %712 : vector<4x16xf32>
    %717 = arith.select %714, %712, %716 : vector<4x16xi1>, vector<4x16xf32>
    %718 = vector.broadcast %706 : vector<1x16xf32> to vector<4x16xf32>
    %719 = arith.mulf %642, %718 : vector<4x16xf32>
    %720 = vector.broadcast %708 : vector<1x16xf32> to vector<4x16xf32>
    %721 = arith.addf %719, %720 : vector<4x16xf32>
    %cst_232 = arith.constant 0.000000e+00 : f32
    %722 = vector.broadcast %cst_232 : f32 to vector<4x16xf32>
    %723 = arith.cmpf ogt, %721, %722 : vector<4x16xf32>
    %cst_233 = arith.constant 2.000000e-01 : f32
    %724 = vector.broadcast %cst_233 : f32 to vector<4x16xf32>
    %725 = arith.mulf %724, %721 : vector<4x16xf32>
    %726 = arith.select %723, %721, %725 : vector<4x16xi1>, vector<4x16xf32>
    %727 = vector.broadcast %706 : vector<1x16xf32> to vector<4x16xf32>
    %728 = arith.mulf %649, %727 : vector<4x16xf32>
    %729 = vector.broadcast %708 : vector<1x16xf32> to vector<4x16xf32>
    %730 = arith.addf %728, %729 : vector<4x16xf32>
    %cst_234 = arith.constant 0.000000e+00 : f32
    %731 = vector.broadcast %cst_234 : f32 to vector<4x16xf32>
    %732 = arith.cmpf ogt, %730, %731 : vector<4x16xf32>
    %cst_235 = arith.constant 2.000000e-01 : f32
    %733 = vector.broadcast %cst_235 : f32 to vector<4x16xf32>
    %734 = arith.mulf %733, %730 : vector<4x16xf32>
    %735 = arith.select %732, %730, %734 : vector<4x16xi1>, vector<4x16xf32>
    %736 = vector.broadcast %706 : vector<1x16xf32> to vector<4x16xf32>
    %737 = arith.mulf %656, %736 : vector<4x16xf32>
    %738 = vector.broadcast %708 : vector<1x16xf32> to vector<4x16xf32>
    %739 = arith.addf %737, %738 : vector<4x16xf32>
    %cst_236 = arith.constant 0.000000e+00 : f32
    %740 = vector.broadcast %cst_236 : f32 to vector<4x16xf32>
    %741 = arith.cmpf ogt, %739, %740 : vector<4x16xf32>
    %cst_237 = arith.constant 2.000000e-01 : f32
    %742 = vector.broadcast %cst_237 : f32 to vector<4x16xf32>
    %743 = arith.mulf %742, %739 : vector<4x16xf32>
    %744 = arith.select %741, %739, %743 : vector<4x16xi1>, vector<4x16xf32>
    %c4_238 = arith.constant 4 : index
    %c0_239 = arith.constant 0 : index
    %c0_240 = arith.constant 0 : index
    %745 = vector.load %arg7[%c4_238, %c0_239, %c0_240] : memref<6x16x16xbf16, #tpu.memory_space<vmem>>, vector<1x16x16xbf16>
    %746 = vector.shape_cast %745 : vector<1x16x16xbf16> to vector<16x16xbf16>
    %c5_241 = arith.constant 5 : index
    %c0_242 = arith.constant 0 : index
    %c0_243 = arith.constant 0 : index
    %747 = vector.load %arg7[%c5_241, %c0_242, %c0_243] : memref<6x16x16xbf16, #tpu.memory_space<vmem>>, vector<1x16x16xbf16>
    %748 = vector.shape_cast %747 : vector<1x16x16xbf16> to vector<16x16xbf16>
    %c2_244 = arith.constant 2 : index
    %c0_245 = arith.constant 0 : index
    %c0_246 = arith.constant 0 : index
    %749 = vector.load %arg8[%c2_244, %c0_245, %c0_246] : memref<3x1x16xf32, #tpu.memory_space<vmem>>, vector<1x1x16xf32>
    %750 = vector.shape_cast %749 : vector<1x1x16xf32> to vector<1x16xf32>
    %751 = arith.truncf %717 : vector<4x16xf32> to vector<4x16xbf16>
    %cst_247 = arith.constant dense<0.000000e+00> : vector<4x16xf32>
    %752 = tpu.matmul %751, %746, %cst_247 {dimension_numbers = #tpu.dot_dimension_numbers<[1], [0], [0], [1], [0, 0, 1, 1], [], []>} : vector<4x16xbf16>, vector<16x16xbf16>, vector<4x16xf32> -> vector<4x16xf32>
    %753 = arith.truncf %726 : vector<4x16xf32> to vector<4x16xbf16>
    %cst_248 = arith.constant dense<0.000000e+00> : vector<4x16xf32>
    %754 = tpu.matmul %753, %748, %cst_248 {dimension_numbers = #tpu.dot_dimension_numbers<[1], [0], [0], [1], [0, 0, 1, 1], [], []>} : vector<4x16xbf16>, vector<16x16xbf16>, vector<4x16xf32> -> vector<4x16xf32>
    %755 = arith.addf %752, %754 : vector<4x16xf32>
    %756 = vector.broadcast %750 : vector<1x16xf32> to vector<4x16xf32>
    %757 = arith.addf %755, %756 : vector<4x16xf32>
    %758 = arith.truncf %735 : vector<4x16xf32> to vector<4x16xbf16>
    %cst_249 = arith.constant dense<0.000000e+00> : vector<4x16xf32>
    %759 = tpu.matmul %758, %746, %cst_249 {dimension_numbers = #tpu.dot_dimension_numbers<[1], [0], [0], [1], [0, 0, 1, 1], [], []>} : vector<4x16xbf16>, vector<16x16xbf16>, vector<4x16xf32> -> vector<4x16xf32>
    %760 = arith.truncf %744 : vector<4x16xf32> to vector<4x16xbf16>
    %cst_250 = arith.constant dense<0.000000e+00> : vector<4x16xf32>
    %761 = tpu.matmul %760, %748, %cst_250 {dimension_numbers = #tpu.dot_dimension_numbers<[1], [0], [0], [1], [0, 0, 1, 1], [], []>} : vector<4x16xbf16>, vector<16x16xbf16>, vector<4x16xf32> -> vector<4x16xf32>
    %762 = arith.addf %759, %761 : vector<4x16xf32>
    %763 = vector.broadcast %750 : vector<1x16xf32> to vector<4x16xf32>
    %764 = arith.addf %762, %763 : vector<4x16xf32>
    %c2_251 = arith.constant 2 : index
    %c0_252 = arith.constant 0 : index
    %c0_253 = arith.constant 0 : index
    %765 = vector.load %arg9[%c2_251, %c0_252, %c0_253] : memref<3x1x16xf32, #tpu.memory_space<vmem>>, vector<1x1x16xf32>
    %766 = vector.shape_cast %765 : vector<1x1x16xf32> to vector<1x16xf32>
    %c2_254 = arith.constant 2 : index
    %c0_255 = arith.constant 0 : index
    %c0_256 = arith.constant 0 : index
    %767 = vector.load %arg10[%c2_254, %c0_255, %c0_256] : memref<3x1x16xf32, #tpu.memory_space<vmem>>, vector<1x1x16xf32>
    %768 = vector.shape_cast %767 : vector<1x1x16xf32> to vector<1x16xf32>
    %cst_257 = arith.constant dense<0.000000e+00> : vector<16xf32>
    %769 = vector.multi_reduction <add>, %757, %cst_257 [0] : vector<4x16xf32> to vector<16xf32>
    %770 = vector.shape_cast %769 : vector<16xf32> to vector<1x16xf32>
    %cst_258 = arith.constant 0.000000e+00 : f32
    %771 = vector.broadcast %cst_258 : f32 to vector<1x16xf32>
    %772 = arith.addf %771, %770 : vector<1x16xf32>
    %cst_259 = arith.constant dense<0.000000e+00> : vector<16xf32>
    %773 = vector.multi_reduction <add>, %764, %cst_259 [0] : vector<4x16xf32> to vector<16xf32>
    %774 = vector.shape_cast %773 : vector<16xf32> to vector<1x16xf32>
    %775 = arith.addf %772, %774 : vector<1x16xf32>
    %cst_260 = arith.constant 8.000000e+00 : f32
    %776 = vector.broadcast %cst_260 : f32 to vector<1x16xf32>
    %777 = arith.divf %775, %776 : vector<1x16xf32>
    %778 = vector.broadcast %777 : vector<1x16xf32> to vector<4x16xf32>
    %779 = arith.subf %757, %778 : vector<4x16xf32>
    %780 = arith.mulf %779, %779 : vector<4x16xf32>
    %cst_261 = arith.constant dense<0.000000e+00> : vector<16xf32>
    %781 = vector.multi_reduction <add>, %780, %cst_261 [0] : vector<4x16xf32> to vector<16xf32>
    %782 = vector.shape_cast %781 : vector<16xf32> to vector<1x16xf32>
    %cst_262 = arith.constant 0.000000e+00 : f32
    %783 = vector.broadcast %cst_262 : f32 to vector<1x16xf32>
    %784 = arith.addf %783, %782 : vector<1x16xf32>
    %785 = vector.broadcast %777 : vector<1x16xf32> to vector<4x16xf32>
    %786 = arith.subf %764, %785 : vector<4x16xf32>
    %787 = arith.mulf %786, %786 : vector<4x16xf32>
    %cst_263 = arith.constant dense<0.000000e+00> : vector<16xf32>
    %788 = vector.multi_reduction <add>, %787, %cst_263 [0] : vector<4x16xf32> to vector<16xf32>
    %789 = vector.shape_cast %788 : vector<16xf32> to vector<1x16xf32>
    %790 = arith.addf %784, %789 : vector<1x16xf32>
    %cst_264 = arith.constant 8.000000e+00 : f32
    %791 = vector.broadcast %cst_264 : f32 to vector<1x16xf32>
    %792 = arith.divf %790, %791 : vector<1x16xf32>
    %cst_265 = arith.constant 9.99999974E-6 : f32
    %793 = vector.broadcast %cst_265 : f32 to vector<1x16xf32>
    %794 = arith.addf %792, %793 : vector<1x16xf32>
    %795 = math.rsqrt %794 : vector<1x16xf32>
    %796 = arith.mulf %766, %795 : vector<1x16xf32>
    %797 = arith.mulf %777, %796 : vector<1x16xf32>
    %798 = arith.subf %768, %797 : vector<1x16xf32>
    %799 = vector.broadcast %796 : vector<1x16xf32> to vector<4x16xf32>
    %800 = arith.mulf %757, %799 : vector<4x16xf32>
    %801 = vector.broadcast %798 : vector<1x16xf32> to vector<4x16xf32>
    %802 = arith.addf %800, %801 : vector<4x16xf32>
    %cst_266 = arith.constant 0.000000e+00 : f32
    %803 = vector.broadcast %cst_266 : f32 to vector<4x16xf32>
    %804 = arith.cmpf ogt, %802, %803 : vector<4x16xf32>
    %cst_267 = arith.constant 2.000000e-01 : f32
    %805 = vector.broadcast %cst_267 : f32 to vector<4x16xf32>
    %806 = arith.mulf %805, %802 : vector<4x16xf32>
    %807 = arith.select %804, %802, %806 : vector<4x16xi1>, vector<4x16xf32>
    %808 = vector.broadcast %796 : vector<1x16xf32> to vector<4x16xf32>
    %809 = arith.mulf %764, %808 : vector<4x16xf32>
    %810 = vector.broadcast %798 : vector<1x16xf32> to vector<4x16xf32>
    %811 = arith.addf %809, %810 : vector<4x16xf32>
    %cst_268 = arith.constant 0.000000e+00 : f32
    %812 = vector.broadcast %cst_268 : f32 to vector<4x16xf32>
    %813 = arith.cmpf ogt, %811, %812 : vector<4x16xf32>
    %cst_269 = arith.constant 2.000000e-01 : f32
    %814 = vector.broadcast %cst_269 : f32 to vector<4x16xf32>
    %815 = arith.mulf %814, %811 : vector<4x16xf32>
    %816 = arith.select %813, %811, %815 : vector<4x16xi1>, vector<4x16xf32>
    %c0_270 = arith.constant 0 : index
    %c0_271 = arith.constant 0 : index
    %817 = vector.load %arg1[%c0_270, %c0_271] : memref<4x100xf32, #tpu.memory_space<vmem>>, vector<4x100xf32>
    %c0_272 = arith.constant 0 : index
    %c0_273 = arith.constant 0 : index
    %818 = vector.load %arg11[%c0_272, %c0_273] : memref<100x256xbf16, #tpu.memory_space<vmem>>, vector<100x256xbf16>
    %819 = arith.truncf %817 : vector<4x100xf32> to vector<4x100xbf16>
    %cst_274 = arith.constant dense<0.000000e+00> : vector<4x256xf32>
    %820 = tpu.matmul %819, %818, %cst_274 {dimension_numbers = #tpu.dot_dimension_numbers<[1], [0], [0], [1], [0, 0, 1, 1], [], []>} : vector<4x100xbf16>, vector<100x256xbf16>, vector<4x256xf32> -> vector<4x256xf32>
    %c0_275 = arith.constant 0 : index
    %c0_276 = arith.constant 0 : index
    %821 = vector.load %arg12[%c0_275, %c0_276] : memref<100x256xbf16, #tpu.memory_space<vmem>>, vector<100x256xbf16>
    %822 = arith.truncf %0 : vector<4x100xf32> to vector<4x100xbf16>
    %cst_277 = arith.constant dense<0.000000e+00> : vector<4x256xf32>
    %823 = tpu.matmul %822, %821, %cst_277 {dimension_numbers = #tpu.dot_dimension_numbers<[1], [0], [0], [1], [0, 0, 1, 1], [], []>} : vector<4x100xbf16>, vector<100x256xbf16>, vector<4x256xf32> -> vector<4x256xf32>
    %824 = arith.addf %820, %823 : vector<4x256xf32>
    %c0_278 = arith.constant 0 : index
    %c0_279 = arith.constant 0 : index
    %825 = vector.load %arg13[%c0_278, %c0_279] : memref<1x256xf32, #tpu.memory_space<vmem>>, vector<1x256xf32>
    %826 = vector.broadcast %825 : vector<1x256xf32> to vector<4x256xf32>
    %827 = arith.addf %824, %826 : vector<4x256xf32>
    %cst_280 = arith.constant dense<0.000000e+00> : vector<256xf32>
    %828 = vector.multi_reduction <add>, %827, %cst_280 [0] : vector<4x256xf32> to vector<256xf32>
    %829 = vector.shape_cast %828 : vector<256xf32> to vector<1x256xf32>
    %cst_281 = arith.constant 4.000000e+00 : f32
    %830 = vector.broadcast %cst_281 : f32 to vector<1x256xf32>
    %831 = arith.divf %829, %830 : vector<1x256xf32>
    %832 = vector.broadcast %831 : vector<1x256xf32> to vector<4x256xf32>
    %833 = arith.subf %827, %832 : vector<4x256xf32>
    %834 = arith.mulf %833, %833 : vector<4x256xf32>
    %cst_282 = arith.constant dense<0.000000e+00> : vector<256xf32>
    %835 = vector.multi_reduction <add>, %834, %cst_282 [0] : vector<4x256xf32> to vector<256xf32>
    %836 = vector.shape_cast %835 : vector<256xf32> to vector<1x256xf32>
    %cst_283 = arith.constant 4.000000e+00 : f32
    %837 = vector.broadcast %cst_283 : f32 to vector<1x256xf32>
    %838 = arith.divf %836, %837 : vector<1x256xf32>
    %839 = vector.broadcast %831 : vector<1x256xf32> to vector<4x256xf32>
    %840 = arith.subf %827, %839 : vector<4x256xf32>
    %c0_284 = arith.constant 0 : index
    %c0_285 = arith.constant 0 : index
    %841 = vector.load %arg14[%c0_284, %c0_285] : memref<1x256xf32, #tpu.memory_space<vmem>>, vector<1x256xf32>
    %cst_286 = arith.constant 9.99999974E-6 : f32
    %842 = vector.broadcast %cst_286 : f32 to vector<1x256xf32>
    %843 = arith.addf %838, %842 : vector<1x256xf32>
    %844 = math.rsqrt %843 : vector<1x256xf32>
    %845 = arith.mulf %841, %844 : vector<1x256xf32>
    %846 = vector.broadcast %845 : vector<1x256xf32> to vector<4x256xf32>
    %847 = arith.mulf %840, %846 : vector<4x256xf32>
    %c0_287 = arith.constant 0 : index
    %c0_288 = arith.constant 0 : index
    %848 = vector.load %arg15[%c0_287, %c0_288] : memref<1x256xf32, #tpu.memory_space<vmem>>, vector<1x256xf32>
    %849 = vector.broadcast %848 : vector<1x256xf32> to vector<4x256xf32>
    %850 = arith.addf %847, %849 : vector<4x256xf32>
    %cst_289 = arith.constant 0.000000e+00 : f32
    %851 = vector.broadcast %cst_289 : f32 to vector<4x256xf32>
    %852 = arith.maximumf %850, %851 : vector<4x256xf32>
    %c0_290 = arith.constant 0 : index
    %c0_291 = arith.constant 0 : index
    %c0_292 = arith.constant 0 : index
    %853 = vector.load %arg19[%c0_290, %c0_291, %c0_292] : memref<3x100x256xbf16, #tpu.memory_space<vmem>>, vector<1x100x256xbf16>
    %854 = vector.shape_cast %853 : vector<1x100x256xbf16> to vector<100x256xbf16>
    %855 = arith.truncf %0 : vector<4x100xf32> to vector<4x100xbf16>
    %cst_293 = arith.constant dense<0.000000e+00> : vector<4x256xf32>
    %856 = tpu.matmul %855, %854, %cst_293 {dimension_numbers = #tpu.dot_dimension_numbers<[1], [0], [0], [1], [0, 0, 1, 1], [], []>} : vector<4x100xbf16>, vector<100x256xbf16>, vector<4x256xf32> -> vector<4x256xf32>
    %c0_294 = arith.constant 0 : index
    %c0_295 = arith.constant 0 : index
    %c0_296 = arith.constant 0 : index
    %857 = vector.load %arg20[%c0_294, %c0_295, %c0_296] : memref<3x1x256xf32, #tpu.memory_space<vmem>>, vector<1x1x256xf32>
    %858 = vector.shape_cast %857 : vector<1x1x256xf32> to vector<1x256xf32>
    %859 = vector.broadcast %858 : vector<1x256xf32> to vector<4x256xf32>
    %860 = arith.addf %856, %859 : vector<4x256xf32>
    %c1_297 = arith.constant 1 : index
    %c0_298 = arith.constant 0 : index
    %c0_299 = arith.constant 0 : index
    %861 = vector.load %arg19[%c1_297, %c0_298, %c0_299] : memref<3x100x256xbf16, #tpu.memory_space<vmem>>, vector<1x100x256xbf16>
    %862 = vector.shape_cast %861 : vector<1x100x256xbf16> to vector<100x256xbf16>
    %863 = arith.truncf %0 : vector<4x100xf32> to vector<4x100xbf16>
    %cst_300 = arith.constant dense<0.000000e+00> : vector<4x256xf32>
    %864 = tpu.matmul %863, %862, %cst_300 {dimension_numbers = #tpu.dot_dimension_numbers<[1], [0], [0], [1], [0, 0, 1, 1], [], []>} : vector<4x100xbf16>, vector<100x256xbf16>, vector<4x256xf32> -> vector<4x256xf32>
    %c1_301 = arith.constant 1 : index
    %c0_302 = arith.constant 0 : index
    %c0_303 = arith.constant 0 : index
    %865 = vector.load %arg20[%c1_301, %c0_302, %c0_303] : memref<3x1x256xf32, #tpu.memory_space<vmem>>, vector<1x1x256xf32>
    %866 = vector.shape_cast %865 : vector<1x1x256xf32> to vector<1x256xf32>
    %867 = vector.broadcast %866 : vector<1x256xf32> to vector<4x256xf32>
    %868 = arith.addf %864, %867 : vector<4x256xf32>
    %c2_304 = arith.constant 2 : index
    %c0_305 = arith.constant 0 : index
    %c0_306 = arith.constant 0 : index
    %869 = vector.load %arg19[%c2_304, %c0_305, %c0_306] : memref<3x100x256xbf16, #tpu.memory_space<vmem>>, vector<1x100x256xbf16>
    %870 = vector.shape_cast %869 : vector<1x100x256xbf16> to vector<100x256xbf16>
    %871 = arith.truncf %0 : vector<4x100xf32> to vector<4x100xbf16>
    %cst_307 = arith.constant dense<0.000000e+00> : vector<4x256xf32>
    %872 = tpu.matmul %871, %870, %cst_307 {dimension_numbers = #tpu.dot_dimension_numbers<[1], [0], [0], [1], [0, 0, 1, 1], [], []>} : vector<4x100xbf16>, vector<100x256xbf16>, vector<4x256xf32> -> vector<4x256xf32>
    %c2_308 = arith.constant 2 : index
    %c0_309 = arith.constant 0 : index
    %c0_310 = arith.constant 0 : index
    %873 = vector.load %arg20[%c2_308, %c0_309, %c0_310] : memref<3x1x256xf32, #tpu.memory_space<vmem>>, vector<1x1x256xf32>
    %874 = vector.shape_cast %873 : vector<1x1x256xf32> to vector<1x256xf32>
    %875 = vector.broadcast %874 : vector<1x256xf32> to vector<4x256xf32>
    %876 = arith.addf %872, %875 : vector<4x256xf32>
    %c0_311 = arith.constant 0 : index
    %c0_312 = arith.constant 0 : index
    %c0_313 = arith.constant 0 : index
    %877 = vector.load %arg16[%c0_311, %c0_312, %c0_313] : memref<2x256x256xbf16, #tpu.memory_space<vmem>>, vector<1x256x256xbf16>
    %878 = vector.shape_cast %877 : vector<1x256x256xbf16> to vector<256x256xbf16>
    %879 = arith.truncf %852 : vector<4x256xf32> to vector<4x256xbf16>
    %cst_314 = arith.constant dense<0.000000e+00> : vector<4x256xf32>
    %880 = tpu.matmul %879, %878, %cst_314 {dimension_numbers = #tpu.dot_dimension_numbers<[1], [0], [0], [1], [0, 0, 1, 1], [], []>} : vector<4x256xbf16>, vector<256x256xbf16>, vector<4x256xf32> -> vector<4x256xf32>
    %c0_315 = arith.constant 0 : index
    %c0_316 = arith.constant 0 : index
    %c0_317 = arith.constant 0 : index
    %881 = vector.load %arg18[%c0_315, %c0_316, %c0_317] : memref<3x16x256xbf16, #tpu.memory_space<vmem>>, vector<1x16x256xbf16>
    %882 = vector.shape_cast %881 : vector<1x16x256xbf16> to vector<16x256xbf16>
    %883 = arith.truncf %807 : vector<4x16xf32> to vector<4x16xbf16>
    %cst_318 = arith.constant dense<0.000000e+00> : vector<4x256xf32>
    %884 = tpu.matmul %883, %882, %cst_318 {dimension_numbers = #tpu.dot_dimension_numbers<[1], [0], [0], [1], [0, 0, 1, 1], [], []>} : vector<4x16xbf16>, vector<16x256xbf16>, vector<4x256xf32> -> vector<4x256xf32>
    %885 = arith.addf %880, %884 : vector<4x256xf32>
    %886 = arith.addf %885, %860 : vector<4x256xf32>
    %887 = vector.extract_strided_slice %886 {offsets = [0, 0], sizes = [4, 128], strides = [1, 1]} : vector<4x256xf32> to vector<4x128xf32>
    %888 = vector.extract_strided_slice %886 {offsets = [0, 128], sizes = [4, 128], strides = [1, 1]} : vector<4x256xf32> to vector<4x128xf32>
    %c1_319 = arith.constant 1 : index
    %c0_320 = arith.constant 0 : index
    %c0_321 = arith.constant 0 : index
    %889 = vector.load %arg16[%c1_319, %c0_320, %c0_321] : memref<2x256x256xbf16, #tpu.memory_space<vmem>>, vector<1x256x256xbf16>
    %890 = vector.shape_cast %889 : vector<1x256x256xbf16> to vector<256x256xbf16>
    %891 = arith.truncf %852 : vector<4x256xf32> to vector<4x256xbf16>
    %cst_322 = arith.constant dense<0.000000e+00> : vector<4x256xf32>
    %892 = tpu.matmul %891, %890, %cst_322 {dimension_numbers = #tpu.dot_dimension_numbers<[1], [0], [0], [1], [0, 0, 1, 1], [], []>} : vector<4x256xbf16>, vector<256x256xbf16>, vector<4x256xf32> -> vector<4x256xf32>
    %c0_323 = arith.constant 0 : index
    %c0_324 = arith.constant 0 : index
    %c0_325 = arith.constant 0 : index
    %893 = vector.load %arg18[%c0_323, %c0_324, %c0_325] : memref<3x16x256xbf16, #tpu.memory_space<vmem>>, vector<1x16x256xbf16>
    %894 = vector.shape_cast %893 : vector<1x16x256xbf16> to vector<16x256xbf16>
    %895 = arith.truncf %816 : vector<4x16xf32> to vector<4x16xbf16>
    %cst_326 = arith.constant dense<0.000000e+00> : vector<4x256xf32>
    %896 = tpu.matmul %895, %894, %cst_326 {dimension_numbers = #tpu.dot_dimension_numbers<[1], [0], [0], [1], [0, 0, 1, 1], [], []>} : vector<4x16xbf16>, vector<16x256xbf16>, vector<4x256xf32> -> vector<4x256xf32>
    %897 = arith.addf %892, %896 : vector<4x256xf32>
    %898 = arith.addf %897, %860 : vector<4x256xf32>
    %899 = vector.extract_strided_slice %898 {offsets = [0, 0], sizes = [4, 128], strides = [1, 1]} : vector<4x256xf32> to vector<4x128xf32>
    %900 = vector.extract_strided_slice %898 {offsets = [0, 128], sizes = [4, 128], strides = [1, 1]} : vector<4x256xf32> to vector<4x128xf32>
    %c0_327 = arith.constant 0 : index
    %c0_328 = arith.constant 0 : index
    %c0_329 = arith.constant 0 : index
    %901 = vector.load %arg21[%c0_327, %c0_328, %c0_329] : memref<3x1x128xf32, #tpu.memory_space<vmem>>, vector<1x1x128xf32>
    %902 = vector.shape_cast %901 : vector<1x1x128xf32> to vector<1x128xf32>
    %c0_330 = arith.constant 0 : index
    %c0_331 = arith.constant 0 : index
    %c0_332 = arith.constant 0 : index
    %903 = vector.load %arg22[%c0_330, %c0_331, %c0_332] : memref<3x1x128xf32, #tpu.memory_space<vmem>>, vector<1x1x128xf32>
    %904 = vector.shape_cast %903 : vector<1x1x128xf32> to vector<1x128xf32>
    %cst_333 = arith.constant dense<0.000000e+00> : vector<128xf32>
    %905 = vector.multi_reduction <add>, %887, %cst_333 [0] : vector<4x128xf32> to vector<128xf32>
    %906 = vector.shape_cast %905 : vector<128xf32> to vector<1x128xf32>
    %cst_334 = arith.constant 0.000000e+00 : f32
    %907 = vector.broadcast %cst_334 : f32 to vector<1x128xf32>
    %908 = arith.addf %907, %906 : vector<1x128xf32>
    %cst_335 = arith.constant dense<0.000000e+00> : vector<128xf32>
    %909 = vector.multi_reduction <add>, %888, %cst_335 [0] : vector<4x128xf32> to vector<128xf32>
    %910 = vector.shape_cast %909 : vector<128xf32> to vector<1x128xf32>
    %911 = arith.addf %908, %910 : vector<1x128xf32>
    %cst_336 = arith.constant dense<0.000000e+00> : vector<128xf32>
    %912 = vector.multi_reduction <add>, %899, %cst_336 [0] : vector<4x128xf32> to vector<128xf32>
    %913 = vector.shape_cast %912 : vector<128xf32> to vector<1x128xf32>
    %914 = arith.addf %911, %913 : vector<1x128xf32>
    %cst_337 = arith.constant dense<0.000000e+00> : vector<128xf32>
    %915 = vector.multi_reduction <add>, %900, %cst_337 [0] : vector<4x128xf32> to vector<128xf32>
    %916 = vector.shape_cast %915 : vector<128xf32> to vector<1x128xf32>
    %917 = arith.addf %914, %916 : vector<1x128xf32>
    %cst_338 = arith.constant 1.600000e+01 : f32
    %918 = vector.broadcast %cst_338 : f32 to vector<1x128xf32>
    %919 = arith.divf %917, %918 : vector<1x128xf32>
    %920 = vector.broadcast %919 : vector<1x128xf32> to vector<4x128xf32>
    %921 = arith.subf %887, %920 : vector<4x128xf32>
    %922 = arith.mulf %921, %921 : vector<4x128xf32>
    %cst_339 = arith.constant dense<0.000000e+00> : vector<128xf32>
    %923 = vector.multi_reduction <add>, %922, %cst_339 [0] : vector<4x128xf32> to vector<128xf32>
    %924 = vector.shape_cast %923 : vector<128xf32> to vector<1x128xf32>
    %cst_340 = arith.constant 0.000000e+00 : f32
    %925 = vector.broadcast %cst_340 : f32 to vector<1x128xf32>
    %926 = arith.addf %925, %924 : vector<1x128xf32>
    %927 = vector.broadcast %919 : vector<1x128xf32> to vector<4x128xf32>
    %928 = arith.subf %888, %927 : vector<4x128xf32>
    %929 = arith.mulf %928, %928 : vector<4x128xf32>
    %cst_341 = arith.constant dense<0.000000e+00> : vector<128xf32>
    %930 = vector.multi_reduction <add>, %929, %cst_341 [0] : vector<4x128xf32> to vector<128xf32>
    %931 = vector.shape_cast %930 : vector<128xf32> to vector<1x128xf32>
    %932 = arith.addf %926, %931 : vector<1x128xf32>
    %933 = vector.broadcast %919 : vector<1x128xf32> to vector<4x128xf32>
    %934 = arith.subf %899, %933 : vector<4x128xf32>
    %935 = arith.mulf %934, %934 : vector<4x128xf32>
    %cst_342 = arith.constant dense<0.000000e+00> : vector<128xf32>
    %936 = vector.multi_reduction <add>, %935, %cst_342 [0] : vector<4x128xf32> to vector<128xf32>
    %937 = vector.shape_cast %936 : vector<128xf32> to vector<1x128xf32>
    %938 = arith.addf %932, %937 : vector<1x128xf32>
    %939 = vector.broadcast %919 : vector<1x128xf32> to vector<4x128xf32>
    %940 = arith.subf %900, %939 : vector<4x128xf32>
    %941 = arith.mulf %940, %940 : vector<4x128xf32>
    %cst_343 = arith.constant dense<0.000000e+00> : vector<128xf32>
    %942 = vector.multi_reduction <add>, %941, %cst_343 [0] : vector<4x128xf32> to vector<128xf32>
    %943 = vector.shape_cast %942 : vector<128xf32> to vector<1x128xf32>
    %944 = arith.addf %938, %943 : vector<1x128xf32>
    %cst_344 = arith.constant 1.600000e+01 : f32
    %945 = vector.broadcast %cst_344 : f32 to vector<1x128xf32>
    %946 = arith.divf %944, %945 : vector<1x128xf32>
    %cst_345 = arith.constant 9.99999974E-6 : f32
    %947 = vector.broadcast %cst_345 : f32 to vector<1x128xf32>
    %948 = arith.addf %946, %947 : vector<1x128xf32>
    %949 = math.rsqrt %948 : vector<1x128xf32>
    %950 = arith.mulf %902, %949 : vector<1x128xf32>
    %951 = arith.mulf %919, %950 : vector<1x128xf32>
    %952 = arith.subf %904, %951 : vector<1x128xf32>
    %953 = vector.broadcast %950 : vector<1x128xf32> to vector<4x128xf32>
    %954 = arith.mulf %887, %953 : vector<4x128xf32>
    %955 = vector.broadcast %952 : vector<1x128xf32> to vector<4x128xf32>
    %956 = arith.addf %954, %955 : vector<4x128xf32>
    %cst_346 = arith.constant 0.000000e+00 : f32
    %957 = vector.broadcast %cst_346 : f32 to vector<4x128xf32>
    %958 = arith.maximumf %956, %957 : vector<4x128xf32>
    %959 = vector.broadcast %950 : vector<1x128xf32> to vector<4x128xf32>
    %960 = arith.mulf %888, %959 : vector<4x128xf32>
    %961 = vector.broadcast %952 : vector<1x128xf32> to vector<4x128xf32>
    %962 = arith.addf %960, %961 : vector<4x128xf32>
    %cst_347 = arith.constant 0.000000e+00 : f32
    %963 = vector.broadcast %cst_347 : f32 to vector<4x128xf32>
    %964 = arith.maximumf %962, %963 : vector<4x128xf32>
    %965 = vector.broadcast %950 : vector<1x128xf32> to vector<4x128xf32>
    %966 = arith.mulf %899, %965 : vector<4x128xf32>
    %967 = vector.broadcast %952 : vector<1x128xf32> to vector<4x128xf32>
    %968 = arith.addf %966, %967 : vector<4x128xf32>
    %cst_348 = arith.constant 0.000000e+00 : f32
    %969 = vector.broadcast %cst_348 : f32 to vector<4x128xf32>
    %970 = arith.maximumf %968, %969 : vector<4x128xf32>
    %971 = vector.broadcast %950 : vector<1x128xf32> to vector<4x128xf32>
    %972 = arith.mulf %900, %971 : vector<4x128xf32>
    %973 = vector.broadcast %952 : vector<1x128xf32> to vector<4x128xf32>
    %974 = arith.addf %972, %973 : vector<4x128xf32>
    %cst_349 = arith.constant 0.000000e+00 : f32
    %975 = vector.broadcast %cst_349 : f32 to vector<4x128xf32>
    %976 = arith.maximumf %974, %975 : vector<4x128xf32>
    %c0_350 = arith.constant 0 : index
    %c0_351 = arith.constant 0 : index
    %c0_352 = arith.constant 0 : index
    %977 = vector.load %arg17[%c0_350, %c0_351, %c0_352] : memref<2x128x256xbf16, #tpu.memory_space<vmem>>, vector<1x128x256xbf16>
    %978 = vector.shape_cast %977 : vector<1x128x256xbf16> to vector<128x256xbf16>
    %c1_353 = arith.constant 1 : index
    %c0_354 = arith.constant 0 : index
    %c0_355 = arith.constant 0 : index
    %979 = vector.load %arg18[%c1_353, %c0_354, %c0_355] : memref<3x16x256xbf16, #tpu.memory_space<vmem>>, vector<1x16x256xbf16>
    %980 = vector.shape_cast %979 : vector<1x16x256xbf16> to vector<16x256xbf16>
    %981 = arith.truncf %958 : vector<4x128xf32> to vector<4x128xbf16>
    %cst_356 = arith.constant dense<0.000000e+00> : vector<4x256xf32>
    %982 = tpu.matmul %981, %978, %cst_356 {dimension_numbers = #tpu.dot_dimension_numbers<[1], [0], [0], [1], [0, 0, 1, 1], [], []>} : vector<4x128xbf16>, vector<128x256xbf16>, vector<4x256xf32> -> vector<4x256xf32>
    %983 = arith.truncf %717 : vector<4x16xf32> to vector<4x16xbf16>
    %cst_357 = arith.constant dense<0.000000e+00> : vector<4x256xf32>
    %984 = tpu.matmul %983, %980, %cst_357 {dimension_numbers = #tpu.dot_dimension_numbers<[1], [0], [0], [1], [0, 0, 1, 1], [], []>} : vector<4x16xbf16>, vector<16x256xbf16>, vector<4x256xf32> -> vector<4x256xf32>
    %985 = arith.addf %982, %984 : vector<4x256xf32>
    %986 = arith.addf %985, %868 : vector<4x256xf32>
    %987 = vector.extract_strided_slice %986 {offsets = [0, 0], sizes = [4, 128], strides = [1, 1]} : vector<4x256xf32> to vector<4x128xf32>
    %988 = vector.extract_strided_slice %986 {offsets = [0, 128], sizes = [4, 128], strides = [1, 1]} : vector<4x256xf32> to vector<4x128xf32>
    %989 = arith.truncf %964 : vector<4x128xf32> to vector<4x128xbf16>
    %cst_358 = arith.constant dense<0.000000e+00> : vector<4x256xf32>
    %990 = tpu.matmul %989, %978, %cst_358 {dimension_numbers = #tpu.dot_dimension_numbers<[1], [0], [0], [1], [0, 0, 1, 1], [], []>} : vector<4x128xbf16>, vector<128x256xbf16>, vector<4x256xf32> -> vector<4x256xf32>
    %991 = arith.truncf %726 : vector<4x16xf32> to vector<4x16xbf16>
    %cst_359 = arith.constant dense<0.000000e+00> : vector<4x256xf32>
    %992 = tpu.matmul %991, %980, %cst_359 {dimension_numbers = #tpu.dot_dimension_numbers<[1], [0], [0], [1], [0, 0, 1, 1], [], []>} : vector<4x16xbf16>, vector<16x256xbf16>, vector<4x256xf32> -> vector<4x256xf32>
    %993 = arith.addf %990, %992 : vector<4x256xf32>
    %994 = arith.addf %993, %868 : vector<4x256xf32>
    %995 = vector.extract_strided_slice %994 {offsets = [0, 0], sizes = [4, 128], strides = [1, 1]} : vector<4x256xf32> to vector<4x128xf32>
    %996 = vector.extract_strided_slice %994 {offsets = [0, 128], sizes = [4, 128], strides = [1, 1]} : vector<4x256xf32> to vector<4x128xf32>
    %997 = arith.truncf %970 : vector<4x128xf32> to vector<4x128xbf16>
    %cst_360 = arith.constant dense<0.000000e+00> : vector<4x256xf32>
    %998 = tpu.matmul %997, %978, %cst_360 {dimension_numbers = #tpu.dot_dimension_numbers<[1], [0], [0], [1], [0, 0, 1, 1], [], []>} : vector<4x128xbf16>, vector<128x256xbf16>, vector<4x256xf32> -> vector<4x256xf32>
    %999 = arith.truncf %735 : vector<4x16xf32> to vector<4x16xbf16>
    %cst_361 = arith.constant dense<0.000000e+00> : vector<4x256xf32>
    %1000 = tpu.matmul %999, %980, %cst_361 {dimension_numbers = #tpu.dot_dimension_numbers<[1], [0], [0], [1], [0, 0, 1, 1], [], []>} : vector<4x16xbf16>, vector<16x256xbf16>, vector<4x256xf32> -> vector<4x256xf32>
    %1001 = arith.addf %998, %1000 : vector<4x256xf32>
    %1002 = arith.addf %1001, %868 : vector<4x256xf32>
    %1003 = vector.extract_strided_slice %1002 {offsets = [0, 0], sizes = [4, 128], strides = [1, 1]} : vector<4x256xf32> to vector<4x128xf32>
    %1004 = vector.extract_strided_slice %1002 {offsets = [0, 128], sizes = [4, 128], strides = [1, 1]} : vector<4x256xf32> to vector<4x128xf32>
    %1005 = arith.truncf %976 : vector<4x128xf32> to vector<4x128xbf16>
    %cst_362 = arith.constant dense<0.000000e+00> : vector<4x256xf32>
    %1006 = tpu.matmul %1005, %978, %cst_362 {dimension_numbers = #tpu.dot_dimension_numbers<[1], [0], [0], [1], [0, 0, 1, 1], [], []>} : vector<4x128xbf16>, vector<128x256xbf16>, vector<4x256xf32> -> vector<4x256xf32>
    %1007 = arith.truncf %744 : vector<4x16xf32> to vector<4x16xbf16>
    %cst_363 = arith.constant dense<0.000000e+00> : vector<4x256xf32>
    %1008 = tpu.matmul %1007, %980, %cst_363 {dimension_numbers = #tpu.dot_dimension_numbers<[1], [0], [0], [1], [0, 0, 1, 1], [], []>} : vector<4x16xbf16>, vector<16x256xbf16>, vector<4x256xf32> -> vector<4x256xf32>
    %1009 = arith.addf %1006, %1008 : vector<4x256xf32>
    %1010 = arith.addf %1009, %868 : vector<4x256xf32>
    %1011 = vector.extract_strided_slice %1010 {offsets = [0, 0], sizes = [4, 128], strides = [1, 1]} : vector<4x256xf32> to vector<4x128xf32>
    %1012 = vector.extract_strided_slice %1010 {offsets = [0, 128], sizes = [4, 128], strides = [1, 1]} : vector<4x256xf32> to vector<4x128xf32>
    %c1_364 = arith.constant 1 : index
    %c0_365 = arith.constant 0 : index
    %c0_366 = arith.constant 0 : index
    %1013 = vector.load %arg21[%c1_364, %c0_365, %c0_366] : memref<3x1x128xf32, #tpu.memory_space<vmem>>, vector<1x1x128xf32>
    %1014 = vector.shape_cast %1013 : vector<1x1x128xf32> to vector<1x128xf32>
    %c1_367 = arith.constant 1 : index
    %c0_368 = arith.constant 0 : index
    %c0_369 = arith.constant 0 : index
    %1015 = vector.load %arg22[%c1_367, %c0_368, %c0_369] : memref<3x1x128xf32, #tpu.memory_space<vmem>>, vector<1x1x128xf32>
    %1016 = vector.shape_cast %1015 : vector<1x1x128xf32> to vector<1x128xf32>
    %cst_370 = arith.constant dense<0.000000e+00> : vector<128xf32>
    %1017 = vector.multi_reduction <add>, %987, %cst_370 [0] : vector<4x128xf32> to vector<128xf32>
    %1018 = vector.shape_cast %1017 : vector<128xf32> to vector<1x128xf32>
    %cst_371 = arith.constant 0.000000e+00 : f32
    %1019 = vector.broadcast %cst_371 : f32 to vector<1x128xf32>
    %1020 = arith.addf %1019, %1018 : vector<1x128xf32>
    %cst_372 = arith.constant dense<0.000000e+00> : vector<128xf32>
    %1021 = vector.multi_reduction <add>, %988, %cst_372 [0] : vector<4x128xf32> to vector<128xf32>
    %1022 = vector.shape_cast %1021 : vector<128xf32> to vector<1x128xf32>
    %1023 = arith.addf %1020, %1022 : vector<1x128xf32>
    %cst_373 = arith.constant dense<0.000000e+00> : vector<128xf32>
    %1024 = vector.multi_reduction <add>, %995, %cst_373 [0] : vector<4x128xf32> to vector<128xf32>
    %1025 = vector.shape_cast %1024 : vector<128xf32> to vector<1x128xf32>
    %1026 = arith.addf %1023, %1025 : vector<1x128xf32>
    %cst_374 = arith.constant dense<0.000000e+00> : vector<128xf32>
    %1027 = vector.multi_reduction <add>, %996, %cst_374 [0] : vector<4x128xf32> to vector<128xf32>
    %1028 = vector.shape_cast %1027 : vector<128xf32> to vector<1x128xf32>
    %1029 = arith.addf %1026, %1028 : vector<1x128xf32>
    %cst_375 = arith.constant dense<0.000000e+00> : vector<128xf32>
    %1030 = vector.multi_reduction <add>, %1003, %cst_375 [0] : vector<4x128xf32> to vector<128xf32>
    %1031 = vector.shape_cast %1030 : vector<128xf32> to vector<1x128xf32>
    %1032 = arith.addf %1029, %1031 : vector<1x128xf32>
    %cst_376 = arith.constant dense<0.000000e+00> : vector<128xf32>
    %1033 = vector.multi_reduction <add>, %1004, %cst_376 [0] : vector<4x128xf32> to vector<128xf32>
    %1034 = vector.shape_cast %1033 : vector<128xf32> to vector<1x128xf32>
    %1035 = arith.addf %1032, %1034 : vector<1x128xf32>
    %cst_377 = arith.constant dense<0.000000e+00> : vector<128xf32>
    %1036 = vector.multi_reduction <add>, %1011, %cst_377 [0] : vector<4x128xf32> to vector<128xf32>
    %1037 = vector.shape_cast %1036 : vector<128xf32> to vector<1x128xf32>
    %1038 = arith.addf %1035, %1037 : vector<1x128xf32>
    %cst_378 = arith.constant dense<0.000000e+00> : vector<128xf32>
    %1039 = vector.multi_reduction <add>, %1012, %cst_378 [0] : vector<4x128xf32> to vector<128xf32>
    %1040 = vector.shape_cast %1039 : vector<128xf32> to vector<1x128xf32>
    %1041 = arith.addf %1038, %1040 : vector<1x128xf32>
    %cst_379 = arith.constant 3.200000e+01 : f32
    %1042 = vector.broadcast %cst_379 : f32 to vector<1x128xf32>
    %1043 = arith.divf %1041, %1042 : vector<1x128xf32>
    %1044 = vector.broadcast %1043 : vector<1x128xf32> to vector<4x128xf32>
    %1045 = arith.subf %987, %1044 : vector<4x128xf32>
    %1046 = arith.mulf %1045, %1045 : vector<4x128xf32>
    %cst_380 = arith.constant dense<0.000000e+00> : vector<128xf32>
    %1047 = vector.multi_reduction <add>, %1046, %cst_380 [0] : vector<4x128xf32> to vector<128xf32>
    %1048 = vector.shape_cast %1047 : vector<128xf32> to vector<1x128xf32>
    %cst_381 = arith.constant 0.000000e+00 : f32
    %1049 = vector.broadcast %cst_381 : f32 to vector<1x128xf32>
    %1050 = arith.addf %1049, %1048 : vector<1x128xf32>
    %1051 = vector.broadcast %1043 : vector<1x128xf32> to vector<4x128xf32>
    %1052 = arith.subf %988, %1051 : vector<4x128xf32>
    %1053 = arith.mulf %1052, %1052 : vector<4x128xf32>
    %cst_382 = arith.constant dense<0.000000e+00> : vector<128xf32>
    %1054 = vector.multi_reduction <add>, %1053, %cst_382 [0] : vector<4x128xf32> to vector<128xf32>
    %1055 = vector.shape_cast %1054 : vector<128xf32> to vector<1x128xf32>
    %1056 = arith.addf %1050, %1055 : vector<1x128xf32>
    %1057 = vector.broadcast %1043 : vector<1x128xf32> to vector<4x128xf32>
    %1058 = arith.subf %995, %1057 : vector<4x128xf32>
    %1059 = arith.mulf %1058, %1058 : vector<4x128xf32>
    %cst_383 = arith.constant dense<0.000000e+00> : vector<128xf32>
    %1060 = vector.multi_reduction <add>, %1059, %cst_383 [0] : vector<4x128xf32> to vector<128xf32>
    %1061 = vector.shape_cast %1060 : vector<128xf32> to vector<1x128xf32>
    %1062 = arith.addf %1056, %1061 : vector<1x128xf32>
    %1063 = vector.broadcast %1043 : vector<1x128xf32> to vector<4x128xf32>
    %1064 = arith.subf %996, %1063 : vector<4x128xf32>
    %1065 = arith.mulf %1064, %1064 : vector<4x128xf32>
    %cst_384 = arith.constant dense<0.000000e+00> : vector<128xf32>
    %1066 = vector.multi_reduction <add>, %1065, %cst_384 [0] : vector<4x128xf32> to vector<128xf32>
    %1067 = vector.shape_cast %1066 : vector<128xf32> to vector<1x128xf32>
    %1068 = arith.addf %1062, %1067 : vector<1x128xf32>
    %1069 = vector.broadcast %1043 : vector<1x128xf32> to vector<4x128xf32>
    %1070 = arith.subf %1003, %1069 : vector<4x128xf32>
    %1071 = arith.mulf %1070, %1070 : vector<4x128xf32>
    %cst_385 = arith.constant dense<0.000000e+00> : vector<128xf32>
    %1072 = vector.multi_reduction <add>, %1071, %cst_385 [0] : vector<4x128xf32> to vector<128xf32>
    %1073 = vector.shape_cast %1072 : vector<128xf32> to vector<1x128xf32>
    %1074 = arith.addf %1068, %1073 : vector<1x128xf32>
    %1075 = vector.broadcast %1043 : vector<1x128xf32> to vector<4x128xf32>
    %1076 = arith.subf %1004, %1075 : vector<4x128xf32>
    %1077 = arith.mulf %1076, %1076 : vector<4x128xf32>
    %cst_386 = arith.constant dense<0.000000e+00> : vector<128xf32>
    %1078 = vector.multi_reduction <add>, %1077, %cst_386 [0] : vector<4x128xf32> to vector<128xf32>
    %1079 = vector.shape_cast %1078 : vector<128xf32> to vector<1x128xf32>
    %1080 = arith.addf %1074, %1079 : vector<1x128xf32>
    %1081 = vector.broadcast %1043 : vector<1x128xf32> to vector<4x128xf32>
    %1082 = arith.subf %1011, %1081 : vector<4x128xf32>
    %1083 = arith.mulf %1082, %1082 : vector<4x128xf32>
    %cst_387 = arith.constant dense<0.000000e+00> : vector<128xf32>
    %1084 = vector.multi_reduction <add>, %1083, %cst_387 [0] : vector<4x128xf32> to vector<128xf32>
    %1085 = vector.shape_cast %1084 : vector<128xf32> to vector<1x128xf32>
    %1086 = arith.addf %1080, %1085 : vector<1x128xf32>
    %1087 = vector.broadcast %1043 : vector<1x128xf32> to vector<4x128xf32>
    %1088 = arith.subf %1012, %1087 : vector<4x128xf32>
    %1089 = arith.mulf %1088, %1088 : vector<4x128xf32>
    %cst_388 = arith.constant dense<0.000000e+00> : vector<128xf32>
    %1090 = vector.multi_reduction <add>, %1089, %cst_388 [0] : vector<4x128xf32> to vector<128xf32>
    %1091 = vector.shape_cast %1090 : vector<128xf32> to vector<1x128xf32>
    %1092 = arith.addf %1086, %1091 : vector<1x128xf32>
    %cst_389 = arith.constant 3.200000e+01 : f32
    %1093 = vector.broadcast %cst_389 : f32 to vector<1x128xf32>
    %1094 = arith.divf %1092, %1093 : vector<1x128xf32>
    %cst_390 = arith.constant 9.99999974E-6 : f32
    %1095 = vector.broadcast %cst_390 : f32 to vector<1x128xf32>
    %1096 = arith.addf %1094, %1095 : vector<1x128xf32>
    %1097 = math.rsqrt %1096 : vector<1x128xf32>
    %1098 = arith.mulf %1014, %1097 : vector<1x128xf32>
    %1099 = arith.mulf %1043, %1098 : vector<1x128xf32>
    %1100 = arith.subf %1016, %1099 : vector<1x128xf32>
    %1101 = vector.broadcast %1098 : vector<1x128xf32> to vector<4x128xf32>
    %1102 = arith.mulf %987, %1101 : vector<4x128xf32>
    %1103 = vector.broadcast %1100 : vector<1x128xf32> to vector<4x128xf32>
    %1104 = arith.addf %1102, %1103 : vector<4x128xf32>
    %cst_391 = arith.constant 0.000000e+00 : f32
    %1105 = vector.broadcast %cst_391 : f32 to vector<4x128xf32>
    %1106 = arith.maximumf %1104, %1105 : vector<4x128xf32>
    %1107 = vector.broadcast %1098 : vector<1x128xf32> to vector<4x128xf32>
    %1108 = arith.mulf %988, %1107 : vector<4x128xf32>
    %1109 = vector.broadcast %1100 : vector<1x128xf32> to vector<4x128xf32>
    %1110 = arith.addf %1108, %1109 : vector<4x128xf32>
    %cst_392 = arith.constant 0.000000e+00 : f32
    %1111 = vector.broadcast %cst_392 : f32 to vector<4x128xf32>
    %1112 = arith.maximumf %1110, %1111 : vector<4x128xf32>
    %1113 = vector.broadcast %1098 : vector<1x128xf32> to vector<4x128xf32>
    %1114 = arith.mulf %995, %1113 : vector<4x128xf32>
    %1115 = vector.broadcast %1100 : vector<1x128xf32> to vector<4x128xf32>
    %1116 = arith.addf %1114, %1115 : vector<4x128xf32>
    %cst_393 = arith.constant 0.000000e+00 : f32
    %1117 = vector.broadcast %cst_393 : f32 to vector<4x128xf32>
    %1118 = arith.maximumf %1116, %1117 : vector<4x128xf32>
    %1119 = vector.broadcast %1098 : vector<1x128xf32> to vector<4x128xf32>
    %1120 = arith.mulf %996, %1119 : vector<4x128xf32>
    %1121 = vector.broadcast %1100 : vector<1x128xf32> to vector<4x128xf32>
    %1122 = arith.addf %1120, %1121 : vector<4x128xf32>
    %cst_394 = arith.constant 0.000000e+00 : f32
    %1123 = vector.broadcast %cst_394 : f32 to vector<4x128xf32>
    %1124 = arith.maximumf %1122, %1123 : vector<4x128xf32>
    %1125 = vector.broadcast %1098 : vector<1x128xf32> to vector<4x128xf32>
    %1126 = arith.mulf %1003, %1125 : vector<4x128xf32>
    %1127 = vector.broadcast %1100 : vector<1x128xf32> to vector<4x128xf32>
    %1128 = arith.addf %1126, %1127 : vector<4x128xf32>
    %cst_395 = arith.constant 0.000000e+00 : f32
    %1129 = vector.broadcast %cst_395 : f32 to vector<4x128xf32>
    %1130 = arith.maximumf %1128, %1129 : vector<4x128xf32>
    %1131 = vector.broadcast %1098 : vector<1x128xf32> to vector<4x128xf32>
    %1132 = arith.mulf %1004, %1131 : vector<4x128xf32>
    %1133 = vector.broadcast %1100 : vector<1x128xf32> to vector<4x128xf32>
    %1134 = arith.addf %1132, %1133 : vector<4x128xf32>
    %cst_396 = arith.constant 0.000000e+00 : f32
    %1135 = vector.broadcast %cst_396 : f32 to vector<4x128xf32>
    %1136 = arith.maximumf %1134, %1135 : vector<4x128xf32>
    %1137 = vector.broadcast %1098 : vector<1x128xf32> to vector<4x128xf32>
    %1138 = arith.mulf %1011, %1137 : vector<4x128xf32>
    %1139 = vector.broadcast %1100 : vector<1x128xf32> to vector<4x128xf32>
    %1140 = arith.addf %1138, %1139 : vector<4x128xf32>
    %cst_397 = arith.constant 0.000000e+00 : f32
    %1141 = vector.broadcast %cst_397 : f32 to vector<4x128xf32>
    %1142 = arith.maximumf %1140, %1141 : vector<4x128xf32>
    %1143 = vector.broadcast %1098 : vector<1x128xf32> to vector<4x128xf32>
    %1144 = arith.mulf %1012, %1143 : vector<4x128xf32>
    %1145 = vector.broadcast %1100 : vector<1x128xf32> to vector<4x128xf32>
    %1146 = arith.addf %1144, %1145 : vector<4x128xf32>
    %cst_398 = arith.constant 0.000000e+00 : f32
    %1147 = vector.broadcast %cst_398 : f32 to vector<4x128xf32>
    %1148 = arith.maximumf %1146, %1147 : vector<4x128xf32>
    %c1_399 = arith.constant 1 : index
    %c0_400 = arith.constant 0 : index
    %c0_401 = arith.constant 0 : index
    %1149 = vector.load %arg17[%c1_399, %c0_400, %c0_401] : memref<2x128x256xbf16, #tpu.memory_space<vmem>>, vector<1x128x256xbf16>
    %1150 = vector.shape_cast %1149 : vector<1x128x256xbf16> to vector<128x256xbf16>
    %c2_402 = arith.constant 2 : index
    %c0_403 = arith.constant 0 : index
    %c0_404 = arith.constant 0 : index
    %1151 = vector.load %arg18[%c2_402, %c0_403, %c0_404] : memref<3x16x256xbf16, #tpu.memory_space<vmem>>, vector<1x16x256xbf16>
    %1152 = vector.shape_cast %1151 : vector<1x16x256xbf16> to vector<16x256xbf16>
    %1153 = arith.truncf %1106 : vector<4x128xf32> to vector<4x128xbf16>
    %cst_405 = arith.constant dense<0.000000e+00> : vector<4x256xf32>
    %1154 = tpu.matmul %1153, %1150, %cst_405 {dimension_numbers = #tpu.dot_dimension_numbers<[1], [0], [0], [1], [0, 0, 1, 1], [], []>} : vector<4x128xbf16>, vector<128x256xbf16>, vector<4x256xf32> -> vector<4x256xf32>
    %1155 = arith.truncf %559 : vector<4x16xf32> to vector<4x16xbf16>
    %cst_406 = arith.constant dense<0.000000e+00> : vector<4x256xf32>
    %1156 = tpu.matmul %1155, %1152, %cst_406 {dimension_numbers = #tpu.dot_dimension_numbers<[1], [0], [0], [1], [0, 0, 1, 1], [], []>} : vector<4x16xbf16>, vector<16x256xbf16>, vector<4x256xf32> -> vector<4x256xf32>
    %1157 = arith.addf %1154, %1156 : vector<4x256xf32>
    %1158 = arith.addf %1157, %876 : vector<4x256xf32>
    %1159 = vector.extract_strided_slice %1158 {offsets = [0, 0], sizes = [4, 128], strides = [1, 1]} : vector<4x256xf32> to vector<4x128xf32>
    %1160 = vector.extract_strided_slice %1158 {offsets = [0, 128], sizes = [4, 128], strides = [1, 1]} : vector<4x256xf32> to vector<4x128xf32>
    %1161 = arith.truncf %1112 : vector<4x128xf32> to vector<4x128xbf16>
    %cst_407 = arith.constant dense<0.000000e+00> : vector<4x256xf32>
    %1162 = tpu.matmul %1161, %1150, %cst_407 {dimension_numbers = #tpu.dot_dimension_numbers<[1], [0], [0], [1], [0, 0, 1, 1], [], []>} : vector<4x128xbf16>, vector<128x256xbf16>, vector<4x256xf32> -> vector<4x256xf32>
    %1163 = arith.truncf %568 : vector<4x16xf32> to vector<4x16xbf16>
    %cst_408 = arith.constant dense<0.000000e+00> : vector<4x256xf32>
    %1164 = tpu.matmul %1163, %1152, %cst_408 {dimension_numbers = #tpu.dot_dimension_numbers<[1], [0], [0], [1], [0, 0, 1, 1], [], []>} : vector<4x16xbf16>, vector<16x256xbf16>, vector<4x256xf32> -> vector<4x256xf32>
    %1165 = arith.addf %1162, %1164 : vector<4x256xf32>
    %1166 = arith.addf %1165, %876 : vector<4x256xf32>
    %1167 = vector.extract_strided_slice %1166 {offsets = [0, 0], sizes = [4, 128], strides = [1, 1]} : vector<4x256xf32> to vector<4x128xf32>
    %1168 = vector.extract_strided_slice %1166 {offsets = [0, 128], sizes = [4, 128], strides = [1, 1]} : vector<4x256xf32> to vector<4x128xf32>
    %1169 = arith.truncf %1118 : vector<4x128xf32> to vector<4x128xbf16>
    %cst_409 = arith.constant dense<0.000000e+00> : vector<4x256xf32>
    %1170 = tpu.matmul %1169, %1150, %cst_409 {dimension_numbers = #tpu.dot_dimension_numbers<[1], [0], [0], [1], [0, 0, 1, 1], [], []>} : vector<4x128xbf16>, vector<128x256xbf16>, vector<4x256xf32> -> vector<4x256xf32>
    %1171 = arith.truncf %577 : vector<4x16xf32> to vector<4x16xbf16>
    %cst_410 = arith.constant dense<0.000000e+00> : vector<4x256xf32>
    %1172 = tpu.matmul %1171, %1152, %cst_410 {dimension_numbers = #tpu.dot_dimension_numbers<[1], [0], [0], [1], [0, 0, 1, 1], [], []>} : vector<4x16xbf16>, vector<16x256xbf16>, vector<4x256xf32> -> vector<4x256xf32>
    %1173 = arith.addf %1170, %1172 : vector<4x256xf32>
    %1174 = arith.addf %1173, %876 : vector<4x256xf32>
    %1175 = vector.extract_strided_slice %1174 {offsets = [0, 0], sizes = [4, 128], strides = [1, 1]} : vector<4x256xf32> to vector<4x128xf32>
    %1176 = vector.extract_strided_slice %1174 {offsets = [0, 128], sizes = [4, 128], strides = [1, 1]} : vector<4x256xf32> to vector<4x128xf32>
    %1177 = arith.truncf %1124 : vector<4x128xf32> to vector<4x128xbf16>
    %cst_411 = arith.constant dense<0.000000e+00> : vector<4x256xf32>
    %1178 = tpu.matmul %1177, %1150, %cst_411 {dimension_numbers = #tpu.dot_dimension_numbers<[1], [0], [0], [1], [0, 0, 1, 1], [], []>} : vector<4x128xbf16>, vector<128x256xbf16>, vector<4x256xf32> -> vector<4x256xf32>
    %1179 = arith.truncf %586 : vector<4x16xf32> to vector<4x16xbf16>
    %cst_412 = arith.constant dense<0.000000e+00> : vector<4x256xf32>
    %1180 = tpu.matmul %1179, %1152, %cst_412 {dimension_numbers = #tpu.dot_dimension_numbers<[1], [0], [0], [1], [0, 0, 1, 1], [], []>} : vector<4x16xbf16>, vector<16x256xbf16>, vector<4x256xf32> -> vector<4x256xf32>
    %1181 = arith.addf %1178, %1180 : vector<4x256xf32>
    %1182 = arith.addf %1181, %876 : vector<4x256xf32>
    %1183 = vector.extract_strided_slice %1182 {offsets = [0, 0], sizes = [4, 128], strides = [1, 1]} : vector<4x256xf32> to vector<4x128xf32>
    %1184 = vector.extract_strided_slice %1182 {offsets = [0, 128], sizes = [4, 128], strides = [1, 1]} : vector<4x256xf32> to vector<4x128xf32>
    %1185 = arith.truncf %1130 : vector<4x128xf32> to vector<4x128xbf16>
    %cst_413 = arith.constant dense<0.000000e+00> : vector<4x256xf32>
    %1186 = tpu.matmul %1185, %1150, %cst_413 {dimension_numbers = #tpu.dot_dimension_numbers<[1], [0], [0], [1], [0, 0, 1, 1], [], []>} : vector<4x128xbf16>, vector<128x256xbf16>, vector<4x256xf32> -> vector<4x256xf32>
    %1187 = arith.truncf %595 : vector<4x16xf32> to vector<4x16xbf16>
    %cst_414 = arith.constant dense<0.000000e+00> : vector<4x256xf32>
    %1188 = tpu.matmul %1187, %1152, %cst_414 {dimension_numbers = #tpu.dot_dimension_numbers<[1], [0], [0], [1], [0, 0, 1, 1], [], []>} : vector<4x16xbf16>, vector<16x256xbf16>, vector<4x256xf32> -> vector<4x256xf32>
    %1189 = arith.addf %1186, %1188 : vector<4x256xf32>
    %1190 = arith.addf %1189, %876 : vector<4x256xf32>
    %1191 = vector.extract_strided_slice %1190 {offsets = [0, 0], sizes = [4, 128], strides = [1, 1]} : vector<4x256xf32> to vector<4x128xf32>
    %1192 = vector.extract_strided_slice %1190 {offsets = [0, 128], sizes = [4, 128], strides = [1, 1]} : vector<4x256xf32> to vector<4x128xf32>
    %1193 = arith.truncf %1136 : vector<4x128xf32> to vector<4x128xbf16>
    %cst_415 = arith.constant dense<0.000000e+00> : vector<4x256xf32>
    %1194 = tpu.matmul %1193, %1150, %cst_415 {dimension_numbers = #tpu.dot_dimension_numbers<[1], [0], [0], [1], [0, 0, 1, 1], [], []>} : vector<4x128xbf16>, vector<128x256xbf16>, vector<4x256xf32> -> vector<4x256xf32>
    %1195 = arith.truncf %604 : vector<4x16xf32> to vector<4x16xbf16>
    %cst_416 = arith.constant dense<0.000000e+00> : vector<4x256xf32>
    %1196 = tpu.matmul %1195, %1152, %cst_416 {dimension_numbers = #tpu.dot_dimension_numbers<[1], [0], [0], [1], [0, 0, 1, 1], [], []>} : vector<4x16xbf16>, vector<16x256xbf16>, vector<4x256xf32> -> vector<4x256xf32>
    %1197 = arith.addf %1194, %1196 : vector<4x256xf32>
    %1198 = arith.addf %1197, %876 : vector<4x256xf32>
    %1199 = vector.extract_strided_slice %1198 {offsets = [0, 0], sizes = [4, 128], strides = [1, 1]} : vector<4x256xf32> to vector<4x128xf32>
    %1200 = vector.extract_strided_slice %1198 {offsets = [0, 128], sizes = [4, 128], strides = [1, 1]} : vector<4x256xf32> to vector<4x128xf32>
    %1201 = arith.truncf %1142 : vector<4x128xf32> to vector<4x128xbf16>
    %cst_417 = arith.constant dense<0.000000e+00> : vector<4x256xf32>
    %1202 = tpu.matmul %1201, %1150, %cst_417 {dimension_numbers = #tpu.dot_dimension_numbers<[1], [0], [0], [1], [0, 0, 1, 1], [], []>} : vector<4x128xbf16>, vector<128x256xbf16>, vector<4x256xf32> -> vector<4x256xf32>
    %1203 = arith.truncf %613 : vector<4x16xf32> to vector<4x16xbf16>
    %cst_418 = arith.constant dense<0.000000e+00> : vector<4x256xf32>
    %1204 = tpu.matmul %1203, %1152, %cst_418 {dimension_numbers = #tpu.dot_dimension_numbers<[1], [0], [0], [1], [0, 0, 1, 1], [], []>} : vector<4x16xbf16>, vector<16x256xbf16>, vector<4x256xf32> -> vector<4x256xf32>
    %1205 = arith.addf %1202, %1204 : vector<4x256xf32>
    %1206 = arith.addf %1205, %876 : vector<4x256xf32>
    %1207 = vector.extract_strided_slice %1206 {offsets = [0, 0], sizes = [4, 128], strides = [1, 1]} : vector<4x256xf32> to vector<4x128xf32>
    %1208 = vector.extract_strided_slice %1206 {offsets = [0, 128], sizes = [4, 128], strides = [1, 1]} : vector<4x256xf32> to vector<4x128xf32>
    %1209 = arith.truncf %1148 : vector<4x128xf32> to vector<4x128xbf16>
    %cst_419 = arith.constant dense<0.000000e+00> : vector<4x256xf32>
    %1210 = tpu.matmul %1209, %1150, %cst_419 {dimension_numbers = #tpu.dot_dimension_numbers<[1], [0], [0], [1], [0, 0, 1, 1], [], []>} : vector<4x128xbf16>, vector<128x256xbf16>, vector<4x256xf32> -> vector<4x256xf32>
    %1211 = arith.truncf %622 : vector<4x16xf32> to vector<4x16xbf16>
    %cst_420 = arith.constant dense<0.000000e+00> : vector<4x256xf32>
    %1212 = tpu.matmul %1211, %1152, %cst_420 {dimension_numbers = #tpu.dot_dimension_numbers<[1], [0], [0], [1], [0, 0, 1, 1], [], []>} : vector<4x16xbf16>, vector<16x256xbf16>, vector<4x256xf32> -> vector<4x256xf32>
    %1213 = arith.addf %1210, %1212 : vector<4x256xf32>
    %1214 = arith.addf %1213, %876 : vector<4x256xf32>
    %1215 = vector.extract_strided_slice %1214 {offsets = [0, 0], sizes = [4, 128], strides = [1, 1]} : vector<4x256xf32> to vector<4x128xf32>
    %1216 = vector.extract_strided_slice %1214 {offsets = [0, 128], sizes = [4, 128], strides = [1, 1]} : vector<4x256xf32> to vector<4x128xf32>
    %c2_421 = arith.constant 2 : index
    %c0_422 = arith.constant 0 : index
    %c0_423 = arith.constant 0 : index
    %1217 = vector.load %arg21[%c2_421, %c0_422, %c0_423] : memref<3x1x128xf32, #tpu.memory_space<vmem>>, vector<1x1x128xf32>
    %1218 = vector.shape_cast %1217 : vector<1x1x128xf32> to vector<1x128xf32>
    %c2_424 = arith.constant 2 : index
    %c0_425 = arith.constant 0 : index
    %c0_426 = arith.constant 0 : index
    %1219 = vector.load %arg22[%c2_424, %c0_425, %c0_426] : memref<3x1x128xf32, #tpu.memory_space<vmem>>, vector<1x1x128xf32>
    %1220 = vector.shape_cast %1219 : vector<1x1x128xf32> to vector<1x128xf32>
    %cst_427 = arith.constant dense<0.000000e+00> : vector<128xf32>
    %1221 = vector.multi_reduction <add>, %1159, %cst_427 [0] : vector<4x128xf32> to vector<128xf32>
    %1222 = vector.shape_cast %1221 : vector<128xf32> to vector<1x128xf32>
    %cst_428 = arith.constant 0.000000e+00 : f32
    %1223 = vector.broadcast %cst_428 : f32 to vector<1x128xf32>
    %1224 = arith.addf %1223, %1222 : vector<1x128xf32>
    %cst_429 = arith.constant dense<0.000000e+00> : vector<128xf32>
    %1225 = vector.multi_reduction <add>, %1160, %cst_429 [0] : vector<4x128xf32> to vector<128xf32>
    %1226 = vector.shape_cast %1225 : vector<128xf32> to vector<1x128xf32>
    %1227 = arith.addf %1224, %1226 : vector<1x128xf32>
    %cst_430 = arith.constant dense<0.000000e+00> : vector<128xf32>
    %1228 = vector.multi_reduction <add>, %1167, %cst_430 [0] : vector<4x128xf32> to vector<128xf32>
    %1229 = vector.shape_cast %1228 : vector<128xf32> to vector<1x128xf32>
    %1230 = arith.addf %1227, %1229 : vector<1x128xf32>
    %cst_431 = arith.constant dense<0.000000e+00> : vector<128xf32>
    %1231 = vector.multi_reduction <add>, %1168, %cst_431 [0] : vector<4x128xf32> to vector<128xf32>
    %1232 = vector.shape_cast %1231 : vector<128xf32> to vector<1x128xf32>
    %1233 = arith.addf %1230, %1232 : vector<1x128xf32>
    %cst_432 = arith.constant dense<0.000000e+00> : vector<128xf32>
    %1234 = vector.multi_reduction <add>, %1175, %cst_432 [0] : vector<4x128xf32> to vector<128xf32>
    %1235 = vector.shape_cast %1234 : vector<128xf32> to vector<1x128xf32>
    %1236 = arith.addf %1233, %1235 : vector<1x128xf32>
    %cst_433 = arith.constant dense<0.000000e+00> : vector<128xf32>
    %1237 = vector.multi_reduction <add>, %1176, %cst_433 [0] : vector<4x128xf32> to vector<128xf32>
    %1238 = vector.shape_cast %1237 : vector<128xf32> to vector<1x128xf32>
    %1239 = arith.addf %1236, %1238 : vector<1x128xf32>
    %cst_434 = arith.constant dense<0.000000e+00> : vector<128xf32>
    %1240 = vector.multi_reduction <add>, %1183, %cst_434 [0] : vector<4x128xf32> to vector<128xf32>
    %1241 = vector.shape_cast %1240 : vector<128xf32> to vector<1x128xf32>
    %1242 = arith.addf %1239, %1241 : vector<1x128xf32>
    %cst_435 = arith.constant dense<0.000000e+00> : vector<128xf32>
    %1243 = vector.multi_reduction <add>, %1184, %cst_435 [0] : vector<4x128xf32> to vector<128xf32>
    %1244 = vector.shape_cast %1243 : vector<128xf32> to vector<1x128xf32>
    %1245 = arith.addf %1242, %1244 : vector<1x128xf32>
    %cst_436 = arith.constant dense<0.000000e+00> : vector<128xf32>
    %1246 = vector.multi_reduction <add>, %1191, %cst_436 [0] : vector<4x128xf32> to vector<128xf32>
    %1247 = vector.shape_cast %1246 : vector<128xf32> to vector<1x128xf32>
    %1248 = arith.addf %1245, %1247 : vector<1x128xf32>
    %cst_437 = arith.constant dense<0.000000e+00> : vector<128xf32>
    %1249 = vector.multi_reduction <add>, %1192, %cst_437 [0] : vector<4x128xf32> to vector<128xf32>
    %1250 = vector.shape_cast %1249 : vector<128xf32> to vector<1x128xf32>
    %1251 = arith.addf %1248, %1250 : vector<1x128xf32>
    %cst_438 = arith.constant dense<0.000000e+00> : vector<128xf32>
    %1252 = vector.multi_reduction <add>, %1199, %cst_438 [0] : vector<4x128xf32> to vector<128xf32>
    %1253 = vector.shape_cast %1252 : vector<128xf32> to vector<1x128xf32>
    %1254 = arith.addf %1251, %1253 : vector<1x128xf32>
    %cst_439 = arith.constant dense<0.000000e+00> : vector<128xf32>
    %1255 = vector.multi_reduction <add>, %1200, %cst_439 [0] : vector<4x128xf32> to vector<128xf32>
    %1256 = vector.shape_cast %1255 : vector<128xf32> to vector<1x128xf32>
    %1257 = arith.addf %1254, %1256 : vector<1x128xf32>
    %cst_440 = arith.constant dense<0.000000e+00> : vector<128xf32>
    %1258 = vector.multi_reduction <add>, %1207, %cst_440 [0] : vector<4x128xf32> to vector<128xf32>
    %1259 = vector.shape_cast %1258 : vector<128xf32> to vector<1x128xf32>
    %1260 = arith.addf %1257, %1259 : vector<1x128xf32>
    %cst_441 = arith.constant dense<0.000000e+00> : vector<128xf32>
    %1261 = vector.multi_reduction <add>, %1208, %cst_441 [0] : vector<4x128xf32> to vector<128xf32>
    %1262 = vector.shape_cast %1261 : vector<128xf32> to vector<1x128xf32>
    %1263 = arith.addf %1260, %1262 : vector<1x128xf32>
    %cst_442 = arith.constant dense<0.000000e+00> : vector<128xf32>
    %1264 = vector.multi_reduction <add>, %1215, %cst_442 [0] : vector<4x128xf32> to vector<128xf32>
    %1265 = vector.shape_cast %1264 : vector<128xf32> to vector<1x128xf32>
    %1266 = arith.addf %1263, %1265 : vector<1x128xf32>
    %cst_443 = arith.constant dense<0.000000e+00> : vector<128xf32>
    %1267 = vector.multi_reduction <add>, %1216, %cst_443 [0] : vector<4x128xf32> to vector<128xf32>
    %1268 = vector.shape_cast %1267 : vector<128xf32> to vector<1x128xf32>
    %1269 = arith.addf %1266, %1268 : vector<1x128xf32>
    %cst_444 = arith.constant 6.400000e+01 : f32
    %1270 = vector.broadcast %cst_444 : f32 to vector<1x128xf32>
    %1271 = arith.divf %1269, %1270 : vector<1x128xf32>
    %1272 = vector.broadcast %1271 : vector<1x128xf32> to vector<4x128xf32>
    %1273 = arith.subf %1159, %1272 : vector<4x128xf32>
    %1274 = arith.mulf %1273, %1273 : vector<4x128xf32>
    %cst_445 = arith.constant dense<0.000000e+00> : vector<128xf32>
    %1275 = vector.multi_reduction <add>, %1274, %cst_445 [0] : vector<4x128xf32> to vector<128xf32>
    %1276 = vector.shape_cast %1275 : vector<128xf32> to vector<1x128xf32>
    %cst_446 = arith.constant 0.000000e+00 : f32
    %1277 = vector.broadcast %cst_446 : f32 to vector<1x128xf32>
    %1278 = arith.addf %1277, %1276 : vector<1x128xf32>
    %1279 = vector.broadcast %1271 : vector<1x128xf32> to vector<4x128xf32>
    %1280 = arith.subf %1160, %1279 : vector<4x128xf32>
    %1281 = arith.mulf %1280, %1280 : vector<4x128xf32>
    %cst_447 = arith.constant dense<0.000000e+00> : vector<128xf32>
    %1282 = vector.multi_reduction <add>, %1281, %cst_447 [0] : vector<4x128xf32> to vector<128xf32>
    %1283 = vector.shape_cast %1282 : vector<128xf32> to vector<1x128xf32>
    %1284 = arith.addf %1278, %1283 : vector<1x128xf32>
    %1285 = vector.broadcast %1271 : vector<1x128xf32> to vector<4x128xf32>
    %1286 = arith.subf %1167, %1285 : vector<4x128xf32>
    %1287 = arith.mulf %1286, %1286 : vector<4x128xf32>
    %cst_448 = arith.constant dense<0.000000e+00> : vector<128xf32>
    %1288 = vector.multi_reduction <add>, %1287, %cst_448 [0] : vector<4x128xf32> to vector<128xf32>
    %1289 = vector.shape_cast %1288 : vector<128xf32> to vector<1x128xf32>
    %1290 = arith.addf %1284, %1289 : vector<1x128xf32>
    %1291 = vector.broadcast %1271 : vector<1x128xf32> to vector<4x128xf32>
    %1292 = arith.subf %1168, %1291 : vector<4x128xf32>
    %1293 = arith.mulf %1292, %1292 : vector<4x128xf32>
    %cst_449 = arith.constant dense<0.000000e+00> : vector<128xf32>
    %1294 = vector.multi_reduction <add>, %1293, %cst_449 [0] : vector<4x128xf32> to vector<128xf32>
    %1295 = vector.shape_cast %1294 : vector<128xf32> to vector<1x128xf32>
    %1296 = arith.addf %1290, %1295 : vector<1x128xf32>
    %1297 = vector.broadcast %1271 : vector<1x128xf32> to vector<4x128xf32>
    %1298 = arith.subf %1175, %1297 : vector<4x128xf32>
    %1299 = arith.mulf %1298, %1298 : vector<4x128xf32>
    %cst_450 = arith.constant dense<0.000000e+00> : vector<128xf32>
    %1300 = vector.multi_reduction <add>, %1299, %cst_450 [0] : vector<4x128xf32> to vector<128xf32>
    %1301 = vector.shape_cast %1300 : vector<128xf32> to vector<1x128xf32>
    %1302 = arith.addf %1296, %1301 : vector<1x128xf32>
    %1303 = vector.broadcast %1271 : vector<1x128xf32> to vector<4x128xf32>
    %1304 = arith.subf %1176, %1303 : vector<4x128xf32>
    %1305 = arith.mulf %1304, %1304 : vector<4x128xf32>
    %cst_451 = arith.constant dense<0.000000e+00> : vector<128xf32>
    %1306 = vector.multi_reduction <add>, %1305, %cst_451 [0] : vector<4x128xf32> to vector<128xf32>
    %1307 = vector.shape_cast %1306 : vector<128xf32> to vector<1x128xf32>
    %1308 = arith.addf %1302, %1307 : vector<1x128xf32>
    %1309 = vector.broadcast %1271 : vector<1x128xf32> to vector<4x128xf32>
    %1310 = arith.subf %1183, %1309 : vector<4x128xf32>
    %1311 = arith.mulf %1310, %1310 : vector<4x128xf32>
    %cst_452 = arith.constant dense<0.000000e+00> : vector<128xf32>
    %1312 = vector.multi_reduction <add>, %1311, %cst_452 [0] : vector<4x128xf32> to vector<128xf32>
    %1313 = vector.shape_cast %1312 : vector<128xf32> to vector<1x128xf32>
    %1314 = arith.addf %1308, %1313 : vector<1x128xf32>
    %1315 = vector.broadcast %1271 : vector<1x128xf32> to vector<4x128xf32>
    %1316 = arith.subf %1184, %1315 : vector<4x128xf32>
    %1317 = arith.mulf %1316, %1316 : vector<4x128xf32>
    %cst_453 = arith.constant dense<0.000000e+00> : vector<128xf32>
    %1318 = vector.multi_reduction <add>, %1317, %cst_453 [0] : vector<4x128xf32> to vector<128xf32>
    %1319 = vector.shape_cast %1318 : vector<128xf32> to vector<1x128xf32>
    %1320 = arith.addf %1314, %1319 : vector<1x128xf32>
    %1321 = vector.broadcast %1271 : vector<1x128xf32> to vector<4x128xf32>
    %1322 = arith.subf %1191, %1321 : vector<4x128xf32>
    %1323 = arith.mulf %1322, %1322 : vector<4x128xf32>
    %cst_454 = arith.constant dense<0.000000e+00> : vector<128xf32>
    %1324 = vector.multi_reduction <add>, %1323, %cst_454 [0] : vector<4x128xf32> to vector<128xf32>
    %1325 = vector.shape_cast %1324 : vector<128xf32> to vector<1x128xf32>
    %1326 = arith.addf %1320, %1325 : vector<1x128xf32>
    %1327 = vector.broadcast %1271 : vector<1x128xf32> to vector<4x128xf32>
    %1328 = arith.subf %1192, %1327 : vector<4x128xf32>
    %1329 = arith.mulf %1328, %1328 : vector<4x128xf32>
    %cst_455 = arith.constant dense<0.000000e+00> : vector<128xf32>
    %1330 = vector.multi_reduction <add>, %1329, %cst_455 [0] : vector<4x128xf32> to vector<128xf32>
    %1331 = vector.shape_cast %1330 : vector<128xf32> to vector<1x128xf32>
    %1332 = arith.addf %1326, %1331 : vector<1x128xf32>
    %1333 = vector.broadcast %1271 : vector<1x128xf32> to vector<4x128xf32>
    %1334 = arith.subf %1199, %1333 : vector<4x128xf32>
    %1335 = arith.mulf %1334, %1334 : vector<4x128xf32>
    %cst_456 = arith.constant dense<0.000000e+00> : vector<128xf32>
    %1336 = vector.multi_reduction <add>, %1335, %cst_456 [0] : vector<4x128xf32> to vector<128xf32>
    %1337 = vector.shape_cast %1336 : vector<128xf32> to vector<1x128xf32>
    %1338 = arith.addf %1332, %1337 : vector<1x128xf32>
    %1339 = vector.broadcast %1271 : vector<1x128xf32> to vector<4x128xf32>
    %1340 = arith.subf %1200, %1339 : vector<4x128xf32>
    %1341 = arith.mulf %1340, %1340 : vector<4x128xf32>
    %cst_457 = arith.constant dense<0.000000e+00> : vector<128xf32>
    %1342 = vector.multi_reduction <add>, %1341, %cst_457 [0] : vector<4x128xf32> to vector<128xf32>
    %1343 = vector.shape_cast %1342 : vector<128xf32> to vector<1x128xf32>
    %1344 = arith.addf %1338, %1343 : vector<1x128xf32>
    %1345 = vector.broadcast %1271 : vector<1x128xf32> to vector<4x128xf32>
    %1346 = arith.subf %1207, %1345 : vector<4x128xf32>
    %1347 = arith.mulf %1346, %1346 : vector<4x128xf32>
    %cst_458 = arith.constant dense<0.000000e+00> : vector<128xf32>
    %1348 = vector.multi_reduction <add>, %1347, %cst_458 [0] : vector<4x128xf32> to vector<128xf32>
    %1349 = vector.shape_cast %1348 : vector<128xf32> to vector<1x128xf32>
    %1350 = arith.addf %1344, %1349 : vector<1x128xf32>
    %1351 = vector.broadcast %1271 : vector<1x128xf32> to vector<4x128xf32>
    %1352 = arith.subf %1208, %1351 : vector<4x128xf32>
    %1353 = arith.mulf %1352, %1352 : vector<4x128xf32>
    %cst_459 = arith.constant dense<0.000000e+00> : vector<128xf32>
    %1354 = vector.multi_reduction <add>, %1353, %cst_459 [0] : vector<4x128xf32> to vector<128xf32>
    %1355 = vector.shape_cast %1354 : vector<128xf32> to vector<1x128xf32>
    %1356 = arith.addf %1350, %1355 : vector<1x128xf32>
    %1357 = vector.broadcast %1271 : vector<1x128xf32> to vector<4x128xf32>
    %1358 = arith.subf %1215, %1357 : vector<4x128xf32>
    %1359 = arith.mulf %1358, %1358 : vector<4x128xf32>
    %cst_460 = arith.constant dense<0.000000e+00> : vector<128xf32>
    %1360 = vector.multi_reduction <add>, %1359, %cst_460 [0] : vector<4x128xf32> to vector<128xf32>
    %1361 = vector.shape_cast %1360 : vector<128xf32> to vector<1x128xf32>
    %1362 = arith.addf %1356, %1361 : vector<1x128xf32>
    %1363 = vector.broadcast %1271 : vector<1x128xf32> to vector<4x128xf32>
    %1364 = arith.subf %1216, %1363 : vector<4x128xf32>
    %1365 = arith.mulf %1364, %1364 : vector<4x128xf32>
    %cst_461 = arith.constant dense<0.000000e+00> : vector<128xf32>
    %1366 = vector.multi_reduction <add>, %1365, %cst_461 [0] : vector<4x128xf32> to vector<128xf32>
    %1367 = vector.shape_cast %1366 : vector<128xf32> to vector<1x128xf32>
    %1368 = arith.addf %1362, %1367 : vector<1x128xf32>
    %cst_462 = arith.constant 6.400000e+01 : f32
    %1369 = vector.broadcast %cst_462 : f32 to vector<1x128xf32>
    %1370 = arith.divf %1368, %1369 : vector<1x128xf32>
    %cst_463 = arith.constant 9.99999974E-6 : f32
    %1371 = vector.broadcast %cst_463 : f32 to vector<1x128xf32>
    %1372 = arith.addf %1370, %1371 : vector<1x128xf32>
    %1373 = math.rsqrt %1372 : vector<1x128xf32>
    %1374 = arith.mulf %1218, %1373 : vector<1x128xf32>
    %1375 = arith.mulf %1271, %1374 : vector<1x128xf32>
    %1376 = arith.subf %1220, %1375 : vector<1x128xf32>
    %1377 = vector.broadcast %1374 : vector<1x128xf32> to vector<4x128xf32>
    %1378 = arith.mulf %1159, %1377 : vector<4x128xf32>
    %1379 = vector.broadcast %1376 : vector<1x128xf32> to vector<4x128xf32>
    %1380 = arith.addf %1378, %1379 : vector<4x128xf32>
    %cst_464 = arith.constant 0.000000e+00 : f32
    %1381 = vector.broadcast %cst_464 : f32 to vector<4x128xf32>
    %1382 = arith.maximumf %1380, %1381 : vector<4x128xf32>
    %1383 = vector.broadcast %1374 : vector<1x128xf32> to vector<4x128xf32>
    %1384 = arith.mulf %1160, %1383 : vector<4x128xf32>
    %1385 = vector.broadcast %1376 : vector<1x128xf32> to vector<4x128xf32>
    %1386 = arith.addf %1384, %1385 : vector<4x128xf32>
    %cst_465 = arith.constant 0.000000e+00 : f32
    %1387 = vector.broadcast %cst_465 : f32 to vector<4x128xf32>
    %1388 = arith.maximumf %1386, %1387 : vector<4x128xf32>
    %1389 = vector.broadcast %1374 : vector<1x128xf32> to vector<4x128xf32>
    %1390 = arith.mulf %1167, %1389 : vector<4x128xf32>
    %1391 = vector.broadcast %1376 : vector<1x128xf32> to vector<4x128xf32>
    %1392 = arith.addf %1390, %1391 : vector<4x128xf32>
    %cst_466 = arith.constant 0.000000e+00 : f32
    %1393 = vector.broadcast %cst_466 : f32 to vector<4x128xf32>
    %1394 = arith.maximumf %1392, %1393 : vector<4x128xf32>
    %1395 = vector.broadcast %1374 : vector<1x128xf32> to vector<4x128xf32>
    %1396 = arith.mulf %1168, %1395 : vector<4x128xf32>
    %1397 = vector.broadcast %1376 : vector<1x128xf32> to vector<4x128xf32>
    %1398 = arith.addf %1396, %1397 : vector<4x128xf32>
    %cst_467 = arith.constant 0.000000e+00 : f32
    %1399 = vector.broadcast %cst_467 : f32 to vector<4x128xf32>
    %1400 = arith.maximumf %1398, %1399 : vector<4x128xf32>
    %1401 = vector.broadcast %1374 : vector<1x128xf32> to vector<4x128xf32>
    %1402 = arith.mulf %1175, %1401 : vector<4x128xf32>
    %1403 = vector.broadcast %1376 : vector<1x128xf32> to vector<4x128xf32>
    %1404 = arith.addf %1402, %1403 : vector<4x128xf32>
    %cst_468 = arith.constant 0.000000e+00 : f32
    %1405 = vector.broadcast %cst_468 : f32 to vector<4x128xf32>
    %1406 = arith.maximumf %1404, %1405 : vector<4x128xf32>
    %1407 = vector.broadcast %1374 : vector<1x128xf32> to vector<4x128xf32>
    %1408 = arith.mulf %1176, %1407 : vector<4x128xf32>
    %1409 = vector.broadcast %1376 : vector<1x128xf32> to vector<4x128xf32>
    %1410 = arith.addf %1408, %1409 : vector<4x128xf32>
    %cst_469 = arith.constant 0.000000e+00 : f32
    %1411 = vector.broadcast %cst_469 : f32 to vector<4x128xf32>
    %1412 = arith.maximumf %1410, %1411 : vector<4x128xf32>
    %1413 = vector.broadcast %1374 : vector<1x128xf32> to vector<4x128xf32>
    %1414 = arith.mulf %1183, %1413 : vector<4x128xf32>
    %1415 = vector.broadcast %1376 : vector<1x128xf32> to vector<4x128xf32>
    %1416 = arith.addf %1414, %1415 : vector<4x128xf32>
    %cst_470 = arith.constant 0.000000e+00 : f32
    %1417 = vector.broadcast %cst_470 : f32 to vector<4x128xf32>
    %1418 = arith.maximumf %1416, %1417 : vector<4x128xf32>
    %1419 = vector.broadcast %1374 : vector<1x128xf32> to vector<4x128xf32>
    %1420 = arith.mulf %1184, %1419 : vector<4x128xf32>
    %1421 = vector.broadcast %1376 : vector<1x128xf32> to vector<4x128xf32>
    %1422 = arith.addf %1420, %1421 : vector<4x128xf32>
    %cst_471 = arith.constant 0.000000e+00 : f32
    %1423 = vector.broadcast %cst_471 : f32 to vector<4x128xf32>
    %1424 = arith.maximumf %1422, %1423 : vector<4x128xf32>
    %1425 = vector.broadcast %1374 : vector<1x128xf32> to vector<4x128xf32>
    %1426 = arith.mulf %1191, %1425 : vector<4x128xf32>
    %1427 = vector.broadcast %1376 : vector<1x128xf32> to vector<4x128xf32>
    %1428 = arith.addf %1426, %1427 : vector<4x128xf32>
    %cst_472 = arith.constant 0.000000e+00 : f32
    %1429 = vector.broadcast %cst_472 : f32 to vector<4x128xf32>
    %1430 = arith.maximumf %1428, %1429 : vector<4x128xf32>
    %1431 = vector.broadcast %1374 : vector<1x128xf32> to vector<4x128xf32>
    %1432 = arith.mulf %1192, %1431 : vector<4x128xf32>
    %1433 = vector.broadcast %1376 : vector<1x128xf32> to vector<4x128xf32>
    %1434 = arith.addf %1432, %1433 : vector<4x128xf32>
    %cst_473 = arith.constant 0.000000e+00 : f32
    %1435 = vector.broadcast %cst_473 : f32 to vector<4x128xf32>
    %1436 = arith.maximumf %1434, %1435 : vector<4x128xf32>
    %1437 = vector.broadcast %1374 : vector<1x128xf32> to vector<4x128xf32>
    %1438 = arith.mulf %1199, %1437 : vector<4x128xf32>
    %1439 = vector.broadcast %1376 : vector<1x128xf32> to vector<4x128xf32>
    %1440 = arith.addf %1438, %1439 : vector<4x128xf32>
    %cst_474 = arith.constant 0.000000e+00 : f32
    %1441 = vector.broadcast %cst_474 : f32 to vector<4x128xf32>
    %1442 = arith.maximumf %1440, %1441 : vector<4x128xf32>
    %1443 = vector.broadcast %1374 : vector<1x128xf32> to vector<4x128xf32>
    %1444 = arith.mulf %1200, %1443 : vector<4x128xf32>
    %1445 = vector.broadcast %1376 : vector<1x128xf32> to vector<4x128xf32>
    %1446 = arith.addf %1444, %1445 : vector<4x128xf32>
    %cst_475 = arith.constant 0.000000e+00 : f32
    %1447 = vector.broadcast %cst_475 : f32 to vector<4x128xf32>
    %1448 = arith.maximumf %1446, %1447 : vector<4x128xf32>
    %1449 = vector.broadcast %1374 : vector<1x128xf32> to vector<4x128xf32>
    %1450 = arith.mulf %1207, %1449 : vector<4x128xf32>
    %1451 = vector.broadcast %1376 : vector<1x128xf32> to vector<4x128xf32>
    %1452 = arith.addf %1450, %1451 : vector<4x128xf32>
    %cst_476 = arith.constant 0.000000e+00 : f32
    %1453 = vector.broadcast %cst_476 : f32 to vector<4x128xf32>
    %1454 = arith.maximumf %1452, %1453 : vector<4x128xf32>
    %1455 = vector.broadcast %1374 : vector<1x128xf32> to vector<4x128xf32>
    %1456 = arith.mulf %1208, %1455 : vector<4x128xf32>
    %1457 = vector.broadcast %1376 : vector<1x128xf32> to vector<4x128xf32>
    %1458 = arith.addf %1456, %1457 : vector<4x128xf32>
    %cst_477 = arith.constant 0.000000e+00 : f32
    %1459 = vector.broadcast %cst_477 : f32 to vector<4x128xf32>
    %1460 = arith.maximumf %1458, %1459 : vector<4x128xf32>
    %1461 = vector.broadcast %1374 : vector<1x128xf32> to vector<4x128xf32>
    %1462 = arith.mulf %1215, %1461 : vector<4x128xf32>
    %1463 = vector.broadcast %1376 : vector<1x128xf32> to vector<4x128xf32>
    %1464 = arith.addf %1462, %1463 : vector<4x128xf32>
    %cst_478 = arith.constant 0.000000e+00 : f32
    %1465 = vector.broadcast %cst_478 : f32 to vector<4x128xf32>
    %1466 = arith.maximumf %1464, %1465 : vector<4x128xf32>
    %1467 = vector.broadcast %1374 : vector<1x128xf32> to vector<4x128xf32>
    %1468 = arith.mulf %1216, %1467 : vector<4x128xf32>
    %1469 = vector.broadcast %1376 : vector<1x128xf32> to vector<4x128xf32>
    %1470 = arith.addf %1468, %1469 : vector<4x128xf32>
    %cst_479 = arith.constant 0.000000e+00 : f32
    %1471 = vector.broadcast %cst_479 : f32 to vector<4x128xf32>
    %1472 = arith.maximumf %1470, %1471 : vector<4x128xf32>
    %c0_480 = arith.constant 0 : index
    %c0_481 = arith.constant 0 : index
    %1473 = vector.load %arg23[%c0_480, %c0_481] : memref<128x128xbf16, #tpu.memory_space<vmem>>, vector<128x128xbf16>
    %c0_482 = arith.constant 0 : index
    %c0_483 = arith.constant 0 : index
    %1474 = vector.load %arg24[%c0_482, %c0_483] : memref<16x128xbf16, #tpu.memory_space<vmem>>, vector<16x128xbf16>
    %c0_484 = arith.constant 0 : index
    %c0_485 = arith.constant 0 : index
    %1475 = vector.load %arg25[%c0_484, %c0_485] : memref<100x128xbf16, #tpu.memory_space<vmem>>, vector<100x128xbf16>
    %1476 = arith.truncf %0 : vector<4x100xf32> to vector<4x100xbf16>
    %cst_486 = arith.constant dense<0.000000e+00> : vector<4x128xf32>
    %1477 = tpu.matmul %1476, %1475, %cst_486 {dimension_numbers = #tpu.dot_dimension_numbers<[1], [0], [0], [1], [0, 0, 1, 1], [], []>} : vector<4x100xbf16>, vector<100x128xbf16>, vector<4x128xf32> -> vector<4x128xf32>
    %c0_487 = arith.constant 0 : index
    %c0_488 = arith.constant 0 : index
    %1478 = vector.load %arg26[%c0_487, %c0_488] : memref<1x128xf32, #tpu.memory_space<vmem>>, vector<1x128xf32>
    %1479 = vector.broadcast %1478 : vector<1x128xf32> to vector<4x128xf32>
    %1480 = arith.addf %1477, %1479 : vector<4x128xf32>
    %1481 = arith.truncf %1382 : vector<4x128xf32> to vector<4x128xbf16>
    %cst_489 = arith.constant dense<0.000000e+00> : vector<4x128xf32>
    %1482 = tpu.matmul %1481, %1473, %cst_489 {dimension_numbers = #tpu.dot_dimension_numbers<[1], [0], [0], [1], [0, 0, 1, 1], [], []>} : vector<4x128xbf16>, vector<128x128xbf16>, vector<4x128xf32> -> vector<4x128xf32>
    %1483 = arith.truncf %265 : vector<4x16xf32> to vector<4x16xbf16>
    %cst_490 = arith.constant dense<0.000000e+00> : vector<4x128xf32>
    %1484 = tpu.matmul %1483, %1474, %cst_490 {dimension_numbers = #tpu.dot_dimension_numbers<[1], [0], [0], [1], [0, 0, 1, 1], [], []>} : vector<4x16xbf16>, vector<16x128xbf16>, vector<4x128xf32> -> vector<4x128xf32>
    %1485 = arith.addf %1482, %1484 : vector<4x128xf32>
    %1486 = arith.addf %1485, %1480 : vector<4x128xf32>
    %1487 = arith.negf %1486 : vector<4x128xf32>
    %1488 = math.exp %1487 : vector<4x128xf32>
    %cst_491 = arith.constant 1.000000e+00 : f32
    %1489 = vector.broadcast %cst_491 : f32 to vector<4x128xf32>
    %1490 = arith.addf %1489, %1488 : vector<4x128xf32>
    %1491 = arith.divf %1489, %1490 : vector<4x128xf32>
    %c0_492 = arith.constant 0 : index
    %c0_493 = arith.constant 0 : index
    %c0_494 = arith.constant 0 : index
    %1492 = vector.load %arg27[%c0_492, %c0_493, %c0_494] : memref<16x4x128xf32, #tpu.memory_space<vmem>>, vector<1x4x128xf32>
    %1493 = vector.shape_cast %1492 : vector<1x4x128xf32> to vector<4x128xf32>
    %1494 = vector.shape_cast %1491 : vector<4x128xf32> to vector<1x4x128xf32>
    tpu.vector_store %arg27[%c0_492, %c0_493, %c0_494], %1494 {strides = array<i32>} : memref<16x4x128xf32, #tpu.memory_space<vmem>>, vector<1x4x128xf32>,
    %1495 = arith.truncf %1388 : vector<4x128xf32> to vector<4x128xbf16>
    %cst_495 = arith.constant dense<0.000000e+00> : vector<4x128xf32>
    %1496 = tpu.matmul %1495, %1473, %cst_495 {dimension_numbers = #tpu.dot_dimension_numbers<[1], [0], [0], [1], [0, 0, 1, 1], [], []>} : vector<4x128xbf16>, vector<128x128xbf16>, vector<4x128xf32> -> vector<4x128xf32>
    %1497 = arith.truncf %274 : vector<4x16xf32> to vector<4x16xbf16>
    %cst_496 = arith.constant dense<0.000000e+00> : vector<4x128xf32>
    %1498 = tpu.matmul %1497, %1474, %cst_496 {dimension_numbers = #tpu.dot_dimension_numbers<[1], [0], [0], [1], [0, 0, 1, 1], [], []>} : vector<4x16xbf16>, vector<16x128xbf16>, vector<4x128xf32> -> vector<4x128xf32>
    %1499 = arith.addf %1496, %1498 : vector<4x128xf32>
    %1500 = arith.addf %1499, %1480 : vector<4x128xf32>
    %1501 = arith.negf %1500 : vector<4x128xf32>
    %1502 = math.exp %1501 : vector<4x128xf32>
    %cst_497 = arith.constant 1.000000e+00 : f32
    %1503 = vector.broadcast %cst_497 : f32 to vector<4x128xf32>
    %1504 = arith.addf %1503, %1502 : vector<4x128xf32>
    %1505 = arith.divf %1503, %1504 : vector<4x128xf32>
    %c1_498 = arith.constant 1 : index
    %c0_499 = arith.constant 0 : index
    %c0_500 = arith.constant 0 : index
    %1506 = vector.load %arg27[%c1_498, %c0_499, %c0_500] : memref<16x4x128xf32, #tpu.memory_space<vmem>>, vector<1x4x128xf32>
    %1507 = vector.shape_cast %1506 : vector<1x4x128xf32> to vector<4x128xf32>
    %1508 = vector.shape_cast %1505 : vector<4x128xf32> to vector<1x4x128xf32>
    tpu.vector_store %arg27[%c1_498, %c0_499, %c0_500], %1508 {strides = array<i32>} : memref<16x4x128xf32, #tpu.memory_space<vmem>>, vector<1x4x128xf32>,
    %1509 = arith.truncf %1394 : vector<4x128xf32> to vector<4x128xbf16>
    %cst_501 = arith.constant dense<0.000000e+00> : vector<4x128xf32>
    %1510 = tpu.matmul %1509, %1473, %cst_501 {dimension_numbers = #tpu.dot_dimension_numbers<[1], [0], [0], [1], [0, 0, 1, 1], [], []>} : vector<4x128xbf16>, vector<128x128xbf16>, vector<4x128xf32> -> vector<4x128xf32>
    %1511 = arith.truncf %283 : vector<4x16xf32> to vector<4x16xbf16>
    %cst_502 = arith.constant dense<0.000000e+00> : vector<4x128xf32>
    %1512 = tpu.matmul %1511, %1474, %cst_502 {dimension_numbers = #tpu.dot_dimension_numbers<[1], [0], [0], [1], [0, 0, 1, 1], [], []>} : vector<4x16xbf16>, vector<16x128xbf16>, vector<4x128xf32> -> vector<4x128xf32>
    %1513 = arith.addf %1510, %1512 : vector<4x128xf32>
    %1514 = arith.addf %1513, %1480 : vector<4x128xf32>
    %1515 = arith.negf %1514 : vector<4x128xf32>
    %1516 = math.exp %1515 : vector<4x128xf32>
    %cst_503 = arith.constant 1.000000e+00 : f32
    %1517 = vector.broadcast %cst_503 : f32 to vector<4x128xf32>
    %1518 = arith.addf %1517, %1516 : vector<4x128xf32>
    %1519 = arith.divf %1517, %1518 : vector<4x128xf32>
    %c2_504 = arith.constant 2 : index
    %c0_505 = arith.constant 0 : index
    %c0_506 = arith.constant 0 : index
    %1520 = vector.load %arg27[%c2_504, %c0_505, %c0_506] : memref<16x4x128xf32, #tpu.memory_space<vmem>>, vector<1x4x128xf32>
    %1521 = vector.shape_cast %1520 : vector<1x4x128xf32> to vector<4x128xf32>
    %1522 = vector.shape_cast %1519 : vector<4x128xf32> to vector<1x4x128xf32>
    tpu.vector_store %arg27[%c2_504, %c0_505, %c0_506], %1522 {strides = array<i32>} : memref<16x4x128xf32, #tpu.memory_space<vmem>>, vector<1x4x128xf32>,
    %1523 = arith.truncf %1400 : vector<4x128xf32> to vector<4x128xbf16>
    %cst_507 = arith.constant dense<0.000000e+00> : vector<4x128xf32>
    %1524 = tpu.matmul %1523, %1473, %cst_507 {dimension_numbers = #tpu.dot_dimension_numbers<[1], [0], [0], [1], [0, 0, 1, 1], [], []>} : vector<4x128xbf16>, vector<128x128xbf16>, vector<4x128xf32> -> vector<4x128xf32>
    %1525 = arith.truncf %292 : vector<4x16xf32> to vector<4x16xbf16>
    %cst_508 = arith.constant dense<0.000000e+00> : vector<4x128xf32>
    %1526 = tpu.matmul %1525, %1474, %cst_508 {dimension_numbers = #tpu.dot_dimension_numbers<[1], [0], [0], [1], [0, 0, 1, 1], [], []>} : vector<4x16xbf16>, vector<16x128xbf16>, vector<4x128xf32> -> vector<4x128xf32>
    %1527 = arith.addf %1524, %1526 : vector<4x128xf32>
    %1528 = arith.addf %1527, %1480 : vector<4x128xf32>
    %1529 = arith.negf %1528 : vector<4x128xf32>
    %1530 = math.exp %1529 : vector<4x128xf32>
    %cst_509 = arith.constant 1.000000e+00 : f32
    %1531 = vector.broadcast %cst_509 : f32 to vector<4x128xf32>
    %1532 = arith.addf %1531, %1530 : vector<4x128xf32>
    %1533 = arith.divf %1531, %1532 : vector<4x128xf32>
    %c3_510 = arith.constant 3 : index
    %c0_511 = arith.constant 0 : index
    %c0_512 = arith.constant 0 : index
    %1534 = vector.load %arg27[%c3_510, %c0_511, %c0_512] : memref<16x4x128xf32, #tpu.memory_space<vmem>>, vector<1x4x128xf32>
    %1535 = vector.shape_cast %1534 : vector<1x4x128xf32> to vector<4x128xf32>
    %1536 = vector.shape_cast %1533 : vector<4x128xf32> to vector<1x4x128xf32>
    tpu.vector_store %arg27[%c3_510, %c0_511, %c0_512], %1536 {strides = array<i32>} : memref<16x4x128xf32, #tpu.memory_space<vmem>>, vector<1x4x128xf32>,
    %1537 = arith.truncf %1406 : vector<4x128xf32> to vector<4x128xbf16>
    %cst_513 = arith.constant dense<0.000000e+00> : vector<4x128xf32>
    %1538 = tpu.matmul %1537, %1473, %cst_513 {dimension_numbers = #tpu.dot_dimension_numbers<[1], [0], [0], [1], [0, 0, 1, 1], [], []>} : vector<4x128xbf16>, vector<128x128xbf16>, vector<4x128xf32> -> vector<4x128xf32>
    %1539 = arith.truncf %301 : vector<4x16xf32> to vector<4x16xbf16>
    %cst_514 = arith.constant dense<0.000000e+00> : vector<4x128xf32>
    %1540 = tpu.matmul %1539, %1474, %cst_514 {dimension_numbers = #tpu.dot_dimension_numbers<[1], [0], [0], [1], [0, 0, 1, 1], [], []>} : vector<4x16xbf16>, vector<16x128xbf16>, vector<4x128xf32> -> vector<4x128xf32>
    %1541 = arith.addf %1538, %1540 : vector<4x128xf32>
    %1542 = arith.addf %1541, %1480 : vector<4x128xf32>
    %1543 = arith.negf %1542 : vector<4x128xf32>
    %1544 = math.exp %1543 : vector<4x128xf32>
    %cst_515 = arith.constant 1.000000e+00 : f32
    %1545 = vector.broadcast %cst_515 : f32 to vector<4x128xf32>
    %1546 = arith.addf %1545, %1544 : vector<4x128xf32>
    %1547 = arith.divf %1545, %1546 : vector<4x128xf32>
    %c4_516 = arith.constant 4 : index
    %c0_517 = arith.constant 0 : index
    %c0_518 = arith.constant 0 : index
    %1548 = vector.load %arg27[%c4_516, %c0_517, %c0_518] : memref<16x4x128xf32, #tpu.memory_space<vmem>>, vector<1x4x128xf32>
    %1549 = vector.shape_cast %1548 : vector<1x4x128xf32> to vector<4x128xf32>
    %1550 = vector.shape_cast %1547 : vector<4x128xf32> to vector<1x4x128xf32>
    tpu.vector_store %arg27[%c4_516, %c0_517, %c0_518], %1550 {strides = array<i32>} : memref<16x4x128xf32, #tpu.memory_space<vmem>>, vector<1x4x128xf32>,
    %1551 = arith.truncf %1412 : vector<4x128xf32> to vector<4x128xbf16>
    %cst_519 = arith.constant dense<0.000000e+00> : vector<4x128xf32>
    %1552 = tpu.matmul %1551, %1473, %cst_519 {dimension_numbers = #tpu.dot_dimension_numbers<[1], [0], [0], [1], [0, 0, 1, 1], [], []>} : vector<4x128xbf16>, vector<128x128xbf16>, vector<4x128xf32> -> vector<4x128xf32>
    %1553 = arith.truncf %310 : vector<4x16xf32> to vector<4x16xbf16>
    %cst_520 = arith.constant dense<0.000000e+00> : vector<4x128xf32>
    %1554 = tpu.matmul %1553, %1474, %cst_520 {dimension_numbers = #tpu.dot_dimension_numbers<[1], [0], [0], [1], [0, 0, 1, 1], [], []>} : vector<4x16xbf16>, vector<16x128xbf16>, vector<4x128xf32> -> vector<4x128xf32>
    %1555 = arith.addf %1552, %1554 : vector<4x128xf32>
    %1556 = arith.addf %1555, %1480 : vector<4x128xf32>
    %1557 = arith.negf %1556 : vector<4x128xf32>
    %1558 = math.exp %1557 : vector<4x128xf32>
    %cst_521 = arith.constant 1.000000e+00 : f32
    %1559 = vector.broadcast %cst_521 : f32 to vector<4x128xf32>
    %1560 = arith.addf %1559, %1558 : vector<4x128xf32>
    %1561 = arith.divf %1559, %1560 : vector<4x128xf32>
    %c5_522 = arith.constant 5 : index
    %c0_523 = arith.constant 0 : index
    %c0_524 = arith.constant 0 : index
    %1562 = vector.load %arg27[%c5_522, %c0_523, %c0_524] : memref<16x4x128xf32, #tpu.memory_space<vmem>>, vector<1x4x128xf32>
    %1563 = vector.shape_cast %1562 : vector<1x4x128xf32> to vector<4x128xf32>
    %1564 = vector.shape_cast %1561 : vector<4x128xf32> to vector<1x4x128xf32>
    tpu.vector_store %arg27[%c5_522, %c0_523, %c0_524], %1564 {strides = array<i32>} : memref<16x4x128xf32, #tpu.memory_space<vmem>>, vector<1x4x128xf32>,
    %1565 = arith.truncf %1418 : vector<4x128xf32> to vector<4x128xbf16>
    %cst_525 = arith.constant dense<0.000000e+00> : vector<4x128xf32>
    %1566 = tpu.matmul %1565, %1473, %cst_525 {dimension_numbers = #tpu.dot_dimension_numbers<[1], [0], [0], [1], [0, 0, 1, 1], [], []>} : vector<4x128xbf16>, vector<128x128xbf16>, vector<4x128xf32> -> vector<4x128xf32>
    %1567 = arith.truncf %319 : vector<4x16xf32> to vector<4x16xbf16>
    %cst_526 = arith.constant dense<0.000000e+00> : vector<4x128xf32>
    %1568 = tpu.matmul %1567, %1474, %cst_526 {dimension_numbers = #tpu.dot_dimension_numbers<[1], [0], [0], [1], [0, 0, 1, 1], [], []>} : vector<4x16xbf16>, vector<16x128xbf16>, vector<4x128xf32> -> vector<4x128xf32>
    %1569 = arith.addf %1566, %1568 : vector<4x128xf32>
    %1570 = arith.addf %1569, %1480 : vector<4x128xf32>
    %1571 = arith.negf %1570 : vector<4x128xf32>
    %1572 = math.exp %1571 : vector<4x128xf32>
    %cst_527 = arith.constant 1.000000e+00 : f32
    %1573 = vector.broadcast %cst_527 : f32 to vector<4x128xf32>
    %1574 = arith.addf %1573, %1572 : vector<4x128xf32>
    %1575 = arith.divf %1573, %1574 : vector<4x128xf32>
    %c6_528 = arith.constant 6 : index
    %c0_529 = arith.constant 0 : index
    %c0_530 = arith.constant 0 : index
    %1576 = vector.load %arg27[%c6_528, %c0_529, %c0_530] : memref<16x4x128xf32, #tpu.memory_space<vmem>>, vector<1x4x128xf32>
    %1577 = vector.shape_cast %1576 : vector<1x4x128xf32> to vector<4x128xf32>
    %1578 = vector.shape_cast %1575 : vector<4x128xf32> to vector<1x4x128xf32>
    tpu.vector_store %arg27[%c6_528, %c0_529, %c0_530], %1578 {strides = array<i32>} : memref<16x4x128xf32, #tpu.memory_space<vmem>>, vector<1x4x128xf32>,
    %1579 = arith.truncf %1424 : vector<4x128xf32> to vector<4x128xbf16>
    %cst_531 = arith.constant dense<0.000000e+00> : vector<4x128xf32>
    %1580 = tpu.matmul %1579, %1473, %cst_531 {dimension_numbers = #tpu.dot_dimension_numbers<[1], [0], [0], [1], [0, 0, 1, 1], [], []>} : vector<4x128xbf16>, vector<128x128xbf16>, vector<4x128xf32> -> vector<4x128xf32>
    %1581 = arith.truncf %328 : vector<4x16xf32> to vector<4x16xbf16>
    %cst_532 = arith.constant dense<0.000000e+00> : vector<4x128xf32>
    %1582 = tpu.matmul %1581, %1474, %cst_532 {dimension_numbers = #tpu.dot_dimension_numbers<[1], [0], [0], [1], [0, 0, 1, 1], [], []>} : vector<4x16xbf16>, vector<16x128xbf16>, vector<4x128xf32> -> vector<4x128xf32>
    %1583 = arith.addf %1580, %1582 : vector<4x128xf32>
    %1584 = arith.addf %1583, %1480 : vector<4x128xf32>
    %1585 = arith.negf %1584 : vector<4x128xf32>
    %1586 = math.exp %1585 : vector<4x128xf32>
    %cst_533 = arith.constant 1.000000e+00 : f32
    %1587 = vector.broadcast %cst_533 : f32 to vector<4x128xf32>
    %1588 = arith.addf %1587, %1586 : vector<4x128xf32>
    %1589 = arith.divf %1587, %1588 : vector<4x128xf32>
    %c7_534 = arith.constant 7 : index
    %c0_535 = arith.constant 0 : index
    %c0_536 = arith.constant 0 : index
    %1590 = vector.load %arg27[%c7_534, %c0_535, %c0_536] : memref<16x4x128xf32, #tpu.memory_space<vmem>>, vector<1x4x128xf32>
    %1591 = vector.shape_cast %1590 : vector<1x4x128xf32> to vector<4x128xf32>
    %1592 = vector.shape_cast %1589 : vector<4x128xf32> to vector<1x4x128xf32>
    tpu.vector_store %arg27[%c7_534, %c0_535, %c0_536], %1592 {strides = array<i32>} : memref<16x4x128xf32, #tpu.memory_space<vmem>>, vector<1x4x128xf32>,
    %1593 = arith.truncf %1430 : vector<4x128xf32> to vector<4x128xbf16>
    %cst_537 = arith.constant dense<0.000000e+00> : vector<4x128xf32>
    %1594 = tpu.matmul %1593, %1473, %cst_537 {dimension_numbers = #tpu.dot_dimension_numbers<[1], [0], [0], [1], [0, 0, 1, 1], [], []>} : vector<4x128xbf16>, vector<128x128xbf16>, vector<4x128xf32> -> vector<4x128xf32>
    %1595 = arith.truncf %337 : vector<4x16xf32> to vector<4x16xbf16>
    %cst_538 = arith.constant dense<0.000000e+00> : vector<4x128xf32>
    %1596 = tpu.matmul %1595, %1474, %cst_538 {dimension_numbers = #tpu.dot_dimension_numbers<[1], [0], [0], [1], [0, 0, 1, 1], [], []>} : vector<4x16xbf16>, vector<16x128xbf16>, vector<4x128xf32> -> vector<4x128xf32>
    %1597 = arith.addf %1594, %1596 : vector<4x128xf32>
    %1598 = arith.addf %1597, %1480 : vector<4x128xf32>
    %1599 = arith.negf %1598 : vector<4x128xf32>
    %1600 = math.exp %1599 : vector<4x128xf32>
    %cst_539 = arith.constant 1.000000e+00 : f32
    %1601 = vector.broadcast %cst_539 : f32 to vector<4x128xf32>
    %1602 = arith.addf %1601, %1600 : vector<4x128xf32>
    %1603 = arith.divf %1601, %1602 : vector<4x128xf32>
    %c8_540 = arith.constant 8 : index
    %c0_541 = arith.constant 0 : index
    %c0_542 = arith.constant 0 : index
    %1604 = vector.load %arg27[%c8_540, %c0_541, %c0_542] : memref<16x4x128xf32, #tpu.memory_space<vmem>>, vector<1x4x128xf32>
    %1605 = vector.shape_cast %1604 : vector<1x4x128xf32> to vector<4x128xf32>
    %1606 = vector.shape_cast %1603 : vector<4x128xf32> to vector<1x4x128xf32>
    tpu.vector_store %arg27[%c8_540, %c0_541, %c0_542], %1606 {strides = array<i32>} : memref<16x4x128xf32, #tpu.memory_space<vmem>>, vector<1x4x128xf32>,
    %1607 = arith.truncf %1436 : vector<4x128xf32> to vector<4x128xbf16>
    %cst_543 = arith.constant dense<0.000000e+00> : vector<4x128xf32>
    %1608 = tpu.matmul %1607, %1473, %cst_543 {dimension_numbers = #tpu.dot_dimension_numbers<[1], [0], [0], [1], [0, 0, 1, 1], [], []>} : vector<4x128xbf16>, vector<128x128xbf16>, vector<4x128xf32> -> vector<4x128xf32>
    %1609 = arith.truncf %346 : vector<4x16xf32> to vector<4x16xbf16>
    %cst_544 = arith.constant dense<0.000000e+00> : vector<4x128xf32>
    %1610 = tpu.matmul %1609, %1474, %cst_544 {dimension_numbers = #tpu.dot_dimension_numbers<[1], [0], [0], [1], [0, 0, 1, 1], [], []>} : vector<4x16xbf16>, vector<16x128xbf16>, vector<4x128xf32> -> vector<4x128xf32>
    %1611 = arith.addf %1608, %1610 : vector<4x128xf32>
    %1612 = arith.addf %1611, %1480 : vector<4x128xf32>
    %1613 = arith.negf %1612 : vector<4x128xf32>
    %1614 = math.exp %1613 : vector<4x128xf32>
    %cst_545 = arith.constant 1.000000e+00 : f32
    %1615 = vector.broadcast %cst_545 : f32 to vector<4x128xf32>
    %1616 = arith.addf %1615, %1614 : vector<4x128xf32>
    %1617 = arith.divf %1615, %1616 : vector<4x128xf32>
    %c9_546 = arith.constant 9 : index
    %c0_547 = arith.constant 0 : index
    %c0_548 = arith.constant 0 : index
    %1618 = vector.load %arg27[%c9_546, %c0_547, %c0_548] : memref<16x4x128xf32, #tpu.memory_space<vmem>>, vector<1x4x128xf32>
    %1619 = vector.shape_cast %1618 : vector<1x4x128xf32> to vector<4x128xf32>
    %1620 = vector.shape_cast %1617 : vector<4x128xf32> to vector<1x4x128xf32>
    tpu.vector_store %arg27[%c9_546, %c0_547, %c0_548], %1620 {strides = array<i32>} : memref<16x4x128xf32, #tpu.memory_space<vmem>>, vector<1x4x128xf32>,
    %1621 = arith.truncf %1442 : vector<4x128xf32> to vector<4x128xbf16>
    %cst_549 = arith.constant dense<0.000000e+00> : vector<4x128xf32>
    %1622 = tpu.matmul %1621, %1473, %cst_549 {dimension_numbers = #tpu.dot_dimension_numbers<[1], [0], [0], [1], [0, 0, 1, 1], [], []>} : vector<4x128xbf16>, vector<128x128xbf16>, vector<4x128xf32> -> vector<4x128xf32>
    %1623 = arith.truncf %355 : vector<4x16xf32> to vector<4x16xbf16>
    %cst_550 = arith.constant dense<0.000000e+00> : vector<4x128xf32>
    %1624 = tpu.matmul %1623, %1474, %cst_550 {dimension_numbers = #tpu.dot_dimension_numbers<[1], [0], [0], [1], [0, 0, 1, 1], [], []>} : vector<4x16xbf16>, vector<16x128xbf16>, vector<4x128xf32> -> vector<4x128xf32>
    %1625 = arith.addf %1622, %1624 : vector<4x128xf32>
    %1626 = arith.addf %1625, %1480 : vector<4x128xf32>
    %1627 = arith.negf %1626 : vector<4x128xf32>
    %1628 = math.exp %1627 : vector<4x128xf32>
    %cst_551 = arith.constant 1.000000e+00 : f32
    %1629 = vector.broadcast %cst_551 : f32 to vector<4x128xf32>
    %1630 = arith.addf %1629, %1628 : vector<4x128xf32>
    %1631 = arith.divf %1629, %1630 : vector<4x128xf32>
    %c10_552 = arith.constant 10 : index
    %c0_553 = arith.constant 0 : index
    %c0_554 = arith.constant 0 : index
    %1632 = vector.load %arg27[%c10_552, %c0_553, %c0_554] : memref<16x4x128xf32, #tpu.memory_space<vmem>>, vector<1x4x128xf32>
    %1633 = vector.shape_cast %1632 : vector<1x4x128xf32> to vector<4x128xf32>
    %1634 = vector.shape_cast %1631 : vector<4x128xf32> to vector<1x4x128xf32>
    tpu.vector_store %arg27[%c10_552, %c0_553, %c0_554], %1634 {strides = array<i32>} : memref<16x4x128xf32, #tpu.memory_space<vmem>>, vector<1x4x128xf32>,
    %1635 = arith.truncf %1448 : vector<4x128xf32> to vector<4x128xbf16>
    %cst_555 = arith.constant dense<0.000000e+00> : vector<4x128xf32>
    %1636 = tpu.matmul %1635, %1473, %cst_555 {dimension_numbers = #tpu.dot_dimension_numbers<[1], [0], [0], [1], [0, 0, 1, 1], [], []>} : vector<4x128xbf16>, vector<128x128xbf16>, vector<4x128xf32> -> vector<4x128xf32>
    %1637 = arith.truncf %364 : vector<4x16xf32> to vector<4x16xbf16>
    %cst_556 = arith.constant dense<0.000000e+00> : vector<4x128xf32>
    %1638 = tpu.matmul %1637, %1474, %cst_556 {dimension_numbers = #tpu.dot_dimension_numbers<[1], [0], [0], [1], [0, 0, 1, 1], [], []>} : vector<4x16xbf16>, vector<16x128xbf16>, vector<4x128xf32> -> vector<4x128xf32>
    %1639 = arith.addf %1636, %1638 : vector<4x128xf32>
    %1640 = arith.addf %1639, %1480 : vector<4x128xf32>
    %1641 = arith.negf %1640 : vector<4x128xf32>
    %1642 = math.exp %1641 : vector<4x128xf32>
    %cst_557 = arith.constant 1.000000e+00 : f32
    %1643 = vector.broadcast %cst_557 : f32 to vector<4x128xf32>
    %1644 = arith.addf %1643, %1642 : vector<4x128xf32>
    %1645 = arith.divf %1643, %1644 : vector<4x128xf32>
    %c11_558 = arith.constant 11 : index
    %c0_559 = arith.constant 0 : index
    %c0_560 = arith.constant 0 : index
    %1646 = vector.load %arg27[%c11_558, %c0_559, %c0_560] : memref<16x4x128xf32, #tpu.memory_space<vmem>>, vector<1x4x128xf32>
    %1647 = vector.shape_cast %1646 : vector<1x4x128xf32> to vector<4x128xf32>
    %1648 = vector.shape_cast %1645 : vector<4x128xf32> to vector<1x4x128xf32>
    tpu.vector_store %arg27[%c11_558, %c0_559, %c0_560], %1648 {strides = array<i32>} : memref<16x4x128xf32, #tpu.memory_space<vmem>>, vector<1x4x128xf32>,
    %1649 = arith.truncf %1454 : vector<4x128xf32> to vector<4x128xbf16>
    %cst_561 = arith.constant dense<0.000000e+00> : vector<4x128xf32>
    %1650 = tpu.matmul %1649, %1473, %cst_561 {dimension_numbers = #tpu.dot_dimension_numbers<[1], [0], [0], [1], [0, 0, 1, 1], [], []>} : vector<4x128xbf16>, vector<128x128xbf16>, vector<4x128xf32> -> vector<4x128xf32>
    %1651 = arith.truncf %373 : vector<4x16xf32> to vector<4x16xbf16>
    %cst_562 = arith.constant dense<0.000000e+00> : vector<4x128xf32>
    %1652 = tpu.matmul %1651, %1474, %cst_562 {dimension_numbers = #tpu.dot_dimension_numbers<[1], [0], [0], [1], [0, 0, 1, 1], [], []>} : vector<4x16xbf16>, vector<16x128xbf16>, vector<4x128xf32> -> vector<4x128xf32>
    %1653 = arith.addf %1650, %1652 : vector<4x128xf32>
    %1654 = arith.addf %1653, %1480 : vector<4x128xf32>
    %1655 = arith.negf %1654 : vector<4x128xf32>
    %1656 = math.exp %1655 : vector<4x128xf32>
    %cst_563 = arith.constant 1.000000e+00 : f32
    %1657 = vector.broadcast %cst_563 : f32 to vector<4x128xf32>
    %1658 = arith.addf %1657, %1656 : vector<4x128xf32>
    %1659 = arith.divf %1657, %1658 : vector<4x128xf32>
    %c12_564 = arith.constant 12 : index
    %c0_565 = arith.constant 0 : index
    %c0_566 = arith.constant 0 : index
    %1660 = vector.load %arg27[%c12_564, %c0_565, %c0_566] : memref<16x4x128xf32, #tpu.memory_space<vmem>>, vector<1x4x128xf32>
    %1661 = vector.shape_cast %1660 : vector<1x4x128xf32> to vector<4x128xf32>
    %1662 = vector.shape_cast %1659 : vector<4x128xf32> to vector<1x4x128xf32>
    tpu.vector_store %arg27[%c12_564, %c0_565, %c0_566], %1662 {strides = array<i32>} : memref<16x4x128xf32, #tpu.memory_space<vmem>>, vector<1x4x128xf32>,
    %1663 = arith.truncf %1460 : vector<4x128xf32> to vector<4x128xbf16>
    %cst_567 = arith.constant dense<0.000000e+00> : vector<4x128xf32>
    %1664 = tpu.matmul %1663, %1473, %cst_567 {dimension_numbers = #tpu.dot_dimension_numbers<[1], [0], [0], [1], [0, 0, 1, 1], [], []>} : vector<4x128xbf16>, vector<128x128xbf16>, vector<4x128xf32> -> vector<4x128xf32>
    %1665 = arith.truncf %382 : vector<4x16xf32> to vector<4x16xbf16>
    %cst_568 = arith.constant dense<0.000000e+00> : vector<4x128xf32>
    %1666 = tpu.matmul %1665, %1474, %cst_568 {dimension_numbers = #tpu.dot_dimension_numbers<[1], [0], [0], [1], [0, 0, 1, 1], [], []>} : vector<4x16xbf16>, vector<16x128xbf16>, vector<4x128xf32> -> vector<4x128xf32>
    %1667 = arith.addf %1664, %1666 : vector<4x128xf32>
    %1668 = arith.addf %1667, %1480 : vector<4x128xf32>
    %1669 = arith.negf %1668 : vector<4x128xf32>
    %1670 = math.exp %1669 : vector<4x128xf32>
    %cst_569 = arith.constant 1.000000e+00 : f32
    %1671 = vector.broadcast %cst_569 : f32 to vector<4x128xf32>
    %1672 = arith.addf %1671, %1670 : vector<4x128xf32>
    %1673 = arith.divf %1671, %1672 : vector<4x128xf32>
    %c13_570 = arith.constant 13 : index
    %c0_571 = arith.constant 0 : index
    %c0_572 = arith.constant 0 : index
    %1674 = vector.load %arg27[%c13_570, %c0_571, %c0_572] : memref<16x4x128xf32, #tpu.memory_space<vmem>>, vector<1x4x128xf32>
    %1675 = vector.shape_cast %1674 : vector<1x4x128xf32> to vector<4x128xf32>
    %1676 = vector.shape_cast %1673 : vector<4x128xf32> to vector<1x4x128xf32>
    tpu.vector_store %arg27[%c13_570, %c0_571, %c0_572], %1676 {strides = array<i32>} : memref<16x4x128xf32, #tpu.memory_space<vmem>>, vector<1x4x128xf32>,
    %1677 = arith.truncf %1466 : vector<4x128xf32> to vector<4x128xbf16>
    %cst_573 = arith.constant dense<0.000000e+00> : vector<4x128xf32>
    %1678 = tpu.matmul %1677, %1473, %cst_573 {dimension_numbers = #tpu.dot_dimension_numbers<[1], [0], [0], [1], [0, 0, 1, 1], [], []>} : vector<4x128xbf16>, vector<128x128xbf16>, vector<4x128xf32> -> vector<4x128xf32>
    %1679 = arith.truncf %391 : vector<4x16xf32> to vector<4x16xbf16>
    %cst_574 = arith.constant dense<0.000000e+00> : vector<4x128xf32>
    %1680 = tpu.matmul %1679, %1474, %cst_574 {dimension_numbers = #tpu.dot_dimension_numbers<[1], [0], [0], [1], [0, 0, 1, 1], [], []>} : vector<4x16xbf16>, vector<16x128xbf16>, vector<4x128xf32> -> vector<4x128xf32>
    %1681 = arith.addf %1678, %1680 : vector<4x128xf32>
    %1682 = arith.addf %1681, %1480 : vector<4x128xf32>
    %1683 = arith.negf %1682 : vector<4x128xf32>
    %1684 = math.exp %1683 : vector<4x128xf32>
    %cst_575 = arith.constant 1.000000e+00 : f32
    %1685 = vector.broadcast %cst_575 : f32 to vector<4x128xf32>
    %1686 = arith.addf %1685, %1684 : vector<4x128xf32>
    %1687 = arith.divf %1685, %1686 : vector<4x128xf32>
    %c14_576 = arith.constant 14 : index
    %c0_577 = arith.constant 0 : index
    %c0_578 = arith.constant 0 : index
    %1688 = vector.load %arg27[%c14_576, %c0_577, %c0_578] : memref<16x4x128xf32, #tpu.memory_space<vmem>>, vector<1x4x128xf32>
    %1689 = vector.shape_cast %1688 : vector<1x4x128xf32> to vector<4x128xf32>
    %1690 = vector.shape_cast %1687 : vector<4x128xf32> to vector<1x4x128xf32>
    tpu.vector_store %arg27[%c14_576, %c0_577, %c0_578], %1690 {strides = array<i32>} : memref<16x4x128xf32, #tpu.memory_space<vmem>>, vector<1x4x128xf32>,
    %1691 = arith.truncf %1472 : vector<4x128xf32> to vector<4x128xbf16>
    %cst_579 = arith.constant dense<0.000000e+00> : vector<4x128xf32>
    %1692 = tpu.matmul %1691, %1473, %cst_579 {dimension_numbers = #tpu.dot_dimension_numbers<[1], [0], [0], [1], [0, 0, 1, 1], [], []>} : vector<4x128xbf16>, vector<128x128xbf16>, vector<4x128xf32> -> vector<4x128xf32>
    %1693 = arith.truncf %400 : vector<4x16xf32> to vector<4x16xbf16>
    %cst_580 = arith.constant dense<0.000000e+00> : vector<4x128xf32>
    %1694 = tpu.matmul %1693, %1474, %cst_580 {dimension_numbers = #tpu.dot_dimension_numbers<[1], [0], [0], [1], [0, 0, 1, 1], [], []>} : vector<4x16xbf16>, vector<16x128xbf16>, vector<4x128xf32> -> vector<4x128xf32>
    %1695 = arith.addf %1692, %1694 : vector<4x128xf32>
    %1696 = arith.addf %1695, %1480 : vector<4x128xf32>
    %1697 = arith.negf %1696 : vector<4x128xf32>
    %1698 = math.exp %1697 : vector<4x128xf32>
    %cst_581 = arith.constant 1.000000e+00 : f32
    %1699 = vector.broadcast %cst_581 : f32 to vector<4x128xf32>
    %1700 = arith.addf %1699, %1698 : vector<4x128xf32>
    %1701 = arith.divf %1699, %1700 : vector<4x128xf32>
    %c15_582 = arith.constant 15 : index
    %c0_583 = arith.constant 0 : index
    %c0_584 = arith.constant 0 : index
    %1702 = vector.load %arg27[%c15_582, %c0_583, %c0_584] : memref<16x4x128xf32, #tpu.memory_space<vmem>>, vector<1x4x128xf32>
    %1703 = vector.shape_cast %1702 : vector<1x4x128xf32> to vector<4x128xf32>
    %1704 = vector.shape_cast %1701 : vector<4x128xf32> to vector<1x4x128xf32>
    tpu.vector_store %arg27[%c15_582, %c0_583, %c0_584], %1704 {strides = array<i32>} : memref<16x4x128xf32, #tpu.memory_space<vmem>>, vector<1x4x128xf32>,
    return
  }
}

</mosaic_0001>

<llo_original>
// kernel: sample_generator_forward.1
$region0: #{sample_generator_forward.1}
  #allocation0 [shape = 'u32[]', space=smem, size = 0x4, offset = 0x4, fixed_abs, tag = 'smem constant byte address 0x4 - core index']
  #allocation1 [shape = 'u32[72,128]{1,0:T(1,128)}', space=vmem, size = 0x9000, scoped, tag = 'internal scratch']
  %s0 = inlined_call_operand.vmem [shape: f32[16,4,128], index: 0, kind: input, shape index: {}]
  %s1 = inlined_call_operand.vmem [shape: f32[4,100], index: 1, kind: input, shape index: {}]
  %s2 = inlined_call_operand.vmem [shape: f32[4,100], index: 2, kind: input, shape index: {}]
  %s3 = inlined_call_operand.vmem [shape: bf16[128,16], index: 3, kind: input, shape index: {}]
  %s4 = inlined_call_operand.vmem [shape: f32[1,16], index: 4, kind: input, shape index: {}]
  %s5 = inlined_call_operand.vmem [shape: f32[1,16], index: 5, kind: input, shape index: {}]
  %s6 = inlined_call_operand.hbm [shape: f32[1,16], index: 6, kind: input, shape index: {}]
  %s7 = inlined_call_operand.hbm [shape: bf16[6,16,16], index: 7, kind: input, shape index: {}]
  %s8 = inlined_call_operand.vmem [shape: f32[3,1,16], index: 8, kind: input, shape index: {}]
  %s9 = inlined_call_operand.vmem [shape: f32[3,1,16], index: 9, kind: input, shape index: {}]
  %s10 = inlined_call_operand.hbm [shape: f32[3,1,16], index: 10, kind: input, shape index: {}]
  %s11 = inlined_call_operand.vmem [shape: bf16[100,256], index: 11, kind: input, shape index: {}]
  %s12 = inlined_call_operand.hbm [shape: bf16[100,256], index: 12, kind: input, shape index: {}]
  %s13 = inlined_call_operand.hbm [shape: f32[1,256], index: 13, kind: input, shape index: {}]
  %s14 = inlined_call_operand.hbm [shape: f32[1,256], index: 14, kind: input, shape index: {}]
  %s15 = inlined_call_operand.hbm [shape: f32[1,256], index: 15, kind: input, shape index: {}]
  %s16 = inlined_call_operand.hbm [shape: bf16[2,256,256], index: 16, kind: input, shape index: {}]
  %s17 = inlined_call_operand.hbm [shape: bf16[2,128,256], index: 17, kind: input, shape index: {}]
  %s18 = inlined_call_operand.hbm [shape: bf16[3,16,256], index: 18, kind: input, shape index: {}]
  %s19 = inlined_call_operand.hbm [shape: bf16[3,100,256], index: 19, kind: input, shape index: {}]
  %s20 = inlined_call_operand.vmem [shape: f32[3,1,256], index: 20, kind: input, shape index: {}]
  %s21 = inlined_call_operand.vmem [shape: f32[3,1,128], index: 21, kind: input, shape index: {}]
  %s22 = inlined_call_operand.hbm [shape: f32[3,1,128], index: 22, kind: input, shape index: {}]
  %s23 = inlined_call_operand.vmem [shape: bf16[128,128], index: 23, kind: input, shape index: {}]
  %s24 = inlined_call_operand.vmem [shape: bf16[16,128], index: 24, kind: input, shape index: {}]
  %s25 = inlined_call_operand.hbm [shape: bf16[100,128], index: 25, kind: input, shape index: {}]
  %s26 = inlined_call_operand.hbm [shape: f32[1,128], index: 26, kind: input, shape index: {}]
  %s27 = inlined_call_operand.vmem [shape: f32[16,4,128], index: 27, kind: output, shape index: {}]
  %s28 = sld [smem:[#allocation0]]
  $region174: #{sample_generator_forward.1} parent=0
    _
  %s30 = ssub.s32 1, %s28
  %s31 = scalar_select 0, %s30, %s28
  $region1: #{sample_generator_forward.1} parent=0
    #allocation2 [shape = 'u8[512]{0}', space=vmem, size = 0x400, scoped, tag = 'input window, operand 6, single buffered']
    #allocation3 [shape = 's32[1]{0}', space=sflag, size = 0x4, scoped, tag = 'scoped memory for sample_generator_forward.1']
    #allocation4 [shape = 'u8[24576]{0}', space=vmem, size = 0x6000, scoped, tag = 'input window, operand 7, single buffered']
    #allocation5 [shape = 's32[1]{0}', space=sflag, size = 0x4, scoped, tag = 'scoped memory for sample_generator_forward.1']
    #allocation6 [shape = 'u8[1536]{0}', space=vmem, size = 0x800, scoped, tag = 'input window, operand 10, single buffered']
    #allocation7 [shape = 'u8[53248]{0}', space=vmem, size = 0xd000, scoped, tag = 'input window, operand 12, single buffered']
    #allocation8 [shape = 's32[1]{0}', space=sflag, size = 0x4, scoped, tag = 'scoped memory for sample_generator_forward.1']
    #allocation9 [shape = 'u8[1024]{0}', space=vmem, size = 0x400, scoped, tag = 'input window, operand 13, single buffered']
    #allocation10 [shape = 'u8[1024]{0}', space=vmem, size = 0x400, scoped, tag = 'input window, operand 14, single buffered']
    #allocation11 [shape = 's32[1]{0}', space=sflag, size = 0x4, scoped, tag = 'scoped memory for sample_generator_forward.1']
    #allocation12 [shape = 'u8[1024]{0}', space=vmem, size = 0x400, scoped, tag = 'input window, operand 15, single buffered']
    #allocation13 [shape = 'u8[262144]{0}', space=vmem, size = 0x40000, scoped, tag = 'input window, operand 16, single buffered']
    #allocation14 [shape = 's32[1]{0}', space=sflag, size = 0x4, scoped, tag = 'scoped memory for sample_generator_forward.1']
    #allocation15 [shape = 'u8[131072]{0}', space=vmem, size = 0x20000, scoped, tag = 'input window, operand 17, single buffered']
    #allocation16 [shape = 'u8[24576]{0}', space=vmem, size = 0x6000, scoped, tag = 'input window, operand 18, single buffered']
    #allocation17 [shape = 's32[1]{0}', space=sflag, size = 0x4, scoped, tag = 'scoped memory for sample_generator_forward.1']
    #allocation18 [shape = 'u8[159744]{0}', space=vmem, size = 0x27000, scoped, tag = 'input window, operand 19, single buffered']
    #allocation19 [shape = 'u8[1536]{0}', space=vmem, size = 0x800, scoped, tag = 'input window, operand 22, single buffered']
    #allocation20 [shape = 's32[1]{0}', space=sflag, size = 0x4, scoped, tag = 'scoped memory for sample_generator_forward.1']
    #allocation21 [shape = 'u8[26624]{0}', space=vmem, size = 0x6800, scoped, tag = 'input window, operand 25, single buffered']
    #allocation22 [shape = 'u8[512]{0}', space=vmem, size = 0x400, scoped, tag = 'input window, operand 26, single buffered']
    #allocation23 [shape = 's32[1]{0}', space=sflag, size = 0x4, scoped, tag = 'scoped memory for sample_generator_forward.1']
    %32 = vsyncpa [#allocation3], 0
    %33 = vsyncpa [#allocation5], 0
    %34 = vsyncpa [#allocation8], 0
    %35 = vsyncpa [#allocation11], 0
    %36 = vsyncpa [#allocation14], 0
    %37 = vsyncpa [#allocation17], 0
    %38 = vsyncpa [#allocation20], 0
    %39 = vsyncpa [#allocation23], 0
    // Predicated region
    $region2: #{sample_generator_forward.1} parent=1 // pred_check
      _
    $region3: #{sample_generator_forward.1} parent=1 // pred_check_branch
      %41 = sbr.rel (0) target = $region5
    $region4: #{sample_generator_forward.1} parent=1 // pred_region
      _
    $region5: #{sample_generator_forward.1} parent=1 // pred_fallthru
      _
    // Predicated region
    $region6: #{sample_generator_forward.1} parent=1 // pred_check
      _
    $region7: #{sample_generator_forward.1} parent=1 // pred_check_branch
      %43 = sbr.rel (0) target = $region9
    $region8: #{sample_generator_forward.1} parent=1 // pred_region
      _
    $region9: #{sample_generator_forward.1} parent=1 // pred_fallthru
      _
    // Predicated region
    $region10: #{sample_generator_forward.1} parent=1 // pred_check
      _
    $region11: #{sample_generator_forward.1} parent=1 // pred_check_branch
      %45 = sbr.rel (0) target = $region13
    $region12: #{sample_generator_forward.1} parent=1 // pred_region
      _
    $region13: #{sample_generator_forward.1} parent=1 // pred_fallthru
      _
    // Predicated region
    $region14: #{sample_generator_forward.1} parent=1 // pred_check
      _
    $region15: #{sample_generator_forward.1} parent=1 // pred_check_branch
      %47 = sbr.rel (0) target = $region17
    $region16: #{sample_generator_forward.1} parent=1 // pred_region
      _
    $region17: #{sample_generator_forward.1} parent=1 // pred_fallthru
      _
    // Predicated region
    $region18: #{sample_generator_forward.1} parent=1 // pred_check
      _
    $region19: #{sample_generator_forward.1} parent=1 // pred_check_branch
      %49 = sbr.rel (0) target = $region21
    $region20: #{sample_generator_forward.1} parent=1 // pred_region
      _
    $region21: #{sample_generator_forward.1} parent=1 // pred_fallthru
      _
    // Predicated region
    $region22: #{sample_generator_forward.1} parent=1 // pred_check
      _
    $region23: #{sample_generator_forward.1} parent=1 // pred_check_branch
      %51 = sbr.rel (0) target = $region25
    $region24: #{sample_generator_forward.1} parent=1 // pred_region
      _
    $region25: #{sample_generator_forward.1} parent=1 // pred_fallthru
      _
    // Predicated region
    $region26: #{sample_generator_forward.1} parent=1 // pred_check
      _
    $region27: #{sample_generator_forward.1} parent=1 // pred_check_branch
      %53 = sbr.rel (0) target = $region29
    $region28: #{sample_generator_forward.1} parent=1 // pred_region
      %55 = vsyncadd [#allocation3], 0
      %s57 = sshll.u32 %s6, 4
      %s58 = int_to_ptr.hbm [resolvable:$true] %s57
      %s59 = sshll.u32 [#allocation2], 4
      %s60 = int_to_ptr.vmem [resolvable:$true] %s59
      %62 = dma.hbm_to_vmem [thread:$0]  %s58, 16, %s60, [#allocation3]
    $region29: #{sample_generator_forward.1} parent=1 // pred_fallthru
      _
    // Predicated region
    $region30: #{sample_generator_forward.1} parent=1 // pred_check
      _
    $region31: #{sample_generator_forward.1} parent=1 // pred_check_branch
      %64 = sbr.rel (0) target = $region33
    $region32: #{sample_generator_forward.1} parent=1 // pred_region
      %66 = vsyncadd [#allocation5], 0
      %s67 = sshll.u32 %s7, 4
      %s68 = int_to_ptr.hbm [resolvable:$true] %s67
      %s69 = sshll.u32 [#allocation4], 4
      %s70 = int_to_ptr.vmem [resolvable:$true] %s69
      %75 = dma.hbm_to_vmem [thread:$0]  %s68, 768, %s70, [#allocation5], 64, 64, 4
    $region33: #{sample_generator_forward.1} parent=1 // pred_fallthru
      _
    // Predicated region
    $region34: #{sample_generator_forward.1} parent=1 // pred_check
      _
    $region35: #{sample_generator_forward.1} parent=1 // pred_check_branch
      %77 = sbr.rel (0) target = $region37
    $region36: #{sample_generator_forward.1} parent=1 // pred_region
      _
    $region37: #{sample_generator_forward.1} parent=1 // pred_fallthru
      _
    // Predicated region
    $region38: #{sample_generator_forward.1} parent=1 // pred_check
      _
    $region39: #{sample_generator_forward.1} parent=1 // pred_check_branch
      %79 = sbr.rel (0) target = $region41
    $region40: #{sample_generator_forward.1} parent=1 // pred_region
      _
    $region41: #{sample_generator_forward.1} parent=1 // pred_fallthru
      _
    // Predicated region
    $region42: #{sample_generator_forward.1} parent=1 // pred_check
      _
    $region43: #{sample_generator_forward.1} parent=1 // pred_check_branch
      %81 = sbr.rel (0) target = $region45
    $region44: #{sample_generator_forward.1} parent=1 // pred_region
      %83 = vsyncadd [#allocation5], 0
      %s84 = sshll.u32 %s10, 4
      %s85 = int_to_ptr.hbm [resolvable:$true] %s84
      %s86 = sshll.u32 [#allocation6], 4
      %s87 = int_to_ptr.vmem [resolvable:$true] %s86
      %92 = dma.hbm_to_vmem [thread:$0]  %s85, 48, %s87, [#allocation5], 16, 16, 1
    $region45: #{sample_generator_forward.1} parent=1 // pred_fallthru
      _
    // Predicated region
    $region46: #{sample_generator_forward.1} parent=1 // pred_check
      _
    $region47: #{sample_generator_forward.1} parent=1 // pred_check_branch
      %94 = sbr.rel (0) target = $region49
    $region48: #{sample_generator_forward.1} parent=1 // pred_region
      _
    $region49: #{sample_generator_forward.1} parent=1 // pred_fallthru
      _
    // Predicated region
    $region50: #{sample_generator_forward.1} parent=1 // pred_check
      _
    $region51: #{sample_generator_forward.1} parent=1 // pred_check_branch
      %96 = sbr.rel (0) target = $region53
    $region52: #{sample_generator_forward.1} parent=1 // pred_region
      %98 = vsyncadd [#allocation8], 0
      %s99 = sshll.u32 %s12, 4
      %s100 = int_to_ptr.hbm [resolvable:$true] %s99
      %s101 = sshll.u32 [#allocation7], 4
      %s102 = int_to_ptr.vmem [resolvable:$true] %s101
      %107 = dma.hbm_to_vmem [thread:$0]  %s100, 1664, %s102, [#allocation8], 128, 128, 8
    $region53: #{sample_generator_forward.1} parent=1 // pred_fallthru
      _
    // Predicated region
    $region54: #{sample_generator_forward.1} parent=1 // pred_check
      _
    $region55: #{sample_generator_forward.1} parent=1 // pred_check_branch
      %109 = sbr.rel (0) target = $region57
    $region56: #{sample_generator_forward.1} parent=1 // pred_region
      %111 = vsyncadd [#allocation8], 0
      %s113 = sshll.u32 %s13, 4
      %s114 = int_to_ptr.hbm [resolvable:$true] %s113
      %s115 = sshll.u32 [#allocation9], 4
      %s116 = int_to_ptr.vmem [resolvable:$true] %s115
      %118 = dma.hbm_to_vmem [thread:$0]  %s114, 32, %s116, [#allocation8]
    $region57: #{sample_generator_forward.1} parent=1 // pred_fallthru
      _
    // Predicated region
    $region58: #{sample_generator_forward.1} parent=1 // pred_check
      _
    $region59: #{sample_generator_forward.1} parent=1 // pred_check_branch
      %120 = sbr.rel (0) target = $region61
    $region60: #{sample_generator_forward.1} parent=1 // pred_region
      %122 = vsyncadd [#allocation11], 0
      %s124 = sshll.u32 %s14, 4
      %s125 = int_to_ptr.hbm [resolvable:$true] %s124
      %s126 = sshll.u32 [#allocation10], 4
      %s127 = int_to_ptr.vmem [resolvable:$true] %s126
      %129 = dma.hbm_to_vmem [thread:$0]  %s125, 32, %s127, [#allocation11]
    $region61: #{sample_generator_forward.1} parent=1 // pred_fallthru
      _
    // Predicated region
    $region62: #{sample_generator_forward.1} parent=1 // pred_check
      _
    $region63: #{sample_generator_forward.1} parent=1 // pred_check_branch
      %131 = sbr.rel (0) target = $region65
    $region64: #{sample_generator_forward.1} parent=1 // pred_region
      %133 = vsyncadd [#allocation11], 0
      %s135 = sshll.u32 %s15, 4
      %s136 = int_to_ptr.hbm [resolvable:$true] %s135
      %s137 = sshll.u32 [#allocation12], 4
      %s138 = int_to_ptr.vmem [resolvable:$true] %s137
      %140 = dma.hbm_to_vmem [thread:$0]  %s136, 32, %s138, [#allocation11]
    $region65: #{sample_generator_forward.1} parent=1 // pred_fallthru
      _
    // Predicated region
    $region66: #{sample_generator_forward.1} parent=1 // pred_check
      _
    $region67: #{sample_generator_forward.1} parent=1 // pred_check_branch
      %142 = sbr.rel (0) target = $region69
    $region68: #{sample_generator_forward.1} parent=1 // pred_region
      %144 = vsyncadd [#allocation14], 0
      %s145 = sshll.u32 %s16, 4
      %s146 = int_to_ptr.hbm [resolvable:$true] %s145
      %s147 = sshll.u32 [#allocation13], 4
      %s148 = int_to_ptr.vmem [resolvable:$true] %s147
      %153 = dma.hbm_to_vmem [thread:$0]  %s146, 8192, %s148, [#allocation14], 128, 128, 8
    $region69: #{sample_generator_forward.1} parent=1 // pred_fallthru
      _
    // Predicated region
    $region70: #{sample_generator_forward.1} parent=1 // pred_check
      _
    $region71: #{sample_generator_forward.1} parent=1 // pred_check_branch
      %155 = sbr.rel (0) target = $region73
    $region72: #{sample_generator_forward.1} parent=1 // pred_region
      %157 = vsyncadd [#allocation14], 0
      %s158 = sshll.u32 %s17, 4
      %s159 = int_to_ptr.hbm [resolvable:$true] %s158
      %s160 = sshll.u32 [#allocation15], 4
      %s161 = int_to_ptr.vmem [resolvable:$true] %s160
      %166 = dma.hbm_to_vmem [thread:$0]  %s159, 4096, %s161, [#allocation14], 128, 128, 8
    $region73: #{sample_generator_forward.1} parent=1 // pred_fallthru
      _
    // Predicated region
    $region74: #{sample_generator_forward.1} parent=1 // pred_check
      _
    $region75: #{sample_generator_forward.1} parent=1 // pred_check_branch
      %168 = sbr.rel (0) target = $region77
    $region76: #{sample_generator_forward.1} parent=1 // pred_region
      %170 = vsyncadd [#allocation17], 0
      %s171 = sshll.u32 %s18, 4
      %s172 = int_to_ptr.hbm [resolvable:$true] %s171
      %s173 = sshll.u32 [#allocation16], 4
      %s174 = int_to_ptr.vmem [resolvable:$true] %s173
      %179 = dma.hbm_to_vmem [thread:$0]  %s172, 768, %s174, [#allocation17], 128, 128, 8
    $region77: #{sample_generator_forward.1} parent=1 // pred_fallthru
      _
    // Predicated region
    $region78: #{sample_generator_forward.1} parent=1 // pred_check
      _
    $region79: #{sample_generator_forward.1} parent=1 // pred_check_branch
      %181 = sbr.rel (0) target = $region81
    $region80: #{sample_generator_forward.1} parent=1 // pred_region
      %183 = vsyncadd [#allocation17], 0
      %s184 = sshll.u32 %s19, 4
      %s185 = int_to_ptr.hbm [resolvable:$true] %s184
      %s186 = sshll.u32 [#allocation18], 4
      %s187 = int_to_ptr.vmem [resolvable:$true] %s186
      %192 = dma.hbm_to_vmem [thread:$0]  %s185, 4992, %s187, [#allocation17], 128, 128, 8
    $region81: #{sample_generator_forward.1} parent=1 // pred_fallthru
      _
    // Predicated region
    $region82: #{sample_generator_forward.1} parent=1 // pred_check
      _
    $region83: #{sample_generator_forward.1} parent=1 // pred_check_branch
      %194 = sbr.rel (0) target = $region85
    $region84: #{sample_generator_forward.1} parent=1 // pred_region
      _
    $region85: #{sample_generator_forward.1} parent=1 // pred_fallthru
      _
    // Predicated region
    $region86: #{sample_generator_forward.1} parent=1 // pred_check
      _
    $region87: #{sample_generator_forward.1} parent=1 // pred_check_branch
      %196 = sbr.rel (0) target = $region89
    $region88: #{sample_generator_forward.1} parent=1 // pred_region
      _
    $region89: #{sample_generator_forward.1} parent=1 // pred_fallthru
      _
    // Predicated region
    $region90: #{sample_generator_forward.1} parent=1 // pred_check
      _
    $region91: #{sample_generator_forward.1} parent=1 // pred_check_branch
      %198 = sbr.rel (0) target = $region93
    $region92: #{sample_generator_forward.1} parent=1 // pred_region
      %200 = vsyncadd [#allocation20], 0
      %s201 = sshll.u32 %s22, 4
      %s202 = int_to_ptr.hbm [resolvable:$true] %s201
      %s203 = sshll.u32 [#allocation19], 4
      %s204 = int_to_ptr.vmem [resolvable:$true] %s203
      %209 = dma.hbm_to_vmem [thread:$0]  %s202, 48, %s204, [#allocation20], 16, 16, 1
    $region93: #{sample_generator_forward.1} parent=1 // pred_fallthru
      _
    // Predicated region
    $region94: #{sample_generator_forward.1} parent=1 // pred_check
      _
    $region95: #{sample_generator_forward.1} parent=1 // pred_check_branch
      %211 = sbr.rel (0) target = $region97
    $region96: #{sample_generator_forward.1} parent=1 // pred_region
      _
    $region97: #{sample_generator_forward.1} parent=1 // pred_fallthru
      _
    // Predicated region
    $region98: #{sample_generator_forward.1} parent=1 // pred_check
      _
    $region99: #{sample_generator_forward.1} parent=1 // pred_check_branch
      %213 = sbr.rel (0) target = $region101
    $region100: #{sample_generator_forward.1} parent=1 // pred_region
      _
    $region101: #{sample_generator_forward.1} parent=1 // pred_fallthru
      _
    // Predicated region
    $region102: #{sample_generator_forward.1} parent=1 // pred_check
      _
    $region103: #{sample_generator_forward.1} parent=1 // pred_check_branch
      %215 = sbr.rel (0) target = $region105
    $region104: #{sample_generator_forward.1} parent=1 // pred_region
      %217 = vsyncadd [#allocation20], 0
      %s218 = sshll.u32 %s25, 4
      %s219 = int_to_ptr.hbm [resolvable:$true] %s218
      %s220 = sshll.u32 [#allocation21], 4
      %s221 = int_to_ptr.vmem [resolvable:$true] %s220
      %226 = dma.hbm_to_vmem [thread:$0]  %s219, 832, %s221, [#allocation20], 64, 64, 4
    $region105: #{sample_generator_forward.1} parent=1 // pred_fallthru
      _
    // Predicated region
    $region106: #{sample_generator_forward.1} parent=1 // pred_check
      _
    $region107: #{sample_generator_forward.1} parent=1 // pred_check_branch
      %228 = sbr.rel (0) target = $region109
    $region108: #{sample_generator_forward.1} parent=1 // pred_region
      %230 = vsyncadd [#allocation23], 0
      %s232 = sshll.u32 %s26, 4
      %s233 = int_to_ptr.hbm [resolvable:$true] %s232
      %s234 = sshll.u32 [#allocation22], 4
      %s235 = int_to_ptr.vmem [resolvable:$true] %s234
      %237 = dma.hbm_to_vmem [thread:$0]  %s233, 16, %s235, [#allocation23]
    $region109: #{sample_generator_forward.1} parent=1 // pred_fallthru
      _
    // Predicated region
    $region110: #{sample_generator_forward.1} parent=1 // pred_check
      _
    $region111: #{sample_generator_forward.1} parent=1 // pred_check_branch
      %239 = sbr.rel (0) target = $region113
    $region112: #{sample_generator_forward.1} parent=1 // pred_region
      %241 = dma.done [#allocation3], 16
    $region113: #{sample_generator_forward.1} parent=1 // pred_fallthru
      _
    // Predicated region
    $region114: #{sample_generator_forward.1} parent=1 // pred_check
      _
    $region115: #{sample_generator_forward.1} parent=1 // pred_check_branch
      %243 = sbr.rel (0) target = $region117
    $region116: #{sample_generator_forward.1} parent=1 // pred_region
      %245 = dma.done [#allocation5], 768
    $region117: #{sample_generator_forward.1} parent=1 // pred_fallthru
      _
    // Predicated region
    $region118: #{sample_generator_forward.1} parent=1 // pred_check
      _
    $region119: #{sample_generator_forward.1} parent=1 // pred_check_branch
      %247 = sbr.rel (0) target = $region121
    $region120: #{sample_generator_forward.1} parent=1 // pred_region
      %249 = dma.done [#allocation5], 48
    $region121: #{sample_generator_forward.1} parent=1 // pred_fallthru
      _
    // Predicated region
    $region122: #{sample_generator_forward.1} parent=1 // pred_check
      _
    $region123: #{sample_generator_forward.1} parent=1 // pred_check_branch
      %251 = sbr.rel (0) target = $region125
    $region124: #{sample_generator_forward.1} parent=1 // pred_region
      %253 = dma.done [#allocation8], 1664
    $region125: #{sample_generator_forward.1} parent=1 // pred_fallthru
      _
    // Predicated region
    $region126: #{sample_generator_forward.1} parent=1 // pred_check
      _
    $region127: #{sample_generator_forward.1} parent=1 // pred_check_branch
      %255 = sbr.rel (0) target = $region129
    $region128: #{sample_generator_forward.1} parent=1 // pred_region
      %257 = dma.done [#allocation8], 32
    $region129: #{sample_generator_forward.1} parent=1 // pred_fallthru
      _
    // Predicated region
    $region130: #{sample_generator_forward.1} parent=1 // pred_check
      _
    $region131: #{sample_generator_forward.1} parent=1 // pred_check_branch
      %259 = sbr.rel (0) target = $region133
    $region132: #{sample_generator_forward.1} parent=1 // pred_region
      %261 = dma.done [#allocation11], 32
    $region133: #{sample_generator_forward.1} parent=1 // pred_fallthru
      _
    // Predicated region
    $region134: #{sample_generator_forward.1} parent=1 // pred_check
      _
    $region135: #{sample_generator_forward.1} parent=1 // pred_check_branch
      %263 = sbr.rel (0) target = $region137
    $region136: #{sample_generator_forward.1} parent=1 // pred_region
      %265 = dma.done [#allocation11], 32
    $region137: #{sample_generator_forward.1} parent=1 // pred_fallthru
      _
    // Predicated region
    $region138: #{sample_generator_forward.1} parent=1 // pred_check
      _
    $region139: #{sample_generator_forward.1} parent=1 // pred_check_branch
      %267 = sbr.rel (0) target = $region141
    $region140: #{sample_generator_forward.1} parent=1 // pred_region
      %269 = dma.done [#allocation14], 8192
    $region141: #{sample_generator_forward.1} parent=1 // pred_fallthru
      _
    // Predicated region
    $region142: #{sample_generator_forward.1} parent=1 // pred_check
      _
    $region143: #{sample_generator_forward.1} parent=1 // pred_check_branch
      %271 = sbr.rel (0) target = $region145
    $region144: #{sample_generator_forward.1} parent=1 // pred_region
      %273 = dma.done [#allocation14], 4096
    $region145: #{sample_generator_forward.1} parent=1 // pred_fallthru
      _
    // Predicated region
    $region146: #{sample_generator_forward.1} parent=1 // pred_check
      _
    $region147: #{sample_generator_forward.1} parent=1 // pred_check_branch
      %275 = sbr.rel (0) target = $region149
    $region148: #{sample_generator_forward.1} parent=1 // pred_region
      %277 = dma.done [#allocation17], 768
    $region149: #{sample_generator_forward.1} parent=1 // pred_fallthru
      _
    // Predicated region
    $region150: #{sample_generator_forward.1} parent=1 // pred_check
      _
    $region151: #{sample_generator_forward.1} parent=1 // pred_check_branch
      %279 = sbr.rel (0) target = $region153
    $region152: #{sample_generator_forward.1} parent=1 // pred_region
      %281 = dma.done [#allocation17], 4992
    $region153: #{sample_generator_forward.1} parent=1 // pred_fallthru
      _
    // Predicated region
    $region154: #{sample_generator_forward.1} parent=1 // pred_check
      _
    $region155: #{sample_generator_forward.1} parent=1 // pred_check_branch
      %283 = sbr.rel (0) target = $region157
    $region156: #{sample_generator_forward.1} parent=1 // pred_region
      %285 = dma.done [#allocation20], 48
    $region157: #{sample_generator_forward.1} parent=1 // pred_fallthru
      _
    // Predicated region
    $region158: #{sample_generator_forward.1} parent=1 // pred_check
      _
    $region159: #{sample_generator_forward.1} parent=1 // pred_check_branch
      %287 = sbr.rel (0) target = $region161
    $region160: #{sample_generator_forward.1} parent=1 // pred_region
      %289 = dma.done [#allocation20], 832
    $region161: #{sample_generator_forward.1} parent=1 // pred_fallthru
      _
    // Predicated region
    $region162: #{sample_generator_forward.1} parent=1 // pred_check
      _
    $region163: #{sample_generator_forward.1} parent=1 // pred_check_branch
      %291 = sbr.rel (0) target = $region165
    $region164: #{sample_generator_forward.1} parent=1 // pred_region
      %293 = dma.done [#allocation23], 16
    $region165: #{sample_generator_forward.1} parent=1 // pred_fallthru
      _
    %v295 = vld [vmem:[%s2] sm:$0xf]
    %v296 = vld [vmem:[%s3] sm:$0xf]
    %v297 = vld [vmem:[%s3 + $0x4] sm:$0xf]
    %v298 = vld [vmem:[%s3 + $0x8] sm:$0xf]
    %v299 = vld [vmem:[%s3 + $0xc] sm:$0xf]
    %v300 = vld [vmem:[%s3 + $0x10] sm:$0xf]
    %v301 = vld [vmem:[%s3 + $0x14] sm:$0xf]
    %v302 = vld [vmem:[%s3 + $0x18] sm:$0xf]
    %v303 = vld [vmem:[%s3 + $0x1c] sm:$0xf]
    %v304 = vld [vmem:[%s3 + $0x20] sm:$0xf]
    %v305 = vld [vmem:[%s3 + $0x24] sm:$0xf]
    %v306 = vld [vmem:[%s3 + $0x28] sm:$0xf]
    %v307 = vld [vmem:[%s3 + $0x2c] sm:$0xf]
    %v308 = vld [vmem:[%s3 + $0x30] sm:$0xf]
    %v309 = vld [vmem:[%s3 + $0x34] sm:$0xf]
    %v310 = vld [vmem:[%s3 + $0x38] sm:$0xf]
    %v311 = vld [vmem:[%s3 + $0x3c] sm:$0xf]
    %v312 = vld [vmem:[%s4] sm:$0x1]
    %v313 = vld [vmem:[%s0] sm:$0xf]
    %v314 = vpack.c.bf16 %v313, %v313
    %v316 = vperm.slane %v312, 0
    %v334 = vunpack.c.l.b16 %v296
    %v335 = vunpack.c.l.b16 %v297
    %v336 = vunpack.c.l.b16 %v298
    %v337 = vunpack.c.l.b16 %v299
    %v338 = vunpack.c.l.b16 %v300
    %v339 = vunpack.c.l.b16 %v301
    %v340 = vunpack.c.l.b16 %v302
    %v341 = vunpack.c.l.b16 %v303
    %v342 = vunpack.c.l.b16 %v304
    %v343 = vunpack.c.l.b16 %v305
    %v344 = vunpack.c.l.b16 %v306
    %v345 = vunpack.c.l.b16 %v307
    %v346 = vunpack.c.l.b16 %v308
    %v347 = vunpack.c.l.b16 %v309
    %v348 = vunpack.c.l.b16 %v310
    %v349 = vunpack.c.l.b16 %v311
    %v350 = vpack.c.b16 %v335, %v334
    %v351 = vpack.c.b16 %v337, %v336
    %v352 = vpack.c.b16 %v339, %v338
    %v353 = vpack.c.b16 %v341, %v340
    %v354 = vpack.c.b16 %v343, %v342
    %v355 = vpack.c.b16 %v345, %v344
    %v356 = vpack.c.b16 %v347, %v346
    %v357 = vpack.c.b16 %v349, %v348
    %366 = vmatpush.bf16.msra.mxu0 %v357
    %367 = vmatpush.bf16.msra.mxu0 %v356
    %368 = vmatpush.bf16.msra.mxu0 %v355
    %369 = vmatpush.bf16.msra.mxu0 %v354
    %370 = vmatpush.bf16.msra.mxu0 %v353
    %371 = vmatpush.bf16.msra.mxu0 %v352
    %372 = vmatpush.bf16.msra.mxu0 %v351
    %373 = vmatpush.bf16.msra.mxu0 %v350
    %374 = vmatmul.bf16.gmra.mxu0 %v314
    %v375 = vpop.f32.mrf.mxu0
    %v376 = vadd.f32 %v316, %v375
    %v377 = vpop.f32.mrf.mxu0
    %378 = vdwg.mxu0
    %s379 = scalar_lea.vmem %s0, 4
    %v380 = vld [vmem:[%s379] sm:$0xf]
    %v381 = vpack.c.bf16 %v380, %v380
    %382 = vmatpush.bf16.msra.mxu0 %v357
    %383 = vmatpush.bf16.msra.mxu0 %v356
    %384 = vmatpush.bf16.msra.mxu0 %v355
    %385 = vmatpush.bf16.msra.mxu0 %v354
    %386 = vmatpush.bf16.msra.mxu0 %v353
    %387 = vmatpush.bf16.msra.mxu0 %v352
    %388 = vmatpush.bf16.msra.mxu0 %v351
    %389 = vmatpush.bf16.msra.mxu0 %v350
    %390 = vmatmul.bf16.gmra.mxu0 %v381
    %v391 = vpop.f32.mrf.mxu0
    %v392 = vadd.f32 %v316, %v391
    %v393 = vpop.f32.mrf.mxu0
    %394 = vdwg.mxu0
    %s395 = scalar_lea.vmem %s0, 8
    %v396 = vld [vmem:[%s395] sm:$0xf]
    %v397 = vpack.c.bf16 %v396, %v396
    %398 = vmatpush.bf16.msra.mxu0 %v357
    %399 = vmatpush.bf16.msra.mxu0 %v356
    %400 = vmatpush.bf16.msra.mxu0 %v355
    %401 = vmatpush.bf16.msra.mxu0 %v354
    %402 = vmatpush.bf16.msra.mxu0 %v353
    %403 = vmatpush.bf16.msra.mxu0 %v352
    %404 = vmatpush.bf16.msra.mxu0 %v351
    %405 = vmatpush.bf16.msra.mxu0 %v350
    %406 = vmatmul.bf16.gmra.mxu0 %v397
    %v407 = vpop.f32.mrf.mxu0
    %v408 = vadd.f32 %v316, %v407
    %v409 = vpop.f32.mrf.mxu0
    %410 = vdwg.mxu0
    %s411 = scalar_lea.vmem %s0, 12
    %v412 = vld [vmem:[%s411] sm:$0xf]
    %v413 = vpack.c.bf16 %v412, %v412
    %414 = vmatpush.bf16.msra.mxu0 %v357
    %415 = vmatpush.bf16.msra.mxu0 %v356
    %416 = vmatpush.bf16.msra.mxu0 %v355
    %417 = vmatpush.bf16.msra.mxu0 %v354
    %418 = vmatpush.bf16.msra.mxu0 %v353
    %419 = vmatpush.bf16.msra.mxu0 %v352
    %420 = vmatpush.bf16.msra.mxu0 %v351
    %421 = vmatpush.bf16.msra.mxu0 %v350
    %422 = vmatmul.bf16.gmra.mxu0 %v413
    %v423 = vpop.f32.mrf.mxu0
    %v424 = vadd.f32 %v316, %v423
    %v425 = vpop.f32.mrf.mxu0
    %426 = vdwg.mxu0
    %s427 = scalar_lea.vmem %s0, 16
    %v428 = vld [vmem:[%s427] sm:$0xf]
    %v429 = vpack.c.bf16 %v428, %v428
    %430 = vmatpush.bf16.msra.mxu0 %v357
    %431 = vmatpush.bf16.msra.mxu0 %v356
    %432 = vmatpush.bf16.msra.mxu0 %v355
    %433 = vmatpush.bf16.msra.mxu0 %v354
    %434 = vmatpush.bf16.msra.mxu0 %v353
    %435 = vmatpush.bf16.msra.mxu0 %v352
    %436 = vmatpush.bf16.msra.mxu0 %v351
    %437 = vmatpush.bf16.msra.mxu0 %v350
    %438 = vmatmul.bf16.gmra.mxu0 %v429
    %v439 = vpop.f32.mrf.mxu0
    %v440 = vadd.f32 %v316, %v439
    %v441 = vpop.f32.mrf.mxu0
    %442 = vdwg.mxu0
    %s443 = scalar_lea.vmem %s0, 20
    %v444 = vld [vmem:[%s443] sm:$0xf]
    %v445 = vpack.c.bf16 %v444, %v444
    %446 = vmatpush.bf16.msra.mxu0 %v357
    %447 = vmatpush.bf16.msra.mxu0 %v356
    %448 = vmatpush.bf16.msra.mxu0 %v355
    %449 = vmatpush.bf16.msra.mxu0 %v354
    %450 = vmatpush.bf16.msra.mxu0 %v353
    %451 = vmatpush.bf16.msra.mxu0 %v352
    %452 = vmatpush.bf16.msra.mxu0 %v351
    %453 = vmatpush.bf16.msra.mxu0 %v350
    %454 = vmatmul.bf16.gmra.mxu0 %v445
    %v455 = vpop.f32.mrf.mxu0
    %v456 = vadd.f32 %v316, %v455
    %v457 = vpop.f32.mrf.mxu0
    %458 = vdwg.mxu0
    %s459 = scalar_lea.vmem %s0, 24
    %v460 = vld [vmem:[%s459] sm:$0xf]
    %v461 = vpack.c.bf16 %v460, %v460
    %462 = vmatpush.bf16.msra.mxu0 %v357
    %463 = vmatpush.bf16.msra.mxu0 %v356
    %464 = vmatpush.bf16.msra.mxu0 %v355
    %465 = vmatpush.bf16.msra.mxu0 %v354
    %466 = vmatpush.bf16.msra.mxu0 %v353
    %467 = vmatpush.bf16.msra.mxu0 %v352
    %468 = vmatpush.bf16.msra.mxu0 %v351
    %469 = vmatpush.bf16.msra.mxu0 %v350
    %470 = vmatmul.bf16.gmra.mxu0 %v461
    %v471 = vpop.f32.mrf.mxu0
    %v472 = vadd.f32 %v316, %v471
    %v473 = vpop.f32.mrf.mxu0
    %474 = vdwg.mxu0
    %s475 = scalar_lea.vmem %s0, 28
    %v476 = vld [vmem:[%s475] sm:$0xf]
    %v477 = vpack.c.bf16 %v476, %v476
    %478 = vmatpush.bf16.msra.mxu0 %v357
    %479 = vmatpush.bf16.msra.mxu0 %v356
    %480 = vmatpush.bf16.msra.mxu0 %v355
    %481 = vmatpush.bf16.msra.mxu0 %v354
    %482 = vmatpush.bf16.msra.mxu0 %v353
    %483 = vmatpush.bf16.msra.mxu0 %v352
    %484 = vmatpush.bf16.msra.mxu0 %v351
    %485 = vmatpush.bf16.msra.mxu0 %v350
    %486 = vmatmul.bf16.gmra.mxu0 %v477
    %v487 = vpop.f32.mrf.mxu0
    %v488 = vadd.f32 %v316, %v487
    %v489 = vpop.f32.mrf.mxu0
    %490 = vdwg.mxu0
    %s491 = scalar_lea.vmem %s0, 32
    %v492 = vld [vmem:[%s491] sm:$0xf]
    %v493 = vpack.c.bf16 %v492, %v492
    %494 = vmatpush.bf16.msra.mxu0 %v357
    %495 = vmatpush.bf16.msra.mxu0 %v356
    %496 = vmatpush.bf16.msra.mxu0 %v355
    %497 = vmatpush.bf16.msra.mxu0 %v354
    %498 = vmatpush.bf16.msra.mxu0 %v353
    %499 = vmatpush.bf16.msra.mxu0 %v352
    %500 = vmatpush.bf16.msra.mxu0 %v351
    %501 = vmatpush.bf16.msra.mxu0 %v350
    %502 = vmatmul.bf16.gmra.mxu0 %v493
    %v503 = vpop.f32.mrf.mxu0
    %v504 = vadd.f32 %v316, %v503
    %v505 = vpop.f32.mrf.mxu0
    %506 = vdwg.mxu0
    %s507 = scalar_lea.vmem %s0, 36
    %v508 = vld [vmem:[%s507] sm:$0xf]
    %v509 = vpack.c.bf16 %v508, %v508
    %510 = vmatpush.bf16.msra.mxu0 %v357
    %511 = vmatpush.bf16.msra.mxu0 %v356
    %512 = vmatpush.bf16.msra.mxu0 %v355
    %513 = vmatpush.bf16.msra.mxu0 %v354
    %514 = vmatpush.bf16.msra.mxu0 %v353
    %515 = vmatpush.bf16.msra.mxu0 %v352
    %516 = vmatpush.bf16.msra.mxu0 %v351
    %517 = vmatpush.bf16.msra.mxu0 %v350
    %518 = vmatmul.bf16.gmra.mxu0 %v509
    %v519 = vpop.f32.mrf.mxu0
    %v520 = vadd.f32 %v316, %v519
    %v521 = vpop.f32.mrf.mxu0
    %522 = vdwg.mxu0
    %s523 = scalar_lea.vmem %s0, 40
    %v524 = vld [vmem:[%s523] sm:$0xf]
    %v525 = vpack.c.bf16 %v524, %v524
    %526 = vmatpush.bf16.msra.mxu0 %v357
    %527 = vmatpush.bf16.msra.mxu0 %v356
    %528 = vmatpush.bf16.msra.mxu0 %v355
    %529 = vmatpush.bf16.msra.mxu0 %v354
    %530 = vmatpush.bf16.msra.mxu0 %v353
    %531 = vmatpush.bf16.msra.mxu0 %v352
    %532 = vmatpush.bf16.msra.mxu0 %v351
    %533 = vmatpush.bf16.msra.mxu0 %v350
    %534 = vmatmul.bf16.gmra.mxu0 %v525
    %v535 = vpop.f32.mrf.mxu0
    %v536 = vadd.f32 %v316, %v535
    %v537 = vpop.f32.mrf.mxu0
    %538 = vdwg.mxu0
    %s539 = scalar_lea.vmem %s0, 44
    %v540 = vld [vmem:[%s539] sm:$0xf]
    %v541 = vpack.c.bf16 %v540, %v540
    %542 = vmatpush.bf16.msra.mxu0 %v357
    %543 = vmatpush.bf16.msra.mxu0 %v356
    %544 = vmatpush.bf16.msra.mxu0 %v355
    %545 = vmatpush.bf16.msra.mxu0 %v354
    %546 = vmatpush.bf16.msra.mxu0 %v353
    %547 = vmatpush.bf16.msra.mxu0 %v352
    %548 = vmatpush.bf16.msra.mxu0 %v351
    %549 = vmatpush.bf16.msra.mxu0 %v350
    %550 = vmatmul.bf16.gmra.mxu0 %v541
    %v551 = vpop.f32.mrf.mxu0
    %v552 = vadd.f32 %v316, %v551
    %v553 = vpop.f32.mrf.mxu0
    %554 = vdwg.mxu0
    %s555 = scalar_lea.vmem %s0, 48
    %v556 = vld [vmem:[%s555] sm:$0xf]
    %v557 = vpack.c.bf16 %v556, %v556
    %558 = vmatpush.bf16.msra.mxu0 %v357
    %559 = vmatpush.bf16.msra.mxu0 %v356
    %560 = vmatpush.bf16.msra.mxu0 %v355
    %561 = vmatpush.bf16.msra.mxu0 %v354
    %562 = vmatpush.bf16.msra.mxu0 %v353
    %563 = vmatpush.bf16.msra.mxu0 %v352
    %564 = vmatpush.bf16.msra.mxu0 %v351
    %565 = vmatpush.bf16.msra.mxu0 %v350
    %566 = vmatmul.bf16.gmra.mxu0 %v557
    %v567 = vpop.f32.mrf.mxu0
    %v568 = vadd.f32 %v316, %v567
    %v569 = vpop.f32.mrf.mxu0
    %570 = vdwg.mxu0
    %s571 = scalar_lea.vmem %s0, 52
    %v572 = vld [vmem:[%s571] sm:$0xf]
    %v573 = vpack.c.bf16 %v572, %v572
    %574 = vmatpush.bf16.msra.mxu0 %v357
    %575 = vmatpush.bf16.msra.mxu0 %v356
    %576 = vmatpush.bf16.msra.mxu0 %v355
    %577 = vmatpush.bf16.msra.mxu0 %v354
    %578 = vmatpush.bf16.msra.mxu0 %v353
    %579 = vmatpush.bf16.msra.mxu0 %v352
    %580 = vmatpush.bf16.msra.mxu0 %v351
    %581 = vmatpush.bf16.msra.mxu0 %v350
    %582 = vmatmul.bf16.gmra.mxu0 %v573
    %v583 = vpop.f32.mrf.mxu0
    %v584 = vadd.f32 %v316, %v583
    %v585 = vpop.f32.mrf.mxu0
    %586 = vdwg.mxu0
    %s587 = scalar_lea.vmem %s0, 56
    %v588 = vld [vmem:[%s587] sm:$0xf]
    %v589 = vpack.c.bf16 %v588, %v588
    %590 = vmatpush.bf16.msra.mxu0 %v357
    %591 = vmatpush.bf16.msra.mxu0 %v356
    %592 = vmatpush.bf16.msra.mxu0 %v355
    %593 = vmatpush.bf16.msra.mxu0 %v354
    %594 = vmatpush.bf16.msra.mxu0 %v353
    %595 = vmatpush.bf16.msra.mxu0 %v352
    %596 = vmatpush.bf16.msra.mxu0 %v351
    %597 = vmatpush.bf16.msra.mxu0 %v350
    %598 = vmatmul.bf16.gmra.mxu0 %v589
    %v599 = vpop.f32.mrf.mxu0
    %v600 = vadd.f32 %v316, %v599
    %v601 = vpop.f32.mrf.mxu0
    %602 = vdwg.mxu0
    %s603 = scalar_lea.vmem %s0, 60
    %v604 = vld [vmem:[%s603] sm:$0xf]
    %v605 = vpack.c.bf16 %v604, %v604
    %606 = vmatpush.bf16.msra.mxu0 %v357
    %607 = vmatpush.bf16.msra.mxu0 %v356
    %608 = vmatpush.bf16.msra.mxu0 %v355
    %609 = vmatpush.bf16.msra.mxu0 %v354
    %610 = vmatpush.bf16.msra.mxu0 %v353
    %611 = vmatpush.bf16.msra.mxu0 %v352
    %612 = vmatpush.bf16.msra.mxu0 %v351
    %613 = vmatpush.bf16.msra.mxu0 %v350
    %614 = vmatmul.bf16.gmra.mxu0 %v605
    %v615 = vpop.f32.mrf.mxu0
    %v616 = vadd.f32 %v316, %v615
    %v617 = vpop.f32.mrf.mxu0
    %618 = vdwg.mxu0
    %v619 = vld [vmem:[%s5] sm:$0x1]
    %v620 = vld [vmem:[#allocation2] sm:$0x1]
    %vm621 = vcmask 125952
    %v622 = vsel %vm621, %v376, 0.0
    %v623 = vrot.slane %v622, 4
    %v624 = vadd.f32 %v622, %v623
    %v625 = vrot.slane %v624, 2
    %v626 = vadd.f32 %v624, %v625
    %v627 = vrot.slane %v626, 1
    %v628 = vadd.f32 %v626, %v627
    %v629 = vadd.f32 %v628, 0.0
    %v630 = vsel %vm621, %v392, 0.0
    %v631 = vrot.slane %v630, 4
    %v632 = vadd.f32 %v630, %v631
    %v633 = vrot.slane %v632, 2
    %v634 = vadd.f32 %v632, %v633
    %v635 = vrot.slane %v634, 1
    %v636 = vadd.f32 %v634, %v635
    %v637 = vadd.f32 %v629, %v636
    %v638 = vsel %vm621, %v408, 0.0
    %v639 = vrot.slane %v638, 4
    %v640 = vadd.f32 %v638, %v639
    %v641 = vrot.slane %v640, 2
    %v642 = vadd.f32 %v640, %v641
    %v643 = vrot.slane %v642, 1
    %v644 = vadd.f32 %v642, %v643
    %v645 = vadd.f32 %v637, %v644
    %v646 = vsel %vm621, %v424, 0.0
    %v647 = vrot.slane %v646, 4
    %v648 = vadd.f32 %v646, %v647
    %v649 = vrot.slane %v648, 2
    %v650 = vadd.f32 %v648, %v649
    %v651 = vrot.slane %v650, 1
    %v652 = vadd.f32 %v650, %v651
    %v653 = vadd.f32 %v645, %v652
    %v654 = vsel %vm621, %v440, 0.0
    %v655 = vrot.slane %v654, 4
    %v656 = vadd.f32 %v654, %v655
    %v657 = vrot.slane %v656, 2
    %v658 = vadd.f32 %v656, %v657
    %v659 = vrot.slane %v658, 1
    %v660 = vadd.f32 %v658, %v659
    %v661 = vadd.f32 %v653, %v660
    %v662 = vsel %vm621, %v456, 0.0
    %v663 = vrot.slane %v662, 4
    %v664 = vadd.f32 %v662, %v663
    %v665 = vrot.slane %v664, 2
    %v666 = vadd.f32 %v664, %v665
    %v667 = vrot.slane %v666, 1
    %v668 = vadd.f32 %v666, %v667
    %v669 = vadd.f32 %v661, %v668
    %v670 = vsel %vm621, %v472, 0.0
    %v671 = vrot.slane %v670, 4
    %v672 = vadd.f32 %v670, %v671
    %v673 = vrot.slane %v672, 2
    %v674 = vadd.f32 %v672, %v673
    %v675 = vrot.slane %v674, 1
    %v676 = vadd.f32 %v674, %v675
    %v677 = vadd.f32 %v669, %v676
    %v678 = vsel %vm621, %v488, 0.0
    %v679 = vrot.slane %v678, 4
    %v680 = vadd.f32 %v678, %v679
    %v681 = vrot.slane %v680, 2
    %v682 = vadd.f32 %v680, %v681
    %v683 = vrot.slane %v682, 1
    %v684 = vadd.f32 %v682, %v683
    %v685 = vadd.f32 %v677, %v684
    %v686 = vsel %vm621, %v504, 0.0
    %v687 = vrot.slane %v686, 4
    %v688 = vadd.f32 %v686, %v687
    %v689 = vrot.slane %v688, 2
    %v690 = vadd.f32 %v688, %v689
    %v691 = vrot.slane %v690, 1
    %v692 = vadd.f32 %v690, %v691
    %v693 = vadd.f32 %v685, %v692
    %v694 = vsel %vm621, %v520, 0.0
    %v695 = vrot.slane %v694, 4
    %v696 = vadd.f32 %v694, %v695
    %v697 = vrot.slane %v696, 2
    %v698 = vadd.f32 %v696, %v697
    %v699 = vrot.slane %v698, 1
    %v700 = vadd.f32 %v698, %v699
    %v701 = vadd.f32 %v693, %v700
    %v702 = vsel %vm621, %v536, 0.0
    %v703 = vrot.slane %v702, 4
    %v704 = vadd.f32 %v702, %v703
    %v705 = vrot.slane %v704, 2
    %v706 = vadd.f32 %v704, %v705
    %v707 = vrot.slane %v706, 1
    %v708 = vadd.f32 %v706, %v707
    %v709 = vadd.f32 %v701, %v708
    %v710 = vsel %vm621, %v552, 0.0
    %v711 = vrot.slane %v710, 4
    %v712 = vadd.f32 %v710, %v711
    %v713 = vrot.slane %v712, 2
    %v714 = vadd.f32 %v712, %v713
    %v715 = vrot.slane %v714, 1
    %v716 = vadd.f32 %v714, %v715
    %v717 = vadd.f32 %v709, %v716
    %v718 = vsel %vm621, %v568, 0.0
    %v719 = vrot.slane %v718, 4
    %v720 = vadd.f32 %v718, %v719
    %v721 = vrot.slane %v720, 2
    %v722 = vadd.f32 %v720, %v721
    %v723 = vrot.slane %v722, 1
    %v724 = vadd.f32 %v722, %v723
    %v725 = vadd.f32 %v717, %v724
    %v726 = vsel %vm621, %v584, 0.0
    %v727 = vrot.slane %v726, 4
    %v728 = vadd.f32 %v726, %v727
    %v729 = vrot.slane %v728, 2
    %v730 = vadd.f32 %v728, %v729
    %v731 = vrot.slane %v730, 1
    %v732 = vadd.f32 %v730, %v731
    %v733 = vadd.f32 %v725, %v732
    %v734 = vsel %vm621, %v600, 0.0
    %v735 = vrot.slane %v734, 4
    %v736 = vadd.f32 %v734, %v735
    %v737 = vrot.slane %v736, 2
    %v738 = vadd.f32 %v736, %v737
    %v739 = vrot.slane %v738, 1
    %v740 = vadd.f32 %v738, %v739
    %v741 = vadd.f32 %v733, %v740
    %v742 = vsel %vm621, %v616, 0.0
    %v743 = vrot.slane %v742, 4
    %v744 = vadd.f32 %v742, %v743
    %v745 = vrot.slane %v744, 2
    %v746 = vadd.f32 %v744, %v745
    %v747 = vrot.slane %v746, 1
    %v748 = vadd.f32 %v746, %v747
    %v749 = vadd.f32 %v741, %v748
    %v750 = vrcp.pop 64.0
    %v751 = vmul.f32 64.0, %v750
    %v752 = vsub.f32 1.0, %v751
    %v753 = vmul.f32 %v750, %v752
    %v754 = vadd.f32 %v750, %v753
    %vm755 = vweird.f32 %v750
    %v756 = vsel %vm755, %v750, %v754
    %v757 = vmul.f32 %v749, %v756
    %v758 = vsub.f32 %v376, %v757
    %v759 = vmul.f32 %v758, %v758
    %v760 = vsel %vm621, %v759, 0.0
    %v761 = vrot.slane %v760, 4
    %v762 = vadd.f32 %v760, %v761
    %v763 = vrot.slane %v762, 2
    %v764 = vadd.f32 %v762, %v763
    %v765 = vrot.slane %v764, 1
    %v766 = vadd.f32 %v764, %v765
    %v767 = vadd.f32 %v766, 0.0
    %v768 = vsub.f32 %v392, %v757
    %v769 = vmul.f32 %v768, %v768
    %v770 = vsel %vm621, %v769, 0.0
    %v771 = vrot.slane %v770, 4
    %v772 = vadd.f32 %v770, %v771
    %v773 = vrot.slane %v772, 2
    %v774 = vadd.f32 %v772, %v773
    %v775 = vrot.slane %v774, 1
    %v776 = vadd.f32 %v774, %v775
    %v777 = vadd.f32 %v767, %v776
    %v778 = vsub.f32 %v408, %v757
    %v779 = vmul.f32 %v778, %v778
    %v780 = vsel %vm621, %v779, 0.0
    %v781 = vrot.slane %v780, 4
    %v782 = vadd.f32 %v780, %v781
    %v783 = vrot.slane %v782, 2
    %v784 = vadd.f32 %v782, %v783
    %v785 = vrot.slane %v784, 1
    %v786 = vadd.f32 %v784, %v785
    %v787 = vadd.f32 %v777, %v786
    %v788 = vsub.f32 %v424, %v757
    %v789 = vmul.f32 %v788, %v788
    %v790 = vsel %vm621, %v789, 0.0
    %v791 = vrot.slane %v790, 4
    %v792 = vadd.f32 %v790, %v791
    %v793 = vrot.slane %v792, 2
    %v794 = vadd.f32 %v792, %v793
    %v795 = vrot.slane %v794, 1
    %v796 = vadd.f32 %v794, %v795
    %v797 = vadd.f32 %v787, %v796
    %v798 = vsub.f32 %v440, %v757
    %v799 = vmul.f32 %v798, %v798
    %v800 = vsel %vm621, %v799, 0.0
    %v801 = vrot.slane %v800, 4
    %v802 = vadd.f32 %v800, %v801
    %v803 = vrot.slane %v802, 2
    %v804 = vadd.f32 %v802, %v803
    %v805 = vrot.slane %v804, 1
    %v806 = vadd.f32 %v804, %v805
    %v807 = vadd.f32 %v797, %v806
    %v808 = vsub.f32 %v456, %v757
    %v809 = vmul.f32 %v808, %v808
    %v810 = vsel %vm621, %v809, 0.0
    %v811 = vrot.slane %v810, 4
    %v812 = vadd.f32 %v810, %v811
    %v813 = vrot.slane %v812, 2
    %v814 = vadd.f32 %v812, %v813
    %v815 = vrot.slane %v814, 1
    %v816 = vadd.f32 %v814, %v815
    %v817 = vadd.f32 %v807, %v816
    %v818 = vsub.f32 %v472, %v757
    %v819 = vmul.f32 %v818, %v818
    %v820 = vsel %vm621, %v819, 0.0
    %v821 = vrot.slane %v820, 4
    %v822 = vadd.f32 %v820, %v821
    %v823 = vrot.slane %v822, 2
    %v824 = vadd.f32 %v822, %v823
    %v825 = vrot.slane %v824, 1
    %v826 = vadd.f32 %v824, %v825
    %v827 = vadd.f32 %v817, %v826
    %v828 = vsub.f32 %v488, %v757
    %v829 = vmul.f32 %v828, %v828
    %v830 = vsel %vm621, %v829, 0.0
    %v831 = vrot.slane %v830, 4
    %v832 = vadd.f32 %v830, %v831
    %v833 = vrot.slane %v832, 2
    %v834 = vadd.f32 %v832, %v833
    %v835 = vrot.slane %v834, 1
    %v836 = vadd.f32 %v834, %v835
    %v837 = vadd.f32 %v827, %v836
    %v838 = vsub.f32 %v504, %v757
    %v839 = vmul.f32 %v838, %v838
    %v840 = vsel %vm621, %v839, 0.0
    %v841 = vrot.slane %v840, 4
    %v842 = vadd.f32 %v840, %v841
    %v843 = vrot.slane %v842, 2
    %v844 = vadd.f32 %v842, %v843
    %v845 = vrot.slane %v844, 1
    %v846 = vadd.f32 %v844, %v845
    %v847 = vadd.f32 %v837, %v846
    %v848 = vsub.f32 %v520, %v757
    %v849 = vmul.f32 %v848, %v848
    %v850 = vsel %vm621, %v849, 0.0
    %v851 = vrot.slane %v850, 4
    %v852 = vadd.f32 %v850, %v851
    %v853 = vrot.slane %v852, 2
    %v854 = vadd.f32 %v852, %v853
    %v855 = vrot.slane %v854, 1
    %v856 = vadd.f32 %v854, %v855
    %v857 = vadd.f32 %v847, %v856
    %v858 = vsub.f32 %v536, %v757
    %v859 = vmul.f32 %v858, %v858
    %v860 = vsel %vm621, %v859, 0.0
    %v861 = vrot.slane %v860, 4
    %v862 = vadd.f32 %v860, %v861
    %v863 = vrot.slane %v862, 2
    %v864 = vadd.f32 %v862, %v863
    %v865 = vrot.slane %v864, 1
    %v866 = vadd.f32 %v864, %v865
    %v867 = vadd.f32 %v857, %v866
    %v868 = vsub.f32 %v552, %v757
    %v869 = vmul.f32 %v868, %v868
    %v870 = vsel %vm621, %v869, 0.0
    %v871 = vrot.slane %v870, 4
    %v872 = vadd.f32 %v870, %v871
    %v873 = vrot.slane %v872, 2
    %v874 = vadd.f32 %v872, %v873
    %v875 = vrot.slane %v874, 1
    %v876 = vadd.f32 %v874, %v875
    %v877 = vadd.f32 %v867, %v876
    %v878 = vsub.f32 %v568, %v757
    %v879 = vmul.f32 %v878, %v878
    %v880 = vsel %vm621, %v879, 0.0
    %v881 = vrot.slane %v880, 4
    %v882 = vadd.f32 %v880, %v881
    %v883 = vrot.slane %v882, 2
    %v884 = vadd.f32 %v882, %v883
    %v885 = vrot.slane %v884, 1
    %v886 = vadd.f32 %v884, %v885
    %v887 = vadd.f32 %v877, %v886
    %v888 = vsub.f32 %v584, %v757
    %v889 = vmul.f32 %v888, %v888
    %v890 = vsel %vm621, %v889, 0.0
    %v891 = vrot.slane %v890, 4
    %v892 = vadd.f32 %v890, %v891
    %v893 = vrot.slane %v892, 2
    %v894 = vadd.f32 %v892, %v893
    %v895 = vrot.slane %v894, 1
    %v896 = vadd.f32 %v894, %v895
    %v897 = vadd.f32 %v887, %v896
    %v898 = vsub.f32 %v600, %v757
    %v899 = vmul.f32 %v898, %v898
    %v900 = vsel %vm621, %v899, 0.0
    %v901 = vrot.slane %v900, 4
    %v902 = vadd.f32 %v900, %v901
    %v903 = vrot.slane %v902, 2
    %v904 = vadd.f32 %v902, %v903
    %v905 = vrot.slane %v904, 1
    %v906 = vadd.f32 %v904, %v905
    %v907 = vadd.f32 %v897, %v906
    %v908 = vsub.f32 %v616, %v757
    %v909 = vmul.f32 %v908, %v908
    %v910 = vsel %vm621, %v909, 0.0
    %v911 = vrot.slane %v910, 4
    %v912 = vadd.f32 %v910, %v911
    %v913 = vrot.slane %v912, 2
    %v914 = vadd.f32 %v912, %v913
    %v915 = vrot.slane %v914, 1
    %v916 = vadd.f32 %v914, %v915
    %v917 = vadd.f32 %v907, %v916
    %v918 = vmul.f32 %v917, %v756
    %v919 = vadd.f32 %v918, 1e-05
    %v920 = vrsqrt.pop %v919
    %v921 = vmul.f32 %v920, %v919
    %v922 = vmul.f32 %v921, %v920
    %v923 = vmul.f32 0.5, %v922
    %v924 = vsub.f32 1.5, %v923
    %v925 = vmul.f32 %v920, %v924
    %vm926 = vweird.f32 %v919
    %vm927 = vweird.f32 %v920
    %vm928 = vmor %vm926, %vm927
    %v929 = vsel %vm928, %v920, %v925
    %v930 = vmul.f32 %v619, %v929
    %v931 = vmul.f32 %v757, %v930
    %v932 = vsub.f32 %v620, %v931
    %v934 = vperm.slane %v930, 0
    %v936 = vmul.f32 %v376, %v934
    %v938 = vperm.slane %v932, 0
    %v940 = vadd.f32 %v936, %v938
    %vm941 = vcmp.gt.f32.partialorder %v940, 0.0
    %v942 = vmul.f32 %v940, 0.2
    %v943 = vsel %vm941, %v940, %v942
    %v944 = vmul.f32 %v392, %v934
    %v945 = vadd.f32 %v944, %v938
    %vm946 = vcmp.gt.f32.partialorder %v945, 0.0
    %v947 = vmul.f32 %v945, 0.2
    %v948 = vsel %vm946, %v945, %v947
    %v949 = vmul.f32 %v408, %v934
    %v950 = vadd.f32 %v949, %v938
    %vm951 = vcmp.gt.f32.partialorder %v950, 0.0
    %v952 = vmul.f32 %v950, 0.2
    %v953 = vsel %vm951, %v950, %v952
    %v954 = vmul.f32 %v424, %v934
    %v955 = vadd.f32 %v954, %v938
    %vm956 = vcmp.gt.f32.partialorder %v955, 0.0
    %v957 = vmul.f32 %v955, 0.2
    %v958 = vsel %vm956, %v955, %v957
    %v959 = vmul.f32 %v440, %v934
    %v960 = vadd.f32 %v959, %v938
    %vm961 = vcmp.gt.f32.partialorder %v960, 0.0
    %v962 = vmul.f32 %v960, 0.2
    %v963 = vsel %vm961, %v960, %v962
    %v964 = vmul.f32 %v456, %v934
    %v965 = vadd.f32 %v964, %v938
    %vm966 = vcmp.gt.f32.partialorder %v965, 0.0
    %v967 = vmul.f32 %v965, 0.2
    %v968 = vsel %vm966, %v965, %v967
    %v969 = vmul.f32 %v472, %v934
    %v970 = vadd.f32 %v969, %v938
    %vm971 = vcmp.gt.f32.partialorder %v970, 0.0
    %v972 = vmul.f32 %v970, 0.2
    %v973 = vsel %vm971, %v970, %v972
    %v974 = vmul.f32 %v488, %v934
    %v975 = vadd.f32 %v974, %v938
    %vm976 = vcmp.gt.f32.partialorder %v975, 0.0
    %v977 = vmul.f32 %v975, 0.2
    %v978 = vsel %vm976, %v975, %v977
    %v979 = vmul.f32 %v504, %v934
    %v980 = vadd.f32 %v979, %v938
    %vm981 = vcmp.gt.f32.partialorder %v980, 0.0
    %v982 = vmul.f32 %v980, 0.2
    %v983 = vsel %vm981, %v980, %v982
    %v984 = vmul.f32 %v520, %v934
    %v985 = vadd.f32 %v984, %v938
    %vm986 = vcmp.gt.f32.partialorder %v985, 0.0
    %v987 = vmul.f32 %v985, 0.2
    %v988 = vsel %vm986, %v985, %v987
    %v989 = vmul.f32 %v536, %v934
    %v990 = vadd.f32 %v989, %v938
    %vm991 = vcmp.gt.f32.partialorder %v990, 0.0
    %v992 = vmul.f32 %v990, 0.2
    %v993 = vsel %vm991, %v990, %v992
    %v994 = vmul.f32 %v552, %v934
    %v995 = vadd.f32 %v994, %v938
    %vm996 = vcmp.gt.f32.partialorder %v995, 0.0
    %v997 = vmul.f32 %v995, 0.2
    %v998 = vsel %vm996, %v995, %v997
    %v999 = vmul.f32 %v568, %v934
    %v1000 = vadd.f32 %v999, %v938
    %vm1001 = vcmp.gt.f32.partialorder %v1000, 0.0
    %v1002 = vmul.f32 %v1000, 0.2
    %v1003 = vsel %vm1001, %v1000, %v1002
    %v1004 = vmul.f32 %v584, %v934
    %v1005 = vadd.f32 %v1004, %v938
    %vm1006 = vcmp.gt.f32.partialorder %v1005, 0.0
    %v1007 = vmul.f32 %v1005, 0.2
    %v1008 = vsel %vm1006, %v1005, %v1007
    %v1009 = vmul.f32 %v600, %v934
    %v1010 = vadd.f32 %v1009, %v938
    %vm1011 = vcmp.gt.f32.partialorder %v1010, 0.0
    %v1012 = vmul.f32 %v1010, 0.2
    %v1013 = vsel %vm1011, %v1010, %v1012
    %v1014 = vmul.f32 %v616, %v934
    %v1015 = vadd.f32 %v1014, %v938
    %vm1016 = vcmp.gt.f32.partialorder %v1015, 0.0
    %v1017 = vmul.f32 %v1015, 0.2
    %v1018 = vsel %vm1016, %v1015, %v1017
    %v1019 = vld [vmem:[#allocation4] sm:$0xf]
    %v1020 = vld [vmem:[#allocation4 + $0x4] sm:$0xf]
    %s1021 = scalar_lea.vmem [#allocation4], 8
    %v1022 = vld [vmem:[%s1021] sm:$0xf]
    %v1023 = vld [vmem:[%s1021 + $0x4] sm:$0xf]
    %v1024 = vld [vmem:[%s8] sm:$0x1]
    %v1025 = vpack.c.bf16 %v943, %v943
    %v1026 = vpack.c.bf16 %v948, %v948
    %v1029 = vunpack.c.l.b16 %v1022
    %v1030 = vunpack.c.l.b16 %v1023
    %v1031 = vpack.c.b16 %v1030, %v1029
    %vm1033 = vcmask 130048
    %v1035 = vsel %vm1033, %v1026, 0
    %1037 = vmatpush.bf16.msra.mxu0 0
    %1038 = vmatpush.bf16.msra.mxu0 0
    %1039 = vmatpush.bf16.msra.mxu0 0
    %1040 = vmatpush.bf16.msra.mxu0 0
    %1041 = vmatpush.bf16.msra.mxu0 0
    %1042 = vmatpush.bf16.msra.mxu0 0
    %1043 = vmatpush.bf16.msra.mxu0 0
    %1044 = vmatpush.bf16.msra.mxu0 %v1031
    %1045 = vmatmul.bf16.gmra.mxu0 %v1035
    %v1046 = vpop.f32.mrf.mxu0
    %v1047 = vadd.f32 0.0, %v1046
    %v1048 = vpop.f32.mrf.mxu0
    %1049 = vdwg.mxu0
    %v1052 = vunpack.c.l.b16 %v1019
    %v1053 = vunpack.c.l.b16 %v1020
    %v1054 = vpack.c.b16 %v1053, %v1052
    %v1057 = vsel %vm1033, %v1025, 0
    %1059 = vmatpush.bf16.msra.mxu0 0
    %1060 = vmatpush.bf16.msra.mxu0 0
    %1061 = vmatpush.bf16.msra.mxu0 0
    %1062 = vmatpush.bf16.msra.mxu0 0
    %1063 = vmatpush.bf16.msra.mxu0 0
    %1064 = vmatpush.bf16.msra.mxu0 0
    %1065 = vmatpush.bf16.msra.mxu0 0
    %1066 = vmatpush.bf16.msra.mxu0 %v1054
    %1067 = vmatmul.bf16.gmra.mxu0 %v1057
    %v1068 = vpop.f32.mrf.mxu0
    %v1069 = vadd.f32 %v1047, %v1068
    %v1070 = vpop.f32.mrf.mxu0
    %1071 = vdwg.mxu0
    %v1073 = vperm.slane %v1024, 0
    %v1075 = vadd.f32 %v1069, %v1073
    %v1076 = vpack.c.bf16 %v953, %v953
    %v1077 = vpack.c.bf16 %v958, %v958
    %v1079 = vsel %vm1033, %v1077, 0
    %1081 = vmatpush.bf16.msra.mxu0 0
    %1082 = vmatpush.bf16.msra.mxu0 0
    %1083 = vmatpush.bf16.msra.mxu0 0
    %1084 = vmatpush.bf16.msra.mxu0 0
    %1085 = vmatpush.bf16.msra.mxu0 0
    %1086 = vmatpush.bf16.msra.mxu0 0
    %1087 = vmatpush.bf16.msra.mxu0 0
    %1088 = vmatpush.bf16.msra.mxu0 %v1031
    %1089 = vmatmul.bf16.gmra.mxu0 %v1079
    %v1090 = vpop.f32.mrf.mxu0
    %v1091 = vadd.f32 0.0, %v1090
    %v1092 = vpop.f32.mrf.mxu0
    %1093 = vdwg.mxu0
    %v1095 = vsel %vm1033, %v1076, 0
    %1097 = vmatpush.bf16.msra.mxu0 0
    %1098 = vmatpush.bf16.msra.mxu0 0
    %1099 = vmatpush.bf16.msra.mxu0 0
    %1100 = vmatpush.bf16.msra.mxu0 0
    %1101 = vmatpush.bf16.msra.mxu0 0
    %1102 = vmatpush.bf16.msra.mxu0 0
    %1103 = vmatpush.bf16.msra.mxu0 0
    %1104 = vmatpush.bf16.msra.mxu0 %v1054
    %1105 = vmatmul.bf16.gmra.mxu0 %v1095
    %v1106 = vpop.f32.mrf.mxu0
    %v1107 = vadd.f32 %v1091, %v1106
    %v1108 = vpop.f32.mrf.mxu0
    %1109 = vdwg.mxu0
    %v1110 = vadd.f32 %v1107, %v1073
    %v1111 = vpack.c.bf16 %v963, %v963
    %v1112 = vpack.c.bf16 %v968, %v968
    %v1114 = vsel %vm1033, %v1112, 0
    %1116 = vmatpush.bf16.msra.mxu0 0
    %1117 = vmatpush.bf16.msra.mxu0 0
    %1118 = vmatpush.bf16.msra.mxu0 0
    %1119 = vmatpush.bf16.msra.mxu0 0
    %1120 = vmatpush.bf16.msra.mxu0 0
    %1121 = vmatpush.bf16.msra.mxu0 0
    %1122 = vmatpush.bf16.msra.mxu0 0
    %1123 = vmatpush.bf16.msra.mxu0 %v1031
    %1124 = vmatmul.bf16.gmra.mxu0 %v1114
    %v1125 = vpop.f32.mrf.mxu0
    %v1126 = vadd.f32 0.0, %v1125
    %v1127 = vpop.f32.mrf.mxu0
    %1128 = vdwg.mxu0
    %v1130 = vsel %vm1033, %v1111, 0
    %1132 = vmatpush.bf16.msra.mxu0 0
    %1133 = vmatpush.bf16.msra.mxu0 0
    %1134 = vmatpush.bf16.msra.mxu0 0
    %1135 = vmatpush.bf16.msra.mxu0 0
    %1136 = vmatpush.bf16.msra.mxu0 0
    %1137 = vmatpush.bf16.msra.mxu0 0
    %1138 = vmatpush.bf16.msra.mxu0 0
    %1139 = vmatpush.bf16.msra.mxu0 %v1054
    %1140 = vmatmul.bf16.gmra.mxu0 %v1130
    %v1141 = vpop.f32.mrf.mxu0
    %v1142 = vadd.f32 %v1126, %v1141
    %v1143 = vpop.f32.mrf.mxu0
    %1144 = vdwg.mxu0
    %v1145 = vadd.f32 %v1142, %v1073
    %v1146 = vpack.c.bf16 %v973, %v973
    %v1147 = vpack.c.bf16 %v978, %v978
    %v1149 = vsel %vm1033, %v1147, 0
    %1151 = vmatpush.bf16.msra.mxu0 0
    %1152 = vmatpush.bf16.msra.mxu0 0
    %1153 = vmatpush.bf16.msra.mxu0 0
    %1154 = vmatpush.bf16.msra.mxu0 0
    %1155 = vmatpush.bf16.msra.mxu0 0
    %1156 = vmatpush.bf16.msra.mxu0 0
    %1157 = vmatpush.bf16.msra.mxu0 0
    %1158 = vmatpush.bf16.msra.mxu0 %v1031
    %1159 = vmatmul.bf16.gmra.mxu0 %v1149
    %v1160 = vpop.f32.mrf.mxu0
    %v1161 = vadd.f32 0.0, %v1160
    %v1162 = vpop.f32.mrf.mxu0
    %1163 = vdwg.mxu0
    %v1165 = vsel %vm1033, %v1146, 0
    %1167 = vmatpush.bf16.msra.mxu0 0
    %1168 = vmatpush.bf16.msra.mxu0 0
    %1169 = vmatpush.bf16.msra.mxu0 0
    %1170 = vmatpush.bf16.msra.mxu0 0
    %1171 = vmatpush.bf16.msra.mxu0 0
    %1172 = vmatpush.bf16.msra.mxu0 0
    %1173 = vmatpush.bf16.msra.mxu0 0
    %1174 = vmatpush.bf16.msra.mxu0 %v1054
    %1175 = vmatmul.bf16.gmra.mxu0 %v1165
    %v1176 = vpop.f32.mrf.mxu0
    %v1177 = vadd.f32 %v1161, %v1176
    %v1178 = vpop.f32.mrf.mxu0
    %1179 = vdwg.mxu0
    %v1180 = vadd.f32 %v1177, %v1073
    %v1181 = vpack.c.bf16 %v983, %v983
    %v1182 = vpack.c.bf16 %v988, %v988
    %v1184 = vsel %vm1033, %v1182, 0
    %1186 = vmatpush.bf16.msra.mxu0 0
    %1187 = vmatpush.bf16.msra.mxu0 0
    %1188 = vmatpush.bf16.msra.mxu0 0
    %1189 = vmatpush.bf16.msra.mxu0 0
    %1190 = vmatpush.bf16.msra.mxu0 0
    %1191 = vmatpush.bf16.msra.mxu0 0
    %1192 = vmatpush.bf16.msra.mxu0 0
    %1193 = vmatpush.bf16.msra.mxu0 %v1031
    %1194 = vmatmul.bf16.gmra.mxu0 %v1184
    %v1195 = vpop.f32.mrf.mxu0
    %v1196 = vadd.f32 0.0, %v1195
    %v1197 = vpop.f32.mrf.mxu0
    %1198 = vdwg.mxu0
    %v1200 = vsel %vm1033, %v1181, 0
    %1202 = vmatpush.bf16.msra.mxu0 0
    %1203 = vmatpush.bf16.msra.mxu0 0
    %1204 = vmatpush.bf16.msra.mxu0 0
    %1205 = vmatpush.bf16.msra.mxu0 0
    %1206 = vmatpush.bf16.msra.mxu0 0
    %1207 = vmatpush.bf16.msra.mxu0 0
    %1208 = vmatpush.bf16.msra.mxu0 0
    %1209 = vmatpush.bf16.msra.mxu0 %v1054
    %1210 = vmatmul.bf16.gmra.mxu0 %v1200
    %v1211 = vpop.f32.mrf.mxu0
    %v1212 = vadd.f32 %v1196, %v1211
    %v1213 = vpop.f32.mrf.mxu0
    %1214 = vdwg.mxu0
    %v1215 = vadd.f32 %v1212, %v1073
    %v1216 = vpack.c.bf16 %v993, %v993
    %v1217 = vpack.c.bf16 %v998, %v998
    %v1219 = vsel %vm1033, %v1217, 0
    %1221 = vmatpush.bf16.msra.mxu0 0
    %1222 = vmatpush.bf16.msra.mxu0 0
    %1223 = vmatpush.bf16.msra.mxu0 0
    %1224 = vmatpush.bf16.msra.mxu0 0
    %1225 = vmatpush.bf16.msra.mxu0 0
    %1226 = vmatpush.bf16.msra.mxu0 0
    %1227 = vmatpush.bf16.msra.mxu0 0
    %1228 = vmatpush.bf16.msra.mxu0 %v1031
    %1229 = vmatmul.bf16.gmra.mxu0 %v1219
    %v1230 = vpop.f32.mrf.mxu0
    %v1231 = vadd.f32 0.0, %v1230
    %v1232 = vpop.f32.mrf.mxu0
    %1233 = vdwg.mxu0
    %v1235 = vsel %vm1033, %v1216, 0
    %1237 = vmatpush.bf16.msra.mxu0 0
    %1238 = vmatpush.bf16.msra.mxu0 0
    %1239 = vmatpush.bf16.msra.mxu0 0
    %1240 = vmatpush.bf16.msra.mxu0 0
    %1241 = vmatpush.bf16.msra.mxu0 0
    %1242 = vmatpush.bf16.msra.mxu0 0
    %1243 = vmatpush.bf16.msra.mxu0 0
    %1244 = vmatpush.bf16.msra.mxu0 %v1054
    %1245 = vmatmul.bf16.gmra.mxu0 %v1235
    %v1246 = vpop.f32.mrf.mxu0
    %v1247 = vadd.f32 %v1231, %v1246
    %v1248 = vpop.f32.mrf.mxu0
    %1249 = vdwg.mxu0
    %v1250 = vadd.f32 %v1247, %v1073
    %v1251 = vpack.c.bf16 %v1003, %v1003
    %v1252 = vpack.c.bf16 %v1008, %v1008
    %v1254 = vsel %vm1033, %v1252, 0
    %1256 = vmatpush.bf16.msra.mxu0 0
    %1257 = vmatpush.bf16.msra.mxu0 0
    %1258 = vmatpush.bf16.msra.mxu0 0
    %1259 = vmatpush.bf16.msra.mxu0 0
    %1260 = vmatpush.bf16.msra.mxu0 0
    %1261 = vmatpush.bf16.msra.mxu0 0
    %1262 = vmatpush.bf16.msra.mxu0 0
    %1263 = vmatpush.bf16.msra.mxu0 %v1031
    %1264 = vmatmul.bf16.gmra.mxu0 %v1254
    %v1265 = vpop.f32.mrf.mxu0
    %v1266 = vadd.f32 0.0, %v1265
    %v1267 = vpop.f32.mrf.mxu0
    %1268 = vdwg.mxu0
    %v1270 = vsel %vm1033, %v1251, 0
    %1272 = vmatpush.bf16.msra.mxu0 0
    %1273 = vmatpush.bf16.msra.mxu0 0
    %1274 = vmatpush.bf16.msra.mxu0 0
    %1275 = vmatpush.bf16.msra.mxu0 0
    %1276 = vmatpush.bf16.msra.mxu0 0
    %1277 = vmatpush.bf16.msra.mxu0 0
    %1278 = vmatpush.bf16.msra.mxu0 0
    %1279 = vmatpush.bf16.msra.mxu0 %v1054
    %1280 = vmatmul.bf16.gmra.mxu0 %v1270
    %v1281 = vpop.f32.mrf.mxu0
    %v1282 = vadd.f32 %v1266, %v1281
    %v1283 = vpop.f32.mrf.mxu0
    %1284 = vdwg.mxu0
    %v1285 = vadd.f32 %v1282, %v1073
    %v1286 = vpack.c.bf16 %v1013, %v1013
    %v1287 = vpack.c.bf16 %v1018, %v1018
    %v1289 = vsel %vm1033, %v1287, 0
    %1291 = vmatpush.bf16.msra.mxu0 0
    %1292 = vmatpush.bf16.msra.mxu0 0
    %1293 = vmatpush.bf16.msra.mxu0 0
    %1294 = vmatpush.bf16.msra.mxu0 0
    %1295 = vmatpush.bf16.msra.mxu0 0
    %1296 = vmatpush.bf16.msra.mxu0 0
    %1297 = vmatpush.bf16.msra.mxu0 0
    %1298 = vmatpush.bf16.msra.mxu0 %v1031
    %1299 = vmatmul.bf16.gmra.mxu0 %v1289
    %v1300 = vpop.f32.mrf.mxu0
    %v1301 = vadd.f32 0.0, %v1300
    %v1302 = vpop.f32.mrf.mxu0
    %1303 = vdwg.mxu0
    %v1305 = vsel %vm1033, %v1286, 0
    %1307 = vmatpush.bf16.msra.mxu0 0
    %1308 = vmatpush.bf16.msra.mxu0 0
    %1309 = vmatpush.bf16.msra.mxu0 0
    %1310 = vmatpush.bf16.msra.mxu0 0
    %1311 = vmatpush.bf16.msra.mxu0 0
    %1312 = vmatpush.bf16.msra.mxu0 0
    %1313 = vmatpush.bf16.msra.mxu0 0
    %1314 = vmatpush.bf16.msra.mxu0 %v1054
    %1315 = vmatmul.bf16.gmra.mxu0 %v1305
    %v1316 = vpop.f32.mrf.mxu0
    %v1317 = vadd.f32 %v1301, %v1316
    %v1318 = vpop.f32.mrf.mxu0
    %1319 = vdwg.mxu0
    %v1320 = vadd.f32 %v1317, %v1073
    %v1321 = vld [vmem:[%s9] sm:$0x1]
    %v1322 = vld [vmem:[#allocation6] sm:$0x1]
    %v1323 = vsel %vm621, %v1075, 0.0
    %v1324 = vrot.slane %v1323, 4
    %v1325 = vadd.f32 %v1323, %v1324
    %v1326 = vrot.slane %v1325, 2
    %v1327 = vadd.f32 %v1325, %v1326
    %v1328 = vrot.slane %v1327, 1
    %v1329 = vadd.f32 %v1327, %v1328
    %v1330 = vadd.f32 %v1329, 0.0
    %v1331 = vsel %vm621, %v1110, 0.0
    %v1332 = vrot.slane %v1331, 4
    %v1333 = vadd.f32 %v1331, %v1332
    %v1334 = vrot.slane %v1333, 2
    %v1335 = vadd.f32 %v1333, %v1334
    %v1336 = vrot.slane %v1335, 1
    %v1337 = vadd.f32 %v1335, %v1336
    %v1338 = vadd.f32 %v1330, %v1337
    %v1339 = vsel %vm621, %v1145, 0.0
    %v1340 = vrot.slane %v1339, 4
    %v1341 = vadd.f32 %v1339, %v1340
    %v1342 = vrot.slane %v1341, 2
    %v1343 = vadd.f32 %v1341, %v1342
    %v1344 = vrot.slane %v1343, 1
    %v1345 = vadd.f32 %v1343, %v1344
    %v1346 = vadd.f32 %v1338, %v1345
    %v1347 = vsel %vm621, %v1180, 0.0
    %v1348 = vrot.slane %v1347, 4
    %v1349 = vadd.f32 %v1347, %v1348
    %v1350 = vrot.slane %v1349, 2
    %v1351 = vadd.f32 %v1349, %v1350
    %v1352 = vrot.slane %v1351, 1
    %v1353 = vadd.f32 %v1351, %v1352
    %v1354 = vadd.f32 %v1346, %v1353
    %v1355 = vsel %vm621, %v1215, 0.0
    %v1356 = vrot.slane %v1355, 4
    %v1357 = vadd.f32 %v1355, %v1356
    %v1358 = vrot.slane %v1357, 2
    %v1359 = vadd.f32 %v1357, %v1358
    %v1360 = vrot.slane %v1359, 1
    %v1361 = vadd.f32 %v1359, %v1360
    %v1362 = vadd.f32 %v1354, %v1361
    %v1363 = vsel %vm621, %v1250, 0.0
    %v1364 = vrot.slane %v1363, 4
    %v1365 = vadd.f32 %v1363, %v1364
    %v1366 = vrot.slane %v1365, 2
    %v1367 = vadd.f32 %v1365, %v1366
    %v1368 = vrot.slane %v1367, 1
    %v1369 = vadd.f32 %v1367, %v1368
    %v1370 = vadd.f32 %v1362, %v1369
    %v1371 = vsel %vm621, %v1285, 0.0
    %v1372 = vrot.slane %v1371, 4
    %v1373 = vadd.f32 %v1371, %v1372
    %v1374 = vrot.slane %v1373, 2
    %v1375 = vadd.f32 %v1373, %v1374
    %v1376 = vrot.slane %v1375, 1
    %v1377 = vadd.f32 %v1375, %v1376
    %v1378 = vadd.f32 %v1370, %v1377
    %v1379 = vsel %vm621, %v1320, 0.0
    %v1380 = vrot.slane %v1379, 4
    %v1381 = vadd.f32 %v1379, %v1380
    %v1382 = vrot.slane %v1381, 2
    %v1383 = vadd.f32 %v1381, %v1382
    %v1384 = vrot.slane %v1383, 1
    %v1385 = vadd.f32 %v1383, %v1384
    %v1386 = vadd.f32 %v1378, %v1385
    %v1387 = vrcp.pop 32.0
    %v1388 = vmul.f32 32.0, %v1387
    %v1389 = vsub.f32 1.0, %v1388
    %v1390 = vmul.f32 %v1387, %v1389
    %v1391 = vadd.f32 %v1387, %v1390
    %vm1392 = vweird.f32 %v1387
    %v1393 = vsel %vm1392, %v1387, %v1391
    %v1394 = vmul.f32 %v1386, %v1393
    %v1395 = vsub.f32 %v1075, %v1394
    %v1396 = vmul.f32 %v1395, %v1395
    %v1397 = vsel %vm621, %v1396, 0.0
    %v1398 = vrot.slane %v1397, 4
    %v1399 = vadd.f32 %v1397, %v1398
    %v1400 = vrot.slane %v1399, 2
    %v1401 = vadd.f32 %v1399, %v1400
    %v1402 = vrot.slane %v1401, 1
    %v1403 = vadd.f32 %v1401, %v1402
    %v1404 = vadd.f32 %v1403, 0.0
    %v1405 = vsub.f32 %v1110, %v1394
    %v1406 = vmul.f32 %v1405, %v1405
    %v1407 = vsel %vm621, %v1406, 0.0
    %v1408 = vrot.slane %v1407, 4
    %v1409 = vadd.f32 %v1407, %v1408
    %v1410 = vrot.slane %v1409, 2
    %v1411 = vadd.f32 %v1409, %v1410
    %v1412 = vrot.slane %v1411, 1
    %v1413 = vadd.f32 %v1411, %v1412
    %v1414 = vadd.f32 %v1404, %v1413
    %v1415 = vsub.f32 %v1145, %v1394
    %v1416 = vmul.f32 %v1415, %v1415
    %v1417 = vsel %vm621, %v1416, 0.0
    %v1418 = vrot.slane %v1417, 4
    %v1419 = vadd.f32 %v1417, %v1418
    %v1420 = vrot.slane %v1419, 2
    %v1421 = vadd.f32 %v1419, %v1420
    %v1422 = vrot.slane %v1421, 1
    %v1423 = vadd.f32 %v1421, %v1422
    %v1424 = vadd.f32 %v1414, %v1423
    %v1425 = vsub.f32 %v1180, %v1394
    %v1426 = vmul.f32 %v1425, %v1425
    %v1427 = vsel %vm621, %v1426, 0.0
    %v1428 = vrot.slane %v1427, 4
    %v1429 = vadd.f32 %v1427, %v1428
    %v1430 = vrot.slane %v1429, 2
    %v1431 = vadd.f32 %v1429, %v1430
    %v1432 = vrot.slane %v1431, 1
    %v1433 = vadd.f32 %v1431, %v1432
    %v1434 = vadd.f32 %v1424, %v1433
    %v1435 = vsub.f32 %v1215, %v1394
    %v1436 = vmul.f32 %v1435, %v1435
    %v1437 = vsel %vm621, %v1436, 0.0
    %v1438 = vrot.slane %v1437, 4
    %v1439 = vadd.f32 %v1437, %v1438
    %v1440 = vrot.slane %v1439, 2
    %v1441 = vadd.f32 %v1439, %v1440
    %v1442 = vrot.slane %v1441, 1
    %v1443 = vadd.f32 %v1441, %v1442
    %v1444 = vadd.f32 %v1434, %v1443
    %v1445 = vsub.f32 %v1250, %v1394
    %v1446 = vmul.f32 %v1445, %v1445
    %v1447 = vsel %vm621, %v1446, 0.0
    %v1448 = vrot.slane %v1447, 4
    %v1449 = vadd.f32 %v1447, %v1448
    %v1450 = vrot.slane %v1449, 2
    %v1451 = vadd.f32 %v1449, %v1450
    %v1452 = vrot.slane %v1451, 1
    %v1453 = vadd.f32 %v1451, %v1452
    %v1454 = vadd.f32 %v1444, %v1453
    %v1455 = vsub.f32 %v1285, %v1394
    %v1456 = vmul.f32 %v1455, %v1455
    %v1457 = vsel %vm621, %v1456, 0.0
    %v1458 = vrot.slane %v1457, 4
    %v1459 = vadd.f32 %v1457, %v1458
    %v1460 = vrot.slane %v1459, 2
    %v1461 = vadd.f32 %v1459, %v1460
    %v1462 = vrot.slane %v1461, 1
    %v1463 = vadd.f32 %v1461, %v1462
    %v1464 = vadd.f32 %v1454, %v1463
    %v1465 = vsub.f32 %v1320, %v1394
    %v1466 = vmul.f32 %v1465, %v1465
    %v1467 = vsel %vm621, %v1466, 0.0
    %v1468 = vrot.slane %v1467, 4
    %v1469 = vadd.f32 %v1467, %v1468
    %v1470 = vrot.slane %v1469, 2
    %v1471 = vadd.f32 %v1469, %v1470
    %v1472 = vrot.slane %v1471, 1
    %v1473 = vadd.f32 %v1471, %v1472
    %v1474 = vadd.f32 %v1464, %v1473
    %v1475 = vmul.f32 %v1474, %v1393
    %v1476 = vadd.f32 %v1475, 1e-05
    %v1477 = vrsqrt.pop %v1476
    %v1478 = vmul.f32 %v1477, %v1476
    %v1479 = vmul.f32 %v1478, %v1477
    %v1480 = vmul.f32 0.5, %v1479
    %v1481 = vsub.f32 1.5, %v1480
    %v1482 = vmul.f32 %v1477, %v1481
    %vm1483 = vweird.f32 %v1476
    %vm1484 = vweird.f32 %v1477
    %vm1485 = vmor %vm1483, %vm1484
    %v1486 = vsel %vm1485, %v1477, %v1482
    %v1487 = vmul.f32 %v1321, %v1486
    %v1488 = vmul.f32 %v1394, %v1487
    %v1489 = vsub.f32 %v1322, %v1488
    %v1491 = vperm.slane %v1487, 0
    %v1493 = vmul.f32 %v1075, %v1491
    %v1495 = vperm.slane %v1489, 0
    %v1497 = vadd.f32 %v1493, %v1495
    %vm1498 = vcmp.gt.f32.partialorder %v1497, 0.0
    %v1499 = vmul.f32 %v1497, 0.2
    %v1500 = vsel %vm1498, %v1497, %v1499
    %v1501 = vmul.f32 %v1110, %v1491
    %v1502 = vadd.f32 %v1501, %v1495
    %vm1503 = vcmp.gt.f32.partialorder %v1502, 0.0
    %v1504 = vmul.f32 %v1502, 0.2
    %v1505 = vsel %vm1503, %v1502, %v1504
    %v1506 = vmul.f32 %v1145, %v1491
    %v1507 = vadd.f32 %v1506, %v1495
    %vm1508 = vcmp.gt.f32.partialorder %v1507, 0.0
    %v1509 = vmul.f32 %v1507, 0.2
    %v1510 = vsel %vm1508, %v1507, %v1509
    %v1511 = vmul.f32 %v1180, %v1491
    %v1512 = vadd.f32 %v1511, %v1495
    %vm1513 = vcmp.gt.f32.partialorder %v1512, 0.0
    %v1514 = vmul.f32 %v1512, 0.2
    %v1515 = vsel %vm1513, %v1512, %v1514
    %v1516 = vmul.f32 %v1215, %v1491
    %v1517 = vadd.f32 %v1516, %v1495
    %vm1518 = vcmp.gt.f32.partialorder %v1517, 0.0
    %v1519 = vmul.f32 %v1517, 0.2
    %v1520 = vsel %vm1518, %v1517, %v1519
    %v1521 = vmul.f32 %v1250, %v1491
    %v1522 = vadd.f32 %v1521, %v1495
    %vm1523 = vcmp.gt.f32.partialorder %v1522, 0.0
    %v1524 = vmul.f32 %v1522, 0.2
    %v1525 = vsel %vm1523, %v1522, %v1524
    %v1526 = vmul.f32 %v1285, %v1491
    %v1527 = vadd.f32 %v1526, %v1495
    %vm1528 = vcmp.gt.f32.partialorder %v1527, 0.0
    %v1529 = vmul.f32 %v1527, 0.2
    %v1530 = vsel %vm1528, %v1527, %v1529
    %v1531 = vmul.f32 %v1320, %v1491
    %v1532 = vadd.f32 %v1531, %v1495
    %vm1533 = vcmp.gt.f32.partialorder %v1532, 0.0
    %v1534 = vmul.f32 %v1532, 0.2
    %v1535 = vsel %vm1533, %v1532, %v1534
    %s1536 = scalar_lea.vmem [#allocation4], 16
    %v1537 = vld [vmem:[%s1536] sm:$0xf]
    %v1538 = vld [vmem:[%s1536 + $0x4] sm:$0xf]
    %s1539 = scalar_lea.vmem [#allocation4], 24
    %v1540 = vld [vmem:[%s1539] sm:$0xf]
    %v1541 = vld [vmem:[%s1539 + $0x4] sm:$0xf]
    %s1542 = scalar_lea.vmem %s8, 1
    %v1543 = vld [vmem:[%s1542] sm:$0x1]
    %v1544 = vpack.c.bf16 %v1500, %v1500
    %v1545 = vpack.c.bf16 %v1505, %v1505
    %v1548 = vunpack.c.l.b16 %v1540
    %v1549 = vunpack.c.l.b16 %v1541
    %v1550 = vpack.c.b16 %v1549, %v1548
    %v1553 = vsel %vm1033, %v1545, 0
    %1555 = vmatpush.bf16.msra.mxu0 0
    %1556 = vmatpush.bf16.msra.mxu0 0
    %1557 = vmatpush.bf16.msra.mxu0 0
    %1558 = vmatpush.bf16.msra.mxu0 0
    %1559 = vmatpush.bf16.msra.mxu0 0
    %1560 = vmatpush.bf16.msra.mxu0 0
    %1561 = vmatpush.bf16.msra.mxu0 0
    %1562 = vmatpush.bf16.msra.mxu0 %v1550
    %1563 = vmatmul.bf16.gmra.mxu0 %v1553
    %v1564 = vpop.f32.mrf.mxu0
    %v1565 = vadd.f32 0.0, %v1564
    %v1566 = vpop.f32.mrf.mxu0
    %1567 = vdwg.mxu0
    %v1570 = vunpack.c.l.b16 %v1537
    %v1571 = vunpack.c.l.b16 %v1538
    %v1572 = vpack.c.b16 %v1571, %v1570
    %v1575 = vsel %vm1033, %v1544, 0
    %1577 = vmatpush.bf16.msra.mxu0 0
    %1578 = vmatpush.bf16.msra.mxu0 0
    %1579 = vmatpush.bf16.msra.mxu0 0
    %1580 = vmatpush.bf16.msra.mxu0 0
    %1581 = vmatpush.bf16.msra.mxu0 0
    %1582 = vmatpush.bf16.msra.mxu0 0
    %1583 = vmatpush.bf16.msra.mxu0 0
    %1584 = vmatpush.bf16.msra.mxu0 %v1572
    %1585 = vmatmul.bf16.gmra.mxu0 %v1575
    %v1586 = vpop.f32.mrf.mxu0
    %v1587 = vadd.f32 %v1565, %v1586
    %v1588 = vpop.f32.mrf.mxu0
    %1589 = vdwg.mxu0
    %v1591 = vperm.slane %v1543, 0
    %v1593 = vadd.f32 %v1587, %v1591
    %v1594 = vpack.c.bf16 %v1510, %v1510
    %v1595 = vpack.c.bf16 %v1515, %v1515
    %v1597 = vsel %vm1033, %v1595, 0
    %1599 = vmatpush.bf16.msra.mxu0 0
    %1600 = vmatpush.bf16.msra.mxu0 0
    %1601 = vmatpush.bf16.msra.mxu0 0
    %1602 = vmatpush.bf16.msra.mxu0 0
    %1603 = vmatpush.bf16.msra.mxu0 0
    %1604 = vmatpush.bf16.msra.mxu0 0
    %1605 = vmatpush.bf16.msra.mxu0 0
    %1606 = vmatpush.bf16.msra.mxu0 %v1550
    %1607 = vmatmul.bf16.gmra.mxu0 %v1597
    %v1608 = vpop.f32.mrf.mxu0
    %v1609 = vadd.f32 0.0, %v1608
    %v1610 = vpop.f32.mrf.mxu0
    %1611 = vdwg.mxu0
    %v1613 = vsel %vm1033, %v1594, 0
    %1615 = vmatpush.bf16.msra.mxu0 0
    %1616 = vmatpush.bf16.msra.mxu0 0
    %1617 = vmatpush.bf16.msra.mxu0 0
    %1618 = vmatpush.bf16.msra.mxu0 0
    %1619 = vmatpush.bf16.msra.mxu0 0
    %1620 = vmatpush.bf16.msra.mxu0 0
    %1621 = vmatpush.bf16.msra.mxu0 0
    %1622 = vmatpush.bf16.msra.mxu0 %v1572
    %1623 = vmatmul.bf16.gmra.mxu0 %v1613
    %v1624 = vpop.f32.mrf.mxu0
    %v1625 = vadd.f32 %v1609, %v1624
    %v1626 = vpop.f32.mrf.mxu0
    %1627 = vdwg.mxu0
    %v1628 = vadd.f32 %v1625, %v1591
    %v1629 = vpack.c.bf16 %v1520, %v1520
    %v1630 = vpack.c.bf16 %v1525, %v1525
    %v1632 = vsel %vm1033, %v1630, 0
    %1634 = vmatpush.bf16.msra.mxu0 0
    %1635 = vmatpush.bf16.msra.mxu0 0
    %1636 = vmatpush.bf16.msra.mxu0 0
    %1637 = vmatpush.bf16.msra.mxu0 0
    %1638 = vmatpush.bf16.msra.mxu0 0
    %1639 = vmatpush.bf16.msra.mxu0 0
    %1640 = vmatpush.bf16.msra.mxu0 0
    %1641 = vmatpush.bf16.msra.mxu0 %v1550
    %1642 = vmatmul.bf16.gmra.mxu0 %v1632
    %v1643 = vpop.f32.mrf.mxu0
    %v1644 = vadd.f32 0.0, %v1643
    %v1645 = vpop.f32.mrf.mxu0
    %1646 = vdwg.mxu0
    %v1648 = vsel %vm1033, %v1629, 0
    %1650 = vmatpush.bf16.msra.mxu0 0
    %1651 = vmatpush.bf16.msra.mxu0 0
    %1652 = vmatpush.bf16.msra.mxu0 0
    %1653 = vmatpush.bf16.msra.mxu0 0
    %1654 = vmatpush.bf16.msra.mxu0 0
    %1655 = vmatpush.bf16.msra.mxu0 0
    %1656 = vmatpush.bf16.msra.mxu0 0
    %1657 = vmatpush.bf16.msra.mxu0 %v1572
    %1658 = vmatmul.bf16.gmra.mxu0 %v1648
    %v1659 = vpop.f32.mrf.mxu0
    %v1660 = vadd.f32 %v1644, %v1659
    %v1661 = vpop.f32.mrf.mxu0
    %1662 = vdwg.mxu0
    %v1663 = vadd.f32 %v1660, %v1591
    %v1664 = vpack.c.bf16 %v1530, %v1530
    %v1665 = vpack.c.bf16 %v1535, %v1535
    %v1667 = vsel %vm1033, %v1665, 0
    %1669 = vmatpush.bf16.msra.mxu0 0
    %1670 = vmatpush.bf16.msra.mxu0 0
    %1671 = vmatpush.bf16.msra.mxu0 0
    %1672 = vmatpush.bf16.msra.mxu0 0
    %1673 = vmatpush.bf16.msra.mxu0 0
    %1674 = vmatpush.bf16.msra.mxu0 0
    %1675 = vmatpush.bf16.msra.mxu0 0
    %1676 = vmatpush.bf16.msra.mxu0 %v1550
    %1677 = vmatmul.bf16.gmra.mxu0 %v1667
    %v1678 = vpop.f32.mrf.mxu0
    %v1679 = vadd.f32 0.0, %v1678
    %v1680 = vpop.f32.mrf.mxu0
    %1681 = vdwg.mxu0
    %v1683 = vsel %vm1033, %v1664, 0
    %1685 = vmatpush.bf16.msra.mxu0 0
    %1686 = vmatpush.bf16.msra.mxu0 0
    %1687 = vmatpush.bf16.msra.mxu0 0
    %1688 = vmatpush.bf16.msra.mxu0 0
    %1689 = vmatpush.bf16.msra.mxu0 0
    %1690 = vmatpush.bf16.msra.mxu0 0
    %1691 = vmatpush.bf16.msra.mxu0 0
    %1692 = vmatpush.bf16.msra.mxu0 %v1572
    %1693 = vmatmul.bf16.gmra.mxu0 %v1683
    %v1694 = vpop.f32.mrf.mxu0
    %v1695 = vadd.f32 %v1679, %v1694
    %v1696 = vpop.f32.mrf.mxu0
    %1697 = vdwg.mxu0
    %v1698 = vadd.f32 %v1695, %v1591
    %s1699 = scalar_lea.vmem %s9, 1
    %v1700 = vld [vmem:[%s1699] sm:$0x1]
    %s1701 = scalar_lea.vmem [#allocation6], 1
    %v1702 = vld [vmem:[%s1701] sm:$0x1]
    %v1703 = vsel %vm621, %v1593, 0.0
    %v1704 = vrot.slane %v1703, 4
    %v1705 = vadd.f32 %v1703, %v1704
    %v1706 = vrot.slane %v1705, 2
    %v1707 = vadd.f32 %v1705, %v1706
    %v1708 = vrot.slane %v1707, 1
    %v1709 = vadd.f32 %v1707, %v1708
    %v1710 = vadd.f32 %v1709, 0.0
    %v1711 = vsel %vm621, %v1628, 0.0
    %v1712 = vrot.slane %v1711, 4
    %v1713 = vadd.f32 %v1711, %v1712
    %v1714 = vrot.slane %v1713, 2
    %v1715 = vadd.f32 %v1713, %v1714
    %v1716 = vrot.slane %v1715, 1
    %v1717 = vadd.f32 %v1715, %v1716
    %v1718 = vadd.f32 %v1710, %v1717
    %v1719 = vsel %vm621, %v1663, 0.0
    %v1720 = vrot.slane %v1719, 4
    %v1721 = vadd.f32 %v1719, %v1720
    %v1722 = vrot.slane %v1721, 2
    %v1723 = vadd.f32 %v1721, %v1722
    %v1724 = vrot.slane %v1723, 1
    %v1725 = vadd.f32 %v1723, %v1724
    %v1726 = vadd.f32 %v1718, %v1725
    %v1727 = vsel %vm621, %v1698, 0.0
    %v1728 = vrot.slane %v1727, 4
    %v1729 = vadd.f32 %v1727, %v1728
    %v1730 = vrot.slane %v1729, 2
    %v1731 = vadd.f32 %v1729, %v1730
    %v1732 = vrot.slane %v1731, 1
    %v1733 = vadd.f32 %v1731, %v1732
    %v1734 = vadd.f32 %v1726, %v1733
    %v1735 = vrcp.pop 16.0
    %v1736 = vmul.f32 16.0, %v1735
    %v1737 = vsub.f32 1.0, %v1736
    %v1738 = vmul.f32 %v1735, %v1737
    %v1739 = vadd.f32 %v1735, %v1738
    %vm1740 = vweird.f32 %v1735
    %v1741 = vsel %vm1740, %v1735, %v1739
    %v1742 = vmul.f32 %v1734, %v1741
    %v1743 = vsub.f32 %v1593, %v1742
    %v1744 = vmul.f32 %v1743, %v1743
    %v1745 = vsel %vm621, %v1744, 0.0
    %v1746 = vrot.slane %v1745, 4
    %v1747 = vadd.f32 %v1745, %v1746
    %v1748 = vrot.slane %v1747, 2
    %v1749 = vadd.f32 %v1747, %v1748
    %v1750 = vrot.slane %v1749, 1
    %v1751 = vadd.f32 %v1749, %v1750
    %v1752 = vadd.f32 %v1751, 0.0
    %v1753 = vsub.f32 %v1628, %v1742
    %v1754 = vmul.f32 %v1753, %v1753
    %v1755 = vsel %vm621, %v1754, 0.0
    %v1756 = vrot.slane %v1755, 4
    %v1757 = vadd.f32 %v1755, %v1756
    %v1758 = vrot.slane %v1757, 2
    %v1759 = vadd.f32 %v1757, %v1758
    %v1760 = vrot.slane %v1759, 1
    %v1761 = vadd.f32 %v1759, %v1760
    %v1762 = vadd.f32 %v1752, %v1761
    %v1763 = vsub.f32 %v1663, %v1742
    %v1764 = vmul.f32 %v1763, %v1763
    %v1765 = vsel %vm621, %v1764, 0.0
    %v1766 = vrot.slane %v1765, 4
    %v1767 = vadd.f32 %v1765, %v1766
    %v1768 = vrot.slane %v1767, 2
    %v1769 = vadd.f32 %v1767, %v1768
    %v1770 = vrot.slane %v1769, 1
    %v1771 = vadd.f32 %v1769, %v1770
    %v1772 = vadd.f32 %v1762, %v1771
    %v1773 = vsub.f32 %v1698, %v1742
    %v1774 = vmul.f32 %v1773, %v1773
    %v1775 = vsel %vm621, %v1774, 0.0
    %v1776 = vrot.slane %v1775, 4
    %v1777 = vadd.f32 %v1775, %v1776
    %v1778 = vrot.slane %v1777, 2
    %v1779 = vadd.f32 %v1777, %v1778
    %v1780 = vrot.slane %v1779, 1
    %v1781 = vadd.f32 %v1779, %v1780
    %v1782 = vadd.f32 %v1772, %v1781
    %v1783 = vmul.f32 %v1782, %v1741
    %v1784 = vadd.f32 %v1783, 1e-05
    %v1785 = vrsqrt.pop %v1784
    %v1786 = vmul.f32 %v1785, %v1784
    %v1787 = vmul.f32 %v1786, %v1785
    %v1788 = vmul.f32 0.5, %v1787
    %v1789 = vsub.f32 1.5, %v1788
    %v1790 = vmul.f32 %v1785, %v1789
    %vm1791 = vweird.f32 %v1784
    %vm1792 = vweird.f32 %v1785
    %vm1793 = vmor %vm1791, %vm1792
    %v1794 = vsel %vm1793, %v1785, %v1790
    %v1795 = vmul.f32 %v1700, %v1794
    %v1796 = vmul.f32 %v1742, %v1795
    %v1797 = vsub.f32 %v1702, %v1796
    %v1799 = vperm.slane %v1795, 0
    %v1801 = vmul.f32 %v1593, %v1799
    %v1803 = vperm.slane %v1797, 0
    %v1805 = vadd.f32 %v1801, %v1803
    %vm1806 = vcmp.gt.f32.partialorder %v1805, 0.0
    %v1807 = vmul.f32 %v1805, 0.2
    %v1808 = vsel %vm1806, %v1805, %v1807
    %v1809 = vmul.f32 %v1628, %v1799
    %v1810 = vadd.f32 %v1809, %v1803
    %vm1811 = vcmp.gt.f32.partialorder %v1810, 0.0
    %v1812 = vmul.f32 %v1810, 0.2
    %v1813 = vsel %vm1811, %v1810, %v1812
    %v1814 = vmul.f32 %v1663, %v1799
    %v1815 = vadd.f32 %v1814, %v1803
    %vm1816 = vcmp.gt.f32.partialorder %v1815, 0.0
    %v1817 = vmul.f32 %v1815, 0.2
    %v1818 = vsel %vm1816, %v1815, %v1817
    %v1819 = vmul.f32 %v1698, %v1799
    %v1820 = vadd.f32 %v1819, %v1803
    %vm1821 = vcmp.gt.f32.partialorder %v1820, 0.0
    %v1822 = vmul.f32 %v1820, 0.2
    %v1823 = vsel %vm1821, %v1820, %v1822
    %s1824 = scalar_lea.vmem [#allocation4], 32
    %v1825 = vld [vmem:[%s1824] sm:$0xf]
    %v1826 = vld [vmem:[%s1824 + $0x4] sm:$0xf]
    %s1827 = scalar_lea.vmem [#allocation4], 40
    %v1828 = vld [vmem:[%s1827] sm:$0xf]
    %v1829 = vld [vmem:[%s1827 + $0x4] sm:$0xf]
    %s1830 = scalar_lea.vmem %s8, 2
    %v1831 = vld [vmem:[%s1830] sm:$0x1]
    %v1832 = vpack.c.bf16 %v1808, %v1808
    %v1833 = vpack.c.bf16 %v1813, %v1813
    %v1836 = vunpack.c.l.b16 %v1828
    %v1837 = vunpack.c.l.b16 %v1829
    %v1838 = vpack.c.b16 %v1837, %v1836
    %v1841 = vsel %vm1033, %v1833, 0
    %1843 = vmatpush.bf16.msra.mxu0 0
    %1844 = vmatpush.bf16.msra.mxu0 0
    %1845 = vmatpush.bf16.msra.mxu0 0
    %1846 = vmatpush.bf16.msra.mxu0 0
    %1847 = vmatpush.bf16.msra.mxu0 0
    %1848 = vmatpush.bf16.msra.mxu0 0
    %1849 = vmatpush.bf16.msra.mxu0 0
    %1850 = vmatpush.bf16.msra.mxu0 %v1838
    %1851 = vmatmul.bf16.gmra.mxu0 %v1841
    %v1852 = vpop.f32.mrf.mxu0
    %v1853 = vadd.f32 0.0, %v1852
    %v1854 = vpop.f32.mrf.mxu0
    %1855 = vdwg.mxu0
    %v1858 = vunpack.c.l.b16 %v1825
    %v1859 = vunpack.c.l.b16 %v1826
    %v1860 = vpack.c.b16 %v1859, %v1858
    %v1863 = vsel %vm1033, %v1832, 0
    %1865 = vmatpush.bf16.msra.mxu0 0
    %1866 = vmatpush.bf16.msra.mxu0 0
    %1867 = vmatpush.bf16.msra.mxu0 0
    %1868 = vmatpush.bf16.msra.mxu0 0
    %1869 = vmatpush.bf16.msra.mxu0 0
    %1870 = vmatpush.bf16.msra.mxu0 0
    %1871 = vmatpush.bf16.msra.mxu0 0
    %1872 = vmatpush.bf16.msra.mxu0 %v1860
    %1873 = vmatmul.bf16.gmra.mxu0 %v1863
    %v1874 = vpop.f32.mrf.mxu0
    %v1875 = vadd.f32 %v1853, %v1874
    %v1876 = vpop.f32.mrf.mxu0
    %1877 = vdwg.mxu0
    %v1879 = vperm.slane %v1831, 0
    %v1881 = vadd.f32 %v1875, %v1879
    %v1882 = vpack.c.bf16 %v1818, %v1818
    %v1883 = vpack.c.bf16 %v1823, %v1823
    %v1885 = vsel %vm1033, %v1883, 0
    %1887 = vmatpush.bf16.msra.mxu0 0
    %1888 = vmatpush.bf16.msra.mxu0 0
    %1889 = vmatpush.bf16.msra.mxu0 0
    %1890 = vmatpush.bf16.msra.mxu0 0
    %1891 = vmatpush.bf16.msra.mxu0 0
    %1892 = vmatpush.bf16.msra.mxu0 0
    %1893 = vmatpush.bf16.msra.mxu0 0
    %1894 = vmatpush.bf16.msra.mxu0 %v1838
    %1895 = vmatmul.bf16.gmra.mxu0 %v1885
    %v1896 = vpop.f32.mrf.mxu0
    %v1897 = vadd.f32 0.0, %v1896
    %v1898 = vpop.f32.mrf.mxu0
    %1899 = vdwg.mxu0
    %v1901 = vsel %vm1033, %v1882, 0
    %1903 = vmatpush.bf16.msra.mxu0 0
    %1904 = vmatpush.bf16.msra.mxu0 0
    %1905 = vmatpush.bf16.msra.mxu0 0
    %1906 = vmatpush.bf16.msra.mxu0 0
    %1907 = vmatpush.bf16.msra.mxu0 0
    %1908 = vmatpush.bf16.msra.mxu0 0
    %1909 = vmatpush.bf16.msra.mxu0 0
    %1910 = vmatpush.bf16.msra.mxu0 %v1860
    %1911 = vmatmul.bf16.gmra.mxu0 %v1901
    %v1912 = vpop.f32.mrf.mxu0
    %v1913 = vadd.f32 %v1897, %v1912
    %v1914 = vpop.f32.mrf.mxu0
    %1915 = vdwg.mxu0
    %v1916 = vadd.f32 %v1913, %v1879
    %s1917 = scalar_lea.vmem %s9, 2
    %v1918 = vld [vmem:[%s1917] sm:$0x1]
    %s1919 = scalar_lea.vmem [#allocation6], 2
    %v1920 = vld [vmem:[%s1919] sm:$0x1]
    %v1921 = vsel %vm621, %v1881, 0.0
    %v1922 = vrot.slane %v1921, 4
    %v1923 = vadd.f32 %v1921, %v1922
    %v1924 = vrot.slane %v1923, 2
    %v1925 = vadd.f32 %v1923, %v1924
    %v1926 = vrot.slane %v1925, 1
    %v1927 = vadd.f32 %v1925, %v1926
    %v1928 = vadd.f32 %v1927, 0.0
    %v1929 = vsel %vm621, %v1916, 0.0
    %v1930 = vrot.slane %v1929, 4
    %v1931 = vadd.f32 %v1929, %v1930
    %v1932 = vrot.slane %v1931, 2
    %v1933 = vadd.f32 %v1931, %v1932
    %v1934 = vrot.slane %v1933, 1
    %v1935 = vadd.f32 %v1933, %v1934
    %v1936 = vadd.f32 %v1928, %v1935
    %v1937 = vrcp.pop 8.0
    %v1938 = vmul.f32 8.0, %v1937
    %v1939 = vsub.f32 1.0, %v1938
    %v1940 = vmul.f32 %v1937, %v1939
    %v1941 = vadd.f32 %v1937, %v1940
    %vm1942 = vweird.f32 %v1937
    %v1943 = vsel %vm1942, %v1937, %v1941
    %v1944 = vmul.f32 %v1936, %v1943
    %v1945 = vsub.f32 %v1881, %v1944
    %v1946 = vmul.f32 %v1945, %v1945
    %v1947 = vsel %vm621, %v1946, 0.0
    %v1948 = vrot.slane %v1947, 4
    %v1949 = vadd.f32 %v1947, %v1948
    %v1950 = vrot.slane %v1949, 2
    %v1951 = vadd.f32 %v1949, %v1950
    %v1952 = vrot.slane %v1951, 1
    %v1953 = vadd.f32 %v1951, %v1952
    %v1954 = vadd.f32 %v1953, 0.0
    %v1955 = vsub.f32 %v1916, %v1944
    %v1956 = vmul.f32 %v1955, %v1955
    %v1957 = vsel %vm621, %v1956, 0.0
    %v1958 = vrot.slane %v1957, 4
    %v1959 = vadd.f32 %v1957, %v1958
    %v1960 = vrot.slane %v1959, 2
    %v1961 = vadd.f32 %v1959, %v1960
    %v1962 = vrot.slane %v1961, 1
    %v1963 = vadd.f32 %v1961, %v1962
    %v1964 = vadd.f32 %v1954, %v1963
    %v1965 = vmul.f32 %v1964, %v1943
    %v1966 = vadd.f32 %v1965, 1e-05
    %v1967 = vrsqrt.pop %v1966
    %v1968 = vmul.f32 %v1967, %v1966
    %v1969 = vmul.f32 %v1968, %v1967
    %v1970 = vmul.f32 0.5, %v1969
    %v1971 = vsub.f32 1.5, %v1970
    %v1972 = vmul.f32 %v1967, %v1971
    %vm1973 = vweird.f32 %v1966
    %vm1974 = vweird.f32 %v1967
    %vm1975 = vmor %vm1973, %vm1974
    %v1976 = vsel %vm1975, %v1967, %v1972
    %v1977 = vmul.f32 %v1918, %v1976
    %v1978 = vmul.f32 %v1944, %v1977
    %v1979 = vsub.f32 %v1920, %v1978
    %v1981 = vperm.slane %v1977, 0
    %v1983 = vmul.f32 %v1881, %v1981
    %v1985 = vperm.slane %v1979, 0
    %v1987 = vadd.f32 %v1983, %v1985
    %vm1988 = vcmp.gt.f32.partialorder %v1987, 0.0
    %v1989 = vmul.f32 %v1987, 0.2
    %v1990 = vsel %vm1988, %v1987, %v1989
    %v1991 = vmul.f32 %v1916, %v1981
    %v1992 = vadd.f32 %v1991, %v1985
    %vm1993 = vcmp.gt.f32.partialorder %v1992, 0.0
    %v1994 = vmul.f32 %v1992, 0.2
    %v1995 = vsel %vm1993, %v1992, %v1994
    %v1996 = vld [vmem:[%s1] sm:$0xf]
    %v1997 = vld [vmem:[%s11] sm:$0xff]
    %v1998 = vld [vmem:[%s11 + $0x8] sm:$0xff]
    %v1999 = vld [vmem:[%s11 + $0x10] sm:$0xff]
    %v2000 = vld [vmem:[%s11 + $0x18] sm:$0xff]
    %v2001 = vld [vmem:[%s11 + $0x20] sm:$0xff]
    %v2002 = vld [vmem:[%s11 + $0x28] sm:$0xff]
    %v2003 = vld [vmem:[%s11 + $0x30] sm:$0xff]
    %v2004 = vld [vmem:[%s11 + $0x38] sm:$0xff]
    %v2005 = vld [vmem:[%s11 + $0x40] sm:$0xff]
    %v2006 = vld [vmem:[%s11 + $0x48] sm:$0xff]
    %v2007 = vld [vmem:[%s11 + $0x50] sm:$0xff]
    %v2008 = vld [vmem:[%s11 + $0x58] sm:$0xff]
    %v2009 = vld [vmem:[%s11 + $0x60] sm:$0x33]
    %v2010 = vpack.c.bf16 %v1996, %v1996
    %v2011 = vld [vmem:[#allocation7] sm:$0xff]
    %v2012 = vld [vmem:[#allocation7 + $0x8] sm:$0xff]
    %v2013 = vld [vmem:[#allocation7 + $0x10] sm:$0xff]
    %v2014 = vld [vmem:[#allocation7 + $0x18] sm:$0xff]
    %v2015 = vld [vmem:[#allocation7 + $0x20] sm:$0xff]
    %v2016 = vld [vmem:[#allocation7 + $0x28] sm:$0xff]
    %v2017 = vld [vmem:[#allocation7 + $0x30] sm:$0xff]
    %v2018 = vld [vmem:[#allocation7 + $0x38] sm:$0xff]
    %v2019 = vld [vmem:[#allocation7 + $0x40] sm:$0xff]
    %v2020 = vld [vmem:[#allocation7 + $0x48] sm:$0xff]
    %v2021 = vld [vmem:[#allocation7 + $0x50] sm:$0xff]
    %v2022 = vld [vmem:[#allocation7 + $0x58] sm:$0xff]
    %v2023 = vld [vmem:[#allocation7 + $0x60] sm:$0x33]
    %v2024 = vpack.c.bf16 %v295, %v295
    %v2038 = vunpack.c.l.b16 %v2011
    %v2039 = vunpack.c.h.b16 %v2011
    %v2040 = vunpack.c.l.b16 %v2012
    %v2041 = vunpack.c.h.b16 %v2012
    %v2042 = vunpack.c.l.b16 %v2013
    %v2043 = vunpack.c.h.b16 %v2013
    %v2044 = vunpack.c.l.b16 %v2014
    %v2045 = vunpack.c.h.b16 %v2014
    %v2046 = vunpack.c.l.b16 %v2015
    %v2047 = vunpack.c.h.b16 %v2015
    %v2048 = vunpack.c.l.b16 %v2016
    %v2049 = vunpack.c.h.b16 %v2016
    %v2050 = vunpack.c.l.b16 %v2017
    %v2051 = vunpack.c.h.b16 %v2017
    %v2052 = vunpack.c.l.b16 %v2018
    %v2053 = vunpack.c.h.b16 %v2018
    %v2054 = vunpack.c.l.b16 %v2019
    %v2055 = vunpack.c.h.b16 %v2019
    %v2056 = vunpack.c.l.b16 %v2020
    %v2057 = vunpack.c.h.b16 %v2020
    %v2058 = vunpack.c.l.b16 %v2021
    %v2059 = vunpack.c.h.b16 %v2021
    %v2060 = vunpack.c.l.b16 %v2022
    %v2061 = vunpack.c.h.b16 %v2022
    %v2062 = vunpack.c.l.b16 %v2023
    %v2063 = vunpack.c.h.b16 %v2023
    %v2064 = vpack.c.b16 %v2040, %v2038
    %v2065 = vpack.c.b16 %v2041, %v2039
    %v2066 = vpack.c.b16 %v2044, %v2042
    %v2067 = vpack.c.b16 %v2045, %v2043
    %v2068 = vpack.c.b16 %v2048, %v2046
    %v2069 = vpack.c.b16 %v2049, %v2047
    %v2070 = vpack.c.b16 %v2052, %v2050
    %v2071 = vpack.c.b16 %v2053, %v2051
    %v2072 = vpack.c.b16 %v2056, %v2054
    %v2073 = vpack.c.b16 %v2057, %v2055
    %v2074 = vpack.c.b16 %v2060, %v2058
    %v2075 = vpack.c.b16 %v2061, %v2059
    %v2076 = vpack.c.b16 %v2062, %v2062
    %v2077 = vpack.c.b16 %v2063, %v2063
    %vm2090 = vcmask 818176
    %v2092 = vsel %vm2090, %v2024, 0
    %vm2094 = vcmask 1041408
    %v2096 = vsel %vm2094, %v2076, 0
    %v2099 = vsel %vm2094, %v2077, 0
    %2101 = vmatpush.bf16.msra.mxu0 0
    %2102 = vmatpush.bf16.msra.mxu0 %v2096
    %2103 = vmatpush.bf16.msra.mxu0 %v2074
    %2104 = vmatpush.bf16.msra.mxu0 %v2072
    %2105 = vmatpush.bf16.msra.mxu0 %v2070
    %2106 = vmatpush.bf16.msra.mxu0 %v2068
    %2107 = vmatpush.bf16.msra.mxu0 %v2066
    %2108 = vmatpush.bf16.msra.mxu0 %v2064
    %2109 = vmatmul.bf16.gmra.mxu0 %v2092
    %v2110 = vpop.f32.mrf.mxu0
    %v2111 = vadd.f32 0.0, %v2110
    %v2112 = vpop.f32.mrf.mxu0
    %2113 = vdwg.mxu0
    %2114 = vmatpush.bf16.msra.mxu0 0
    %2115 = vmatpush.bf16.msra.mxu0 %v2099
    %2116 = vmatpush.bf16.msra.mxu0 %v2075
    %2117 = vmatpush.bf16.msra.mxu0 %v2073
    %2118 = vmatpush.bf16.msra.mxu0 %v2071
    %2119 = vmatpush.bf16.msra.mxu0 %v2069
    %2120 = vmatpush.bf16.msra.mxu0 %v2067
    %2121 = vmatpush.bf16.msra.mxu0 %v2065
    %2122 = vmatmul.bf16.gmra.mxu0 %v2092
    %v2123 = vpop.f32.mrf.mxu0
    %v2124 = vadd.f32 0.0, %v2123
    %v2125 = vpop.f32.mrf.mxu0
    %2126 = vdwg.mxu0
    %v2140 = vunpack.c.l.b16 %v1997
    %v2141 = vunpack.c.h.b16 %v1997
    %v2142 = vunpack.c.l.b16 %v1998
    %v2143 = vunpack.c.h.b16 %v1998
    %v2144 = vunpack.c.l.b16 %v1999
    %v2145 = vunpack.c.h.b16 %v1999
    %v2146 = vunpack.c.l.b16 %v2000
    %v2147 = vunpack.c.h.b16 %v2000
    %v2148 = vunpack.c.l.b16 %v2001
    %v2149 = vunpack.c.h.b16 %v2001
    %v2150 = vunpack.c.l.b16 %v2002
    %v2151 = vunpack.c.h.b16 %v2002
    %v2152 = vunpack.c.l.b16 %v2003
    %v2153 = vunpack.c.h.b16 %v2003
    %v2154 = vunpack.c.l.b16 %v2004
    %v2155 = vunpack.c.h.b16 %v2004
    %v2156 = vunpack.c.l.b16 %v2005
    %v2157 = vunpack.c.h.b16 %v2005
    %v2158 = vunpack.c.l.b16 %v2006
    %v2159 = vunpack.c.h.b16 %v2006
    %v2160 = vunpack.c.l.b16 %v2007
    %v2161 = vunpack.c.h.b16 %v2007
    %v2162 = vunpack.c.l.b16 %v2008
    %v2163 = vunpack.c.h.b16 %v2008
    %v2164 = vunpack.c.l.b16 %v2009
    %v2165 = vunpack.c.h.b16 %v2009
    %v2166 = vpack.c.b16 %v2142, %v2140
    %v2167 = vpack.c.b16 %v2143, %v2141
    %v2168 = vpack.c.b16 %v2146, %v2144
    %v2169 = vpack.c.b16 %v2147, %v2145
    %v2170 = vpack.c.b16 %v2150, %v2148
    %v2171 = vpack.c.b16 %v2151, %v2149
    %v2172 = vpack.c.b16 %v2154, %v2152
    %v2173 = vpack.c.b16 %v2155, %v2153
    %v2174 = vpack.c.b16 %v2158, %v2156
    %v2175 = vpack.c.b16 %v2159, %v2157
    %v2176 = vpack.c.b16 %v2162, %v2160
    %v2177 = vpack.c.b16 %v2163, %v2161
    %v2178 = vpack.c.b16 %v2164, %v2164
    %v2179 = vpack.c.b16 %v2165, %v2165
    %v2193 = vsel %vm2090, %v2010, 0
    %v2196 = vsel %vm2094, %v2178, 0
    %v2199 = vsel %vm2094, %v2179, 0
    %2201 = vmatpush.bf16.msra.mxu0 0
    %2202 = vmatpush.bf16.msra.mxu0 %v2196
    %2203 = vmatpush.bf16.msra.mxu0 %v2176
    %2204 = vmatpush.bf16.msra.mxu0 %v2174
    %2205 = vmatpush.bf16.msra.mxu0 %v2172
    %2206 = vmatpush.bf16.msra.mxu0 %v2170
    %2207 = vmatpush.bf16.msra.mxu0 %v2168
    %2208 = vmatpush.bf16.msra.mxu0 %v2166
    %2209 = vmatmul.bf16.gmra.mxu0 %v2193
    %v2210 = vpop.f32.mrf.mxu0
    %v2211 = vadd.f32 %v2111, %v2210
    %v2212 = vpop.f32.mrf.mxu0
    %2213 = vdwg.mxu0
    %2214 = vmatpush.bf16.msra.mxu0 0
    %2215 = vmatpush.bf16.msra.mxu0 %v2199
    %2216 = vmatpush.bf16.msra.mxu0 %v2177
    %2217 = vmatpush.bf16.msra.mxu0 %v2175
    %2218 = vmatpush.bf16.msra.mxu0 %v2173
    %2219 = vmatpush.bf16.msra.mxu0 %v2171
    %2220 = vmatpush.bf16.msra.mxu0 %v2169
    %2221 = vmatpush.bf16.msra.mxu0 %v2167
    %2222 = vmatmul.bf16.gmra.mxu0 %v2193
    %v2223 = vpop.f32.mrf.mxu0
    %v2224 = vadd.f32 %v2124, %v2223
    %v2225 = vpop.f32.mrf.mxu0
    %2226 = vdwg.mxu0
    %v2227 = vld [vmem:[#allocation9] sm:$0x3]
    %v2229 = vperm.slane %v2227, 0
    %v2230 = vperm.slane %v2227, 1
    %v2233 = vadd.f32 %v2211, %v2229
    %v2234 = vadd.f32 %v2224, %v2230
    %vm2235 = vcmask 1043456
    %v2236 = vsel %vm2235, %v2233, 0.0
    %v2237 = vrot.slane %v2236, 4
    %v2238 = vadd.f32 %v2236, %v2237
    %v2239 = vrot.slane %v2238, 2
    %v2240 = vadd.f32 %v2238, %v2239
    %v2241 = vrot.slane %v2240, 1
    %v2242 = vadd.f32 %v2240, %v2241
    %v2243 = vsel %vm2235, %v2234, 0.0
    %v2244 = vrot.slane %v2243, 4
    %v2245 = vadd.f32 %v2243, %v2244
    %v2246 = vrot.slane %v2245, 2
    %v2247 = vadd.f32 %v2245, %v2246
    %v2248 = vrot.slane %v2247, 1
    %v2249 = vadd.f32 %v2247, %v2248
    %v2250 = vrcp.pop 4.0
    %v2251 = vmul.f32 4.0, %v2250
    %v2252 = vsub.f32 1.0, %v2251
    %v2253 = vmul.f32 %v2250, %v2252
    %v2254 = vadd.f32 %v2250, %v2253
    %vm2255 = vweird.f32 %v2250
    %v2256 = vsel %vm2255, %v2250, %v2254
    %v2257 = vmul.f32 %v2242, %v2256
    %v2258 = vmul.f32 %v2249, %v2256
    %v2259 = vsub.f32 %v2233, %v2257
    %v2260 = vsub.f32 %v2234, %v2258
    %v2261 = vmul.f32 %v2259, %v2259
    %v2262 = vmul.f32 %v2260, %v2260
    %v2263 = vsel %vm2235, %v2261, 0.0
    %v2264 = vrot.slane %v2263, 4
    %v2265 = vadd.f32 %v2263, %v2264
    %v2266 = vrot.slane %v2265, 2
    %v2267 = vadd.f32 %v2265, %v2266
    %v2268 = vrot.slane %v2267, 1
    %v2269 = vadd.f32 %v2267, %v2268
    %v2270 = vsel %vm2235, %v2262, 0.0
    %v2271 = vrot.slane %v2270, 4
    %v2272 = vadd.f32 %v2270, %v2271
    %v2273 = vrot.slane %v2272, 2
    %v2274 = vadd.f32 %v2272, %v2273
    %v2275 = vrot.slane %v2274, 1
    %v2276 = vadd.f32 %v2274, %v2275
    %v2277 = vmul.f32 %v2269, %v2256
    %v2278 = vmul.f32 %v2276, %v2256
    %v2279 = vld [vmem:[#allocation10] sm:$0x3]
    %v2280 = vadd.f32 %v2277, 1e-05
    %v2281 = vadd.f32 %v2278, 1e-05
    %v2282 = vrsqrt.pop %v2280
    %v2283 = vmul.f32 %v2282, %v2280
    %v2284 = vmul.f32 %v2283, %v2282
    %v2285 = vmul.f32 0.5, %v2284
    %v2286 = vsub.f32 1.5, %v2285
    %v2287 = vmul.f32 %v2282, %v2286
    %vm2288 = vweird.f32 %v2280
    %vm2289 = vweird.f32 %v2282
    %vm2290 = vmor %vm2288, %vm2289
    %v2291 = vsel %vm2290, %v2282, %v2287
    %v2292 = vrsqrt.pop %v2281
    %v2293 = vmul.f32 %v2292, %v2281
    %v2294 = vmul.f32 %v2293, %v2292
    %v2295 = vmul.f32 0.5, %v2294
    %v2296 = vsub.f32 1.5, %v2295
    %v2297 = vmul.f32 %v2292, %v2296
    %vm2298 = vweird.f32 %v2281
    %vm2299 = vweird.f32 %v2292
    %vm2300 = vmor %vm2298, %vm2299
    %v2301 = vsel %vm2300, %v2292, %v2297
    %v2304 = vrot.slane %v2301, 7
    %vm2305 = vcmask 1040384
    %v2306 = vsel %vm2305, %v2291, %v2304
    %v2308 = vmul.f32 %v2279, %v2306
    %v2310 = vperm.slane %v2308, 0
    %v2311 = vperm.slane %v2308, 1
    %v2314 = vmul.f32 %v2259, %v2310
    %v2315 = vmul.f32 %v2260, %v2311
    %v2316 = vld [vmem:[#allocation12] sm:$0x3]
    %v2318 = vperm.slane %v2316, 0
    %v2319 = vperm.slane %v2316, 1
    %v2322 = vadd.f32 %v2314, %v2318
    %v2323 = vadd.f32 %v2315, %v2319
    %v2324 = vmax.f32 %v2322, 0.0
    %v2325 = vmax.f32 %v2323, 0.0
    %v2326 = vld [vmem:[#allocation18] sm:$0xff]
    %v2327 = vld [vmem:[#allocation18 + $0x8] sm:$0xff]
    %v2328 = vld [vmem:[#allocation18 + $0x10] sm:$0xff]
    %v2329 = vld [vmem:[#allocation18 + $0x18] sm:$0xff]
    %v2330 = vld [vmem:[#allocation18 + $0x20] sm:$0xff]
    %v2331 = vld [vmem:[#allocation18 + $0x28] sm:$0xff]
    %v2332 = vld [vmem:[#allocation18 + $0x30] sm:$0xff]
    %v2333 = vld [vmem:[#allocation18 + $0x38] sm:$0xff]
    %v2334 = vld [vmem:[#allocation18 + $0x40] sm:$0xff]
    %v2335 = vld [vmem:[#allocation18 + $0x48] sm:$0xff]
    %v2336 = vld [vmem:[#allocation18 + $0x50] sm:$0xff]
    %v2337 = vld [vmem:[#allocation18 + $0x58] sm:$0xff]
    %v2338 = vld [vmem:[#allocation18 + $0x60] sm:$0x33]
    %v2339 = vld [vmem:[%s20] sm:$0x3]
    %v2341 = vperm.slane %v2339, 0
    %v2342 = vperm.slane %v2339, 1
    %v2358 = vunpack.c.l.b16 %v2326
    %v2359 = vunpack.c.h.b16 %v2326
    %v2360 = vunpack.c.l.b16 %v2327
    %v2361 = vunpack.c.h.b16 %v2327
    %v2362 = vunpack.c.l.b16 %v2328
    %v2363 = vunpack.c.h.b16 %v2328
    %v2364 = vunpack.c.l.b16 %v2329
    %v2365 = vunpack.c.h.b16 %v2329
    %v2366 = vunpack.c.l.b16 %v2330
    %v2367 = vunpack.c.h.b16 %v2330
    %v2368 = vunpack.c.l.b16 %v2331
    %v2369 = vunpack.c.h.b16 %v2331
    %v2370 = vunpack.c.l.b16 %v2332
    %v2371 = vunpack.c.h.b16 %v2332
    %v2372 = vunpack.c.l.b16 %v2333
    %v2373 = vunpack.c.h.b16 %v2333
    %v2374 = vunpack.c.l.b16 %v2334
    %v2375 = vunpack.c.h.b16 %v2334
    %v2376 = vunpack.c.l.b16 %v2335
    %v2377 = vunpack.c.h.b16 %v2335
    %v2378 = vunpack.c.l.b16 %v2336
    %v2379 = vunpack.c.h.b16 %v2336
    %v2380 = vunpack.c.l.b16 %v2337
    %v2381 = vunpack.c.h.b16 %v2337
    %v2382 = vunpack.c.l.b16 %v2338
    %v2383 = vunpack.c.h.b16 %v2338
    %v2384 = vpack.c.b16 %v2360, %v2358
    %v2385 = vpack.c.b16 %v2361, %v2359
    %v2386 = vpack.c.b16 %v2364, %v2362
    %v2387 = vpack.c.b16 %v2365, %v2363
    %v2388 = vpack.c.b16 %v2368, %v2366
    %v2389 = vpack.c.b16 %v2369, %v2367
    %v2390 = vpack.c.b16 %v2372, %v2370
    %v2391 = vpack.c.b16 %v2373, %v2371
    %v2392 = vpack.c.b16 %v2376, %v2374
    %v2393 = vpack.c.b16 %v2377, %v2375
    %v2394 = vpack.c.b16 %v2380, %v2378
    %v2395 = vpack.c.b16 %v2381, %v2379
    %v2396 = vpack.c.b16 %v2382, %v2382
    %v2397 = vpack.c.b16 %v2383, %v2383
    %v2411 = vsel %vm2094, %v2396, 0
    %v2414 = vsel %vm2094, %v2397, 0
    %2416 = vmatpush.bf16.msra.mxu0 0
    %2417 = vmatpush.bf16.msra.mxu0 %v2411
    %2418 = vmatpush.bf16.msra.mxu0 %v2394
    %2419 = vmatpush.bf16.msra.mxu0 %v2392
    %2420 = vmatpush.bf16.msra.mxu0 %v2390
    %2421 = vmatpush.bf16.msra.mxu0 %v2388
    %2422 = vmatpush.bf16.msra.mxu0 %v2386
    %2423 = vmatpush.bf16.msra.mxu0 %v2384
    %2424 = vmatmul.bf16.gmra.mxu0 %v2092
    %v2425 = vpop.f32.mrf.mxu0
    %v2426 = vadd.f32 %v2341, %v2425
    %v2427 = vpop.f32.mrf.mxu0
    %2428 = vdwg.mxu0
    %2429 = vmatpush.bf16.msra.mxu0 0
    %2430 = vmatpush.bf16.msra.mxu0 %v2414
    %2431 = vmatpush.bf16.msra.mxu0 %v2395
    %2432 = vmatpush.bf16.msra.mxu0 %v2393
    %2433 = vmatpush.bf16.msra.mxu0 %v2391
    %2434 = vmatpush.bf16.msra.mxu0 %v2389
    %2435 = vmatpush.bf16.msra.mxu0 %v2387
    %2436 = vmatpush.bf16.msra.mxu0 %v2385
    %2437 = vmatmul.bf16.gmra.mxu0 %v2092
    %v2438 = vpop.f32.mrf.mxu0
    %v2439 = vadd.f32 %v2342, %v2438
    %v2440 = vpop.f32.mrf.mxu0
    %2441 = vdwg.mxu0
    %s2442 = scalar_lea.vmem [#allocation18], 104
    %v2443 = vld [vmem:[%s2442] sm:$0xff]
    %v2444 = vld [vmem:[%s2442 + $0x8] sm:$0xff]
    %v2445 = vld [vmem:[%s2442 + $0x10] sm:$0xff]
    %v2446 = vld [vmem:[%s2442 + $0x18] sm:$0xff]
    %v2447 = vld [vmem:[%s2442 + $0x20] sm:$0xff]
    %v2448 = vld [vmem:[%s2442 + $0x28] sm:$0xff]
    %v2449 = vld [vmem:[%s2442 + $0x30] sm:$0xff]
    %v2450 = vld [vmem:[%s2442 + $0x38] sm:$0xff]
    %v2451 = vld [vmem:[%s2442 + $0x40] sm:$0xff]
    %v2452 = vld [vmem:[%s2442 + $0x48] sm:$0xff]
    %v2453 = vld [vmem:[%s2442 + $0x50] sm:$0xff]
    %v2454 = vld [vmem:[%s2442 + $0x58] sm:$0xff]
    %v2455 = vld [vmem:[%s2442 + $0x60] sm:$0x33]
    %s2456 = scalar_lea.vmem %s20, 2
    %v2457 = vld [vmem:[%s2456] sm:$0x3]
    %v2459 = vperm.slane %v2457, 0
    %v2460 = vperm.slane %v2457, 1
    %v2476 = vunpack.c.l.b16 %v2443
    %v2477 = vunpack.c.h.b16 %v2443
    %v2478 = vunpack.c.l.b16 %v2444
    %v2479 = vunpack.c.h.b16 %v2444
    %v2480 = vunpack.c.l.b16 %v2445
    %v2481 = vunpack.c.h.b16 %v2445
    %v2482 = vunpack.c.l.b16 %v2446
    %v2483 = vunpack.c.h.b16 %v2446
    %v2484 = vunpack.c.l.b16 %v2447
    %v2485 = vunpack.c.h.b16 %v2447
    %v2486 = vunpack.c.l.b16 %v2448
    %v2487 = vunpack.c.h.b16 %v2448
    %v2488 = vunpack.c.l.b16 %v2449
    %v2489 = vunpack.c.h.b16 %v2449
    %v2490 = vunpack.c.l.b16 %v2450
    %v2491 = vunpack.c.h.b16 %v2450
    %v2492 = vunpack.c.l.b16 %v2451
    %v2493 = vunpack.c.h.b16 %v2451
    %v2494 = vunpack.c.l.b16 %v2452
    %v2495 = vunpack.c.h.b16 %v2452
    %v2496 = vunpack.c.l.b16 %v2453
    %v2497 = vunpack.c.h.b16 %v2453
    %v2498 = vunpack.c.l.b16 %v2454
    %v2499 = vunpack.c.h.b16 %v2454
    %v2500 = vunpack.c.l.b16 %v2455
    %v2501 = vunpack.c.h.b16 %v2455
    %v2502 = vpack.c.b16 %v2478, %v2476
    %v2503 = vpack.c.b16 %v2479, %v2477
    %v2504 = vpack.c.b16 %v2482, %v2480
    %v2505 = vpack.c.b16 %v2483, %v2481
    %v2506 = vpack.c.b16 %v2486, %v2484
    %v2507 = vpack.c.b16 %v2487, %v2485
    %v2508 = vpack.c.b16 %v2490, %v2488
    %v2509 = vpack.c.b16 %v2491, %v2489
    %v2510 = vpack.c.b16 %v2494, %v2492
    %v2511 = vpack.c.b16 %v2495, %v2493
    %v2512 = vpack.c.b16 %v2498, %v2496
    %v2513 = vpack.c.b16 %v2499, %v2497
    %v2514 = vpack.c.b16 %v2500, %v2500
    %v2515 = vpack.c.b16 %v2501, %v2501
    %v2529 = vsel %vm2094, %v2514, 0
    %v2532 = vsel %vm2094, %v2515, 0
    %2534 = vmatpush.bf16.msra.mxu0 0
    %2535 = vmatpush.bf16.msra.mxu0 %v2529
    %2536 = vmatpush.bf16.msra.mxu0 %v2512
    %2537 = vmatpush.bf16.msra.mxu0 %v2510
    %2538 = vmatpush.bf16.msra.mxu0 %v2508
    %2539 = vmatpush.bf16.msra.mxu0 %v2506
    %2540 = vmatpush.bf16.msra.mxu0 %v2504
    %2541 = vmatpush.bf16.msra.mxu0 %v2502
    %2542 = vmatmul.bf16.gmra.mxu0 %v2092
    %v2543 = vpop.f32.mrf.mxu0
    %v2544 = vadd.f32 %v2459, %v2543
    %v2545 = vpop.f32.mrf.mxu0
    %2546 = vdwg.mxu0
    %2547 = vmatpush.bf16.msra.mxu0 0
    %2548 = vmatpush.bf16.msra.mxu0 %v2532
    %2549 = vmatpush.bf16.msra.mxu0 %v2513
    %2550 = vmatpush.bf16.msra.mxu0 %v2511
    %2551 = vmatpush.bf16.msra.mxu0 %v2509
    %2552 = vmatpush.bf16.msra.mxu0 %v2507
    %2553 = vmatpush.bf16.msra.mxu0 %v2505
    %2554 = vmatpush.bf16.msra.mxu0 %v2503
    %2555 = vmatmul.bf16.gmra.mxu0 %v2092
    %v2556 = vpop.f32.mrf.mxu0
    %v2557 = vadd.f32 %v2460, %v2556
    %v2558 = vpop.f32.mrf.mxu0
    %2559 = vdwg.mxu0
    %s2560 = scalar_lea.vmem [#allocation18], 208
    %v2561 = vld [vmem:[%s2560] sm:$0xff]
    %v2562 = vld [vmem:[%s2560 + $0x8] sm:$0xff]
    %v2563 = vld [vmem:[%s2560 + $0x10] sm:$0xff]
    %v2564 = vld [vmem:[%s2560 + $0x18] sm:$0xff]
    %v2565 = vld [vmem:[%s2560 + $0x20] sm:$0xff]
    %v2566 = vld [vmem:[%s2560 + $0x28] sm:$0xff]
    %v2567 = vld [vmem:[%s2560 + $0x30] sm:$0xff]
    %v2568 = vld [vmem:[%s2560 + $0x38] sm:$0xff]
    %v2569 = vld [vmem:[%s2560 + $0x40] sm:$0xff]
    %v2570 = vld [vmem:[%s2560 + $0x48] sm:$0xff]
    %v2571 = vld [vmem:[%s2560 + $0x50] sm:$0xff]
    %v2572 = vld [vmem:[%s2560 + $0x58] sm:$0xff]
    %v2573 = vld [vmem:[%s2560 + $0x60] sm:$0x33]
    %s2574 = scalar_lea.vmem %s20, 4
    %v2575 = vld [vmem:[%s2574] sm:$0x3]
    %v2577 = vperm.slane %v2575, 0
    %v2578 = vperm.slane %v2575, 1
    %v2594 = vunpack.c.l.b16 %v2561
    %v2595 = vunpack.c.h.b16 %v2561
    %v2596 = vunpack.c.l.b16 %v2562
    %v2597 = vunpack.c.h.b16 %v2562
    %v2598 = vunpack.c.l.b16 %v2563
    %v2599 = vunpack.c.h.b16 %v2563
    %v2600 = vunpack.c.l.b16 %v2564
    %v2601 = vunpack.c.h.b16 %v2564
    %v2602 = vunpack.c.l.b16 %v2565
    %v2603 = vunpack.c.h.b16 %v2565
    %v2604 = vunpack.c.l.b16 %v2566
    %v2605 = vunpack.c.h.b16 %v2566
    %v2606 = vunpack.c.l.b16 %v2567
    %v2607 = vunpack.c.h.b16 %v2567
    %v2608 = vunpack.c.l.b16 %v2568
    %v2609 = vunpack.c.h.b16 %v2568
    %v2610 = vunpack.c.l.b16 %v2569
    %v2611 = vunpack.c.h.b16 %v2569
    %v2612 = vunpack.c.l.b16 %v2570
    %v2613 = vunpack.c.h.b16 %v2570
    %v2614 = vunpack.c.l.b16 %v2571
    %v2615 = vunpack.c.h.b16 %v2571
    %v2616 = vunpack.c.l.b16 %v2572
    %v2617 = vunpack.c.h.b16 %v2572
    %v2618 = vunpack.c.l.b16 %v2573
    %v2619 = vunpack.c.h.b16 %v2573
    %v2620 = vpack.c.b16 %v2596, %v2594
    %v2621 = vpack.c.b16 %v2597, %v2595
    %v2622 = vpack.c.b16 %v2600, %v2598
    %v2623 = vpack.c.b16 %v2601, %v2599
    %v2624 = vpack.c.b16 %v2604, %v2602
    %v2625 = vpack.c.b16 %v2605, %v2603
    %v2626 = vpack.c.b16 %v2608, %v2606
    %v2627 = vpack.c.b16 %v2609, %v2607
    %v2628 = vpack.c.b16 %v2612, %v2610
    %v2629 = vpack.c.b16 %v2613, %v2611
    %v2630 = vpack.c.b16 %v2616, %v2614
    %v2631 = vpack.c.b16 %v2617, %v2615
    %v2632 = vpack.c.b16 %v2618, %v2618
    %v2633 = vpack.c.b16 %v2619, %v2619
    %v2647 = vsel %vm2094, %v2632, 0
    %v2650 = vsel %vm2094, %v2633, 0
    %2652 = vmatpush.bf16.msra.mxu0 0
    %2653 = vmatpush.bf16.msra.mxu0 %v2647
    %2654 = vmatpush.bf16.msra.mxu0 %v2630
    %2655 = vmatpush.bf16.msra.mxu0 %v2628
    %2656 = vmatpush.bf16.msra.mxu0 %v2626
    %2657 = vmatpush.bf16.msra.mxu0 %v2624
    %2658 = vmatpush.bf16.msra.mxu0 %v2622
    %2659 = vmatpush.bf16.msra.mxu0 %v2620
    %2660 = vmatmul.bf16.gmra.mxu0 %v2092
    %v2661 = vpop.f32.mrf.mxu0
    %v2662 = vadd.f32 %v2577, %v2661
    %v2663 = vpop.f32.mrf.mxu0
    %2664 = vdwg.mxu0
    %2665 = vmatpush.bf16.msra.mxu0 0
    %2666 = vmatpush.bf16.msra.mxu0 %v2650
    %2667 = vmatpush.bf16.msra.mxu0 %v2631
    %2668 = vmatpush.bf16.msra.mxu0 %v2629
    %2669 = vmatpush.bf16.msra.mxu0 %v2627
    %2670 = vmatpush.bf16.msra.mxu0 %v2625
    %2671 = vmatpush.bf16.msra.mxu0 %v2623
    %2672 = vmatpush.bf16.msra.mxu0 %v2621
    %2673 = vmatmul.bf16.gmra.mxu0 %v2092
    %v2674 = vpop.f32.mrf.mxu0
    %v2675 = vadd.f32 %v2578, %v2674
    %v2676 = vpop.f32.mrf.mxu0
    %2677 = vdwg.mxu0
    %v2678 = vld [vmem:[#allocation13] sm:$0xff]
    %v2679 = vld [vmem:[#allocation13 + $0x8] sm:$0xff]
    %v2680 = vld [vmem:[#allocation13 + $0x10] sm:$0xff]
    %v2681 = vld [vmem:[#allocation13 + $0x18] sm:$0xff]
    %v2682 = vld [vmem:[#allocation13 + $0x20] sm:$0xff]
    %v2683 = vld [vmem:[#allocation13 + $0x28] sm:$0xff]
    %v2684 = vld [vmem:[#allocation13 + $0x30] sm:$0xff]
    %v2685 = vld [vmem:[#allocation13 + $0x38] sm:$0xff]
    %v2686 = vld [vmem:[#allocation13 + $0x40] sm:$0xff]
    %v2687 = vld [vmem:[#allocation13 + $0x48] sm:$0xff]
    %v2688 = vld [vmem:[#allocation13 + $0x50] sm:$0xff]
    %v2689 = vld [vmem:[#allocation13 + $0x58] sm:$0xff]
    %v2690 = vld [vmem:[#allocation13 + $0x60] sm:$0xff]
    %v2691 = vld [vmem:[#allocation13 + $0x68] sm:$0xff]
    %v2692 = vld [vmem:[#allocation13 + $0x70] sm:$0xff]
    %v2693 = vld [vmem:[#allocation13 + $0x78] sm:$0xff]
    %v2694 = vld [vmem:[#allocation13 + $0x80] sm:$0xff]
    %v2695 = vld [vmem:[#allocation13 + $0x88] sm:$0xff]
    %v2696 = vld [vmem:[#allocation13 + $0x90] sm:$0xff]
    %v2697 = vld [vmem:[#allocation13 + $0x98] sm:$0xff]
    %v2698 = vld [vmem:[#allocation13 + $0xa0] sm:$0xff]
    %v2699 = vld [vmem:[#allocation13 + $0xa8] sm:$0xff]
    %v2700 = vld [vmem:[#allocation13 + $0xb0] sm:$0xff]
    %v2701 = vld [vmem:[#allocation13 + $0xb8] sm:$0xff]
    %v2702 = vld [vmem:[#allocation13 + $0xc0] sm:$0xff]
    %v2703 = vld [vmem:[#allocation13 + $0xc8] sm:$0xff]
    %v2704 = vld [vmem:[#allocation13 + $0xd0] sm:$0xff]
    %v2705 = vld [vmem:[#allocation13 + $0xd8] sm:$0xff]
    %v2706 = vld [vmem:[#allocation13 + $0xe0] sm:$0xff]
    %v2707 = vld [vmem:[#allocation13 + $0xe8] sm:$0xff]
    %v2708 = vld [vmem:[#allocation13 + $0xf0] sm:$0xff]
    %v2709 = vld [vmem:[#allocation13 + $0xf8] sm:$0xff]
    %v2710 = vpack.c.bf16 %v2324, %v2324
    %v2711 = vpack.c.bf16 %v2325, %v2325
    %v2712 = vld [vmem:[#allocation16] sm:$0xff]
    %v2713 = vld [vmem:[#allocation16 + $0x8] sm:$0xff]
    %v2714 = vpack.c.bf16 %v1990, %v1990
    %v2717 = vunpack.c.l.b16 %v2712
    %v2718 = vunpack.c.h.b16 %v2712
    %v2719 = vunpack.c.l.b16 %v2713
    %v2720 = vunpack.c.h.b16 %v2713
    %v2721 = vpack.c.b16 %v2719, %v2717
    %v2722 = vpack.c.b16 %v2720, %v2718
    %v2726 = vsel %vm1033, %v2714, 0
    %2728 = vmatpush.bf16.msra.mxu0 0
    %2729 = vmatpush.bf16.msra.mxu0 0
    %2730 = vmatpush.bf16.msra.mxu0 0
    %2731 = vmatpush.bf16.msra.mxu0 0
    %2732 = vmatpush.bf16.msra.mxu0 0
    %2733 = vmatpush.bf16.msra.mxu0 0
    %2734 = vmatpush.bf16.msra.mxu0 0
    %2735 = vmatpush.bf16.msra.mxu0 %v2721
    %2736 = vmatmul.bf16.gmra.mxu0 %v2726
    %v2737 = vpop.f32.mrf.mxu0
    %v2738 = vadd.f32 0.0, %v2737
    %v2739 = vpop.f32.mrf.mxu0
    %2740 = vdwg.mxu0
    %2741 = vmatpush.bf16.msra.mxu0 0
    %2742 = vmatpush.bf16.msra.mxu0 0
    %2743 = vmatpush.bf16.msra.mxu0 0
    %2744 = vmatpush.bf16.msra.mxu0 0
    %2745 = vmatpush.bf16.msra.mxu0 0
    %2746 = vmatpush.bf16.msra.mxu0 0
    %2747 = vmatpush.bf16.msra.mxu0 0
    %2748 = vmatpush.bf16.msra.mxu0 %v2722
    %2749 = vmatmul.bf16.gmra.mxu0 %v2726
    %v2750 = vpop.f32.mrf.mxu0
    %v2751 = vadd.f32 0.0, %v2750
    %v2752 = vpop.f32.mrf.mxu0
    %2753 = vdwg.mxu0
    %v2786 = vunpack.c.l.b16 %v2678
    %v2787 = vunpack.c.h.b16 %v2678
    %v2788 = vunpack.c.l.b16 %v2679
    %v2789 = vunpack.c.h.b16 %v2679
    %v2790 = vunpack.c.l.b16 %v2680
    %v2791 = vunpack.c.h.b16 %v2680
    %v2792 = vunpack.c.l.b16 %v2681
    %v2793 = vunpack.c.h.b16 %v2681
    %v2794 = vunpack.c.l.b16 %v2682
    %v2795 = vunpack.c.h.b16 %v2682
    %v2796 = vunpack.c.l.b16 %v2683
    %v2797 = vunpack.c.h.b16 %v2683
    %v2798 = vunpack.c.l.b16 %v2684
    %v2799 = vunpack.c.h.b16 %v2684
    %v2800 = vunpack.c.l.b16 %v2685
    %v2801 = vunpack.c.h.b16 %v2685
    %v2802 = vunpack.c.l.b16 %v2686
    %v2803 = vunpack.c.h.b16 %v2686
    %v2804 = vunpack.c.l.b16 %v2687
    %v2805 = vunpack.c.h.b16 %v2687
    %v2806 = vunpack.c.l.b16 %v2688
    %v2807 = vunpack.c.h.b16 %v2688
    %v2808 = vunpack.c.l.b16 %v2689
    %v2809 = vunpack.c.h.b16 %v2689
    %v2810 = vunpack.c.l.b16 %v2690
    %v2811 = vunpack.c.h.b16 %v2690
    %v2812 = vunpack.c.l.b16 %v2691
    %v2813 = vunpack.c.h.b16 %v2691
    %v2814 = vunpack.c.l.b16 %v2692
    %v2815 = vunpack.c.h.b16 %v2692
    %v2816 = vunpack.c.l.b16 %v2693
    %v2817 = vunpack.c.h.b16 %v2693
    %v2818 = vunpack.c.l.b16 %v2694
    %v2819 = vunpack.c.h.b16 %v2694
    %v2820 = vunpack.c.l.b16 %v2695
    %v2821 = vunpack.c.h.b16 %v2695
    %v2822 = vunpack.c.l.b16 %v2696
    %v2823 = vunpack.c.h.b16 %v2696
    %v2824 = vunpack.c.l.b16 %v2697
    %v2825 = vunpack.c.h.b16 %v2697
    %v2826 = vunpack.c.l.b16 %v2698
    %v2827 = vunpack.c.h.b16 %v2698
    %v2828 = vunpack.c.l.b16 %v2699
    %v2829 = vunpack.c.h.b16 %v2699
    %v2830 = vunpack.c.l.b16 %v2700
    %v2831 = vunpack.c.h.b16 %v2700
    %v2832 = vunpack.c.l.b16 %v2701
    %v2833 = vunpack.c.h.b16 %v2701
    %v2834 = vunpack.c.l.b16 %v2702
    %v2835 = vunpack.c.h.b16 %v2702
    %v2836 = vunpack.c.l.b16 %v2703
    %v2837 = vunpack.c.h.b16 %v2703
    %v2838 = vunpack.c.l.b16 %v2704
    %v2839 = vunpack.c.h.b16 %v2704
    %v2840 = vunpack.c.l.b16 %v2705
    %v2841 = vunpack.c.h.b16 %v2705
    %v2842 = vunpack.c.l.b16 %v2706
    %v2843 = vunpack.c.h.b16 %v2706
    %v2844 = vunpack.c.l.b16 %v2707
    %v2845 = vunpack.c.h.b16 %v2707
    %v2846 = vunpack.c.l.b16 %v2708
    %v2847 = vunpack.c.h.b16 %v2708
    %v2848 = vunpack.c.l.b16 %v2709
    %v2849 = vunpack.c.h.b16 %v2709
    %v2850 = vpack.c.b16 %v2788, %v2786
    %v2851 = vpack.c.b16 %v2789, %v2787
    %v2852 = vpack.c.b16 %v2792, %v2790
    %v2853 = vpack.c.b16 %v2793, %v2791
    %v2854 = vpack.c.b16 %v2796, %v2794
    %v2855 = vpack.c.b16 %v2797, %v2795
    %v2856 = vpack.c.b16 %v2800, %v2798
    %v2857 = vpack.c.b16 %v2801, %v2799
    %v2858 = vpack.c.b16 %v2804, %v2802
    %v2859 = vpack.c.b16 %v2805, %v2803
    %v2860 = vpack.c.b16 %v2808, %v2806
    %v2861 = vpack.c.b16 %v2809, %v2807
    %v2862 = vpack.c.b16 %v2812, %v2810
    %v2863 = vpack.c.b16 %v2813, %v2811
    %v2864 = vpack.c.b16 %v2816, %v2814
    %v2865 = vpack.c.b16 %v2817, %v2815
    %v2866 = vpack.c.b16 %v2820, %v2818
    %v2867 = vpack.c.b16 %v2821, %v2819
    %v2868 = vpack.c.b16 %v2824, %v2822
    %v2869 = vpack.c.b16 %v2825, %v2823
    %v2870 = vpack.c.b16 %v2828, %v2826
    %v2871 = vpack.c.b16 %v2829, %v2827
    %v2872 = vpack.c.b16 %v2832, %v2830
    %v2873 = vpack.c.b16 %v2833, %v2831
    %v2874 = vpack.c.b16 %v2836, %v2834
    %v2875 = vpack.c.b16 %v2837, %v2835
    %v2876 = vpack.c.b16 %v2840, %v2838
    %v2877 = vpack.c.b16 %v2841, %v2839
    %v2878 = vpack.c.b16 %v2844, %v2842
    %v2879 = vpack.c.b16 %v2845, %v2843
    %v2880 = vpack.c.b16 %v2848, %v2846
    %v2881 = vpack.c.b16 %v2849, %v2847
    %2914 = vmatpush.bf16.msra.mxu0 %v2864
    %2915 = vmatpush.bf16.msra.mxu0 %v2862
    %2916 = vmatpush.bf16.msra.mxu0 %v2860
    %2917 = vmatpush.bf16.msra.mxu0 %v2858
    %2918 = vmatpush.bf16.msra.mxu0 %v2856
    %2919 = vmatpush.bf16.msra.mxu0 %v2854
    %2920 = vmatpush.bf16.msra.mxu0 %v2852
    %2921 = vmatpush.bf16.msra.mxu0 %v2850
    %2922 = vmatmul.bf16.gmra.mxu0 %v2710
    %v2923 = vpop.f32.mrf.mxu0
    %v2924 = vadd.f32 %v2738, %v2923
    %v2925 = vpop.f32.mrf.mxu0
    %2926 = vdwg.mxu0
    %2927 = vmatpush.bf16.msra.mxu0 %v2880
    %2928 = vmatpush.bf16.msra.mxu0 %v2878
    %2929 = vmatpush.bf16.msra.mxu0 %v2876
    %2930 = vmatpush.bf16.msra.mxu0 %v2874
    %2931 = vmatpush.bf16.msra.mxu0 %v2872
    %2932 = vmatpush.bf16.msra.mxu0 %v2870
    %2933 = vmatpush.bf16.msra.mxu0 %v2868
    %2934 = vmatpush.bf16.msra.mxu0 %v2866
    %2935 = vmatmul.bf16.gmra.mxu0 %v2711
    %v2936 = vpop.f32.mrf.mxu0
    %v2937 = vadd.f32 %v2924, %v2936
    %v2938 = vpop.f32.mrf.mxu0
    %2939 = vdwg.mxu0
    %2940 = vmatpush.bf16.msra.mxu0 %v2865
    %2941 = vmatpush.bf16.msra.mxu0 %v2863
    %2942 = vmatpush.bf16.msra.mxu0 %v2861
    %2943 = vmatpush.bf16.msra.mxu0 %v2859
    %2944 = vmatpush.bf16.msra.mxu0 %v2857
    %2945 = vmatpush.bf16.msra.mxu0 %v2855
    %2946 = vmatpush.bf16.msra.mxu0 %v2853
    %2947 = vmatpush.bf16.msra.mxu0 %v2851
    %2948 = vmatmul.bf16.gmra.mxu0 %v2710
    %v2949 = vpop.f32.mrf.mxu0
    %v2950 = vadd.f32 %v2751, %v2949
    %v2951 = vpop.f32.mrf.mxu0
    %2952 = vdwg.mxu0
    %2953 = vmatpush.bf16.msra.mxu0 %v2881
    %2954 = vmatpush.bf16.msra.mxu0 %v2879
    %2955 = vmatpush.bf16.msra.mxu0 %v2877
    %2956 = vmatpush.bf16.msra.mxu0 %v2875
    %2957 = vmatpush.bf16.msra.mxu0 %v2873
    %2958 = vmatpush.bf16.msra.mxu0 %v2871
    %2959 = vmatpush.bf16.msra.mxu0 %v2869
    %2960 = vmatpush.bf16.msra.mxu0 %v2867
    %2961 = vmatmul.bf16.gmra.mxu0 %v2711
    %v2962 = vpop.f32.mrf.mxu0
    %v2963 = vadd.f32 %v2950, %v2962
    %v2964 = vpop.f32.mrf.mxu0
    %2965 = vdwg.mxu0
    %v2966 = vadd.f32 %v2937, %v2426
    %v2967 = vadd.f32 %v2963, %v2439
    %s2968 = scalar_lea.vmem [#allocation13], 256
    %v2969 = vld [vmem:[%s2968] sm:$0xff]
    %v2970 = vld [vmem:[%s2968 + $0x8] sm:$0xff]
    %v2971 = vld [vmem:[%s2968 + $0x10] sm:$0xff]
    %v2972 = vld [vmem:[%s2968 + $0x18] sm:$0xff]
    %v2973 = vld [vmem:[%s2968 + $0x20] sm:$0xff]
    %v2974 = vld [vmem:[%s2968 + $0x28] sm:$0xff]
    %v2975 = vld [vmem:[%s2968 + $0x30] sm:$0xff]
    %v2976 = vld [vmem:[%s2968 + $0x38] sm:$0xff]
    %v2977 = vld [vmem:[%s2968 + $0x40] sm:$0xff]
    %v2978 = vld [vmem:[%s2968 + $0x48] sm:$0xff]
    %v2979 = vld [vmem:[%s2968 + $0x50] sm:$0xff]
    %v2980 = vld [vmem:[%s2968 + $0x58] sm:$0xff]
    %v2981 = vld [vmem:[%s2968 + $0x60] sm:$0xff]
    %v2982 = vld [vmem:[%s2968 + $0x68] sm:$0xff]
    %v2983 = vld [vmem:[%s2968 + $0x70] sm:$0xff]
    %v2984 = vld [vmem:[%s2968 + $0x78] sm:$0xff]
    %v2985 = vld [vmem:[%s2968 + $0x80] sm:$0xff]
    %v2986 = vld [vmem:[%s2968 + $0x88] sm:$0xff]
    %v2987 = vld [vmem:[%s2968 + $0x90] sm:$0xff]
    %v2988 = vld [vmem:[%s2968 + $0x98] sm:$0xff]
    %v2989 = vld [vmem:[%s2968 + $0xa0] sm:$0xff]
    %v2990 = vld [vmem:[%s2968 + $0xa8] sm:$0xff]
    %v2991 = vld [vmem:[%s2968 + $0xb0] sm:$0xff]
    %v2992 = vld [vmem:[%s2968 + $0xb8] sm:$0xff]
    %v2993 = vld [vmem:[%s2968 + $0xc0] sm:$0xff]
    %v2994 = vld [vmem:[%s2968 + $0xc8] sm:$0xff]
    %v2995 = vld [vmem:[%s2968 + $0xd0] sm:$0xff]
    %v2996 = vld [vmem:[%s2968 + $0xd8] sm:$0xff]
    %v2997 = vld [vmem:[%s2968 + $0xe0] sm:$0xff]
    %v2998 = vld [vmem:[%s2968 + $0xe8] sm:$0xff]
    %v2999 = vld [vmem:[%s2968 + $0xf0] sm:$0xff]
    %v3000 = vld [vmem:[%s2968 + $0xf8] sm:$0xff]
    %v3001 = vpack.c.bf16 %v1995, %v1995
    %v3003 = vsel %vm1033, %v3001, 0
    %3005 = vmatpush.bf16.msra.mxu0 0
    %3006 = vmatpush.bf16.msra.mxu0 0
    %3007 = vmatpush.bf16.msra.mxu0 0
    %3008 = vmatpush.bf16.msra.mxu0 0
    %3009 = vmatpush.bf16.msra.mxu0 0
    %3010 = vmatpush.bf16.msra.mxu0 0
    %3011 = vmatpush.bf16.msra.mxu0 0
    %3012 = vmatpush.bf16.msra.mxu0 %v2721
    %3013 = vmatmul.bf16.gmra.mxu0 %v3003
    %v3014 = vpop.f32.mrf.mxu0
    %v3015 = vadd.f32 0.0, %v3014
    %v3016 = vpop.f32.mrf.mxu0
    %3017 = vdwg.mxu0
    %3018 = vmatpush.bf16.msra.mxu0 0
    %3019 = vmatpush.bf16.msra.mxu0 0
    %3020 = vmatpush.bf16.msra.mxu0 0
    %3021 = vmatpush.bf16.msra.mxu0 0
    %3022 = vmatpush.bf16.msra.mxu0 0
    %3023 = vmatpush.bf16.msra.mxu0 0
    %3024 = vmatpush.bf16.msra.mxu0 0
    %3025 = vmatpush.bf16.msra.mxu0 %v2722
    %3026 = vmatmul.bf16.gmra.mxu0 %v3003
    %v3027 = vpop.f32.mrf.mxu0
    %v3028 = vadd.f32 0.0, %v3027
    %v3029 = vpop.f32.mrf.mxu0
    %3030 = vdwg.mxu0
    %v3063 = vunpack.c.l.b16 %v2969
    %v3064 = vunpack.c.h.b16 %v2969
    %v3065 = vunpack.c.l.b16 %v2970
    %v3066 = vunpack.c.h.b16 %v2970
    %v3067 = vunpack.c.l.b16 %v2971
    %v3068 = vunpack.c.h.b16 %v2971
    %v3069 = vunpack.c.l.b16 %v2972
    %v3070 = vunpack.c.h.b16 %v2972
    %v3071 = vunpack.c.l.b16 %v2973
    %v3072 = vunpack.c.h.b16 %v2973
    %v3073 = vunpack.c.l.b16 %v2974
    %v3074 = vunpack.c.h.b16 %v2974
    %v3075 = vunpack.c.l.b16 %v2975
    %v3076 = vunpack.c.h.b16 %v2975
    %v3077 = vunpack.c.l.b16 %v2976
    %v3078 = vunpack.c.h.b16 %v2976
    %v3079 = vunpack.c.l.b16 %v2977
    %v3080 = vunpack.c.h.b16 %v2977
    %v3081 = vunpack.c.l.b16 %v2978
    %v3082 = vunpack.c.h.b16 %v2978
    %v3083 = vunpack.c.l.b16 %v2979
    %v3084 = vunpack.c.h.b16 %v2979
    %v3085 = vunpack.c.l.b16 %v2980
    %v3086 = vunpack.c.h.b16 %v2980
    %v3087 = vunpack.c.l.b16 %v2981
    %v3088 = vunpack.c.h.b16 %v2981
    %v3089 = vunpack.c.l.b16 %v2982
    %v3090 = vunpack.c.h.b16 %v2982
    %v3091 = vunpack.c.l.b16 %v2983
    %v3092 = vunpack.c.h.b16 %v2983
    %v3093 = vunpack.c.l.b16 %v2984
    %v3094 = vunpack.c.h.b16 %v2984
    %v3095 = vunpack.c.l.b16 %v2985
    %v3096 = vunpack.c.h.b16 %v2985
    %v3097 = vunpack.c.l.b16 %v2986
    %v3098 = vunpack.c.h.b16 %v2986
    %v3099 = vunpack.c.l.b16 %v2987
    %v3100 = vunpack.c.h.b16 %v2987
    %v3101 = vunpack.c.l.b16 %v2988
    %v3102 = vunpack.c.h.b16 %v2988
    %v3103 = vunpack.c.l.b16 %v2989
    %v3104 = vunpack.c.h.b16 %v2989
    %v3105 = vunpack.c.l.b16 %v2990
    %v3106 = vunpack.c.h.b16 %v2990
    %v3107 = vunpack.c.l.b16 %v2991
    %v3108 = vunpack.c.h.b16 %v2991
    %v3109 = vunpack.c.l.b16 %v2992
    %v3110 = vunpack.c.h.b16 %v2992
    %v3111 = vunpack.c.l.b16 %v2993
    %v3112 = vunpack.c.h.b16 %v2993
    %v3113 = vunpack.c.l.b16 %v2994
    %v3114 = vunpack.c.h.b16 %v2994
    %v3115 = vunpack.c.l.b16 %v2995
    %v3116 = vunpack.c.h.b16 %v2995
    %v3117 = vunpack.c.l.b16 %v2996
    %v3118 = vunpack.c.h.b16 %v2996
    %v3119 = vunpack.c.l.b16 %v2997
    %v3120 = vunpack.c.h.b16 %v2997
    %v3121 = vunpack.c.l.b16 %v2998
    %v3122 = vunpack.c.h.b16 %v2998
    %v3123 = vunpack.c.l.b16 %v2999
    %v3124 = vunpack.c.h.b16 %v2999
    %v3125 = vunpack.c.l.b16 %v3000
    %v3126 = vunpack.c.h.b16 %v3000
    %v3127 = vpack.c.b16 %v3065, %v3063
    %v3128 = vpack.c.b16 %v3066, %v3064
    %v3129 = vpack.c.b16 %v3069, %v3067
    %v3130 = vpack.c.b16 %v3070, %v3068
    %v3131 = vpack.c.b16 %v3073, %v3071
    %v3132 = vpack.c.b16 %v3074, %v3072
    %v3133 = vpack.c.b16 %v3077, %v3075
    %v3134 = vpack.c.b16 %v3078, %v3076
    %v3135 = vpack.c.b16 %v3081, %v3079
    %v3136 = vpack.c.b16 %v3082, %v3080
    %v3137 = vpack.c.b16 %v3085, %v3083
    %v3138 = vpack.c.b16 %v3086, %v3084
    %v3139 = vpack.c.b16 %v3089, %v3087
    %v3140 = vpack.c.b16 %v3090, %v3088
    %v3141 = vpack.c.b16 %v3093, %v3091
    %v3142 = vpack.c.b16 %v3094, %v3092
    %v3143 = vpack.c.b16 %v3097, %v3095
    %v3144 = vpack.c.b16 %v3098, %v3096
    %v3145 = vpack.c.b16 %v3101, %v3099
    %v3146 = vpack.c.b16 %v3102, %v3100
    %v3147 = vpack.c.b16 %v3105, %v3103
    %v3148 = vpack.c.b16 %v3106, %v3104
    %v3149 = vpack.c.b16 %v3109, %v3107
    %v3150 = vpack.c.b16 %v3110, %v3108
    %v3151 = vpack.c.b16 %v3113, %v3111
    %v3152 = vpack.c.b16 %v3114, %v3112
    %v3153 = vpack.c.b16 %v3117, %v3115
    %v3154 = vpack.c.b16 %v3118, %v3116
    %v3155 = vpack.c.b16 %v3121, %v3119
    %v3156 = vpack.c.b16 %v3122, %v3120
    %v3157 = vpack.c.b16 %v3125, %v3123
    %v3158 = vpack.c.b16 %v3126, %v3124
    %3191 = vmatpush.bf16.msra.mxu0 %v3141
    %3192 = vmatpush.bf16.msra.mxu0 %v3139
    %3193 = vmatpush.bf16.msra.mxu0 %v3137
    %3194 = vmatpush.bf16.msra.mxu0 %v3135
    %3195 = vmatpush.bf16.msra.mxu0 %v3133
    %3196 = vmatpush.bf16.msra.mxu0 %v3131
    %3197 = vmatpush.bf16.msra.mxu0 %v3129
    %3198 = vmatpush.bf16.msra.mxu0 %v3127
    %3199 = vmatmul.bf16.gmra.mxu0 %v2710
    %v3200 = vpop.f32.mrf.mxu0
    %v3201 = vadd.f32 %v3015, %v3200
    %v3202 = vpop.f32.mrf.mxu0
    %3203 = vdwg.mxu0
    %3204 = vmatpush.bf16.msra.mxu0 %v3157
    %3205 = vmatpush.bf16.msra.mxu0 %v3155
    %3206 = vmatpush.bf16.msra.mxu0 %v3153
    %3207 = vmatpush.bf16.msra.mxu0 %v3151
    %3208 = vmatpush.bf16.msra.mxu0 %v3149
    %3209 = vmatpush.bf16.msra.mxu0 %v3147
    %3210 = vmatpush.bf16.msra.mxu0 %v3145
    %3211 = vmatpush.bf16.msra.mxu0 %v3143
    %3212 = vmatmul.bf16.gmra.mxu0 %v2711
    %v3213 = vpop.f32.mrf.mxu0
    %v3214 = vadd.f32 %v3201, %v3213
    %v3215 = vpop.f32.mrf.mxu0
    %3216 = vdwg.mxu0
    %3217 = vmatpush.bf16.msra.mxu0 %v3142
    %3218 = vmatpush.bf16.msra.mxu0 %v3140
    %3219 = vmatpush.bf16.msra.mxu0 %v3138
    %3220 = vmatpush.bf16.msra.mxu0 %v3136
    %3221 = vmatpush.bf16.msra.mxu0 %v3134
    %3222 = vmatpush.bf16.msra.mxu0 %v3132
    %3223 = vmatpush.bf16.msra.mxu0 %v3130
    %3224 = vmatpush.bf16.msra.mxu0 %v3128
    %3225 = vmatmul.bf16.gmra.mxu0 %v2710
    %v3226 = vpop.f32.mrf.mxu0
    %v3227 = vadd.f32 %v3028, %v3226
    %v3228 = vpop.f32.mrf.mxu0
    %3229 = vdwg.mxu0
    %3230 = vmatpush.bf16.msra.mxu0 %v3158
    %3231 = vmatpush.bf16.msra.mxu0 %v3156
    %3232 = vmatpush.bf16.msra.mxu0 %v3154
    %3233 = vmatpush.bf16.msra.mxu0 %v3152
    %3234 = vmatpush.bf16.msra.mxu0 %v3150
    %3235 = vmatpush.bf16.msra.mxu0 %v3148
    %3236 = vmatpush.bf16.msra.mxu0 %v3146
    %3237 = vmatpush.bf16.msra.mxu0 %v3144
    %3238 = vmatmul.bf16.gmra.mxu0 %v2711
    %v3239 = vpop.f32.mrf.mxu0
    %v3240 = vadd.f32 %v3227, %v3239
    %v3241 = vpop.f32.mrf.mxu0
    %3242 = vdwg.mxu0
    %v3243 = vadd.f32 %v3214, %v2426
    %v3244 = vadd.f32 %v3240, %v2439
    %v3245 = vld [vmem:[%s21] sm:$0x1]
    %v3246 = vld [vmem:[#allocation19] sm:$0x1]
    %v3247 = vsel %vm2235, %v2966, 0.0
    %v3248 = vrot.slane %v3247, 4
    %v3249 = vadd.f32 %v3247, %v3248
    %v3250 = vrot.slane %v3249, 2
    %v3251 = vadd.f32 %v3249, %v3250
    %v3252 = vrot.slane %v3251, 1
    %v3253 = vadd.f32 %v3251, %v3252
    %v3254 = vadd.f32 %v3253, 0.0
    %v3255 = vsel %vm2235, %v2967, 0.0
    %v3256 = vrot.slane %v3255, 4
    %v3257 = vadd.f32 %v3255, %v3256
    %v3258 = vrot.slane %v3257, 2
    %v3259 = vadd.f32 %v3257, %v3258
    %v3260 = vrot.slane %v3259, 1
    %v3261 = vadd.f32 %v3259, %v3260
    %v3262 = vadd.f32 %v3254, %v3261
    %v3263 = vsel %vm2235, %v3243, 0.0
    %v3264 = vrot.slane %v3263, 4
    %v3265 = vadd.f32 %v3263, %v3264
    %v3266 = vrot.slane %v3265, 2
    %v3267 = vadd.f32 %v3265, %v3266
    %v3268 = vrot.slane %v3267, 1
    %v3269 = vadd.f32 %v3267, %v3268
    %v3270 = vadd.f32 %v3262, %v3269
    %v3271 = vsel %vm2235, %v3244, 0.0
    %v3272 = vrot.slane %v3271, 4
    %v3273 = vadd.f32 %v3271, %v3272
    %v3274 = vrot.slane %v3273, 2
    %v3275 = vadd.f32 %v3273, %v3274
    %v3276 = vrot.slane %v3275, 1
    %v3277 = vadd.f32 %v3275, %v3276
    %v3278 = vadd.f32 %v3270, %v3277
    %v3279 = vmul.f32 %v3278, %v1741
    %v3280 = vsub.f32 %v2966, %v3279
    %v3281 = vmul.f32 %v3280, %v3280
    %v3282 = vsel %vm2235, %v3281, 0.0
    %v3283 = vrot.slane %v3282, 4
    %v3284 = vadd.f32 %v3282, %v3283
    %v3285 = vrot.slane %v3284, 2
    %v3286 = vadd.f32 %v3284, %v3285
    %v3287 = vrot.slane %v3286, 1
    %v3288 = vadd.f32 %v3286, %v3287
    %v3289 = vadd.f32 %v3288, 0.0
    %v3290 = vsub.f32 %v2967, %v3279
    %v3291 = vmul.f32 %v3290, %v3290
    %v3292 = vsel %vm2235, %v3291, 0.0
    %v3293 = vrot.slane %v3292, 4
    %v3294 = vadd.f32 %v3292, %v3293
    %v3295 = vrot.slane %v3294, 2
    %v3296 = vadd.f32 %v3294, %v3295
    %v3297 = vrot.slane %v3296, 1
    %v3298 = vadd.f32 %v3296, %v3297
    %v3299 = vadd.f32 %v3289, %v3298
    %v3300 = vsub.f32 %v3243, %v3279
    %v3301 = vmul.f32 %v3300, %v3300
    %v3302 = vsel %vm2235, %v3301, 0.0
    %v3303 = vrot.slane %v3302, 4
    %v3304 = vadd.f32 %v3302, %v3303
    %v3305 = vrot.slane %v3304, 2
    %v3306 = vadd.f32 %v3304, %v3305
    %v3307 = vrot.slane %v3306, 1
    %v3308 = vadd.f32 %v3306, %v3307
    %v3309 = vadd.f32 %v3299, %v3308
    %v3310 = vsub.f32 %v3244, %v3279
    %v3311 = vmul.f32 %v3310, %v3310
    %v3312 = vsel %vm2235, %v3311, 0.0
    %v3313 = vrot.slane %v3312, 4
    %v3314 = vadd.f32 %v3312, %v3313
    %v3315 = vrot.slane %v3314, 2
    %v3316 = vadd.f32 %v3314, %v3315
    %v3317 = vrot.slane %v3316, 1
    %v3318 = vadd.f32 %v3316, %v3317
    %v3319 = vadd.f32 %v3309, %v3318
    %v3320 = vmul.f32 %v3319, %v1741
    %v3321 = vadd.f32 %v3320, 1e-05
    %v3322 = vrsqrt.pop %v3321
    %v3323 = vmul.f32 %v3322, %v3321
    %v3324 = vmul.f32 %v3323, %v3322
    %v3325 = vmul.f32 0.5, %v3324
    %v3326 = vsub.f32 1.5, %v3325
    %v3327 = vmul.f32 %v3322, %v3326
    %vm3328 = vweird.f32 %v3321
    %vm3329 = vweird.f32 %v3322
    %vm3330 = vmor %vm3328, %vm3329
    %v3331 = vsel %vm3330, %v3322, %v3327
    %v3332 = vmul.f32 %v3245, %v3331
    %v3333 = vmul.f32 %v3279, %v3332
    %v3334 = vsub.f32 %v3246, %v3333
    %v3336 = vperm.slane %v3332, 0
    %v3338 = vmul.f32 %v2966, %v3336
    %v3340 = vperm.slane %v3334, 0
    %v3342 = vadd.f32 %v3338, %v3340
    %v3343 = vmax.f32 %v3342, 0.0
    %v3344 = vmul.f32 %v2967, %v3336
    %v3345 = vadd.f32 %v3344, %v3340
    %v3346 = vmax.f32 %v3345, 0.0
    %v3347 = vmul.f32 %v3243, %v3336
    %v3348 = vadd.f32 %v3347, %v3340
    %v3349 = vmax.f32 %v3348, 0.0
    %v3350 = vmul.f32 %v3244, %v3336
    %v3351 = vadd.f32 %v3350, %v3340
    %v3352 = vmax.f32 %v3351, 0.0
    %v3353 = vld [vmem:[#allocation15] sm:$0xff]
    %v3354 = vld [vmem:[#allocation15 + $0x8] sm:$0xff]
    %v3355 = vld [vmem:[#allocation15 + $0x10] sm:$0xff]
    %v3356 = vld [vmem:[#allocation15 + $0x18] sm:$0xff]
    %v3357 = vld [vmem:[#allocation15 + $0x20] sm:$0xff]
    %v3358 = vld [vmem:[#allocation15 + $0x28] sm:$0xff]
    %v3359 = vld [vmem:[#allocation15 + $0x30] sm:$0xff]
    %v3360 = vld [vmem:[#allocation15 + $0x38] sm:$0xff]
    %v3361 = vld [vmem:[#allocation15 + $0x40] sm:$0xff]
    %v3362 = vld [vmem:[#allocation15 + $0x48] sm:$0xff]
    %v3363 = vld [vmem:[#allocation15 + $0x50] sm:$0xff]
    %v3364 = vld [vmem:[#allocation15 + $0x58] sm:$0xff]
    %v3365 = vld [vmem:[#allocation15 + $0x60] sm:$0xff]
    %v3366 = vld [vmem:[#allocation15 + $0x68] sm:$0xff]
    %v3367 = vld [vmem:[#allocation15 + $0x70] sm:$0xff]
    %v3368 = vld [vmem:[#allocation15 + $0x78] sm:$0xff]
    %s3369 = scalar_lea.vmem [#allocation16], 16
    %v3370 = vld [vmem:[%s3369] sm:$0xff]
    %v3371 = vld [vmem:[%s3369 + $0x8] sm:$0xff]
    %v3372 = vpack.c.bf16 %v3343, %v3343
    %v3375 = vunpack.c.l.b16 %v3370
    %v3376 = vunpack.c.h.b16 %v3370
    %v3377 = vunpack.c.l.b16 %v3371
    %v3378 = vunpack.c.h.b16 %v3371
    %v3379 = vpack.c.b16 %v3377, %v3375
    %v3380 = vpack.c.b16 %v3378, %v3376
    %3383 = vmatpush.bf16.msra.mxu0 0
    %3384 = vmatpush.bf16.msra.mxu0 0
    %3385 = vmatpush.bf16.msra.mxu0 0
    %3386 = vmatpush.bf16.msra.mxu0 0
    %3387 = vmatpush.bf16.msra.mxu0 0
    %3388 = vmatpush.bf16.msra.mxu0 0
    %3389 = vmatpush.bf16.msra.mxu0 0
    %3390 = vmatpush.bf16.msra.mxu0 %v3379
    %3391 = vmatmul.bf16.gmra.mxu0 %v1863
    %v3392 = vpop.f32.mrf.mxu0
    %v3393 = vadd.f32 0.0, %v3392
    %v3394 = vpop.f32.mrf.mxu0
    %3395 = vdwg.mxu0
    %3396 = vmatpush.bf16.msra.mxu0 0
    %3397 = vmatpush.bf16.msra.mxu0 0
    %3398 = vmatpush.bf16.msra.mxu0 0
    %3399 = vmatpush.bf16.msra.mxu0 0
    %3400 = vmatpush.bf16.msra.mxu0 0
    %3401 = vmatpush.bf16.msra.mxu0 0
    %3402 = vmatpush.bf16.msra.mxu0 0
    %3403 = vmatpush.bf16.msra.mxu0 %v3380
    %3404 = vmatmul.bf16.gmra.mxu0 %v1863
    %v3405 = vpop.f32.mrf.mxu0
    %v3406 = vadd.f32 0.0, %v3405
    %v3407 = vpop.f32.mrf.mxu0
    %3408 = vdwg.mxu0
    %v3425 = vunpack.c.l.b16 %v3353
    %v3426 = vunpack.c.h.b16 %v3353
    %v3427 = vunpack.c.l.b16 %v3354
    %v3428 = vunpack.c.h.b16 %v3354
    %v3429 = vunpack.c.l.b16 %v3355
    %v3430 = vunpack.c.h.b16 %v3355
    %v3431 = vunpack.c.l.b16 %v3356
    %v3432 = vunpack.c.h.b16 %v3356
    %v3433 = vunpack.c.l.b16 %v3357
    %v3434 = vunpack.c.h.b16 %v3357
    %v3435 = vunpack.c.l.b16 %v3358
    %v3436 = vunpack.c.h.b16 %v3358
    %v3437 = vunpack.c.l.b16 %v3359
    %v3438 = vunpack.c.h.b16 %v3359
    %v3439 = vunpack.c.l.b16 %v3360
    %v3440 = vunpack.c.h.b16 %v3360
    %v3441 = vunpack.c.l.b16 %v3361
    %v3442 = vunpack.c.h.b16 %v3361
    %v3443 = vunpack.c.l.b16 %v3362
    %v3444 = vunpack.c.h.b16 %v3362
    %v3445 = vunpack.c.l.b16 %v3363
    %v3446 = vunpack.c.h.b16 %v3363
    %v3447 = vunpack.c.l.b16 %v3364
    %v3448 = vunpack.c.h.b16 %v3364
    %v3449 = vunpack.c.l.b16 %v3365
    %v3450 = vunpack.c.h.b16 %v3365
    %v3451 = vunpack.c.l.b16 %v3366
    %v3452 = vunpack.c.h.b16 %v3366
    %v3453 = vunpack.c.l.b16 %v3367
    %v3454 = vunpack.c.h.b16 %v3367
    %v3455 = vunpack.c.l.b16 %v3368
    %v3456 = vunpack.c.h.b16 %v3368
    %v3457 = vpack.c.b16 %v3427, %v3425
    %v3458 = vpack.c.b16 %v3428, %v3426
    %v3459 = vpack.c.b16 %v3431, %v3429
    %v3460 = vpack.c.b16 %v3432, %v3430
    %v3461 = vpack.c.b16 %v3435, %v3433
    %v3462 = vpack.c.b16 %v3436, %v3434
    %v3463 = vpack.c.b16 %v3439, %v3437
    %v3464 = vpack.c.b16 %v3440, %v3438
    %v3465 = vpack.c.b16 %v3443, %v3441
    %v3466 = vpack.c.b16 %v3444, %v3442
    %v3467 = vpack.c.b16 %v3447, %v3445
    %v3468 = vpack.c.b16 %v3448, %v3446
    %v3469 = vpack.c.b16 %v3451, %v3449
    %v3470 = vpack.c.b16 %v3452, %v3450
    %v3471 = vpack.c.b16 %v3455, %v3453
    %v3472 = vpack.c.b16 %v3456, %v3454
    %3489 = vmatpush.bf16.msra.mxu0 %v3471
    %3490 = vmatpush.bf16.msra.mxu0 %v3469
    %3491 = vmatpush.bf16.msra.mxu0 %v3467
    %3492 = vmatpush.bf16.msra.mxu0 %v3465
    %3493 = vmatpush.bf16.msra.mxu0 %v3463
    %3494 = vmatpush.bf16.msra.mxu0 %v3461
    %3495 = vmatpush.bf16.msra.mxu0 %v3459
    %3496 = vmatpush.bf16.msra.mxu0 %v3457
    %3497 = vmatmul.bf16.gmra.mxu0 %v3372
    %v3498 = vpop.f32.mrf.mxu0
    %v3499 = vadd.f32 %v3393, %v3498
    %v3500 = vpop.f32.mrf.mxu0
    %3501 = vdwg.mxu0
    %3502 = vmatpush.bf16.msra.mxu0 %v3472
    %3503 = vmatpush.bf16.msra.mxu0 %v3470
    %3504 = vmatpush.bf16.msra.mxu0 %v3468
    %3505 = vmatpush.bf16.msra.mxu0 %v3466
    %3506 = vmatpush.bf16.msra.mxu0 %v3464
    %3507 = vmatpush.bf16.msra.mxu0 %v3462
    %3508 = vmatpush.bf16.msra.mxu0 %v3460
    %3509 = vmatpush.bf16.msra.mxu0 %v3458
    %3510 = vmatmul.bf16.gmra.mxu0 %v3372
    %v3511 = vpop.f32.mrf.mxu0
    %v3512 = vadd.f32 %v3406, %v3511
    %v3513 = vpop.f32.mrf.mxu0
    %3514 = vdwg.mxu0
    %v3515 = vadd.f32 %v3499, %v2544
    %v3516 = vadd.f32 %v3512, %v2557
    %v3517 = vpack.c.bf16 %v3346, %v3346
    %3518 = vmatpush.bf16.msra.mxu0 0
    %3519 = vmatpush.bf16.msra.mxu0 0
    %3520 = vmatpush.bf16.msra.mxu0 0
    %3521 = vmatpush.bf16.msra.mxu0 0
    %3522 = vmatpush.bf16.msra.mxu0 0
    %3523 = vmatpush.bf16.msra.mxu0 0
    %3524 = vmatpush.bf16.msra.mxu0 0
    %3525 = vmatpush.bf16.msra.mxu0 %v3379
    %3526 = vmatmul.bf16.gmra.mxu0 %v1841
    %v3527 = vpop.f32.mrf.mxu0
    %v3528 = vadd.f32 0.0, %v3527
    %v3529 = vpop.f32.mrf.mxu0
    %3530 = vdwg.mxu0
    %3531 = vmatpush.bf16.msra.mxu0 0
    %3532 = vmatpush.bf16.msra.mxu0 0
    %3533 = vmatpush.bf16.msra.mxu0 0
    %3534 = vmatpush.bf16.msra.mxu0 0
    %3535 = vmatpush.bf16.msra.mxu0 0
    %3536 = vmatpush.bf16.msra.mxu0 0
    %3537 = vmatpush.bf16.msra.mxu0 0
    %3538 = vmatpush.bf16.msra.mxu0 %v3380
    %3539 = vmatmul.bf16.gmra.mxu0 %v1841
    %v3540 = vpop.f32.mrf.mxu0
    %v3541 = vadd.f32 0.0, %v3540
    %v3542 = vpop.f32.mrf.mxu0
    %3543 = vdwg.mxu0
    %3544 = vmatpush.bf16.msra.mxu0 %v3471
    %3545 = vmatpush.bf16.msra.mxu0 %v3469
    %3546 = vmatpush.bf16.msra.mxu0 %v3467
    %3547 = vmatpush.bf16.msra.mxu0 %v3465
    %3548 = vmatpush.bf16.msra.mxu0 %v3463
    %3549 = vmatpush.bf16.msra.mxu0 %v3461
    %3550 = vmatpush.bf16.msra.mxu0 %v3459
    %3551 = vmatpush.bf16.msra.mxu0 %v3457
    %3552 = vmatmul.bf16.gmra.mxu0 %v3517
    %v3553 = vpop.f32.mrf.mxu0
    %v3554 = vadd.f32 %v3528, %v3553
    %v3555 = vpop.f32.mrf.mxu0
    %3556 = vdwg.mxu0
    %3557 = vmatpush.bf16.msra.mxu0 %v3472
    %3558 = vmatpush.bf16.msra.mxu0 %v3470
    %3559 = vmatpush.bf16.msra.mxu0 %v3468
    %3560 = vmatpush.bf16.msra.mxu0 %v3466
    %3561 = vmatpush.bf16.msra.mxu0 %v3464
    %3562 = vmatpush.bf16.msra.mxu0 %v3462
    %3563 = vmatpush.bf16.msra.mxu0 %v3460
    %3564 = vmatpush.bf16.msra.mxu0 %v3458
    %3565 = vmatmul.bf16.gmra.mxu0 %v3517
    %v3566 = vpop.f32.mrf.mxu0
    %v3567 = vadd.f32 %v3541, %v3566
    %v3568 = vpop.f32.mrf.mxu0
    %3569 = vdwg.mxu0
    %v3570 = vadd.f32 %v3554, %v2544
    %v3571 = vadd.f32 %v3567, %v2557
    %v3572 = vpack.c.bf16 %v3349, %v3349
    %3573 = vmatpush.bf16.msra.mxu0 0
    %3574 = vmatpush.bf16.msra.mxu0 0
    %3575 = vmatpush.bf16.msra.mxu0 0
    %3576 = vmatpush.bf16.msra.mxu0 0
    %3577 = vmatpush.bf16.msra.mxu0 0
    %3578 = vmatpush.bf16.msra.mxu0 0
    %3579 = vmatpush.bf16.msra.mxu0 0
    %3580 = vmatpush.bf16.msra.mxu0 %v3379
    %3581 = vmatmul.bf16.gmra.mxu0 %v1901
    %v3582 = vpop.f32.mrf.mxu0
    %v3583 = vadd.f32 0.0, %v3582
    %v3584 = vpop.f32.mrf.mxu0
    %3585 = vdwg.mxu0
    %3586 = vmatpush.bf16.msra.mxu0 0
    %3587 = vmatpush.bf16.msra.mxu0 0
    %3588 = vmatpush.bf16.msra.mxu0 0
    %3589 = vmatpush.bf16.msra.mxu0 0
    %3590 = vmatpush.bf16.msra.mxu0 0
    %3591 = vmatpush.bf16.msra.mxu0 0
    %3592 = vmatpush.bf16.msra.mxu0 0
    %3593 = vmatpush.bf16.msra.mxu0 %v3380
    %3594 = vmatmul.bf16.gmra.mxu0 %v1901
    %v3595 = vpop.f32.mrf.mxu0
    %v3596 = vadd.f32 0.0, %v3595
    %v3597 = vpop.f32.mrf.mxu0
    %3598 = vdwg.mxu0
    %3599 = vmatpush.bf16.msra.mxu0 %v3471
    %3600 = vmatpush.bf16.msra.mxu0 %v3469
    %3601 = vmatpush.bf16.msra.mxu0 %v3467
    %3602 = vmatpush.bf16.msra.mxu0 %v3465
    %3603 = vmatpush.bf16.msra.mxu0 %v3463
    %3604 = vmatpush.bf16.msra.mxu0 %v3461
    %3605 = vmatpush.bf16.msra.mxu0 %v3459
    %3606 = vmatpush.bf16.msra.mxu0 %v3457
    %3607 = vmatmul.bf16.gmra.mxu0 %v3572
    %v3608 = vpop.f32.mrf.mxu0
    %v3609 = vadd.f32 %v3583, %v3608
    %v3610 = vpop.f32.mrf.mxu0
    %3611 = vdwg.mxu0
    %3612 = vmatpush.bf16.msra.mxu0 %v3472
    %3613 = vmatpush.bf16.msra.mxu0 %v3470
    %3614 = vmatpush.bf16.msra.mxu0 %v3468
    %3615 = vmatpush.bf16.msra.mxu0 %v3466
    %3616 = vmatpush.bf16.msra.mxu0 %v3464
    %3617 = vmatpush.bf16.msra.mxu0 %v3462
    %3618 = vmatpush.bf16.msra.mxu0 %v3460
    %3619 = vmatpush.bf16.msra.mxu0 %v3458
    %3620 = vmatmul.bf16.gmra.mxu0 %v3572
    %v3621 = vpop.f32.mrf.mxu0
    %v3622 = vadd.f32 %v3596, %v3621
    %v3623 = vpop.f32.mrf.mxu0
    %3624 = vdwg.mxu0
    %v3625 = vadd.f32 %v3609, %v2544
    %v3626 = vadd.f32 %v3622, %v2557
    %v3627 = vpack.c.bf16 %v3352, %v3352
    %3628 = vmatpush.bf16.msra.mxu0 0
    %3629 = vmatpush.bf16.msra.mxu0 0
    %3630 = vmatpush.bf16.msra.mxu0 0
    %3631 = vmatpush.bf16.msra.mxu0 0
    %3632 = vmatpush.bf16.msra.mxu0 0
    %3633 = vmatpush.bf16.msra.mxu0 0
    %3634 = vmatpush.bf16.msra.mxu0 0
    %3635 = vmatpush.bf16.msra.mxu0 %v3379
    %3636 = vmatmul.bf16.gmra.mxu0 %v1885
    %v3637 = vpop.f32.mrf.mxu0
    %v3638 = vadd.f32 0.0, %v3637
    %v3639 = vpop.f32.mrf.mxu0
    %3640 = vdwg.mxu0
    %3641 = vmatpush.bf16.msra.mxu0 0
    %3642 = vmatpush.bf16.msra.mxu0 0
    %3643 = vmatpush.bf16.msra.mxu0 0
    %3644 = vmatpush.bf16.msra.mxu0 0
    %3645 = vmatpush.bf16.msra.mxu0 0
    %3646 = vmatpush.bf16.msra.mxu0 0
    %3647 = vmatpush.bf16.msra.mxu0 0
    %3648 = vmatpush.bf16.msra.mxu0 %v3380
    %3649 = vmatmul.bf16.gmra.mxu0 %v1885
    %v3650 = vpop.f32.mrf.mxu0
    %v3651 = vadd.f32 0.0, %v3650
    %v3652 = vpop.f32.mrf.mxu0
    %3653 = vdwg.mxu0
    %3654 = vmatpush.bf16.msra.mxu0 %v3471
    %3655 = vmatpush.bf16.msra.mxu0 %v3469
    %3656 = vmatpush.bf16.msra.mxu0 %v3467
    %3657 = vmatpush.bf16.msra.mxu0 %v3465
    %3658 = vmatpush.bf16.msra.mxu0 %v3463
    %3659 = vmatpush.bf16.msra.mxu0 %v3461
    %3660 = vmatpush.bf16.msra.mxu0 %v3459
    %3661 = vmatpush.bf16.msra.mxu0 %v3457
    %3662 = vmatmul.bf16.gmra.mxu0 %v3627
    %v3663 = vpop.f32.mrf.mxu0
    %v3664 = vadd.f32 %v3638, %v3663
    %v3665 = vpop.f32.mrf.mxu0
    %3666 = vdwg.mxu0
    %3667 = vmatpush.bf16.msra.mxu0 %v3472
    %3668 = vmatpush.bf16.msra.mxu0 %v3470
    %3669 = vmatpush.bf16.msra.mxu0 %v3468
    %3670 = vmatpush.bf16.msra.mxu0 %v3466
    %3671 = vmatpush.bf16.msra.mxu0 %v3464
    %3672 = vmatpush.bf16.msra.mxu0 %v3462
    %3673 = vmatpush.bf16.msra.mxu0 %v3460
    %3674 = vmatpush.bf16.msra.mxu0 %v3458
    %3675 = vmatmul.bf16.gmra.mxu0 %v3627
    %v3676 = vpop.f32.mrf.mxu0
    %v3677 = vadd.f32 %v3651, %v3676
    %v3678 = vpop.f32.mrf.mxu0
    %3679 = vdwg.mxu0
    %v3680 = vadd.f32 %v3664, %v2544
    %v3681 = vadd.f32 %v3677, %v2557
    %s3682 = scalar_lea.vmem %s21, 1
    %v3683 = vld [vmem:[%s3682] sm:$0x1]
    %s3684 = scalar_lea.vmem [#allocation19], 1
    %v3685 = vld [vmem:[%s3684] sm:$0x1]
    %v3686 = vsel %vm2235, %v3515, 0.0
    %v3687 = vrot.slane %v3686, 4
    %v3688 = vadd.f32 %v3686, %v3687
    %v3689 = vrot.slane %v3688, 2
    %v3690 = vadd.f32 %v3688, %v3689
    %v3691 = vrot.slane %v3690, 1
    %v3692 = vadd.f32 %v3690, %v3691
    %v3693 = vadd.f32 %v3692, 0.0
    %v3694 = vsel %vm2235, %v3516, 0.0
    %v3695 = vrot.slane %v3694, 4
    %v3696 = vadd.f32 %v3694, %v3695
    %v3697 = vrot.slane %v3696, 2
    %v3698 = vadd.f32 %v3696, %v3697
    %v3699 = vrot.slane %v3698, 1
    %v3700 = vadd.f32 %v3698, %v3699
    %v3701 = vadd.f32 %v3693, %v3700
    %v3702 = vsel %vm2235, %v3570, 0.0
    %v3703 = vrot.slane %v3702, 4
    %v3704 = vadd.f32 %v3702, %v3703
    %v3705 = vrot.slane %v3704, 2
    %v3706 = vadd.f32 %v3704, %v3705
    %v3707 = vrot.slane %v3706, 1
    %v3708 = vadd.f32 %v3706, %v3707
    %v3709 = vadd.f32 %v3701, %v3708
    %v3710 = vsel %vm2235, %v3571, 0.0
    %v3711 = vrot.slane %v3710, 4
    %v3712 = vadd.f32 %v3710, %v3711
    %v3713 = vrot.slane %v3712, 2
    %v3714 = vadd.f32 %v3712, %v3713
    %v3715 = vrot.slane %v3714, 1
    %v3716 = vadd.f32 %v3714, %v3715
    %v3717 = vadd.f32 %v3709, %v3716
    %v3718 = vsel %vm2235, %v3625, 0.0
    %v3719 = vrot.slane %v3718, 4
    %v3720 = vadd.f32 %v3718, %v3719
    %v3721 = vrot.slane %v3720, 2
    %v3722 = vadd.f32 %v3720, %v3721
    %v3723 = vrot.slane %v3722, 1
    %v3724 = vadd.f32 %v3722, %v3723
    %v3725 = vadd.f32 %v3717, %v3724
    %v3726 = vsel %vm2235, %v3626, 0.0
    %v3727 = vrot.slane %v3726, 4
    %v3728 = vadd.f32 %v3726, %v3727
    %v3729 = vrot.slane %v3728, 2
    %v3730 = vadd.f32 %v3728, %v3729
    %v3731 = vrot.slane %v3730, 1
    %v3732 = vadd.f32 %v3730, %v3731
    %v3733 = vadd.f32 %v3725, %v3732
    %v3734 = vsel %vm2235, %v3680, 0.0
    %v3735 = vrot.slane %v3734, 4
    %v3736 = vadd.f32 %v3734, %v3735
    %v3737 = vrot.slane %v3736, 2
    %v3738 = vadd.f32 %v3736, %v3737
    %v3739 = vrot.slane %v3738, 1
    %v3740 = vadd.f32 %v3738, %v3739
    %v3741 = vadd.f32 %v3733, %v3740
    %v3742 = vsel %vm2235, %v3681, 0.0
    %v3743 = vrot.slane %v3742, 4
    %v3744 = vadd.f32 %v3742, %v3743
    %v3745 = vrot.slane %v3744, 2
    %v3746 = vadd.f32 %v3744, %v3745
    %v3747 = vrot.slane %v3746, 1
    %v3748 = vadd.f32 %v3746, %v3747
    %v3749 = vadd.f32 %v3741, %v3748
    %v3750 = vmul.f32 %v3749, %v1393
    %v3751 = vsub.f32 %v3515, %v3750
    %v3752 = vmul.f32 %v3751, %v3751
    %v3753 = vsel %vm2235, %v3752, 0.0
    %v3754 = vrot.slane %v3753, 4
    %v3755 = vadd.f32 %v3753, %v3754
    %v3756 = vrot.slane %v3755, 2
    %v3757 = vadd.f32 %v3755, %v3756
    %v3758 = vrot.slane %v3757, 1
    %v3759 = vadd.f32 %v3757, %v3758
    %v3760 = vadd.f32 %v3759, 0.0
    %v3761 = vsub.f32 %v3516, %v3750
    %v3762 = vmul.f32 %v3761, %v3761
    %v3763 = vsel %vm2235, %v3762, 0.0
    %v3764 = vrot.slane %v3763, 4
    %v3765 = vadd.f32 %v3763, %v3764
    %v3766 = vrot.slane %v3765, 2
    %v3767 = vadd.f32 %v3765, %v3766
    %v3768 = vrot.slane %v3767, 1
    %v3769 = vadd.f32 %v3767, %v3768
    %v3770 = vadd.f32 %v3760, %v3769
    %v3771 = vsub.f32 %v3570, %v3750
    %v3772 = vmul.f32 %v3771, %v3771
    %v3773 = vsel %vm2235, %v3772, 0.0
    %v3774 = vrot.slane %v3773, 4
    %v3775 = vadd.f32 %v3773, %v3774
    %v3776 = vrot.slane %v3775, 2
    %v3777 = vadd.f32 %v3775, %v3776
    %v3778 = vrot.slane %v3777, 1
    %v3779 = vadd.f32 %v3777, %v3778
    %v3780 = vadd.f32 %v3770, %v3779
    %v3781 = vsub.f32 %v3571, %v3750
    %v3782 = vmul.f32 %v3781, %v3781
    %v3783 = vsel %vm2235, %v3782, 0.0
    %v3784 = vrot.slane %v3783, 4
    %v3785 = vadd.f32 %v3783, %v3784
    %v3786 = vrot.slane %v3785, 2
    %v3787 = vadd.f32 %v3785, %v3786
    %v3788 = vrot.slane %v3787, 1
    %v3789 = vadd.f32 %v3787, %v3788
    %v3790 = vadd.f32 %v3780, %v3789
    %v3791 = vsub.f32 %v3625, %v3750
    %v3792 = vmul.f32 %v3791, %v3791
    %v3793 = vsel %vm2235, %v3792, 0.0
    %v3794 = vrot.slane %v3793, 4
    %v3795 = vadd.f32 %v3793, %v3794
    %v3796 = vrot.slane %v3795, 2
    %v3797 = vadd.f32 %v3795, %v3796
    %v3798 = vrot.slane %v3797, 1
    %v3799 = vadd.f32 %v3797, %v3798
    %v3800 = vadd.f32 %v3790, %v3799
    %v3801 = vsub.f32 %v3626, %v3750
    %v3802 = vmul.f32 %v3801, %v3801
    %v3803 = vsel %vm2235, %v3802, 0.0
    %v3804 = vrot.slane %v3803, 4
    %v3805 = vadd.f32 %v3803, %v3804
    %v3806 = vrot.slane %v3805, 2
    %v3807 = vadd.f32 %v3805, %v3806
    %v3808 = vrot.slane %v3807, 1
    %v3809 = vadd.f32 %v3807, %v3808
    %v3810 = vadd.f32 %v3800, %v3809
    %v3811 = vsub.f32 %v3680, %v3750
    %v3812 = vmul.f32 %v3811, %v3811
    %v3813 = vsel %vm2235, %v3812, 0.0
    %v3814 = vrot.slane %v3813, 4
    %v3815 = vadd.f32 %v3813, %v3814
    %v3816 = vrot.slane %v3815, 2
    %v3817 = vadd.f32 %v3815, %v3816
    %v3818 = vrot.slane %v3817, 1
    %v3819 = vadd.f32 %v3817, %v3818
    %v3820 = vadd.f32 %v3810, %v3819
    %v3821 = vsub.f32 %v3681, %v3750
    %v3822 = vmul.f32 %v3821, %v3821
    %v3823 = vsel %vm2235, %v3822, 0.0
    %v3824 = vrot.slane %v3823, 4
    %v3825 = vadd.f32 %v3823, %v3824
    %v3826 = vrot.slane %v3825, 2
    %v3827 = vadd.f32 %v3825, %v3826
    %v3828 = vrot.slane %v3827, 1
    %v3829 = vadd.f32 %v3827, %v3828
    %v3830 = vadd.f32 %v3820, %v3829
    %v3831 = vmul.f32 %v3830, %v1393
    %v3832 = vadd.f32 %v3831, 1e-05
    %v3833 = vrsqrt.pop %v3832
    %v3834 = vmul.f32 %v3833, %v3832
    %v3835 = vmul.f32 %v3834, %v3833
    %v3836 = vmul.f32 0.5, %v3835
    %v3837 = vsub.f32 1.5, %v3836
    %v3838 = vmul.f32 %v3833, %v3837
    %vm3839 = vweird.f32 %v3832
    %vm3840 = vweird.f32 %v3833
    %vm3841 = vmor %vm3839, %vm3840
    %v3842 = vsel %vm3841, %v3833, %v3838
    %v3843 = vmul.f32 %v3683, %v3842
    %v3844 = vmul.f32 %v3750, %v3843
    %v3845 = vsub.f32 %v3685, %v3844
    %v3847 = vperm.slane %v3843, 0
    %v3849 = vmul.f32 %v3515, %v3847
    %v3851 = vperm.slane %v3845, 0
    %v3853 = vadd.f32 %v3849, %v3851
    %v3854 = vmax.f32 %v3853, 0.0
    %v3855 = vmul.f32 %v3516, %v3847
    %v3856 = vadd.f32 %v3855, %v3851
    %v3857 = vmax.f32 %v3856, 0.0
    %v3858 = vmul.f32 %v3570, %v3847
    %v3859 = vadd.f32 %v3858, %v3851
    %v3860 = vmax.f32 %v3859, 0.0
    %v3861 = vmul.f32 %v3571, %v3847
    %v3862 = vadd.f32 %v3861, %v3851
    %v3863 = vmax.f32 %v3862, 0.0
    %v3864 = vmul.f32 %v3625, %v3847
    %v3865 = vadd.f32 %v3864, %v3851
    %v3866 = vmax.f32 %v3865, 0.0
    %v3867 = vmul.f32 %v3626, %v3847
    %v3868 = vadd.f32 %v3867, %v3851
    %v3869 = vmax.f32 %v3868, 0.0
    %v3870 = vmul.f32 %v3680, %v3847
    %v3871 = vadd.f32 %v3870, %v3851
    %v3872 = vmax.f32 %v3871, 0.0
    %v3873 = vmul.f32 %v3681, %v3847
    %v3874 = vadd.f32 %v3873, %v3851
    %v3875 = vmax.f32 %v3874, 0.0
    %s3876 = scalar_lea.vmem [#allocation15], 128
    %v3877 = vld [vmem:[%s3876] sm:$0xff]
    %v3878 = vld [vmem:[%s3876 + $0x8] sm:$0xff]
    %v3879 = vld [vmem:[%s3876 + $0x10] sm:$0xff]
    %v3880 = vld [vmem:[%s3876 + $0x18] sm:$0xff]
    %v3881 = vld [vmem:[%s3876 + $0x20] sm:$0xff]
    %v3882 = vld [vmem:[%s3876 + $0x28] sm:$0xff]
    %v3883 = vld [vmem:[%s3876 + $0x30] sm:$0xff]
    %v3884 = vld [vmem:[%s3876 + $0x38] sm:$0xff]
    %v3885 = vld [vmem:[%s3876 + $0x40] sm:$0xff]
    %v3886 = vld [vmem:[%s3876 + $0x48] sm:$0xff]
    %v3887 = vld [vmem:[%s3876 + $0x50] sm:$0xff]
    %v3888 = vld [vmem:[%s3876 + $0x58] sm:$0xff]
    %v3889 = vld [vmem:[%s3876 + $0x60] sm:$0xff]
    %v3890 = vld [vmem:[%s3876 + $0x68] sm:$0xff]
    %v3891 = vld [vmem:[%s3876 + $0x70] sm:$0xff]
    %v3892 = vld [vmem:[%s3876 + $0x78] sm:$0xff]
    %s3893 = scalar_lea.vmem [#allocation16], 32
    %v3894 = vld [vmem:[%s3893] sm:$0xff]
    %v3895 = vld [vmem:[%s3893 + $0x8] sm:$0xff]
    %v3896 = vpack.c.bf16 %v3854, %v3854
    %v3899 = vunpack.c.l.b16 %v3894
    %v3900 = vunpack.c.h.b16 %v3894
    %v3901 = vunpack.c.l.b16 %v3895
    %v3902 = vunpack.c.h.b16 %v3895
    %v3903 = vpack.c.b16 %v3901, %v3899
    %v3904 = vpack.c.b16 %v3902, %v3900
    %3907 = vmatpush.bf16.msra.mxu0 0
    %3908 = vmatpush.bf16.msra.mxu0 0
    %3909 = vmatpush.bf16.msra.mxu0 0
    %3910 = vmatpush.bf16.msra.mxu0 0
    %3911 = vmatpush.bf16.msra.mxu0 0
    %3912 = vmatpush.bf16.msra.mxu0 0
    %3913 = vmatpush.bf16.msra.mxu0 0
    %3914 = vmatpush.bf16.msra.mxu0 %v3903
    %3915 = vmatmul.bf16.gmra.mxu0 %v1575
    %v3916 = vpop.f32.mrf.mxu0
    %v3917 = vadd.f32 0.0, %v3916
    %v3918 = vpop.f32.mrf.mxu0
    %3919 = vdwg.mxu0
    %3920 = vmatpush.bf16.msra.mxu0 0
    %3921 = vmatpush.bf16.msra.mxu0 0
    %3922 = vmatpush.bf16.msra.mxu0 0
    %3923 = vmatpush.bf16.msra.mxu0 0
    %3924 = vmatpush.bf16.msra.mxu0 0
    %3925 = vmatpush.bf16.msra.mxu0 0
    %3926 = vmatpush.bf16.msra.mxu0 0
    %3927 = vmatpush.bf16.msra.mxu0 %v3904
    %3928 = vmatmul.bf16.gmra.mxu0 %v1575
    %v3929 = vpop.f32.mrf.mxu0
    %v3930 = vadd.f32 0.0, %v3929
    %v3931 = vpop.f32.mrf.mxu0
    %3932 = vdwg.mxu0
    %v3949 = vunpack.c.l.b16 %v3877
    %v3950 = vunpack.c.h.b16 %v3877
    %v3951 = vunpack.c.l.b16 %v3878
    %v3952 = vunpack.c.h.b16 %v3878
    %v3953 = vunpack.c.l.b16 %v3879
    %v3954 = vunpack.c.h.b16 %v3879
    %v3955 = vunpack.c.l.b16 %v3880
    %v3956 = vunpack.c.h.b16 %v3880
    %v3957 = vunpack.c.l.b16 %v3881
    %v3958 = vunpack.c.h.b16 %v3881
    %v3959 = vunpack.c.l.b16 %v3882
    %v3960 = vunpack.c.h.b16 %v3882
    %v3961 = vunpack.c.l.b16 %v3883
    %v3962 = vunpack.c.h.b16 %v3883
    %v3963 = vunpack.c.l.b16 %v3884
    %v3964 = vunpack.c.h.b16 %v3884
    %v3965 = vunpack.c.l.b16 %v3885
    %v3966 = vunpack.c.h.b16 %v3885
    %v3967 = vunpack.c.l.b16 %v3886
    %v3968 = vunpack.c.h.b16 %v3886
    %v3969 = vunpack.c.l.b16 %v3887
    %v3970 = vunpack.c.h.b16 %v3887
    %v3971 = vunpack.c.l.b16 %v3888
    %v3972 = vunpack.c.h.b16 %v3888
    %v3973 = vunpack.c.l.b16 %v3889
    %v3974 = vunpack.c.h.b16 %v3889
    %v3975 = vunpack.c.l.b16 %v3890
    %v3976 = vunpack.c.h.b16 %v3890
    %v3977 = vunpack.c.l.b16 %v3891
    %v3978 = vunpack.c.h.b16 %v3891
    %v3979 = vunpack.c.l.b16 %v3892
    %v3980 = vunpack.c.h.b16 %v3892
    %v3981 = vpack.c.b16 %v3951, %v3949
    %v3982 = vpack.c.b16 %v3952, %v3950
    %v3983 = vpack.c.b16 %v3955, %v3953
    %v3984 = vpack.c.b16 %v3956, %v3954
    %v3985 = vpack.c.b16 %v3959, %v3957
    %v3986 = vpack.c.b16 %v3960, %v3958
    %v3987 = vpack.c.b16 %v3963, %v3961
    %v3988 = vpack.c.b16 %v3964, %v3962
    %v3989 = vpack.c.b16 %v3967, %v3965
    %v3990 = vpack.c.b16 %v3968, %v3966
    %v3991 = vpack.c.b16 %v3971, %v3969
    %v3992 = vpack.c.b16 %v3972, %v3970
    %v3993 = vpack.c.b16 %v3975, %v3973
    %v3994 = vpack.c.b16 %v3976, %v3974
    %v3995 = vpack.c.b16 %v3979, %v3977
    %v3996 = vpack.c.b16 %v3980, %v3978
    %4013 = vmatpush.bf16.msra.mxu0 %v3995
    %4014 = vmatpush.bf16.msra.mxu0 %v3993
    %4015 = vmatpush.bf16.msra.mxu0 %v3991
    %4016 = vmatpush.bf16.msra.mxu0 %v3989
    %4017 = vmatpush.bf16.msra.mxu0 %v3987
    %4018 = vmatpush.bf16.msra.mxu0 %v3985
    %4019 = vmatpush.bf16.msra.mxu0 %v3983
    %4020 = vmatpush.bf16.msra.mxu0 %v3981
    %4021 = vmatmul.bf16.gmra.mxu0 %v3896
    %v4022 = vpop.f32.mrf.mxu0
    %v4023 = vadd.f32 %v3917, %v4022
    %v4024 = vpop.f32.mrf.mxu0
    %4025 = vdwg.mxu0
    %4026 = vmatpush.bf16.msra.mxu0 %v3996
    %4027 = vmatpush.bf16.msra.mxu0 %v3994
    %4028 = vmatpush.bf16.msra.mxu0 %v3992
    %4029 = vmatpush.bf16.msra.mxu0 %v3990
    %4030 = vmatpush.bf16.msra.mxu0 %v3988
    %4031 = vmatpush.bf16.msra.mxu0 %v3986
    %4032 = vmatpush.bf16.msra.mxu0 %v3984
    %4033 = vmatpush.bf16.msra.mxu0 %v3982
    %4034 = vmatmul.bf16.gmra.mxu0 %v3896
    %v4035 = vpop.f32.mrf.mxu0
    %v4036 = vadd.f32 %v3930, %v4035
    %v4037 = vpop.f32.mrf.mxu0
    %4038 = vdwg.mxu0
    %v4039 = vadd.f32 %v4023, %v2662
    %v4040 = vadd.f32 %v4036, %v2675
    %v4041 = vpack.c.bf16 %v3857, %v3857
    %4042 = vmatpush.bf16.msra.mxu0 0
    %4043 = vmatpush.bf16.msra.mxu0 0
    %4044 = vmatpush.bf16.msra.mxu0 0
    %4045 = vmatpush.bf16.msra.mxu0 0
    %4046 = vmatpush.bf16.msra.mxu0 0
    %4047 = vmatpush.bf16.msra.mxu0 0
    %4048 = vmatpush.bf16.msra.mxu0 0
    %4049 = vmatpush.bf16.msra.mxu0 %v3903
    %4050 = vmatmul.bf16.gmra.mxu0 %v1553
    %v4051 = vpop.f32.mrf.mxu0
    %v4052 = vadd.f32 0.0, %v4051
    %v4053 = vpop.f32.mrf.mxu0
    %4054 = vdwg.mxu0
    %4055 = vmatpush.bf16.msra.mxu0 0
    %4056 = vmatpush.bf16.msra.mxu0 0
    %4057 = vmatpush.bf16.msra.mxu0 0
    %4058 = vmatpush.bf16.msra.mxu0 0
    %4059 = vmatpush.bf16.msra.mxu0 0
    %4060 = vmatpush.bf16.msra.mxu0 0
    %4061 = vmatpush.bf16.msra.mxu0 0
    %4062 = vmatpush.bf16.msra.mxu0 %v3904
    %4063 = vmatmul.bf16.gmra.mxu0 %v1553
    %v4064 = vpop.f32.mrf.mxu0
    %v4065 = vadd.f32 0.0, %v4064
    %v4066 = vpop.f32.mrf.mxu0
    %4067 = vdwg.mxu0
    %4068 = vmatpush.bf16.msra.mxu0 %v3995
    %4069 = vmatpush.bf16.msra.mxu0 %v3993
    %4070 = vmatpush.bf16.msra.mxu0 %v3991
    %4071 = vmatpush.bf16.msra.mxu0 %v3989
    %4072 = vmatpush.bf16.msra.mxu0 %v3987
    %4073 = vmatpush.bf16.msra.mxu0 %v3985
    %4074 = vmatpush.bf16.msra.mxu0 %v3983
    %4075 = vmatpush.bf16.msra.mxu0 %v3981
    %4076 = vmatmul.bf16.gmra.mxu0 %v4041
    %v4077 = vpop.f32.mrf.mxu0
    %v4078 = vadd.f32 %v4052, %v4077
    %v4079 = vpop.f32.mrf.mxu0
    %4080 = vdwg.mxu0
    %4081 = vmatpush.bf16.msra.mxu0 %v3996
    %4082 = vmatpush.bf16.msra.mxu0 %v3994
    %4083 = vmatpush.bf16.msra.mxu0 %v3992
    %4084 = vmatpush.bf16.msra.mxu0 %v3990
    %4085 = vmatpush.bf16.msra.mxu0 %v3988
    %4086 = vmatpush.bf16.msra.mxu0 %v3986
    %4087 = vmatpush.bf16.msra.mxu0 %v3984
    %4088 = vmatpush.bf16.msra.mxu0 %v3982
    %4089 = vmatmul.bf16.gmra.mxu0 %v4041
    %v4090 = vpop.f32.mrf.mxu0
    %v4091 = vadd.f32 %v4065, %v4090
    %v4092 = vpop.f32.mrf.mxu0
    %4093 = vdwg.mxu0
    %v4094 = vadd.f32 %v4078, %v2662
    %v4095 = vadd.f32 %v4091, %v2675
    %v4096 = vpack.c.bf16 %v3860, %v3860
    %4097 = vmatpush.bf16.msra.mxu0 0
    %4098 = vmatpush.bf16.msra.mxu0 0
    %4099 = vmatpush.bf16.msra.mxu0 0
    %4100 = vmatpush.bf16.msra.mxu0 0
    %4101 = vmatpush.bf16.msra.mxu0 0
    %4102 = vmatpush.bf16.msra.mxu0 0
    %4103 = vmatpush.bf16.msra.mxu0 0
    %4104 = vmatpush.bf16.msra.mxu0 %v3903
    %4105 = vmatmul.bf16.gmra.mxu0 %v1613
    %v4106 = vpop.f32.mrf.mxu0
    %v4107 = vadd.f32 0.0, %v4106
    %v4108 = vpop.f32.mrf.mxu0
    %4109 = vdwg.mxu0
    %4110 = vmatpush.bf16.msra.mxu0 0
    %4111 = vmatpush.bf16.msra.mxu0 0
    %4112 = vmatpush.bf16.msra.mxu0 0
    %4113 = vmatpush.bf16.msra.mxu0 0
    %4114 = vmatpush.bf16.msra.mxu0 0
    %4115 = vmatpush.bf16.msra.mxu0 0
    %4116 = vmatpush.bf16.msra.mxu0 0
    %4117 = vmatpush.bf16.msra.mxu0 %v3904
    %4118 = vmatmul.bf16.gmra.mxu0 %v1613
    %v4119 = vpop.f32.mrf.mxu0
    %v4120 = vadd.f32 0.0, %v4119
    %v4121 = vpop.f32.mrf.mxu0
    %4122 = vdwg.mxu0
    %4123 = vmatpush.bf16.msra.mxu0 %v3995
    %4124 = vmatpush.bf16.msra.mxu0 %v3993
    %4125 = vmatpush.bf16.msra.mxu0 %v3991
    %4126 = vmatpush.bf16.msra.mxu0 %v3989
    %4127 = vmatpush.bf16.msra.mxu0 %v3987
    %4128 = vmatpush.bf16.msra.mxu0 %v3985
    %4129 = vmatpush.bf16.msra.mxu0 %v3983
    %4130 = vmatpush.bf16.msra.mxu0 %v3981
    %4131 = vmatmul.bf16.gmra.mxu0 %v4096
    %v4132 = vpop.f32.mrf.mxu0
    %v4133 = vadd.f32 %v4107, %v4132
    %v4134 = vpop.f32.mrf.mxu0
    %4135 = vdwg.mxu0
    %4136 = vmatpush.bf16.msra.mxu0 %v3996
    %4137 = vmatpush.bf16.msra.mxu0 %v3994
    %4138 = vmatpush.bf16.msra.mxu0 %v3992
    %4139 = vmatpush.bf16.msra.mxu0 %v3990
    %4140 = vmatpush.bf16.msra.mxu0 %v3988
    %4141 = vmatpush.bf16.msra.mxu0 %v3986
    %4142 = vmatpush.bf16.msra.mxu0 %v3984
    %4143 = vmatpush.bf16.msra.mxu0 %v3982
    %4144 = vmatmul.bf16.gmra.mxu0 %v4096
    %v4145 = vpop.f32.mrf.mxu0
    %v4146 = vadd.f32 %v4120, %v4145
    %v4147 = vpop.f32.mrf.mxu0
    %4148 = vdwg.mxu0
    %v4149 = vadd.f32 %v4133, %v2662
    %v4150 = vadd.f32 %v4146, %v2675
    %v4151 = vpack.c.bf16 %v3863, %v3863
    %4152 = vmatpush.bf16.msra.mxu0 0
    %4153 = vmatpush.bf16.msra.mxu0 0
    %4154 = vmatpush.bf16.msra.mxu0 0
    %4155 = vmatpush.bf16.msra.mxu0 0
    %4156 = vmatpush.bf16.msra.mxu0 0
    %4157 = vmatpush.bf16.msra.mxu0 0
    %4158 = vmatpush.bf16.msra.mxu0 0
    %4159 = vmatpush.bf16.msra.mxu0 %v3903
    %4160 = vmatmul.bf16.gmra.mxu0 %v1597
    %v4161 = vpop.f32.mrf.mxu0
    %v4162 = vadd.f32 0.0, %v4161
    %v4163 = vpop.f32.mrf.mxu0
    %4164 = vdwg.mxu0
    %4165 = vmatpush.bf16.msra.mxu0 0
    %4166 = vmatpush.bf16.msra.mxu0 0
    %4167 = vmatpush.bf16.msra.mxu0 0
    %4168 = vmatpush.bf16.msra.mxu0 0
    %4169 = vmatpush.bf16.msra.mxu0 0
    %4170 = vmatpush.bf16.msra.mxu0 0
    %4171 = vmatpush.bf16.msra.mxu0 0
    %4172 = vmatpush.bf16.msra.mxu0 %v3904
    %4173 = vmatmul.bf16.gmra.mxu0 %v1597
    %v4174 = vpop.f32.mrf.mxu0
    %v4175 = vadd.f32 0.0, %v4174
    %v4176 = vpop.f32.mrf.mxu0
    %4177 = vdwg.mxu0
    %4178 = vmatpush.bf16.msra.mxu0 %v3995
    %4179 = vmatpush.bf16.msra.mxu0 %v3993
    %4180 = vmatpush.bf16.msra.mxu0 %v3991
    %4181 = vmatpush.bf16.msra.mxu0 %v3989
    %4182 = vmatpush.bf16.msra.mxu0 %v3987
    %4183 = vmatpush.bf16.msra.mxu0 %v3985
    %4184 = vmatpush.bf16.msra.mxu0 %v3983
    %4185 = vmatpush.bf16.msra.mxu0 %v3981
    %4186 = vmatmul.bf16.gmra.mxu0 %v4151
    %v4187 = vpop.f32.mrf.mxu0
    %v4188 = vadd.f32 %v4162, %v4187
    %v4189 = vpop.f32.mrf.mxu0
    %4190 = vdwg.mxu0
    %4191 = vmatpush.bf16.msra.mxu0 %v3996
    %4192 = vmatpush.bf16.msra.mxu0 %v3994
    %4193 = vmatpush.bf16.msra.mxu0 %v3992
    %4194 = vmatpush.bf16.msra.mxu0 %v3990
    %4195 = vmatpush.bf16.msra.mxu0 %v3988
    %4196 = vmatpush.bf16.msra.mxu0 %v3986
    %4197 = vmatpush.bf16.msra.mxu0 %v3984
    %4198 = vmatpush.bf16.msra.mxu0 %v3982
    %4199 = vmatmul.bf16.gmra.mxu0 %v4151
    %v4200 = vpop.f32.mrf.mxu0
    %v4201 = vadd.f32 %v4175, %v4200
    %v4202 = vpop.f32.mrf.mxu0
    %4203 = vdwg.mxu0
    %v4204 = vadd.f32 %v4188, %v2662
    %v4205 = vadd.f32 %v4201, %v2675
    %v4206 = vpack.c.bf16 %v3866, %v3866
    %4207 = vmatpush.bf16.msra.mxu0 0
    %4208 = vmatpush.bf16.msra.mxu0 0
    %4209 = vmatpush.bf16.msra.mxu0 0
    %4210 = vmatpush.bf16.msra.mxu0 0
    %4211 = vmatpush.bf16.msra.mxu0 0
    %4212 = vmatpush.bf16.msra.mxu0 0
    %4213 = vmatpush.bf16.msra.mxu0 0
    %4214 = vmatpush.bf16.msra.mxu0 %v3903
    %4215 = vmatmul.bf16.gmra.mxu0 %v1648
    %v4216 = vpop.f32.mrf.mxu0
    %v4217 = vadd.f32 0.0, %v4216
    %v4218 = vpop.f32.mrf.mxu0
    %4219 = vdwg.mxu0
    %4220 = vmatpush.bf16.msra.mxu0 0
    %4221 = vmatpush.bf16.msra.mxu0 0
    %4222 = vmatpush.bf16.msra.mxu0 0
    %4223 = vmatpush.bf16.msra.mxu0 0
    %4224 = vmatpush.bf16.msra.mxu0 0
    %4225 = vmatpush.bf16.msra.mxu0 0
    %4226 = vmatpush.bf16.msra.mxu0 0
    %4227 = vmatpush.bf16.msra.mxu0 %v3904
    %4228 = vmatmul.bf16.gmra.mxu0 %v1648
    %v4229 = vpop.f32.mrf.mxu0
    %v4230 = vadd.f32 0.0, %v4229
    %v4231 = vpop.f32.mrf.mxu0
    %4232 = vdwg.mxu0
    %4233 = vmatpush.bf16.msra.mxu0 %v3995
    %4234 = vmatpush.bf16.msra.mxu0 %v3993
    %4235 = vmatpush.bf16.msra.mxu0 %v3991
    %4236 = vmatpush.bf16.msra.mxu0 %v3989
    %4237 = vmatpush.bf16.msra.mxu0 %v3987
    %4238 = vmatpush.bf16.msra.mxu0 %v3985
    %4239 = vmatpush.bf16.msra.mxu0 %v3983
    %4240 = vmatpush.bf16.msra.mxu0 %v3981
    %4241 = vmatmul.bf16.gmra.mxu0 %v4206
    %v4242 = vpop.f32.mrf.mxu0
    %v4243 = vadd.f32 %v4217, %v4242
    %v4244 = vpop.f32.mrf.mxu0
    %4245 = vdwg.mxu0
    %4246 = vmatpush.bf16.msra.mxu0 %v3996
    %4247 = vmatpush.bf16.msra.mxu0 %v3994
    %4248 = vmatpush.bf16.msra.mxu0 %v3992
    %4249 = vmatpush.bf16.msra.mxu0 %v3990
    %4250 = vmatpush.bf16.msra.mxu0 %v3988
    %4251 = vmatpush.bf16.msra.mxu0 %v3986
    %4252 = vmatpush.bf16.msra.mxu0 %v3984
    %4253 = vmatpush.bf16.msra.mxu0 %v3982
    %4254 = vmatmul.bf16.gmra.mxu0 %v4206
    %v4255 = vpop.f32.mrf.mxu0
    %v4256 = vadd.f32 %v4230, %v4255
    %v4257 = vpop.f32.mrf.mxu0
    %4258 = vdwg.mxu0
    %v4259 = vadd.f32 %v4243, %v2662
    %v4260 = vadd.f32 %v4256, %v2675
    %v4261 = vpack.c.bf16 %v3869, %v3869
    %4262 = vmatpush.bf16.msra.mxu0 0
    %4263 = vmatpush.bf16.msra.mxu0 0
    %4264 = vmatpush.bf16.msra.mxu0 0
    %4265 = vmatpush.bf16.msra.mxu0 0
    %4266 = vmatpush.bf16.msra.mxu0 0
    %4267 = vmatpush.bf16.msra.mxu0 0
    %4268 = vmatpush.bf16.msra.mxu0 0
    %4269 = vmatpush.bf16.msra.mxu0 %v3903
    %4270 = vmatmul.bf16.gmra.mxu0 %v1632
    %v4271 = vpop.f32.mrf.mxu0
    %v4272 = vadd.f32 0.0, %v4271
    %v4273 = vpop.f32.mrf.mxu0
    %4274 = vdwg.mxu0
    %4275 = vmatpush.bf16.msra.mxu0 0
    %4276 = vmatpush.bf16.msra.mxu0 0
    %4277 = vmatpush.bf16.msra.mxu0 0
    %4278 = vmatpush.bf16.msra.mxu0 0
    %4279 = vmatpush.bf16.msra.mxu0 0
    %4280 = vmatpush.bf16.msra.mxu0 0
    %4281 = vmatpush.bf16.msra.mxu0 0
    %4282 = vmatpush.bf16.msra.mxu0 %v3904
    %4283 = vmatmul.bf16.gmra.mxu0 %v1632
    %v4284 = vpop.f32.mrf.mxu0
    %v4285 = vadd.f32 0.0, %v4284
    %v4286 = vpop.f32.mrf.mxu0
    %4287 = vdwg.mxu0
    %4288 = vmatpush.bf16.msra.mxu0 %v3995
    %4289 = vmatpush.bf16.msra.mxu0 %v3993
    %4290 = vmatpush.bf16.msra.mxu0 %v3991
    %4291 = vmatpush.bf16.msra.mxu0 %v3989
    %4292 = vmatpush.bf16.msra.mxu0 %v3987
    %4293 = vmatpush.bf16.msra.mxu0 %v3985
    %4294 = vmatpush.bf16.msra.mxu0 %v3983
    %4295 = vmatpush.bf16.msra.mxu0 %v3981
    %4296 = vmatmul.bf16.gmra.mxu0 %v4261
    %v4297 = vpop.f32.mrf.mxu0
    %v4298 = vadd.f32 %v4272, %v4297
    %v4299 = vpop.f32.mrf.mxu0
    %4300 = vdwg.mxu0
    %4301 = vmatpush.bf16.msra.mxu0 %v3996
    %4302 = vmatpush.bf16.msra.mxu0 %v3994
    %4303 = vmatpush.bf16.msra.mxu0 %v3992
    %4304 = vmatpush.bf16.msra.mxu0 %v3990
    %4305 = vmatpush.bf16.msra.mxu0 %v3988
    %4306 = vmatpush.bf16.msra.mxu0 %v3986
    %4307 = vmatpush.bf16.msra.mxu0 %v3984
    %4308 = vmatpush.bf16.msra.mxu0 %v3982
    %4309 = vmatmul.bf16.gmra.mxu0 %v4261
    %v4310 = vpop.f32.mrf.mxu0
    %v4311 = vadd.f32 %v4285, %v4310
    %v4312 = vpop.f32.mrf.mxu0
    %4313 = vdwg.mxu0
    %v4314 = vadd.f32 %v4298, %v2662
    %v4315 = vadd.f32 %v4311, %v2675
    %v4316 = vpack.c.bf16 %v3872, %v3872
    %4317 = vmatpush.bf16.msra.mxu0 0
    %4318 = vmatpush.bf16.msra.mxu0 0
    %4319 = vmatpush.bf16.msra.mxu0 0
    %4320 = vmatpush.bf16.msra.mxu0 0
    %4321 = vmatpush.bf16.msra.mxu0 0
    %4322 = vmatpush.bf16.msra.mxu0 0
    %4323 = vmatpush.bf16.msra.mxu0 0
    %4324 = vmatpush.bf16.msra.mxu0 %v3903
    %4325 = vmatmul.bf16.gmra.mxu0 %v1683
    %v4326 = vpop.f32.mrf.mxu0
    %v4327 = vadd.f32 0.0, %v4326
    %v4328 = vpop.f32.mrf.mxu0
    %4329 = vdwg.mxu0
    %4330 = vmatpush.bf16.msra.mxu0 0
    %4331 = vmatpush.bf16.msra.mxu0 0
    %4332 = vmatpush.bf16.msra.mxu0 0
    %4333 = vmatpush.bf16.msra.mxu0 0
    %4334 = vmatpush.bf16.msra.mxu0 0
    %4335 = vmatpush.bf16.msra.mxu0 0
    %4336 = vmatpush.bf16.msra.mxu0 0
    %4337 = vmatpush.bf16.msra.mxu0 %v3904
    %4338 = vmatmul.bf16.gmra.mxu0 %v1683
    %v4339 = vpop.f32.mrf.mxu0
    %v4340 = vadd.f32 0.0, %v4339
    %v4341 = vpop.f32.mrf.mxu0
    %4342 = vdwg.mxu0
    %4343 = vmatpush.bf16.msra.mxu0 %v3995
    %4344 = vmatpush.bf16.msra.mxu0 %v3993
    %4345 = vmatpush.bf16.msra.mxu0 %v3991
    %4346 = vmatpush.bf16.msra.mxu0 %v3989
    %4347 = vmatpush.bf16.msra.mxu0 %v3987
    %4348 = vmatpush.bf16.msra.mxu0 %v3985
    %4349 = vmatpush.bf16.msra.mxu0 %v3983
    %4350 = vmatpush.bf16.msra.mxu0 %v3981
    %4351 = vmatmul.bf16.gmra.mxu0 %v4316
    %v4352 = vpop.f32.mrf.mxu0
    %v4353 = vadd.f32 %v4327, %v4352
    %v4354 = vpop.f32.mrf.mxu0
    %4355 = vdwg.mxu0
    %4356 = vmatpush.bf16.msra.mxu0 %v3996
    %4357 = vmatpush.bf16.msra.mxu0 %v3994
    %4358 = vmatpush.bf16.msra.mxu0 %v3992
    %4359 = vmatpush.bf16.msra.mxu0 %v3990
    %4360 = vmatpush.bf16.msra.mxu0 %v3988
    %4361 = vmatpush.bf16.msra.mxu0 %v3986
    %4362 = vmatpush.bf16.msra.mxu0 %v3984
    %4363 = vmatpush.bf16.msra.mxu0 %v3982
    %4364 = vmatmul.bf16.gmra.mxu0 %v4316
    %v4365 = vpop.f32.mrf.mxu0
    %v4366 = vadd.f32 %v4340, %v4365
    %v4367 = vpop.f32.mrf.mxu0
    %4368 = vdwg.mxu0
    %v4369 = vadd.f32 %v4353, %v2662
    %v4370 = vadd.f32 %v4366, %v2675
    %v4371 = vpack.c.bf16 %v3875, %v3875
    %4372 = vmatpush.bf16.msra.mxu0 0
    %4373 = vmatpush.bf16.msra.mxu0 0
    %4374 = vmatpush.bf16.msra.mxu0 0
    %4375 = vmatpush.bf16.msra.mxu0 0
    %4376 = vmatpush.bf16.msra.mxu0 0
    %4377 = vmatpush.bf16.msra.mxu0 0
    %4378 = vmatpush.bf16.msra.mxu0 0
    %4379 = vmatpush.bf16.msra.mxu0 %v3903
    %4380 = vmatmul.bf16.gmra.mxu0 %v1667
    %v4381 = vpop.f32.mrf.mxu0
    %v4382 = vadd.f32 0.0, %v4381
    %v4383 = vpop.f32.mrf.mxu0
    %4384 = vdwg.mxu0
    %4385 = vmatpush.bf16.msra.mxu0 0
    %4386 = vmatpush.bf16.msra.mxu0 0
    %4387 = vmatpush.bf16.msra.mxu0 0
    %4388 = vmatpush.bf16.msra.mxu0 0
    %4389 = vmatpush.bf16.msra.mxu0 0
    %4390 = vmatpush.bf16.msra.mxu0 0
    %4391 = vmatpush.bf16.msra.mxu0 0
    %4392 = vmatpush.bf16.msra.mxu0 %v3904
    %4393 = vmatmul.bf16.gmra.mxu0 %v1667
    %v4394 = vpop.f32.mrf.mxu0
    %v4395 = vadd.f32 0.0, %v4394
    %v4396 = vpop.f32.mrf.mxu0
    %4397 = vdwg.mxu0
    %4398 = vmatpush.bf16.msra.mxu0 %v3995
    %4399 = vmatpush.bf16.msra.mxu0 %v3993
    %4400 = vmatpush.bf16.msra.mxu0 %v3991
    %4401 = vmatpush.bf16.msra.mxu0 %v3989
    %4402 = vmatpush.bf16.msra.mxu0 %v3987
    %4403 = vmatpush.bf16.msra.mxu0 %v3985
    %4404 = vmatpush.bf16.msra.mxu0 %v3983
    %4405 = vmatpush.bf16.msra.mxu0 %v3981
    %4406 = vmatmul.bf16.gmra.mxu0 %v4371
    %v4407 = vpop.f32.mrf.mxu0
    %v4408 = vadd.f32 %v4382, %v4407
    %v4409 = vpop.f32.mrf.mxu0
    %4410 = vdwg.mxu0
    %4411 = vmatpush.bf16.msra.mxu0 %v3996
    %4412 = vmatpush.bf16.msra.mxu0 %v3994
    %4413 = vmatpush.bf16.msra.mxu0 %v3992
    %4414 = vmatpush.bf16.msra.mxu0 %v3990
    %4415 = vmatpush.bf16.msra.mxu0 %v3988
    %4416 = vmatpush.bf16.msra.mxu0 %v3986
    %4417 = vmatpush.bf16.msra.mxu0 %v3984
    %4418 = vmatpush.bf16.msra.mxu0 %v3982
    %4419 = vmatmul.bf16.gmra.mxu0 %v4371
    %v4420 = vpop.f32.mrf.mxu0
    %v4421 = vadd.f32 %v4395, %v4420
    %v4422 = vpop.f32.mrf.mxu0
    %4423 = vdwg.mxu0
    %v4424 = vadd.f32 %v4408, %v2662
    %v4425 = vadd.f32 %v4421, %v2675
    %s4426 = scalar_lea.vmem %s21, 2
    %v4427 = vld [vmem:[%s4426] sm:$0x1]
    %s4428 = scalar_lea.vmem [#allocation19], 2
    %v4429 = vld [vmem:[%s4428] sm:$0x1]
    %v4430 = vsel %vm2235, %v4039, 0.0
    %v4431 = vrot.slane %v4430, 4
    %v4432 = vadd.f32 %v4430, %v4431
    %v4433 = vrot.slane %v4432, 2
    %v4434 = vadd.f32 %v4432, %v4433
    %v4435 = vrot.slane %v4434, 1
    %v4436 = vadd.f32 %v4434, %v4435
    %v4437 = vadd.f32 %v4436, 0.0
    %v4438 = vsel %vm2235, %v4040, 0.0
    %v4439 = vrot.slane %v4438, 4
    %v4440 = vadd.f32 %v4438, %v4439
    %v4441 = vrot.slane %v4440, 2
    %v4442 = vadd.f32 %v4440, %v4441
    %v4443 = vrot.slane %v4442, 1
    %v4444 = vadd.f32 %v4442, %v4443
    %v4445 = vadd.f32 %v4437, %v4444
    %v4446 = vsel %vm2235, %v4094, 0.0
    %v4447 = vrot.slane %v4446, 4
    %v4448 = vadd.f32 %v4446, %v4447
    %v4449 = vrot.slane %v4448, 2
    %v4450 = vadd.f32 %v4448, %v4449
    %v4451 = vrot.slane %v4450, 1
    %v4452 = vadd.f32 %v4450, %v4451
    %v4453 = vadd.f32 %v4445, %v4452
    %v4454 = vsel %vm2235, %v4095, 0.0
    %v4455 = vrot.slane %v4454, 4
    %v4456 = vadd.f32 %v4454, %v4455
    %v4457 = vrot.slane %v4456, 2
    %v4458 = vadd.f32 %v4456, %v4457
    %v4459 = vrot.slane %v4458, 1
    %v4460 = vadd.f32 %v4458, %v4459
    %v4461 = vadd.f32 %v4453, %v4460
    %v4462 = vsel %vm2235, %v4149, 0.0
    %v4463 = vrot.slane %v4462, 4
    %v4464 = vadd.f32 %v4462, %v4463
    %v4465 = vrot.slane %v4464, 2
    %v4466 = vadd.f32 %v4464, %v4465
    %v4467 = vrot.slane %v4466, 1
    %v4468 = vadd.f32 %v4466, %v4467
    %v4469 = vadd.f32 %v4461, %v4468
    %v4470 = vsel %vm2235, %v4150, 0.0
    %v4471 = vrot.slane %v4470, 4
    %v4472 = vadd.f32 %v4470, %v4471
    %v4473 = vrot.slane %v4472, 2
    %v4474 = vadd.f32 %v4472, %v4473
    %v4475 = vrot.slane %v4474, 1
    %v4476 = vadd.f32 %v4474, %v4475
    %v4477 = vadd.f32 %v4469, %v4476
    %v4478 = vsel %vm2235, %v4204, 0.0
    %v4479 = vrot.slane %v4478, 4
    %v4480 = vadd.f32 %v4478, %v4479
    %v4481 = vrot.slane %v4480, 2
    %v4482 = vadd.f32 %v4480, %v4481
    %v4483 = vrot.slane %v4482, 1
    %v4484 = vadd.f32 %v4482, %v4483
    %v4485 = vadd.f32 %v4477, %v4484
    %v4486 = vsel %vm2235, %v4205, 0.0
    %v4487 = vrot.slane %v4486, 4
    %v4488 = vadd.f32 %v4486, %v4487
    %v4489 = vrot.slane %v4488, 2
    %v4490 = vadd.f32 %v4488, %v4489
    %v4491 = vrot.slane %v4490, 1
    %v4492 = vadd.f32 %v4490, %v4491
    %v4493 = vadd.f32 %v4485, %v4492
    %v4494 = vsel %vm2235, %v4259, 0.0
    %v4495 = vrot.slane %v4494, 4
    %v4496 = vadd.f32 %v4494, %v4495
    %v4497 = vrot.slane %v4496, 2
    %v4498 = vadd.f32 %v4496, %v4497
    %v4499 = vrot.slane %v4498, 1
    %v4500 = vadd.f32 %v4498, %v4499
    %v4501 = vadd.f32 %v4493, %v4500
    %v4502 = vsel %vm2235, %v4260, 0.0
    %v4503 = vrot.slane %v4502, 4
    %v4504 = vadd.f32 %v4502, %v4503
    %v4505 = vrot.slane %v4504, 2
    %v4506 = vadd.f32 %v4504, %v4505
    %v4507 = vrot.slane %v4506, 1
    %v4508 = vadd.f32 %v4506, %v4507
    %v4509 = vadd.f32 %v4501, %v4508
    %v4510 = vsel %vm2235, %v4314, 0.0
    %v4511 = vrot.slane %v4510, 4
    %v4512 = vadd.f32 %v4510, %v4511
    %v4513 = vrot.slane %v4512, 2
    %v4514 = vadd.f32 %v4512, %v4513
    %v4515 = vrot.slane %v4514, 1
    %v4516 = vadd.f32 %v4514, %v4515
    %v4517 = vadd.f32 %v4509, %v4516
    %v4518 = vsel %vm2235, %v4315, 0.0
    %v4519 = vrot.slane %v4518, 4
    %v4520 = vadd.f32 %v4518, %v4519
    %v4521 = vrot.slane %v4520, 2
    %v4522 = vadd.f32 %v4520, %v4521
    %v4523 = vrot.slane %v4522, 1
    %v4524 = vadd.f32 %v4522, %v4523
    %v4525 = vadd.f32 %v4517, %v4524
    %v4526 = vsel %vm2235, %v4369, 0.0
    %v4527 = vrot.slane %v4526, 4
    %v4528 = vadd.f32 %v4526, %v4527
    %v4529 = vrot.slane %v4528, 2
    %v4530 = vadd.f32 %v4528, %v4529
    %v4531 = vrot.slane %v4530, 1
    %v4532 = vadd.f32 %v4530, %v4531
    %v4533 = vadd.f32 %v4525, %v4532
    %v4534 = vsel %vm2235, %v4370, 0.0
    %v4535 = vrot.slane %v4534, 4
    %v4536 = vadd.f32 %v4534, %v4535
    %v4537 = vrot.slane %v4536, 2
    %v4538 = vadd.f32 %v4536, %v4537
    %v4539 = vrot.slane %v4538, 1
    %v4540 = vadd.f32 %v4538, %v4539
    %v4541 = vadd.f32 %v4533, %v4540
    %v4542 = vsel %vm2235, %v4424, 0.0
    %v4543 = vrot.slane %v4542, 4
    %v4544 = vadd.f32 %v4542, %v4543
    %v4545 = vrot.slane %v4544, 2
    %v4546 = vadd.f32 %v4544, %v4545
    %v4547 = vrot.slane %v4546, 1
    %v4548 = vadd.f32 %v4546, %v4547
    %v4549 = vadd.f32 %v4541, %v4548
    %v4550 = vsel %vm2235, %v4425, 0.0
    %v4551 = vrot.slane %v4550, 4
    %v4552 = vadd.f32 %v4550, %v4551
    %v4553 = vrot.slane %v4552, 2
    %v4554 = vadd.f32 %v4552, %v4553
    %v4555 = vrot.slane %v4554, 1
    %v4556 = vadd.f32 %v4554, %v4555
    %v4557 = vadd.f32 %v4549, %v4556
    %v4558 = vmul.f32 %v4557, %v756
    %v4559 = vsub.f32 %v4039, %v4558
    %v4560 = vmul.f32 %v4559, %v4559
    %v4561 = vsel %vm2235, %v4560, 0.0
    %v4562 = vrot.slane %v4561, 4
    %v4563 = vadd.f32 %v4561, %v4562
    %v4564 = vrot.slane %v4563, 2
    %v4565 = vadd.f32 %v4563, %v4564
    %v4566 = vrot.slane %v4565, 1
    %v4567 = vadd.f32 %v4565, %v4566
    %v4568 = vadd.f32 %v4567, 0.0
    %v4569 = vsub.f32 %v4040, %v4558
    %v4570 = vmul.f32 %v4569, %v4569
    %v4571 = vsel %vm2235, %v4570, 0.0
    %v4572 = vrot.slane %v4571, 4
    %v4573 = vadd.f32 %v4571, %v4572
    %v4574 = vrot.slane %v4573, 2
    %v4575 = vadd.f32 %v4573, %v4574
    %v4576 = vrot.slane %v4575, 1
    %v4577 = vadd.f32 %v4575, %v4576
    %v4578 = vadd.f32 %v4568, %v4577
    %v4579 = vsub.f32 %v4094, %v4558
    %v4580 = vmul.f32 %v4579, %v4579
    %v4581 = vsel %vm2235, %v4580, 0.0
    %v4582 = vrot.slane %v4581, 4
    %v4583 = vadd.f32 %v4581, %v4582
    %v4584 = vrot.slane %v4583, 2
    %v4585 = vadd.f32 %v4583, %v4584
    %v4586 = vrot.slane %v4585, 1
    %v4587 = vadd.f32 %v4585, %v4586
    %v4588 = vadd.f32 %v4578, %v4587
    %v4589 = vsub.f32 %v4095, %v4558
    %v4590 = vmul.f32 %v4589, %v4589
    %v4591 = vsel %vm2235, %v4590, 0.0
    %v4592 = vrot.slane %v4591, 4
    %v4593 = vadd.f32 %v4591, %v4592
    %v4594 = vrot.slane %v4593, 2
    %v4595 = vadd.f32 %v4593, %v4594
    %v4596 = vrot.slane %v4595, 1
    %v4597 = vadd.f32 %v4595, %v4596
    %v4598 = vadd.f32 %v4588, %v4597
    %v4599 = vsub.f32 %v4149, %v4558
    %v4600 = vmul.f32 %v4599, %v4599
    %v4601 = vsel %vm2235, %v4600, 0.0
    %v4602 = vrot.slane %v4601, 4
    %v4603 = vadd.f32 %v4601, %v4602
    %v4604 = vrot.slane %v4603, 2
    %v4605 = vadd.f32 %v4603, %v4604
    %v4606 = vrot.slane %v4605, 1
    %v4607 = vadd.f32 %v4605, %v4606
    %v4608 = vadd.f32 %v4598, %v4607
    %v4609 = vsub.f32 %v4150, %v4558
    %v4610 = vmul.f32 %v4609, %v4609
    %v4611 = vsel %vm2235, %v4610, 0.0
    %v4612 = vrot.slane %v4611, 4
    %v4613 = vadd.f32 %v4611, %v4612
    %v4614 = vrot.slane %v4613, 2
    %v4615 = vadd.f32 %v4613, %v4614
    %v4616 = vrot.slane %v4615, 1
    %v4617 = vadd.f32 %v4615, %v4616
    %v4618 = vadd.f32 %v4608, %v4617
    %v4619 = vsub.f32 %v4204, %v4558
    %v4620 = vmul.f32 %v4619, %v4619
    %v4621 = vsel %vm2235, %v4620, 0.0
    %v4622 = vrot.slane %v4621, 4
    %v4623 = vadd.f32 %v4621, %v4622
    %v4624 = vrot.slane %v4623, 2
    %v4625 = vadd.f32 %v4623, %v4624
    %v4626 = vrot.slane %v4625, 1
    %v4627 = vadd.f32 %v4625, %v4626
    %v4628 = vadd.f32 %v4618, %v4627
    %v4629 = vsub.f32 %v4205, %v4558
    %v4630 = vmul.f32 %v4629, %v4629
    %v4631 = vsel %vm2235, %v4630, 0.0
    %v4632 = vrot.slane %v4631, 4
    %v4633 = vadd.f32 %v4631, %v4632
    %v4634 = vrot.slane %v4633, 2
    %v4635 = vadd.f32 %v4633, %v4634
    %v4636 = vrot.slane %v4635, 1
    %v4637 = vadd.f32 %v4635, %v4636
    %v4638 = vadd.f32 %v4628, %v4637
    %v4639 = vsub.f32 %v4259, %v4558
    %v4640 = vmul.f32 %v4639, %v4639
    %v4641 = vsel %vm2235, %v4640, 0.0
    %v4642 = vrot.slane %v4641, 4
    %v4643 = vadd.f32 %v4641, %v4642
    %v4644 = vrot.slane %v4643, 2
    %v4645 = vadd.f32 %v4643, %v4644
    %v4646 = vrot.slane %v4645, 1
    %v4647 = vadd.f32 %v4645, %v4646
    %v4648 = vadd.f32 %v4638, %v4647
    %v4649 = vsub.f32 %v4260, %v4558
    %v4650 = vmul.f32 %v4649, %v4649
    %v4651 = vsel %vm2235, %v4650, 0.0
    %v4652 = vrot.slane %v4651, 4
    %v4653 = vadd.f32 %v4651, %v4652
    %v4654 = vrot.slane %v4653, 2
    %v4655 = vadd.f32 %v4653, %v4654
    %v4656 = vrot.slane %v4655, 1
    %v4657 = vadd.f32 %v4655, %v4656
    %v4658 = vadd.f32 %v4648, %v4657
    %v4659 = vsub.f32 %v4314, %v4558
    %v4660 = vmul.f32 %v4659, %v4659
    %v4661 = vsel %vm2235, %v4660, 0.0
    %v4662 = vrot.slane %v4661, 4
    %v4663 = vadd.f32 %v4661, %v4662
    %v4664 = vrot.slane %v4663, 2
    %v4665 = vadd.f32 %v4663, %v4664
    %v4666 = vrot.slane %v4665, 1
    %v4667 = vadd.f32 %v4665, %v4666
    %v4668 = vadd.f32 %v4658, %v4667
    %v4669 = vsub.f32 %v4315, %v4558
    %v4670 = vmul.f32 %v4669, %v4669
    %v4671 = vsel %vm2235, %v4670, 0.0
    %v4672 = vrot.slane %v4671, 4
    %v4673 = vadd.f32 %v4671, %v4672
    %v4674 = vrot.slane %v4673, 2
    %v4675 = vadd.f32 %v4673, %v4674
    %v4676 = vrot.slane %v4675, 1
    %v4677 = vadd.f32 %v4675, %v4676
    %v4678 = vadd.f32 %v4668, %v4677
    %v4679 = vsub.f32 %v4369, %v4558
    %v4680 = vmul.f32 %v4679, %v4679
    %v4681 = vsel %vm2235, %v4680, 0.0
    %v4682 = vrot.slane %v4681, 4
    %v4683 = vadd.f32 %v4681, %v4682
    %v4684 = vrot.slane %v4683, 2
    %v4685 = vadd.f32 %v4683, %v4684
    %v4686 = vrot.slane %v4685, 1
    %v4687 = vadd.f32 %v4685, %v4686
    %v4688 = vadd.f32 %v4678, %v4687
    %v4689 = vsub.f32 %v4370, %v4558
    %v4690 = vmul.f32 %v4689, %v4689
    %v4691 = vsel %vm2235, %v4690, 0.0
    %v4692 = vrot.slane %v4691, 4
    %v4693 = vadd.f32 %v4691, %v4692
    %v4694 = vrot.slane %v4693, 2
    %v4695 = vadd.f32 %v4693, %v4694
    %v4696 = vrot.slane %v4695, 1
    %v4697 = vadd.f32 %v4695, %v4696
    %v4698 = vadd.f32 %v4688, %v4697
    %v4699 = vsub.f32 %v4424, %v4558
    %v4700 = vmul.f32 %v4699, %v4699
    %v4701 = vsel %vm2235, %v4700, 0.0
    %v4702 = vrot.slane %v4701, 4
    %v4703 = vadd.f32 %v4701, %v4702
    %v4704 = vrot.slane %v4703, 2
    %v4705 = vadd.f32 %v4703, %v4704
    %v4706 = vrot.slane %v4705, 1
    %v4707 = vadd.f32 %v4705, %v4706
    %v4708 = vadd.f32 %v4698, %v4707
    %v4709 = vsub.f32 %v4425, %v4558
    %v4710 = vmul.f32 %v4709, %v4709
    %v4711 = vsel %vm2235, %v4710, 0.0
    %v4712 = vrot.slane %v4711, 4
    %v4713 = vadd.f32 %v4711, %v4712
    %v4714 = vrot.slane %v4713, 2
    %v4715 = vadd.f32 %v4713, %v4714
    %v4716 = vrot.slane %v4715, 1
    %v4717 = vadd.f32 %v4715, %v4716
    %v4718 = vadd.f32 %v4708, %v4717
    %v4719 = vmul.f32 %v4718, %v756
    %v4720 = vadd.f32 %v4719, 1e-05
    %v4721 = vrsqrt.pop %v4720
    %v4722 = vmul.f32 %v4721, %v4720
    %v4723 = vmul.f32 %v4722, %v4721
    %v4724 = vmul.f32 0.5, %v4723
    %v4725 = vsub.f32 1.5, %v4724
    %v4726 = vmul.f32 %v4721, %v4725
    %vm4727 = vweird.f32 %v4720
    %vm4728 = vweird.f32 %v4721
    %vm4729 = vmor %vm4727, %vm4728
    %v4730 = vsel %vm4729, %v4721, %v4726
    %v4731 = vmul.f32 %v4427, %v4730
    %v4732 = vmul.f32 %v4558, %v4731
    %v4733 = vsub.f32 %v4429, %v4732
    %v4735 = vperm.slane %v4731, 0
    %v4737 = vmul.f32 %v4039, %v4735
    %v4739 = vperm.slane %v4733, 0
    %v4741 = vadd.f32 %v4737, %v4739
    %v4742 = vmax.f32 %v4741, 0.0
    %v4743 = vmul.f32 %v4040, %v4735
    %v4744 = vadd.f32 %v4743, %v4739
    %v4745 = vmax.f32 %v4744, 0.0
    %v4746 = vmul.f32 %v4094, %v4735
    %v4747 = vadd.f32 %v4746, %v4739
    %v4748 = vmax.f32 %v4747, 0.0
    %v4749 = vmul.f32 %v4095, %v4735
    %v4750 = vadd.f32 %v4749, %v4739
    %v4751 = vmax.f32 %v4750, 0.0
    %v4752 = vmul.f32 %v4149, %v4735
    %v4753 = vadd.f32 %v4752, %v4739
    %v4754 = vmax.f32 %v4753, 0.0
    %v4755 = vmul.f32 %v4150, %v4735
    %v4756 = vadd.f32 %v4755, %v4739
    %v4757 = vmax.f32 %v4756, 0.0
    %v4758 = vmul.f32 %v4204, %v4735
    %v4759 = vadd.f32 %v4758, %v4739
    %v4760 = vmax.f32 %v4759, 0.0
    %v4761 = vmul.f32 %v4205, %v4735
    %v4762 = vadd.f32 %v4761, %v4739
    %v4763 = vmax.f32 %v4762, 0.0
    %v4764 = vmul.f32 %v4259, %v4735
    %v4765 = vadd.f32 %v4764, %v4739
    %v4766 = vmax.f32 %v4765, 0.0
    %v4767 = vmul.f32 %v4260, %v4735
    %v4768 = vadd.f32 %v4767, %v4739
    %v4769 = vmax.f32 %v4768, 0.0
    %v4770 = vmul.f32 %v4314, %v4735
    %v4771 = vadd.f32 %v4770, %v4739
    %v4772 = vmax.f32 %v4771, 0.0
    %v4773 = vmul.f32 %v4315, %v4735
    %v4774 = vadd.f32 %v4773, %v4739
    %v4775 = vmax.f32 %v4774, 0.0
    %v4776 = vmul.f32 %v4369, %v4735
    %v4777 = vadd.f32 %v4776, %v4739
    %v4778 = vmax.f32 %v4777, 0.0
    %v4779 = vmul.f32 %v4370, %v4735
    %v4780 = vadd.f32 %v4779, %v4739
    %v4781 = vmax.f32 %v4780, 0.0
    %v4782 = vmul.f32 %v4424, %v4735
    %v4783 = vadd.f32 %v4782, %v4739
    %v4784 = vmax.f32 %v4783, 0.0
    %v4785 = vmul.f32 %v4425, %v4735
    %v4786 = vadd.f32 %v4785, %v4739
    %v4787 = vmax.f32 %v4786, 0.0
    %v4788 = vld [vmem:[%s23] sm:$0xf]
    %v4789 = vld [vmem:[%s23 + $0x4] sm:$0xf]
    %v4790 = vld [vmem:[%s23 + $0x8] sm:$0xf]
    %v4791 = vld [vmem:[%s23 + $0xc] sm:$0xf]
    %v4792 = vld [vmem:[%s23 + $0x10] sm:$0xf]
    %v4793 = vld [vmem:[%s23 + $0x14] sm:$0xf]
    %v4794 = vld [vmem:[%s23 + $0x18] sm:$0xf]
    %v4795 = vld [vmem:[%s23 + $0x1c] sm:$0xf]
    %v4796 = vld [vmem:[%s23 + $0x20] sm:$0xf]
    %v4797 = vld [vmem:[%s23 + $0x24] sm:$0xf]
    %v4798 = vld [vmem:[%s23 + $0x28] sm:$0xf]
    %v4799 = vld [vmem:[%s23 + $0x2c] sm:$0xf]
    %v4800 = vld [vmem:[%s23 + $0x30] sm:$0xf]
    %v4801 = vld [vmem:[%s23 + $0x34] sm:$0xf]
    %v4802 = vld [vmem:[%s23 + $0x38] sm:$0xf]
    %v4803 = vld [vmem:[%s23 + $0x3c] sm:$0xf]
    %v4804 = vld [vmem:[%s24] sm:$0xf]
    %v4805 = vld [vmem:[%s24 + $0x4] sm:$0xf]
    %v4806 = vld [vmem:[#allocation21] sm:$0xf]
    %v4807 = vld [vmem:[#allocation21 + $0x4] sm:$0xf]
    %v4808 = vld [vmem:[#allocation21 + $0x8] sm:$0xf]
    %v4809 = vld [vmem:[#allocation21 + $0xc] sm:$0xf]
    %v4810 = vld [vmem:[#allocation21 + $0x10] sm:$0xf]
    %v4811 = vld [vmem:[#allocation21 + $0x14] sm:$0xf]
    %v4812 = vld [vmem:[#allocation21 + $0x18] sm:$0xf]
    %v4813 = vld [vmem:[#allocation21 + $0x1c] sm:$0xf]
    %v4814 = vld [vmem:[#allocation21 + $0x20] sm:$0xf]
    %v4815 = vld [vmem:[#allocation21 + $0x24] sm:$0xf]
    %v4816 = vld [vmem:[#allocation21 + $0x28] sm:$0xf]
    %v4817 = vld [vmem:[#allocation21 + $0x2c] sm:$0xf]
    %v4818 = vld [vmem:[#allocation21 + $0x30] sm:$0x3]
    %v4819 = vld [vmem:[#allocation22] sm:$0x1]
    %v4821 = vperm.slane %v4819, 0
    %v4836 = vunpack.c.l.b16 %v4806
    %v4837 = vunpack.c.l.b16 %v4807
    %v4838 = vunpack.c.l.b16 %v4808
    %v4839 = vunpack.c.l.b16 %v4809
    %v4840 = vunpack.c.l.b16 %v4810
    %v4841 = vunpack.c.l.b16 %v4811
    %v4842 = vunpack.c.l.b16 %v4812
    %v4843 = vunpack.c.l.b16 %v4813
    %v4844 = vunpack.c.l.b16 %v4814
    %v4845 = vunpack.c.l.b16 %v4815
    %v4846 = vunpack.c.l.b16 %v4816
    %v4847 = vunpack.c.l.b16 %v4817
    %v4848 = vunpack.c.l.b16 %v4818
    %v4849 = vpack.c.b16 %v4837, %v4836
    %v4850 = vpack.c.b16 %v4839, %v4838
    %v4851 = vpack.c.b16 %v4841, %v4840
    %v4852 = vpack.c.b16 %v4843, %v4842
    %v4853 = vpack.c.b16 %v4845, %v4844
    %v4854 = vpack.c.b16 %v4847, %v4846
    %v4855 = vpack.c.b16 %v4848, %v4848
    %v4863 = vsel %vm2094, %v4855, 0
    %4865 = vmatpush.bf16.msra.mxu0 0
    %4866 = vmatpush.bf16.msra.mxu0 %v4863
    %4867 = vmatpush.bf16.msra.mxu0 %v4854
    %4868 = vmatpush.bf16.msra.mxu0 %v4853
    %4869 = vmatpush.bf16.msra.mxu0 %v4852
    %4870 = vmatpush.bf16.msra.mxu0 %v4851
    %4871 = vmatpush.bf16.msra.mxu0 %v4850
    %4872 = vmatpush.bf16.msra.mxu0 %v4849
    %4873 = vmatmul.bf16.gmra.mxu0 %v2092
    %v4874 = vpop.f32.mrf.mxu0
    %v4875 = vadd.f32 %v4821, %v4874
    %v4876 = vpop.f32.mrf.mxu0
    %4877 = vdwg.mxu0
    %v4878 = vpack.c.bf16 %v4742, %v4742
    %v4881 = vunpack.c.l.b16 %v4804
    %v4882 = vunpack.c.l.b16 %v4805
    %v4883 = vpack.c.b16 %v4882, %v4881
    %4885 = vmatpush.bf16.msra.mxu0 0
    %4886 = vmatpush.bf16.msra.mxu0 0
    %4887 = vmatpush.bf16.msra.mxu0 0
    %4888 = vmatpush.bf16.msra.mxu0 0
    %4889 = vmatpush.bf16.msra.mxu0 0
    %4890 = vmatpush.bf16.msra.mxu0 0
    %4891 = vmatpush.bf16.msra.mxu0 0
    %4892 = vmatpush.bf16.msra.mxu0 %v4883
    %4893 = vmatmul.bf16.gmra.mxu0 %v1057
    %v4894 = vpop.f32.mrf.mxu0
    %v4895 = vadd.f32 0.0, %v4894
    %v4896 = vpop.f32.mrf.mxu0
    %4897 = vdwg.mxu0
    %v4914 = vunpack.c.l.b16 %v4788
    %v4915 = vunpack.c.l.b16 %v4789
    %v4916 = vunpack.c.l.b16 %v4790
    %v4917 = vunpack.c.l.b16 %v4791
    %v4918 = vunpack.c.l.b16 %v4792
    %v4919 = vunpack.c.l.b16 %v4793
    %v4920 = vunpack.c.l.b16 %v4794
    %v4921 = vunpack.c.l.b16 %v4795
    %v4922 = vunpack.c.l.b16 %v4796
    %v4923 = vunpack.c.l.b16 %v4797
    %v4924 = vunpack.c.l.b16 %v4798
    %v4925 = vunpack.c.l.b16 %v4799
    %v4926 = vunpack.c.l.b16 %v4800
    %v4927 = vunpack.c.l.b16 %v4801
    %v4928 = vunpack.c.l.b16 %v4802
    %v4929 = vunpack.c.l.b16 %v4803
    %v4930 = vpack.c.b16 %v4915, %v4914
    %v4931 = vpack.c.b16 %v4917, %v4916
    %v4932 = vpack.c.b16 %v4919, %v4918
    %v4933 = vpack.c.b16 %v4921, %v4920
    %v4934 = vpack.c.b16 %v4923, %v4922
    %v4935 = vpack.c.b16 %v4925, %v4924
    %v4936 = vpack.c.b16 %v4927, %v4926
    %v4937 = vpack.c.b16 %v4929, %v4928
    %4946 = vmatpush.bf16.msra.mxu0 %v4937
    %4947 = vmatpush.bf16.msra.mxu0 %v4936
    %4948 = vmatpush.bf16.msra.mxu0 %v4935
    %4949 = vmatpush.bf16.msra.mxu0 %v4934
    %4950 = vmatpush.bf16.msra.mxu0 %v4933
    %4951 = vmatpush.bf16.msra.mxu0 %v4932
    %4952 = vmatpush.bf16.msra.mxu0 %v4931
    %4953 = vmatpush.bf16.msra.mxu0 %v4930
    %4954 = vmatmul.bf16.gmra.mxu0 %v4878
    %v4955 = vpop.f32.mrf.mxu0
    %v4956 = vadd.f32 %v4895, %v4955
    %v4957 = vpop.f32.mrf.mxu0
    %4958 = vdwg.mxu0
    %v4959 = vadd.f32 %v4956, %v4875
    %v4960 = vxor.u32 %v4959, 2147483648
    %v4961 = vmul.f32 %v4960, 1.442695
    %v4962 = vpow.pop %v4961
    %v4963 = vadd.f32 %v4962, 1.0
    %v4964 = vrcp.pop %v4963
    %v4965 = vmul.f32 %v4963, %v4964
    %v4966 = vsub.f32 1.0, %v4965
    %v4967 = vmul.f32 %v4964, %v4966
    %v4968 = vadd.f32 %v4964, %v4967
    %vm4969 = vweird.f32 %v4963
    %vm4970 = vweird.f32 %v4964
    %vm4971 = vmor %vm4969, %vm4970
    %v4972 = vsel %vm4971, %v4964, %v4968
    %v4973 = vand.u32 2147483647, %v4963
    %vm4974 = vcmp.eq.f32.partialorder %v4973, 8.507059e+37
    %v4975 = vand.u32 %v4963, 2147483648
    %v4976 = vor.u32 1.1754944e-38, %v4975
    %v4977 = vsel %vm4974, %v4976, %v4972
    %v4978 = vmul.f32 1.0, %v4977
    %4979 = vst [vmem:[%s27] sm:$0xf] %v4978
    %v4980 = vpack.c.bf16 %v4745, %v4745
    %4981 = vmatpush.bf16.msra.mxu0 0
    %4982 = vmatpush.bf16.msra.mxu0 0
    %4983 = vmatpush.bf16.msra.mxu0 0
    %4984 = vmatpush.bf16.msra.mxu0 0
    %4985 = vmatpush.bf16.msra.mxu0 0
    %4986 = vmatpush.bf16.msra.mxu0 0
    %4987 = vmatpush.bf16.msra.mxu0 0
    %4988 = vmatpush.bf16.msra.mxu0 %v4883
    %4989 = vmatmul.bf16.gmra.mxu0 %v1035
    %v4990 = vpop.f32.mrf.mxu0
    %v4991 = vadd.f32 0.0, %v4990
    %v4992 = vpop.f32.mrf.mxu0
    %4993 = vdwg.mxu0
    %4994 = vmatpush.bf16.msra.mxu0 %v4937
    %4995 = vmatpush.bf16.msra.mxu0 %v4936
    %4996 = vmatpush.bf16.msra.mxu0 %v4935
    %4997 = vmatpush.bf16.msra.mxu0 %v4934
    %4998 = vmatpush.bf16.msra.mxu0 %v4933
    %4999 = vmatpush.bf16.msra.mxu0 %v4932
    %5000 = vmatpush.bf16.msra.mxu0 %v4931
    %5001 = vmatpush.bf16.msra.mxu0 %v4930
    %5002 = vmatmul.bf16.gmra.mxu0 %v4980
    %v5003 = vpop.f32.mrf.mxu0
    %v5004 = vadd.f32 %v4991, %v5003
    %v5005 = vpop.f32.mrf.mxu0
    %5006 = vdwg.mxu0
    %v5007 = vadd.f32 %v5004, %v4875
    %v5008 = vxor.u32 %v5007, 2147483648
    %v5009 = vmul.f32 %v5008, 1.442695
    %v5010 = vpow.pop %v5009
    %v5011 = vadd.f32 %v5010, 1.0
    %v5012 = vrcp.pop %v5011
    %v5013 = vmul.f32 %v5011, %v5012
    %v5014 = vsub.f32 1.0, %v5013
    %v5015 = vmul.f32 %v5012, %v5014
    %v5016 = vadd.f32 %v5012, %v5015
    %vm5017 = vweird.f32 %v5011
    %vm5018 = vweird.f32 %v5012
    %vm5019 = vmor %vm5017, %vm5018
    %v5020 = vsel %vm5019, %v5012, %v5016
    %v5021 = vand.u32 2147483647, %v5011
    %vm5022 = vcmp.eq.f32.partialorder %v5021, 8.507059e+37
    %v5023 = vand.u32 %v5011, 2147483648
    %v5024 = vor.u32 1.1754944e-38, %v5023
    %v5025 = vsel %vm5022, %v5024, %v5020
    %v5026 = vmul.f32 1.0, %v5025
    %s5027 = scalar_lea.vmem %s27, 4
    %5028 = vst [vmem:[%s5027] sm:$0xf] %v5026
    %v5029 = vpack.c.bf16 %v4748, %v4748
    %5030 = vmatpush.bf16.msra.mxu0 0
    %5031 = vmatpush.bf16.msra.mxu0 0
    %5032 = vmatpush.bf16.msra.mxu0 0
    %5033 = vmatpush.bf16.msra.mxu0 0
    %5034 = vmatpush.bf16.msra.mxu0 0
    %5035 = vmatpush.bf16.msra.mxu0 0
    %5036 = vmatpush.bf16.msra.mxu0 0
    %5037 = vmatpush.bf16.msra.mxu0 %v4883
    %5038 = vmatmul.bf16.gmra.mxu0 %v1095
    %v5039 = vpop.f32.mrf.mxu0
    %v5040 = vadd.f32 0.0, %v5039
    %v5041 = vpop.f32.mrf.mxu0
    %5042 = vdwg.mxu0
    %5043 = vmatpush.bf16.msra.mxu0 %v4937
    %5044 = vmatpush.bf16.msra.mxu0 %v4936
    %5045 = vmatpush.bf16.msra.mxu0 %v4935
    %5046 = vmatpush.bf16.msra.mxu0 %v4934
    %5047 = vmatpush.bf16.msra.mxu0 %v4933
    %5048 = vmatpush.bf16.msra.mxu0 %v4932
    %5049 = vmatpush.bf16.msra.mxu0 %v4931
    %5050 = vmatpush.bf16.msra.mxu0 %v4930
    %5051 = vmatmul.bf16.gmra.mxu0 %v5029
    %v5052 = vpop.f32.mrf.mxu0
    %v5053 = vadd.f32 %v5040, %v5052
    %v5054 = vpop.f32.mrf.mxu0
    %5055 = vdwg.mxu0
    %v5056 = vadd.f32 %v5053, %v4875
    %v5057 = vxor.u32 %v5056, 2147483648
    %v5058 = vmul.f32 %v5057, 1.442695
    %v5059 = vpow.pop %v5058
    %v5060 = vadd.f32 %v5059, 1.0
    %v5061 = vrcp.pop %v5060
    %v5062 = vmul.f32 %v5060, %v5061
    %v5063 = vsub.f32 1.0, %v5062
    %v5064 = vmul.f32 %v5061, %v5063
    %v5065 = vadd.f32 %v5061, %v5064
    %vm5066 = vweird.f32 %v5060
    %vm5067 = vweird.f32 %v5061
    %vm5068 = vmor %vm5066, %vm5067
    %v5069 = vsel %vm5068, %v5061, %v5065
    %v5070 = vand.u32 2147483647, %v5060
    %vm5071 = vcmp.eq.f32.partialorder %v5070, 8.507059e+37
    %v5072 = vand.u32 %v5060, 2147483648
    %v5073 = vor.u32 1.1754944e-38, %v5072
    %v5074 = vsel %vm5071, %v5073, %v5069
    %v5075 = vmul.f32 1.0, %v5074
    %s5076 = scalar_lea.vmem %s27, 8
    %5077 = vst [vmem:[%s5076] sm:$0xf] %v5075
    %v5078 = vpack.c.bf16 %v4751, %v4751
    %5079 = vmatpush.bf16.msra.mxu0 0
    %5080 = vmatpush.bf16.msra.mxu0 0
    %5081 = vmatpush.bf16.msra.mxu0 0
    %5082 = vmatpush.bf16.msra.mxu0 0
    %5083 = vmatpush.bf16.msra.mxu0 0
    %5084 = vmatpush.bf16.msra.mxu0 0
    %5085 = vmatpush.bf16.msra.mxu0 0
    %5086 = vmatpush.bf16.msra.mxu0 %v4883
    %5087 = vmatmul.bf16.gmra.mxu0 %v1079
    %v5088 = vpop.f32.mrf.mxu0
    %v5089 = vadd.f32 0.0, %v5088
    %v5090 = vpop.f32.mrf.mxu0
    %5091 = vdwg.mxu0
    %5092 = vmatpush.bf16.msra.mxu0 %v4937
    %5093 = vmatpush.bf16.msra.mxu0 %v4936
    %5094 = vmatpush.bf16.msra.mxu0 %v4935
    %5095 = vmatpush.bf16.msra.mxu0 %v4934
    %5096 = vmatpush.bf16.msra.mxu0 %v4933
    %5097 = vmatpush.bf16.msra.mxu0 %v4932
    %5098 = vmatpush.bf16.msra.mxu0 %v4931
    %5099 = vmatpush.bf16.msra.mxu0 %v4930
    %5100 = vmatmul.bf16.gmra.mxu0 %v5078
    %v5101 = vpop.f32.mrf.mxu0
    %v5102 = vadd.f32 %v5089, %v5101
    %v5103 = vpop.f32.mrf.mxu0
    %5104 = vdwg.mxu0
    %v5105 = vadd.f32 %v5102, %v4875
    %v5106 = vxor.u32 %v5105, 2147483648
    %v5107 = vmul.f32 %v5106, 1.442695
    %v5108 = vpow.pop %v5107
    %v5109 = vadd.f32 %v5108, 1.0
    %v5110 = vrcp.pop %v5109
    %v5111 = vmul.f32 %v5109, %v5110
    %v5112 = vsub.f32 1.0, %v5111
    %v5113 = vmul.f32 %v5110, %v5112
    %v5114 = vadd.f32 %v5110, %v5113
    %vm5115 = vweird.f32 %v5109
    %vm5116 = vweird.f32 %v5110
    %vm5117 = vmor %vm5115, %vm5116
    %v5118 = vsel %vm5117, %v5110, %v5114
    %v5119 = vand.u32 2147483647, %v5109
    %vm5120 = vcmp.eq.f32.partialorder %v5119, 8.507059e+37
    %v5121 = vand.u32 %v5109, 2147483648
    %v5122 = vor.u32 1.1754944e-38, %v5121
    %v5123 = vsel %vm5120, %v5122, %v5118
    %v5124 = vmul.f32 1.0, %v5123
    %s5125 = scalar_lea.vmem %s27, 12
    %5126 = vst [vmem:[%s5125] sm:$0xf] %v5124
    %v5127 = vpack.c.bf16 %v4754, %v4754
    %5128 = vmatpush.bf16.msra.mxu0 0
    %5129 = vmatpush.bf16.msra.mxu0 0
    %5130 = vmatpush.bf16.msra.mxu0 0
    %5131 = vmatpush.bf16.msra.mxu0 0
    %5132 = vmatpush.bf16.msra.mxu0 0
    %5133 = vmatpush.bf16.msra.mxu0 0
    %5134 = vmatpush.bf16.msra.mxu0 0
    %5135 = vmatpush.bf16.msra.mxu0 %v4883
    %5136 = vmatmul.bf16.gmra.mxu0 %v1130
    %v5137 = vpop.f32.mrf.mxu0
    %v5138 = vadd.f32 0.0, %v5137
    %v5139 = vpop.f32.mrf.mxu0
    %5140 = vdwg.mxu0
    %5141 = vmatpush.bf16.msra.mxu0 %v4937
    %5142 = vmatpush.bf16.msra.mxu0 %v4936
    %5143 = vmatpush.bf16.msra.mxu0 %v4935
    %5144 = vmatpush.bf16.msra.mxu0 %v4934
    %5145 = vmatpush.bf16.msra.mxu0 %v4933
    %5146 = vmatpush.bf16.msra.mxu0 %v4932
    %5147 = vmatpush.bf16.msra.mxu0 %v4931
    %5148 = vmatpush.bf16.msra.mxu0 %v4930
    %5149 = vmatmul.bf16.gmra.mxu0 %v5127
    %v5150 = vpop.f32.mrf.mxu0
    %v5151 = vadd.f32 %v5138, %v5150
    %v5152 = vpop.f32.mrf.mxu0
    %5153 = vdwg.mxu0
    %v5154 = vadd.f32 %v5151, %v4875
    %v5155 = vxor.u32 %v5154, 2147483648
    %v5156 = vmul.f32 %v5155, 1.442695
    %v5157 = vpow.pop %v5156
    %v5158 = vadd.f32 %v5157, 1.0
    %v5159 = vrcp.pop %v5158
    %v5160 = vmul.f32 %v5158, %v5159
    %v5161 = vsub.f32 1.0, %v5160
    %v5162 = vmul.f32 %v5159, %v5161
    %v5163 = vadd.f32 %v5159, %v5162
    %vm5164 = vweird.f32 %v5158
    %vm5165 = vweird.f32 %v5159
    %vm5166 = vmor %vm5164, %vm5165
    %v5167 = vsel %vm5166, %v5159, %v5163
    %v5168 = vand.u32 2147483647, %v5158
    %vm5169 = vcmp.eq.f32.partialorder %v5168, 8.507059e+37
    %v5170 = vand.u32 %v5158, 2147483648
    %v5171 = vor.u32 1.1754944e-38, %v5170
    %v5172 = vsel %vm5169, %v5171, %v5167
    %v5173 = vmul.f32 1.0, %v5172
    %s5174 = scalar_lea.vmem %s27, 16
    %5175 = vst [vmem:[%s5174] sm:$0xf] %v5173
    %v5176 = vpack.c.bf16 %v4757, %v4757
    %5177 = vmatpush.bf16.msra.mxu0 0
    %5178 = vmatpush.bf16.msra.mxu0 0
    %5179 = vmatpush.bf16.msra.mxu0 0
    %5180 = vmatpush.bf16.msra.mxu0 0
    %5181 = vmatpush.bf16.msra.mxu0 0
    %5182 = vmatpush.bf16.msra.mxu0 0
    %5183 = vmatpush.bf16.msra.mxu0 0
    %5184 = vmatpush.bf16.msra.mxu0 %v4883
    %5185 = vmatmul.bf16.gmra.mxu0 %v1114
    %v5186 = vpop.f32.mrf.mxu0
    %v5187 = vadd.f32 0.0, %v5186
    %v5188 = vpop.f32.mrf.mxu0
    %5189 = vdwg.mxu0
    %5190 = vmatpush.bf16.msra.mxu0 %v4937
    %5191 = vmatpush.bf16.msra.mxu0 %v4936
    %5192 = vmatpush.bf16.msra.mxu0 %v4935
    %5193 = vmatpush.bf16.msra.mxu0 %v4934
    %5194 = vmatpush.bf16.msra.mxu0 %v4933
    %5195 = vmatpush.bf16.msra.mxu0 %v4932
    %5196 = vmatpush.bf16.msra.mxu0 %v4931
    %5197 = vmatpush.bf16.msra.mxu0 %v4930
    %5198 = vmatmul.bf16.gmra.mxu0 %v5176
    %v5199 = vpop.f32.mrf.mxu0
    %v5200 = vadd.f32 %v5187, %v5199
    %v5201 = vpop.f32.mrf.mxu0
    %5202 = vdwg.mxu0
    %v5203 = vadd.f32 %v5200, %v4875
    %v5204 = vxor.u32 %v5203, 2147483648
    %v5205 = vmul.f32 %v5204, 1.442695
    %v5206 = vpow.pop %v5205
    %v5207 = vadd.f32 %v5206, 1.0
    %v5208 = vrcp.pop %v5207
    %v5209 = vmul.f32 %v5207, %v5208
    %v5210 = vsub.f32 1.0, %v5209
    %v5211 = vmul.f32 %v5208, %v5210
    %v5212 = vadd.f32 %v5208, %v5211
    %vm5213 = vweird.f32 %v5207
    %vm5214 = vweird.f32 %v5208
    %vm5215 = vmor %vm5213, %vm5214
    %v5216 = vsel %vm5215, %v5208, %v5212
    %v5217 = vand.u32 2147483647, %v5207
    %vm5218 = vcmp.eq.f32.partialorder %v5217, 8.507059e+37
    %v5219 = vand.u32 %v5207, 2147483648
    %v5220 = vor.u32 1.1754944e-38, %v5219
    %v5221 = vsel %vm5218, %v5220, %v5216
    %v5222 = vmul.f32 1.0, %v5221
    %s5223 = scalar_lea.vmem %s27, 20
    %5224 = vst [vmem:[%s5223] sm:$0xf] %v5222
    %v5225 = vpack.c.bf16 %v4760, %v4760
    %5226 = vmatpush.bf16.msra.mxu0 0
    %5227 = vmatpush.bf16.msra.mxu0 0
    %5228 = vmatpush.bf16.msra.mxu0 0
    %5229 = vmatpush.bf16.msra.mxu0 0
    %5230 = vmatpush.bf16.msra.mxu0 0
    %5231 = vmatpush.bf16.msra.mxu0 0
    %5232 = vmatpush.bf16.msra.mxu0 0
    %5233 = vmatpush.bf16.msra.mxu0 %v4883
    %5234 = vmatmul.bf16.gmra.mxu0 %v1165
    %v5235 = vpop.f32.mrf.mxu0
    %v5236 = vadd.f32 0.0, %v5235
    %v5237 = vpop.f32.mrf.mxu0
    %5238 = vdwg.mxu0
    %5239 = vmatpush.bf16.msra.mxu0 %v4937
    %5240 = vmatpush.bf16.msra.mxu0 %v4936
    %5241 = vmatpush.bf16.msra.mxu0 %v4935
    %5242 = vmatpush.bf16.msra.mxu0 %v4934
    %5243 = vmatpush.bf16.msra.mxu0 %v4933
    %5244 = vmatpush.bf16.msra.mxu0 %v4932
    %5245 = vmatpush.bf16.msra.mxu0 %v4931
    %5246 = vmatpush.bf16.msra.mxu0 %v4930
    %5247 = vmatmul.bf16.gmra.mxu0 %v5225
    %v5248 = vpop.f32.mrf.mxu0
    %v5249 = vadd.f32 %v5236, %v5248
    %v5250 = vpop.f32.mrf.mxu0
    %5251 = vdwg.mxu0
    %v5252 = vadd.f32 %v5249, %v4875
    %v5253 = vxor.u32 %v5252, 2147483648
    %v5254 = vmul.f32 %v5253, 1.442695
    %v5255 = vpow.pop %v5254
    %v5256 = vadd.f32 %v5255, 1.0
    %v5257 = vrcp.pop %v5256
    %v5258 = vmul.f32 %v5256, %v5257
    %v5259 = vsub.f32 1.0, %v5258
    %v5260 = vmul.f32 %v5257, %v5259
    %v5261 = vadd.f32 %v5257, %v5260
    %vm5262 = vweird.f32 %v5256
    %vm5263 = vweird.f32 %v5257
    %vm5264 = vmor %vm5262, %vm5263
    %v5265 = vsel %vm5264, %v5257, %v5261
    %v5266 = vand.u32 2147483647, %v5256
    %vm5267 = vcmp.eq.f32.partialorder %v5266, 8.507059e+37
    %v5268 = vand.u32 %v5256, 2147483648
    %v5269 = vor.u32 1.1754944e-38, %v5268
    %v5270 = vsel %vm5267, %v5269, %v5265
    %v5271 = vmul.f32 1.0, %v5270
    %s5272 = scalar_lea.vmem %s27, 24
    %5273 = vst [vmem:[%s5272] sm:$0xf] %v5271
    %v5274 = vpack.c.bf16 %v4763, %v4763
    %5275 = vmatpush.bf16.msra.mxu0 0
    %5276 = vmatpush.bf16.msra.mxu0 0
    %5277 = vmatpush.bf16.msra.mxu0 0
    %5278 = vmatpush.bf16.msra.mxu0 0
    %5279 = vmatpush.bf16.msra.mxu0 0
    %5280 = vmatpush.bf16.msra.mxu0 0
    %5281 = vmatpush.bf16.msra.mxu0 0
    %5282 = vmatpush.bf16.msra.mxu0 %v4883
    %5283 = vmatmul.bf16.gmra.mxu0 %v1149
    %v5284 = vpop.f32.mrf.mxu0
    %v5285 = vadd.f32 0.0, %v5284
    %v5286 = vpop.f32.mrf.mxu0
    %5287 = vdwg.mxu0
    %5288 = vmatpush.bf16.msra.mxu0 %v4937
    %5289 = vmatpush.bf16.msra.mxu0 %v4936
    %5290 = vmatpush.bf16.msra.mxu0 %v4935
    %5291 = vmatpush.bf16.msra.mxu0 %v4934
    %5292 = vmatpush.bf16.msra.mxu0 %v4933
    %5293 = vmatpush.bf16.msra.mxu0 %v4932
    %5294 = vmatpush.bf16.msra.mxu0 %v4931
    %5295 = vmatpush.bf16.msra.mxu0 %v4930
    %5296 = vmatmul.bf16.gmra.mxu0 %v5274
    %v5297 = vpop.f32.mrf.mxu0
    %v5298 = vadd.f32 %v5285, %v5297
    %v5299 = vpop.f32.mrf.mxu0
    %5300 = vdwg.mxu0
    %v5301 = vadd.f32 %v5298, %v4875
    %v5302 = vxor.u32 %v5301, 2147483648
    %v5303 = vmul.f32 %v5302, 1.442695
    %v5304 = vpow.pop %v5303
    %v5305 = vadd.f32 %v5304, 1.0
    %v5306 = vrcp.pop %v5305
    %v5307 = vmul.f32 %v5305, %v5306
    %v5308 = vsub.f32 1.0, %v5307
    %v5309 = vmul.f32 %v5306, %v5308
    %v5310 = vadd.f32 %v5306, %v5309
    %vm5311 = vweird.f32 %v5305
    %vm5312 = vweird.f32 %v5306
    %vm5313 = vmor %vm5311, %vm5312
    %v5314 = vsel %vm5313, %v5306, %v5310
    %v5315 = vand.u32 2147483647, %v5305
    %vm5316 = vcmp.eq.f32.partialorder %v5315, 8.507059e+37
    %v5317 = vand.u32 %v5305, 2147483648
    %v5318 = vor.u32 1.1754944e-38, %v5317
    %v5319 = vsel %vm5316, %v5318, %v5314
    %v5320 = vmul.f32 1.0, %v5319
    %s5321 = scalar_lea.vmem %s27, 28
    %5322 = vst [vmem:[%s5321] sm:$0xf] %v5320
    %v5323 = vpack.c.bf16 %v4766, %v4766
    %5324 = vmatpush.bf16.msra.mxu0 0
    %5325 = vmatpush.bf16.msra.mxu0 0
    %5326 = vmatpush.bf16.msra.mxu0 0
    %5327 = vmatpush.bf16.msra.mxu0 0
    %5328 = vmatpush.bf16.msra.mxu0 0
    %5329 = vmatpush.bf16.msra.mxu0 0
    %5330 = vmatpush.bf16.msra.mxu0 0
    %5331 = vmatpush.bf16.msra.mxu0 %v4883
    %5332 = vmatmul.bf16.gmra.mxu0 %v1200
    %v5333 = vpop.f32.mrf.mxu0
    %v5334 = vadd.f32 0.0, %v5333
    %v5335 = vpop.f32.mrf.mxu0
    %5336 = vdwg.mxu0
    %5337 = vmatpush.bf16.msra.mxu0 %v4937
    %5338 = vmatpush.bf16.msra.mxu0 %v4936
    %5339 = vmatpush.bf16.msra.mxu0 %v4935
    %5340 = vmatpush.bf16.msra.mxu0 %v4934
    %5341 = vmatpush.bf16.msra.mxu0 %v4933
    %5342 = vmatpush.bf16.msra.mxu0 %v4932
    %5343 = vmatpush.bf16.msra.mxu0 %v4931
    %5344 = vmatpush.bf16.msra.mxu0 %v4930
    %5345 = vmatmul.bf16.gmra.mxu0 %v5323
    %v5346 = vpop.f32.mrf.mxu0
    %v5347 = vadd.f32 %v5334, %v5346
    %v5348 = vpop.f32.mrf.mxu0
    %5349 = vdwg.mxu0
    %v5350 = vadd.f32 %v5347, %v4875
    %v5351 = vxor.u32 %v5350, 2147483648
    %v5352 = vmul.f32 %v5351, 1.442695
    %v5353 = vpow.pop %v5352
    %v5354 = vadd.f32 %v5353, 1.0
    %v5355 = vrcp.pop %v5354
    %v5356 = vmul.f32 %v5354, %v5355
    %v5357 = vsub.f32 1.0, %v5356
    %v5358 = vmul.f32 %v5355, %v5357
    %v5359 = vadd.f32 %v5355, %v5358
    %vm5360 = vweird.f32 %v5354
    %vm5361 = vweird.f32 %v5355
    %vm5362 = vmor %vm5360, %vm5361
    %v5363 = vsel %vm5362, %v5355, %v5359
    %v5364 = vand.u32 2147483647, %v5354
    %vm5365 = vcmp.eq.f32.partialorder %v5364, 8.507059e+37
    %v5366 = vand.u32 %v5354, 2147483648
    %v5367 = vor.u32 1.1754944e-38, %v5366
    %v5368 = vsel %vm5365, %v5367, %v5363
    %v5369 = vmul.f32 1.0, %v5368
    %s5370 = scalar_lea.vmem %s27, 32
    %5371 = vst [vmem:[%s5370] sm:$0xf] %v5369
    %v5372 = vpack.c.bf16 %v4769, %v4769
    %5373 = vmatpush.bf16.msra.mxu0 0
    %5374 = vmatpush.bf16.msra.mxu0 0
    %5375 = vmatpush.bf16.msra.mxu0 0
    %5376 = vmatpush.bf16.msra.mxu0 0
    %5377 = vmatpush.bf16.msra.mxu0 0
    %5378 = vmatpush.bf16.msra.mxu0 0
    %5379 = vmatpush.bf16.msra.mxu0 0
    %5380 = vmatpush.bf16.msra.mxu0 %v4883
    %5381 = vmatmul.bf16.gmra.mxu0 %v1184
    %v5382 = vpop.f32.mrf.mxu0
    %v5383 = vadd.f32 0.0, %v5382
    %v5384 = vpop.f32.mrf.mxu0
    %5385 = vdwg.mxu0
    %5386 = vmatpush.bf16.msra.mxu0 %v4937
    %5387 = vmatpush.bf16.msra.mxu0 %v4936
    %5388 = vmatpush.bf16.msra.mxu0 %v4935
    %5389 = vmatpush.bf16.msra.mxu0 %v4934
    %5390 = vmatpush.bf16.msra.mxu0 %v4933
    %5391 = vmatpush.bf16.msra.mxu0 %v4932
    %5392 = vmatpush.bf16.msra.mxu0 %v4931
    %5393 = vmatpush.bf16.msra.mxu0 %v4930
    %5394 = vmatmul.bf16.gmra.mxu0 %v5372
    %v5395 = vpop.f32.mrf.mxu0
    %v5396 = vadd.f32 %v5383, %v5395
    %v5397 = vpop.f32.mrf.mxu0
    %5398 = vdwg.mxu0
    %v5399 = vadd.f32 %v5396, %v4875
    %v5400 = vxor.u32 %v5399, 2147483648
    %v5401 = vmul.f32 %v5400, 1.442695
    %v5402 = vpow.pop %v5401
    %v5403 = vadd.f32 %v5402, 1.0
    %v5404 = vrcp.pop %v5403
    %v5405 = vmul.f32 %v5403, %v5404
    %v5406 = vsub.f32 1.0, %v5405
    %v5407 = vmul.f32 %v5404, %v5406
    %v5408 = vadd.f32 %v5404, %v5407
    %vm5409 = vweird.f32 %v5403
    %vm5410 = vweird.f32 %v5404
    %vm5411 = vmor %vm5409, %vm5410
    %v5412 = vsel %vm5411, %v5404, %v5408
    %v5413 = vand.u32 2147483647, %v5403
    %vm5414 = vcmp.eq.f32.partialorder %v5413, 8.507059e+37
    %v5415 = vand.u32 %v5403, 2147483648
    %v5416 = vor.u32 1.1754944e-38, %v5415
    %v5417 = vsel %vm5414, %v5416, %v5412
    %v5418 = vmul.f32 1.0, %v5417
    %s5419 = scalar_lea.vmem %s27, 36
    %5420 = vst [vmem:[%s5419] sm:$0xf] %v5418
    %v5421 = vpack.c.bf16 %v4772, %v4772
    %5422 = vmatpush.bf16.msra.mxu0 0
    %5423 = vmatpush.bf16.msra.mxu0 0
    %5424 = vmatpush.bf16.msra.mxu0 0
    %5425 = vmatpush.bf16.msra.mxu0 0
    %5426 = vmatpush.bf16.msra.mxu0 0
    %5427 = vmatpush.bf16.msra.mxu0 0
    %5428 = vmatpush.bf16.msra.mxu0 0
    %5429 = vmatpush.bf16.msra.mxu0 %v4883
    %5430 = vmatmul.bf16.gmra.mxu0 %v1235
    %v5431 = vpop.f32.mrf.mxu0
    %v5432 = vadd.f32 0.0, %v5431
    %v5433 = vpop.f32.mrf.mxu0
    %5434 = vdwg.mxu0
    %5435 = vmatpush.bf16.msra.mxu0 %v4937
    %5436 = vmatpush.bf16.msra.mxu0 %v4936
    %5437 = vmatpush.bf16.msra.mxu0 %v4935
    %5438 = vmatpush.bf16.msra.mxu0 %v4934
    %5439 = vmatpush.bf16.msra.mxu0 %v4933
    %5440 = vmatpush.bf16.msra.mxu0 %v4932
    %5441 = vmatpush.bf16.msra.mxu0 %v4931
    %5442 = vmatpush.bf16.msra.mxu0 %v4930
    %5443 = vmatmul.bf16.gmra.mxu0 %v5421
    %v5444 = vpop.f32.mrf.mxu0
    %v5445 = vadd.f32 %v5432, %v5444
    %v5446 = vpop.f32.mrf.mxu0
    %5447 = vdwg.mxu0
    %v5448 = vadd.f32 %v5445, %v4875
    %v5449 = vxor.u32 %v5448, 2147483648
    %v5450 = vmul.f32 %v5449, 1.442695
    %v5451 = vpow.pop %v5450
    %v5452 = vadd.f32 %v5451, 1.0
    %v5453 = vrcp.pop %v5452
    %v5454 = vmul.f32 %v5452, %v5453
    %v5455 = vsub.f32 1.0, %v5454
    %v5456 = vmul.f32 %v5453, %v5455
    %v5457 = vadd.f32 %v5453, %v5456
    %vm5458 = vweird.f32 %v5452
    %vm5459 = vweird.f32 %v5453
    %vm5460 = vmor %vm5458, %vm5459
    %v5461 = vsel %vm5460, %v5453, %v5457
    %v5462 = vand.u32 2147483647, %v5452
    %vm5463 = vcmp.eq.f32.partialorder %v5462, 8.507059e+37
    %v5464 = vand.u32 %v5452, 2147483648
    %v5465 = vor.u32 1.1754944e-38, %v5464
    %v5466 = vsel %vm5463, %v5465, %v5461
    %v5467 = vmul.f32 1.0, %v5466
    %s5468 = scalar_lea.vmem %s27, 40
    %5469 = vst [vmem:[%s5468] sm:$0xf] %v5467
    %v5470 = vpack.c.bf16 %v4775, %v4775
    %5471 = vmatpush.bf16.msra.mxu0 0
    %5472 = vmatpush.bf16.msra.mxu0 0
    %5473 = vmatpush.bf16.msra.mxu0 0
    %5474 = vmatpush.bf16.msra.mxu0 0
    %5475 = vmatpush.bf16.msra.mxu0 0
    %5476 = vmatpush.bf16.msra.mxu0 0
    %5477 = vmatpush.bf16.msra.mxu0 0
    %5478 = vmatpush.bf16.msra.mxu0 %v4883
    %5479 = vmatmul.bf16.gmra.mxu0 %v1219
    %v5480 = vpop.f32.mrf.mxu0
    %v5481 = vadd.f32 0.0, %v5480
    %v5482 = vpop.f32.mrf.mxu0
    %5483 = vdwg.mxu0
    %5484 = vmatpush.bf16.msra.mxu0 %v4937
    %5485 = vmatpush.bf16.msra.mxu0 %v4936
    %5486 = vmatpush.bf16.msra.mxu0 %v4935
    %5487 = vmatpush.bf16.msra.mxu0 %v4934
    %5488 = vmatpush.bf16.msra.mxu0 %v4933
    %5489 = vmatpush.bf16.msra.mxu0 %v4932
    %5490 = vmatpush.bf16.msra.mxu0 %v4931
    %5491 = vmatpush.bf16.msra.mxu0 %v4930
    %5492 = vmatmul.bf16.gmra.mxu0 %v5470
    %v5493 = vpop.f32.mrf.mxu0
    %v5494 = vadd.f32 %v5481, %v5493
    %v5495 = vpop.f32.mrf.mxu0
    %5496 = vdwg.mxu0
    %v5497 = vadd.f32 %v5494, %v4875
    %v5498 = vxor.u32 %v5497, 2147483648
    %v5499 = vmul.f32 %v5498, 1.442695
    %v5500 = vpow.pop %v5499
    %v5501 = vadd.f32 %v5500, 1.0
    %v5502 = vrcp.pop %v5501
    %v5503 = vmul.f32 %v5501, %v5502
    %v5504 = vsub.f32 1.0, %v5503
    %v5505 = vmul.f32 %v5502, %v5504
    %v5506 = vadd.f32 %v5502, %v5505
    %vm5507 = vweird.f32 %v5501
    %vm5508 = vweird.f32 %v5502
    %vm5509 = vmor %vm5507, %vm5508
    %v5510 = vsel %vm5509, %v5502, %v5506
    %v5511 = vand.u32 2147483647, %v5501
    %vm5512 = vcmp.eq.f32.partialorder %v5511, 8.507059e+37
    %v5513 = vand.u32 %v5501, 2147483648
    %v5514 = vor.u32 1.1754944e-38, %v5513
    %v5515 = vsel %vm5512, %v5514, %v5510
    %v5516 = vmul.f32 1.0, %v5515
    %s5517 = scalar_lea.vmem %s27, 44
    %5518 = vst [vmem:[%s5517] sm:$0xf] %v5516
    %v5519 = vpack.c.bf16 %v4778, %v4778
    %5520 = vmatpush.bf16.msra.mxu0 0
    %5521 = vmatpush.bf16.msra.mxu0 0
    %5522 = vmatpush.bf16.msra.mxu0 0
    %5523 = vmatpush.bf16.msra.mxu0 0
    %5524 = vmatpush.bf16.msra.mxu0 0
    %5525 = vmatpush.bf16.msra.mxu0 0
    %5526 = vmatpush.bf16.msra.mxu0 0
    %5527 = vmatpush.bf16.msra.mxu0 %v4883
    %5528 = vmatmul.bf16.gmra.mxu0 %v1270
    %v5529 = vpop.f32.mrf.mxu0
    %v5530 = vadd.f32 0.0, %v5529
    %v5531 = vpop.f32.mrf.mxu0
    %5532 = vdwg.mxu0
    %5533 = vmatpush.bf16.msra.mxu0 %v4937
    %5534 = vmatpush.bf16.msra.mxu0 %v4936
    %5535 = vmatpush.bf16.msra.mxu0 %v4935
    %5536 = vmatpush.bf16.msra.mxu0 %v4934
    %5537 = vmatpush.bf16.msra.mxu0 %v4933
    %5538 = vmatpush.bf16.msra.mxu0 %v4932
    %5539 = vmatpush.bf16.msra.mxu0 %v4931
    %5540 = vmatpush.bf16.msra.mxu0 %v4930
    %5541 = vmatmul.bf16.gmra.mxu0 %v5519
    %v5542 = vpop.f32.mrf.mxu0
    %v5543 = vadd.f32 %v5530, %v5542
    %v5544 = vpop.f32.mrf.mxu0
    %5545 = vdwg.mxu0
    %v5546 = vadd.f32 %v5543, %v4875
    %v5547 = vxor.u32 %v5546, 2147483648
    %v5548 = vmul.f32 %v5547, 1.442695
    %v5549 = vpow.pop %v5548
    %v5550 = vadd.f32 %v5549, 1.0
    %v5551 = vrcp.pop %v5550
    %v5552 = vmul.f32 %v5550, %v5551
    %v5553 = vsub.f32 1.0, %v5552
    %v5554 = vmul.f32 %v5551, %v5553
    %v5555 = vadd.f32 %v5551, %v5554
    %vm5556 = vweird.f32 %v5550
    %vm5557 = vweird.f32 %v5551
    %vm5558 = vmor %vm5556, %vm5557
    %v5559 = vsel %vm5558, %v5551, %v5555
    %v5560 = vand.u32 2147483647, %v5550
    %vm5561 = vcmp.eq.f32.partialorder %v5560, 8.507059e+37
    %v5562 = vand.u32 %v5550, 2147483648
    %v5563 = vor.u32 1.1754944e-38, %v5562
    %v5564 = vsel %vm5561, %v5563, %v5559
    %v5565 = vmul.f32 1.0, %v5564
    %s5566 = scalar_lea.vmem %s27, 48
    %5567 = vst [vmem:[%s5566] sm:$0xf] %v5565
    %v5568 = vpack.c.bf16 %v4781, %v4781
    %5569 = vmatpush.bf16.msra.mxu0 0
    %5570 = vmatpush.bf16.msra.mxu0 0
    %5571 = vmatpush.bf16.msra.mxu0 0
    %5572 = vmatpush.bf16.msra.mxu0 0
    %5573 = vmatpush.bf16.msra.mxu0 0
    %5574 = vmatpush.bf16.msra.mxu0 0
    %5575 = vmatpush.bf16.msra.mxu0 0
    %5576 = vmatpush.bf16.msra.mxu0 %v4883
    %5577 = vmatmul.bf16.gmra.mxu0 %v1254
    %v5578 = vpop.f32.mrf.mxu0
    %v5579 = vadd.f32 0.0, %v5578
    %v5580 = vpop.f32.mrf.mxu0
    %5581 = vdwg.mxu0
    %5582 = vmatpush.bf16.msra.mxu0 %v4937
    %5583 = vmatpush.bf16.msra.mxu0 %v4936
    %5584 = vmatpush.bf16.msra.mxu0 %v4935
    %5585 = vmatpush.bf16.msra.mxu0 %v4934
    %5586 = vmatpush.bf16.msra.mxu0 %v4933
    %5587 = vmatpush.bf16.msra.mxu0 %v4932
    %5588 = vmatpush.bf16.msra.mxu0 %v4931
    %5589 = vmatpush.bf16.msra.mxu0 %v4930
    %5590 = vmatmul.bf16.gmra.mxu0 %v5568
    %v5591 = vpop.f32.mrf.mxu0
    %v5592 = vadd.f32 %v5579, %v5591
    %v5593 = vpop.f32.mrf.mxu0
    %5594 = vdwg.mxu0
    %v5595 = vadd.f32 %v5592, %v4875
    %v5596 = vxor.u32 %v5595, 2147483648
    %v5597 = vmul.f32 %v5596, 1.442695
    %v5598 = vpow.pop %v5597
    %v5599 = vadd.f32 %v5598, 1.0
    %v5600 = vrcp.pop %v5599
    %v5601 = vmul.f32 %v5599, %v5600
    %v5602 = vsub.f32 1.0, %v5601
    %v5603 = vmul.f32 %v5600, %v5602
    %v5604 = vadd.f32 %v5600, %v5603
    %vm5605 = vweird.f32 %v5599
    %vm5606 = vweird.f32 %v5600
    %vm5607 = vmor %vm5605, %vm5606
    %v5608 = vsel %vm5607, %v5600, %v5604
    %v5609 = vand.u32 2147483647, %v5599
    %vm5610 = vcmp.eq.f32.partialorder %v5609, 8.507059e+37
    %v5611 = vand.u32 %v5599, 2147483648
    %v5612 = vor.u32 1.1754944e-38, %v5611
    %v5613 = vsel %vm5610, %v5612, %v5608
    %v5614 = vmul.f32 1.0, %v5613
    %s5615 = scalar_lea.vmem %s27, 52
    %5616 = vst [vmem:[%s5615] sm:$0xf] %v5614
    %v5617 = vpack.c.bf16 %v4784, %v4784
    %5618 = vmatpush.bf16.msra.mxu0 0
    %5619 = vmatpush.bf16.msra.mxu0 0
    %5620 = vmatpush.bf16.msra.mxu0 0
    %5621 = vmatpush.bf16.msra.mxu0 0
    %5622 = vmatpush.bf16.msra.mxu0 0
    %5623 = vmatpush.bf16.msra.mxu0 0
    %5624 = vmatpush.bf16.msra.mxu0 0
    %5625 = vmatpush.bf16.msra.mxu0 %v4883
    %5626 = vmatmul.bf16.gmra.mxu0 %v1305
    %v5627 = vpop.f32.mrf.mxu0
    %v5628 = vadd.f32 0.0, %v5627
    %v5629 = vpop.f32.mrf.mxu0
    %5630 = vdwg.mxu0
    %5631 = vmatpush.bf16.msra.mxu0 %v4937
    %5632 = vmatpush.bf16.msra.mxu0 %v4936
    %5633 = vmatpush.bf16.msra.mxu0 %v4935
    %5634 = vmatpush.bf16.msra.mxu0 %v4934
    %5635 = vmatpush.bf16.msra.mxu0 %v4933
    %5636 = vmatpush.bf16.msra.mxu0 %v4932
    %5637 = vmatpush.bf16.msra.mxu0 %v4931
    %5638 = vmatpush.bf16.msra.mxu0 %v4930
    %5639 = vmatmul.bf16.gmra.mxu0 %v5617
    %v5640 = vpop.f32.mrf.mxu0
    %v5641 = vadd.f32 %v5628, %v5640
    %v5642 = vpop.f32.mrf.mxu0
    %5643 = vdwg.mxu0
    %v5644 = vadd.f32 %v5641, %v4875
    %v5645 = vxor.u32 %v5644, 2147483648
    %v5646 = vmul.f32 %v5645, 1.442695
    %v5647 = vpow.pop %v5646
    %v5648 = vadd.f32 %v5647, 1.0
    %v5649 = vrcp.pop %v5648
    %v5650 = vmul.f32 %v5648, %v5649
    %v5651 = vsub.f32 1.0, %v5650
    %v5652 = vmul.f32 %v5649, %v5651
    %v5653 = vadd.f32 %v5649, %v5652
    %vm5654 = vweird.f32 %v5648
    %vm5655 = vweird.f32 %v5649
    %vm5656 = vmor %vm5654, %vm5655
    %v5657 = vsel %vm5656, %v5649, %v5653
    %v5658 = vand.u32 2147483647, %v5648
    %vm5659 = vcmp.eq.f32.partialorder %v5658, 8.507059e+37
    %v5660 = vand.u32 %v5648, 2147483648
    %v5661 = vor.u32 1.1754944e-38, %v5660
    %v5662 = vsel %vm5659, %v5661, %v5657
    %v5663 = vmul.f32 1.0, %v5662
    %s5664 = scalar_lea.vmem %s27, 56
    %5665 = vst [vmem:[%s5664] sm:$0xf] %v5663
    %v5666 = vpack.c.bf16 %v4787, %v4787
    %5667 = vmatpush.bf16.msra.mxu0 0
    %5668 = vmatpush.bf16.msra.mxu0 0
    %5669 = vmatpush.bf16.msra.mxu0 0
    %5670 = vmatpush.bf16.msra.mxu0 0
    %5671 = vmatpush.bf16.msra.mxu0 0
    %5672 = vmatpush.bf16.msra.mxu0 0
    %5673 = vmatpush.bf16.msra.mxu0 0
    %5674 = vmatpush.bf16.msra.mxu0 %v4883
    %5675 = vmatmul.bf16.gmra.mxu0 %v1289
    %v5676 = vpop.f32.mrf.mxu0
    %v5677 = vadd.f32 0.0, %v5676
    %v5678 = vpop.f32.mrf.mxu0
    %5679 = vdwg.mxu0
    %5680 = vmatpush.bf16.msra.mxu0 %v4937
    %5681 = vmatpush.bf16.msra.mxu0 %v4936
    %5682 = vmatpush.bf16.msra.mxu0 %v4935
    %5683 = vmatpush.bf16.msra.mxu0 %v4934
    %5684 = vmatpush.bf16.msra.mxu0 %v4933
    %5685 = vmatpush.bf16.msra.mxu0 %v4932
    %5686 = vmatpush.bf16.msra.mxu0 %v4931
    %5687 = vmatpush.bf16.msra.mxu0 %v4930
    %5688 = vmatmul.bf16.gmra.mxu0 %v5666
    %v5689 = vpop.f32.mrf.mxu0
    %v5690 = vadd.f32 %v5677, %v5689
    %v5691 = vpop.f32.mrf.mxu0
    %5692 = vdwg.mxu0
    %v5693 = vadd.f32 %v5690, %v4875
    %v5694 = vxor.u32 %v5693, 2147483648
    %v5695 = vmul.f32 %v5694, 1.442695
    %v5696 = vpow.pop %v5695
    %v5697 = vadd.f32 %v5696, 1.0
    %v5698 = vrcp.pop %v5697
    %v5699 = vmul.f32 %v5697, %v5698
    %v5700 = vsub.f32 1.0, %v5699
    %v5701 = vmul.f32 %v5698, %v5700
    %v5702 = vadd.f32 %v5698, %v5701
    %vm5703 = vweird.f32 %v5697
    %vm5704 = vweird.f32 %v5698
    %vm5705 = vmor %vm5703, %vm5704
    %v5706 = vsel %vm5705, %v5698, %v5702
    %v5707 = vand.u32 2147483647, %v5697
    %vm5708 = vcmp.eq.f32.partialorder %v5707, 8.507059e+37
    %v5709 = vand.u32 %v5697, 2147483648
    %v5710 = vor.u32 1.1754944e-38, %v5709
    %v5711 = vsel %vm5708, %v5710, %v5706
    %v5712 = vmul.f32 1.0, %v5711
    %s5713 = scalar_lea.vmem %s27, 60
    %5714 = vst [vmem:[%s5713] sm:$0xf] %v5712
    // Predicated region
    $region166: #{sample_generator_forward.1} parent=1 // pred_check
      _
    $region167: #{sample_generator_forward.1} parent=1 // pred_check_branch
      %5716 = sbr.rel (0) target = $region169
    $region168: #{sample_generator_forward.1} parent=1 // pred_region
      _
    $region169: #{sample_generator_forward.1} parent=1 // pred_fallthru
      _
    // Predicated region
    $region170: #{sample_generator_forward.1} parent=1 // pred_check
      _
    $region171: #{sample_generator_forward.1} parent=1 // pred_check_branch
      %5718 = sbr.rel (0) target = $region173
    $region172: #{sample_generator_forward.1} parent=1 // pred_region
      _
    $region173: #{sample_generator_forward.1} parent=1 // pred_fallthru
      _
    %5719 = vsyncpa [#allocation3], 1
    %5720 = vsyncpa [#allocation5], 1
    %5721 = vsyncpa [#allocation8], 1
    %5722 = vsyncpa [#allocation11], 1
    %5723 = vsyncpa [#allocation14], 1
    %5724 = vsyncpa [#allocation17], 1
    %5725 = vsyncpa [#allocation20], 1
    %5726 = vsyncpa [#allocation23], 1

</llo_original>
